<compile_context>
chip_gen: v7x
topology: tpu7x:2x2x1
jax: 0.10.0
libtpu: 0.0.40
codegen_flags: <defaults>
</compile_context>

<pallas_src>
import functools

import jax
import jax.numpy as jnp
from jax.experimental import pallas as pl
from jax.experimental.pallas import tpu as pltpu


# ----------------------------------------------------------------------------
# Compiler params (generation-aware VMEM limit)
# ----------------------------------------------------------------------------
@functools.lru_cache(maxsize=None)
def _vmem_limit_bytes():
    try:
        cap = int(pltpu.get_tpu_info().vmem_capacity_bytes)
    except Exception:
        cap = 64 * 1024 * 1024          # conservative fallback (v7x-sized)
    return (cap * 3) // 4               # ~48 MiB on v7x, ~96 MiB on v5e/v6e


def _compiler_params():
    return pltpu.CompilerParams(
        dimension_semantics=("parallel",),   # batch across TCs (v7x megacore)
        vmem_limit_bytes=_vmem_limit_bytes())


# ----------------------------------------------------------------------------
# Pallas kernels
# ----------------------------------------------------------------------------
def _conv_in_kernel(a_ref, w_ref, o_ref, *, taps, wp, wo, inv_cnt, do_relu):
    """Stride-1 conv (single fused matmul) + InstanceNorm + optional ReLU.

    a_ref: (Hp*Wp, Cin)      f32/bf16 flattened spatially padded image
    w_ref: (kh*kw*Cin, Cout) bf16     weights, rows ordered (ky, kx, ci)
    o_ref: (Lv, Cout)                 output in padded-width row layout
    """
    lv = o_ref.shape[0]
    xb = a_ref[...].astype(jnp.bfloat16)                 # hoisted single cast

    # In-VMEM im2col: lane-concat the kh*kw shifted row slabs, one MXU matmul
    # with K = kh*kw*Cin (instead of kh*kw matmuls with K = Cin).
    lhs = jnp.concatenate([xb[d:d + lv, :] for d in taps], axis=1)
    acc = jnp.dot(lhs, w_ref[...], preferred_element_type=jnp.float32)

    # Masked single-pass InstanceNorm2d (affine=False, eps=1e-5, biased var).
    col = jax.lax.broadcasted_iota(jnp.int32, (lv, 1), 0) % wp
    valid = (col < wo).astype(jnp.float32)               # row-wrap garbage mask
    av = acc * valid
    mean = jnp.sum(av, axis=0, keepdims=True) * inv_cnt
    ex2 = jnp.sum(av * acc, axis=0, keepdims=True) * inv_cnt
    var = jnp.maximum(ex2 - mean * mean, 0.0)            # cancellation guard
    y = (acc - mean) * jax.lax.rsqrt(var + 1e-5)
    if do_relu:
        y = jnp.maximum(y, 0.0)
    o_ref[...] = y.astype(o_ref.dtype)


def _resnet_block_kernel(a_ref, w1_ref, w2_ref, o_ref, zpad_ref, *, wp, wo, hp,
                         ho, inv_cnt):
    """Fused ResnetBlock: conv3x3+IN+ReLU -> pad rebuild -> conv3x3+IN -> +res.

    a_ref:    (Hp*Wp, C) bf16   flattened ReflectionPad2d(1) of the block input
    w1_ref:   (9*C, C)  bf16
    w2_ref:   (9*C, C)  bf16
    o_ref:    (Lv, C)           output in padded-width row layout
    zpad_ref: (Hp*Wp, C) bf16   VMEM scratch holding the padded intermediate
    """
    lv = o_ref.shape[0]
    taps = tuple(ky * wp + kx for ky in range(3) for kx in range(3))
    xb = a_ref[...].astype(jnp.bfloat16)

    col = jax.lax.broadcasted_iota(jnp.int32, (lv, 1), 0) % wp
    valid = (col < wo).astype(jnp.float32)

    def conv3x3(get_slab, w_ref_):
        lhs = jnp.concatenate([get_slab(d) for d in taps], axis=1)
        return jnp.dot(lhs, w_ref_[...], preferred_element_type=jnp.float32)

    def inorm(acc):
        av = acc * valid
        mean = jnp.sum(av, axis=0, keepdims=True) * inv_cnt
        ex2 = jnp.sum(av * acc, axis=0, keepdims=True) * inv_cnt
        var = jnp.maximum(ex2 - mean * mean, 0.0)
        return (acc - mean) * jax.lax.rsqrt(var + 1e-5)

    # conv1 + IN + ReLU (intermediate never leaves VMEM).
    z = jnp.maximum(inorm(conv3x3(lambda d: xb[d:d + lv, :], w1_ref)), 0.0)

    # Rebuild ReflectionPad2d(1)(z_valid) in the (Hp*Wp, C) scratch:
    #   * one big slice store covers the whole interior (padded (r+1, c+1)),
    #   * borders are patched with O(H+W) tiny slice copies
    #     (no full-tensor rolls / selects).
    zpad_ref[wp + 1:wp + 1 + lv, :] = z.astype(jnp.bfloat16)
    for r in range(1, ho + 1):                            # reflect columns
        base = r * wp
        zpad_ref[base:base + 1, :] = zpad_ref[base + 2:base + 3, :]
        zpad_ref[base + wp - 1:base + wp, :] = \
            zpad_ref[base + wp - 3:base + wp - 2, :]
    zpad_ref[0:wp, :] = zpad_ref[2 * wp:3 * wp, :]        # reflect row 0
    zpad_ref[(hp - 1) * wp:hp * wp, :] = \
        zpad_ref[(hp - 3) * wp:(hp - 2) * wp, :]          # reflect last row

    # conv2 + IN + residual (residual = un-padded centre of the padded input).
    y2 = inorm(conv3x3(lambda d: zpad_ref[d:d + lv, :], w2_ref))
    res = xb[wp + 1:wp + 1 + lv, :].astype(jnp.float32)
    o_ref[...] = (y2 + res).astype(o_ref.dtype)


# ----------------------------------------------------------------------------
# Plain-JAX glue (layout only: padding, space-to-depth, flatten/unflatten)
# ----------------------------------------------------------------------------
def _space_to_depth(x):
    """(N, H, W, C) -> (N, H//2, W//2, 4C), sub-pixel order (sy, sx, c)."""
    n, h, w, c = x.shape
    x = x.reshape(n, h // 2, 2, w // 2, 2, c)
    x = x.transpose(0, 1, 3, 2, 4, 5)
    return x.reshape(n, h // 2, w // 2, 4 * c)


def _s2d_weights(w):
    """(4,4,C,Co) stride-2 weights -> (2,2,4C,Co) stride-1 weights."""
    kh, kw, c, co = w.shape
    w = w.reshape(kh // 2, 2, kw // 2, 2, c, co)
    w = w.transpose(0, 2, 1, 3, 4, 5)          # (ky2, kx2, sy, sx, c, co)
    return w.reshape(kh // 2, kw // 2, 4 * c, co)


def _unflatten_valid(o_flat, ho, wo, wp):
    """(N, Lv, C) padded-width rows -> (N, ho, wo, C) valid output."""
    n, lv, c = o_flat.shape
    o = jnp.pad(o_flat, ((0, 0), (0, ho * wp - lv), (0, 0)))
    return o.reshape(n, ho, wp, c)[:, :, :wo, :]


def conv_in_layer(x, w, *, stride, pad, pad_mode, do_relu,
                  out_dtype=jnp.bfloat16):
    """Conv2d (no bias; cancelled by IN) + InstanceNorm2d + optional ReLU."""
    n = x.shape[0]
    if pad:
        x = jnp.pad(x, ((0, 0), (pad, pad), (pad, pad), (0, 0)), mode=pad_mode)
    if stride == 2:
        x = _space_to_depth(x)
        w = _s2d_weights(w)
    elif stride != 1:
        raise NotImplementedError("only stride 1 / 2 supported")

    kh, kw, cin, cout = w.shape
    hp, wp = x.shape[1], x.shape[2]
    ho, wo = hp - kh + 1, wp - kw + 1
    lv = (ho - 1) * wp + wo                       # last valid flat position + 1
    taps = tuple(ky * wp + kx for ky in range(kh) for kx in range(kw))

    a = x.reshape(n, hp * wp, cin)
    w_mat = w.reshape(kh * kw * cin, cout).astype(jnp.bfloat16)

    kernel = functools.partial(_conv_in_kernel, taps=taps, wp=wp, wo=wo,
                               inv_cnt=1.0 / float(ho * wo), do_relu=do_relu)
    out = pl.pallas_call(
        kernel,
        out_shape=jax.ShapeDtypeStruct((n, lv, cout), out_dtype),
        grid=(n,),
        in_specs=[
            pl.BlockSpec((None, hp * wp, cin), lambda i: (i, 0, 0)),
            pl.BlockSpec((kh * kw * cin, cout), lambda i: (0, 0)),
        ],
        out_specs=pl.BlockSpec((None, lv, cout), lambda i: (i, 0, 0)),
        compiler_params=_compiler_params(),
    )(a, w_mat)
    return _unflatten_valid(out, ho, wo, wp)


def resnet_block_layer(h, w1, w2, *, out_dtype=jnp.bfloat16):
    """Whole ResnetBlock (reflect padding) as a single fused pallas_call."""
    n, hh, ww, c = h.shape
    x = jnp.pad(h, ((0, 0), (1, 1), (1, 1), (0, 0)), mode="reflect")
    hp, wp = hh + 2, ww + 2
    ho, wo = hh, ww
    lv = (ho - 1) * wp + wo
    p2 = hp * wp

    a = x.reshape(n, p2, c)
    w1m = w1.reshape(9 * c, c).astype(jnp.bfloat16)
    w2m = w2.reshape(9 * c, c).astype(jnp.bfloat16)

    kernel = functools.partial(_resnet_block_kernel, wp=wp, wo=wo, hp=hp, ho=ho,
                               inv_cnt=1.0 / float(ho * wo))
    out = pl.pallas_call(
        kernel,
        out_shape=jax.ShapeDtypeStruct((n, lv, c), out_dtype),
        grid=(n,),
        in_specs=[
            pl.BlockSpec((None, p2, c), lambda i: (i, 0, 0)),
            pl.BlockSpec((9 * c, c), lambda i: (0, 0)),
            pl.BlockSpec((9 * c, c), lambda i: (0, 0)),
        ],
        out_specs=pl.BlockSpec((None, lv, c), lambda i: (i, 0, 0)),
        scratch_shapes=[pltpu.VMEM((p2, c), jnp.bfloat16)],
        compiler_params=_compiler_params(),
    )(a, w1m, w2m)
    return _unflatten_valid(out, ho, wo, wp)


# ----------------------------------------------------------------------------
# Parameters and forward pass (NHWC activations)
# ----------------------------------------------------------------------------
def init_params(key, input_nc, ngf, n_blocks):
    # Conv biases omitted on purpose: they are exactly cancelled by the
    # InstanceNorm2d(affine=False) mean subtraction.
    def conv_w(k, kh, kw, cin, cout):
        fan_in = kh * kw * cin
        return jax.random.normal(k, (kh, kw, cin, cout),
                                 jnp.float32) / jnp.sqrt(jnp.float32(fan_in))

    keys = jax.random.split(key, 3 + 2 * n_blocks)
    return {
        "stem": conv_w(keys[0], 7, 7, input_nc, ngf),
        "down": [conv_w(keys[1], 4, 4, ngf, ngf * 2),
                 conv_w(keys[2], 4, 4, ngf * 2, ngf * 4)],
        "blocks": [(conv_w(keys[3 + 2 * i], 3, 3, ngf * 4, ngf * 4),
                    conv_w(keys[4 + 2 * i], 3, 3, ngf * 4, ngf * 4))
                   for i in range(n_blocks)],
    }


def hdr_resnet_encoder_clear(x_nhwc, params):
    # Stem: ReflectionPad2d(3) + Conv7x7 + IN + ReLU
    h = conv_in_layer(x_nhwc, params["stem"], stride=1, pad=3,
                      pad_mode="reflect", do_relu=True)
    # Two downsampling stages: Conv4x4 stride 2 (zero pad 1) + IN + ReLU
    for w in params["down"]:
        h = conv_in_layer(h, w, stride=2, pad=1, pad_mode="constant",
                          do_relu=True)
    # ResnetBlocks (reflect padding), each fully fused in one kernel;
    # the last one emits f32 directly so the final cast below is a no-op.
    n_blocks = len(params["blocks"])
    for bi, (w1, w2) in enumerate(params["blocks"]):
        od = jnp.float32 if bi == n_blocks - 1 else jnp.bfloat16
        h = resnet_block_layer(h, w1, w2, out_dtype=od)
    return h.astype(jnp.float32)


# ----------------------------------------------------------------------------
# Pure-JAX reference (f32) for a sanity check
# ----------------------------------------------------------------------------
def _conv_ref(x, w, stride, pad, pad_mode):
    if pad:
        x = jnp.pad(x, ((0, 0), (pad, pad), (pad, pad), (0, 0)), mode=pad_mode)
    return jax.lax.conv_general_dilated(
        x, w, window_strides=(stride, stride), padding="VALID",
        dimension_numbers=("NHWC", "HWIO", "NHWC"),
        precision=jax.lax.Precision.HIGHEST)


def _in_relu_ref(x, relu):
    m = jnp.mean(x, axis=(1, 2), keepdims=True)
    v = jnp.mean((x - m) ** 2, axis=(1, 2), keepdims=True)
    y = (x - m) * jax.lax.rsqrt(v + 1e-5)
    return jnp.maximum(y, 0.0) if relu else y


def _ref_resnet_block(h, w1, w2):
    y = _in_relu_ref(_conv_ref(h, w1, 1, 1, "reflect"), True)
    return h + _in_relu_ref(_conv_ref(y, w2, 1, 1, "reflect"), False)


def reference_forward(x, params):
    h = _in_relu_ref(_conv_ref(x, params["stem"], 1, 3, "reflect"), True)
    for w in params["down"]:
        h = _in_relu_ref(_conv_ref(h, w, 2, 1, "constant"), True)
    for w1, w2 in params["blocks"]:
        h = _ref_resnet_block(h, w1, w2)
    return h


if __name__ == "__main__":
    # Small shapes consistent with the module: batch=2, input_nc=4,
    # spatial=16, ngf=8, n_blocks=3  ->  output (2, 4, 4, 32) in NHWC.
    N, C_IN, H, W = 2, 4, 16, 16
    NGF, N_BLOCKS = 8, 3

    key = jax.random.PRNGKey(0)
    kx, kp = jax.random.split(key)
    x_nchw = jax.random.normal(kx, (N, C_IN, H, W), jnp.float32)  # PyTorch-style
    x_nhwc = jnp.transpose(x_nchw, (0, 2, 3, 1))                  # kernel layout
    params = init_params(kp, C_IN, NGF, N_BLOCKS)

    fwd = jax.jit(hdr_resnet_encoder_clear)
    out = jax.block_until_ready(fwd(x_nhwc, params))

    assert out.shape == (N, H // 4, W // 4, NGF * 4), out.shape
    assert out.dtype == jnp.float32, out.dtype
    assert bool(jnp.all(jnp.isfinite(out)))

    # End-to-end check against the f32 reference (tolerance accounts for bf16
    # matmuls + bf16 inter-layer activations across 8 stacked conv layers).
    ref = reference_forward(x_nhwc, params)
    err = float(jnp.max(jnp.abs(out - ref)))
    scale = float(jnp.max(jnp.abs(ref))) + 1.0
    assert err <= 0.1 * scale, (err, scale)

    # Robustness check of the fused ResnetBlock's in-kernel reflection-pad
    # rebuild at a NON-SQUARE spatial size (reviewer correctness concern).
    hb = jax.random.normal(jax.random.PRNGKey(3), (1, 4, 6, NGF * 4),
                           jnp.float32)
    w1t, w2t = params["blocks"][0]
    blk = jax.block_until_ready(
        resnet_block_layer(hb, w1t, w2t, out_dtype=jnp.float32))
    blk_ref = _ref_resnet_block(hb, w1t, w2t)
    blk_err = float(jnp.max(jnp.abs(blk - blk_ref)))
    blk_scale = float(jnp.max(jnp.abs(blk_ref))) + 1.0
    assert blk_err <= 0.05 * blk_scale, (blk_err, blk_scale)

    print("KERNEL_OK")
</pallas_src>

<mosaic_0001>
module attributes {stable_mosaic.version = 11 : i64} {
  func.func @_conv_in_kernel(%arg0: i32, %arg1: memref<1x484x4xf32, #tpu.memory_space<vmem>>, %arg2: memref<196x8xbf16, #tpu.memory_space<vmem>>, %arg3: memref<1x346x8xbf16, #tpu.memory_space<vmem>>) attributes {dimension_semantics = [#tpu.dimension_semantics<parallel>], iteration_bounds = array<i64: 2>, scalar_prefetch = 0 : i64, scratch_operands = 0 : i64, tpu.core_type = #tpu.core_type<tc>, window_params = [{transform_indices = @transform_0, window_bounds = array<i64: 1, 484, 4>}, {pipeline_mode = #tpu.pipeline_mode<synchronous>, transform_indices = @transform_1, window_bounds = array<i64: 196, 8>}, {transform_indices = @transform_2, window_bounds = array<i64: 1, 346, 8>}]} {
    %c0 = arith.constant 0 : index
    %c0_0 = arith.constant 0 : index
    %c0_1 = arith.constant 0 : index
    %0 = vector.load %arg1[%c0, %c0_0, %c0_1] : memref<1x484x4xf32, #tpu.memory_space<vmem>>, vector<1x484x4xf32>
    %1 = vector.shape_cast %0 : vector<1x484x4xf32> to vector<484x4xf32>
    %2 = arith.truncf %1 : vector<484x4xf32> to vector<484x4xbf16>
    %3 = vector.extract_strided_slice %2 {offsets = [0, 0], sizes = [346, 4], strides = [1, 1]} : vector<484x4xbf16> to vector<346x4xbf16>
    %4 = vector.extract_strided_slice %2 {offsets = [1, 0], sizes = [346, 4], strides = [1, 1]} : vector<484x4xbf16> to vector<346x4xbf16>
    %5 = vector.extract_strided_slice %2 {offsets = [2, 0], sizes = [346, 4], strides = [1, 1]} : vector<484x4xbf16> to vector<346x4xbf16>
    %6 = vector.extract_strided_slice %2 {offsets = [3, 0], sizes = [346, 4], strides = [1, 1]} : vector<484x4xbf16> to vector<346x4xbf16>
    %7 = vector.extract_strided_slice %2 {offsets = [4, 0], sizes = [346, 4], strides = [1, 1]} : vector<484x4xbf16> to vector<346x4xbf16>
    %8 = vector.extract_strided_slice %2 {offsets = [5, 0], sizes = [346, 4], strides = [1, 1]} : vector<484x4xbf16> to vector<346x4xbf16>
    %9 = vector.extract_strided_slice %2 {offsets = [6, 0], sizes = [346, 4], strides = [1, 1]} : vector<484x4xbf16> to vector<346x4xbf16>
    %10 = vector.extract_strided_slice %2 {offsets = [22, 0], sizes = [346, 4], strides = [1, 1]} : vector<484x4xbf16> to vector<346x4xbf16>
    %11 = vector.extract_strided_slice %2 {offsets = [23, 0], sizes = [346, 4], strides = [1, 1]} : vector<484x4xbf16> to vector<346x4xbf16>
    %12 = vector.extract_strided_slice %2 {offsets = [24, 0], sizes = [346, 4], strides = [1, 1]} : vector<484x4xbf16> to vector<346x4xbf16>
    %13 = vector.extract_strided_slice %2 {offsets = [25, 0], sizes = [346, 4], strides = [1, 1]} : vector<484x4xbf16> to vector<346x4xbf16>
    %14 = vector.extract_strided_slice %2 {offsets = [26, 0], sizes = [346, 4], strides = [1, 1]} : vector<484x4xbf16> to vector<346x4xbf16>
    %15 = vector.extract_strided_slice %2 {offsets = [27, 0], sizes = [346, 4], strides = [1, 1]} : vector<484x4xbf16> to vector<346x4xbf16>
    %16 = vector.extract_strided_slice %2 {offsets = [28, 0], sizes = [346, 4], strides = [1, 1]} : vector<484x4xbf16> to vector<346x4xbf16>
    %17 = vector.extract_strided_slice %2 {offsets = [44, 0], sizes = [346, 4], strides = [1, 1]} : vector<484x4xbf16> to vector<346x4xbf16>
    %18 = vector.extract_strided_slice %2 {offsets = [45, 0], sizes = [346, 4], strides = [1, 1]} : vector<484x4xbf16> to vector<346x4xbf16>
    %19 = vector.extract_strided_slice %2 {offsets = [46, 0], sizes = [346, 4], strides = [1, 1]} : vector<484x4xbf16> to vector<346x4xbf16>
    %20 = vector.extract_strided_slice %2 {offsets = [47, 0], sizes = [346, 4], strides = [1, 1]} : vector<484x4xbf16> to vector<346x4xbf16>
    %21 = vector.extract_strided_slice %2 {offsets = [48, 0], sizes = [346, 4], strides = [1, 1]} : vector<484x4xbf16> to vector<346x4xbf16>
    %22 = vector.extract_strided_slice %2 {offsets = [49, 0], sizes = [346, 4], strides = [1, 1]} : vector<484x4xbf16> to vector<346x4xbf16>
    %23 = vector.extract_strided_slice %2 {offsets = [50, 0], sizes = [346, 4], strides = [1, 1]} : vector<484x4xbf16> to vector<346x4xbf16>
    %24 = vector.extract_strided_slice %2 {offsets = [66, 0], sizes = [346, 4], strides = [1, 1]} : vector<484x4xbf16> to vector<346x4xbf16>
    %25 = vector.extract_strided_slice %2 {offsets = [67, 0], sizes = [346, 4], strides = [1, 1]} : vector<484x4xbf16> to vector<346x4xbf16>
    %26 = vector.extract_strided_slice %2 {offsets = [68, 0], sizes = [346, 4], strides = [1, 1]} : vector<484x4xbf16> to vector<346x4xbf16>
    %27 = vector.extract_strided_slice %2 {offsets = [69, 0], sizes = [346, 4], strides = [1, 1]} : vector<484x4xbf16> to vector<346x4xbf16>
    %28 = vector.extract_strided_slice %2 {offsets = [70, 0], sizes = [346, 4], strides = [1, 1]} : vector<484x4xbf16> to vector<346x4xbf16>
    %29 = vector.extract_strided_slice %2 {offsets = [71, 0], sizes = [346, 4], strides = [1, 1]} : vector<484x4xbf16> to vector<346x4xbf16>
    %30 = vector.extract_strided_slice %2 {offsets = [72, 0], sizes = [346, 4], strides = [1, 1]} : vector<484x4xbf16> to vector<346x4xbf16>
    %31 = vector.extract_strided_slice %2 {offsets = [88, 0], sizes = [346, 4], strides = [1, 1]} : vector<484x4xbf16> to vector<346x4xbf16>
    %32 = vector.extract_strided_slice %2 {offsets = [89, 0], sizes = [346, 4], strides = [1, 1]} : vector<484x4xbf16> to vector<346x4xbf16>
    %33 = vector.extract_strided_slice %2 {offsets = [90, 0], sizes = [346, 4], strides = [1, 1]} : vector<484x4xbf16> to vector<346x4xbf16>
    %34 = vector.extract_strided_slice %2 {offsets = [91, 0], sizes = [346, 4], strides = [1, 1]} : vector<484x4xbf16> to vector<346x4xbf16>
    %35 = vector.extract_strided_slice %2 {offsets = [92, 0], sizes = [346, 4], strides = [1, 1]} : vector<484x4xbf16> to vector<346x4xbf16>
    %36 = vector.extract_strided_slice %2 {offsets = [93, 0], sizes = [346, 4], strides = [1, 1]} : vector<484x4xbf16> to vector<346x4xbf16>
    %37 = vector.extract_strided_slice %2 {offsets = [94, 0], sizes = [346, 4], strides = [1, 1]} : vector<484x4xbf16> to vector<346x4xbf16>
    %38 = vector.extract_strided_slice %2 {offsets = [110, 0], sizes = [346, 4], strides = [1, 1]} : vector<484x4xbf16> to vector<346x4xbf16>
    %39 = vector.extract_strided_slice %2 {offsets = [111, 0], sizes = [346, 4], strides = [1, 1]} : vector<484x4xbf16> to vector<346x4xbf16>
    %40 = vector.extract_strided_slice %2 {offsets = [112, 0], sizes = [346, 4], strides = [1, 1]} : vector<484x4xbf16> to vector<346x4xbf16>
    %41 = vector.extract_strided_slice %2 {offsets = [113, 0], sizes = [346, 4], strides = [1, 1]} : vector<484x4xbf16> to vector<346x4xbf16>
    %42 = vector.extract_strided_slice %2 {offsets = [114, 0], sizes = [346, 4], strides = [1, 1]} : vector<484x4xbf16> to vector<346x4xbf16>
    %43 = vector.extract_strided_slice %2 {offsets = [115, 0], sizes = [346, 4], strides = [1, 1]} : vector<484x4xbf16> to vector<346x4xbf16>
    %44 = vector.extract_strided_slice %2 {offsets = [116, 0], sizes = [346, 4], strides = [1, 1]} : vector<484x4xbf16> to vector<346x4xbf16>
    %45 = vector.extract_strided_slice %2 {offsets = [132, 0], sizes = [346, 4], strides = [1, 1]} : vector<484x4xbf16> to vector<346x4xbf16>
    %46 = vector.extract_strided_slice %2 {offsets = [133, 0], sizes = [346, 4], strides = [1, 1]} : vector<484x4xbf16> to vector<346x4xbf16>
    %47 = vector.extract_strided_slice %2 {offsets = [134, 0], sizes = [346, 4], strides = [1, 1]} : vector<484x4xbf16> to vector<346x4xbf16>
    %48 = vector.extract_strided_slice %2 {offsets = [135, 0], sizes = [346, 4], strides = [1, 1]} : vector<484x4xbf16> to vector<346x4xbf16>
    %49 = vector.extract_strided_slice %2 {offsets = [136, 0], sizes = [346, 4], strides = [1, 1]} : vector<484x4xbf16> to vector<346x4xbf16>
    %50 = vector.extract_strided_slice %2 {offsets = [137, 0], sizes = [346, 4], strides = [1, 1]} : vector<484x4xbf16> to vector<346x4xbf16>
    %51 = vector.extract_strided_slice %2 {offsets = [138, 0], sizes = [346, 4], strides = [1, 1]} : vector<484x4xbf16> to vector<346x4xbf16>
    %52 = tpu.concatenate %3, %4, %5, %6, %7, %8, %9, %10, %11, %12, %13, %14, %15, %16, %17, %18 in 1 : vector<346x4xbf16>, vector<346x4xbf16>, vector<346x4xbf16>, vector<346x4xbf16>, vector<346x4xbf16>, vector<346x4xbf16>, vector<346x4xbf16>, vector<346x4xbf16>, vector<346x4xbf16>, vector<346x4xbf16>, vector<346x4xbf16>, vector<346x4xbf16>, vector<346x4xbf16>, vector<346x4xbf16>, vector<346x4xbf16>, vector<346x4xbf16> -> vector<346x64xbf16>
    %53 = tpu.concatenate %19, %20, %21, %22, %23, %24, %25, %26, %27, %28, %29, %30, %31, %32, %33, %34 in 1 : vector<346x4xbf16>, vector<346x4xbf16>, vector<346x4xbf16>, vector<346x4xbf16>, vector<346x4xbf16>, vector<346x4xbf16>, vector<346x4xbf16>, vector<346x4xbf16>, vector<346x4xbf16>, vector<346x4xbf16>, vector<346x4xbf16>, vector<346x4xbf16>, vector<346x4xbf16>, vector<346x4xbf16>, vector<346x4xbf16>, vector<346x4xbf16> -> vector<346x64xbf16>
    %54 = tpu.concatenate %35, %36, %37, %38, %39, %40, %41, %42, %43, %44, %45, %46, %47, %48, %49, %50 in 1 : vector<346x4xbf16>, vector<346x4xbf16>, vector<346x4xbf16>, vector<346x4xbf16>, vector<346x4xbf16>, vector<346x4xbf16>, vector<346x4xbf16>, vector<346x4xbf16>, vector<346x4xbf16>, vector<346x4xbf16>, vector<346x4xbf16>, vector<346x4xbf16>, vector<346x4xbf16>, vector<346x4xbf16>, vector<346x4xbf16>, vector<346x4xbf16> -> vector<346x64xbf16>
    %55 = tpu.concatenate %52, %53, %54, %51 in 1 : vector<346x64xbf16>, vector<346x64xbf16>, vector<346x64xbf16>, vector<346x4xbf16> -> vector<346x196xbf16>
    %c0_2 = arith.constant 0 : index
    %c0_3 = arith.constant 0 : index
    %56 = vector.load %arg2[%c0_2, %c0_3] : memref<196x8xbf16, #tpu.memory_space<vmem>>, vector<196x8xbf16>
    %cst = arith.constant dense<0.000000e+00> : vector<346x8xf32>
    %57 = tpu.matmul %55, %56, %cst {dimension_numbers = #tpu.dot_dimension_numbers<[1], [0], [0], [1], [0, 0, 1, 1], [], []>} : vector<346x196xbf16>, vector<196x8xbf16>, vector<346x8xf32> -> vector<346x8xf32>
    %58 = tpu.iota {dimensions = array<i32: 0>} : vector<346x1xi32>
    %c22_i32 = arith.constant 22 : i32
    %c0_i32 = arith.constant 0 : i32
    %59 = arith.cmpi eq, %c22_i32, %c0_i32 : i32
    %c1_i32 = arith.constant 1 : i32
    %60 = arith.select %59, %c1_i32, %c22_i32 : i32
    %61 = vector.broadcast %60 : i32 to vector<346x1xi32>
    %62 = arith.remsi %58, %61 : vector<346x1xi32>
    %c0_i32_4 = arith.constant 0 : i32
    %63 = vector.broadcast %c0_i32_4 : i32 to vector<346x1xi32>
    %64 = arith.cmpi ne, %62, %63 : vector<346x1xi32>
    %c0_i32_5 = arith.constant 0 : i32
    %65 = vector.broadcast %c0_i32_5 : i32 to vector<346x1xi32>
    %66 = arith.cmpi slt, %62, %65 : vector<346x1xi32>
    %c0_i32_6 = arith.constant 0 : i32
    %67 = arith.cmpi slt, %60, %c0_i32_6 : i32
    %68 = vector.broadcast %67 : i1 to vector<346x1xi1>
    %69 = vector.broadcast %68 : vector<346x1xi1> to vector<346x1xi1>
    %70 = arith.xori %66, %69 : vector<346x1xi1>
    %71 = arith.andi %70, %64 : vector<346x1xi1>
    %72 = vector.broadcast %60 : i32 to vector<346x1xi32>
    %73 = arith.addi %62, %72 : vector<346x1xi32>
    %74 = arith.select %71, %73, %62 : vector<346x1xi1>, vector<346x1xi32>
    %c16_i32 = arith.constant 16 : i32
    %75 = vector.broadcast %c16_i32 : i32 to vector<346x1xi32>
    %76 = arith.cmpi slt, %74, %75 : vector<346x1xi32>
    %77 = arith.extui %76 : vector<346x1xi1> to vector<346x1xi32>
    %78 = arith.sitofp %77 : vector<346x1xi32> to vector<346x1xf32>
    %79 = vector.broadcast %78 : vector<346x1xf32> to vector<346x8xf32>
    %80 = arith.mulf %57, %79 : vector<346x8xf32>
    %cst_7 = arith.constant dense<0.000000e+00> : vector<8xf32>
    %81 = vector.multi_reduction <add>, %80, %cst_7 [0] : vector<346x8xf32> to vector<8xf32>
    %82 = vector.shape_cast %81 : vector<8xf32> to vector<1x8xf32>
    %cst_8 = arith.constant 3.906250e-03 : f32
    %83 = vector.broadcast %cst_8 : f32 to vector<1x8xf32>
    %84 = arith.mulf %82, %83 : vector<1x8xf32>
    %85 = arith.mulf %80, %57 : vector<346x8xf32>
    %cst_9 = arith.constant dense<0.000000e+00> : vector<8xf32>
    %86 = vector.multi_reduction <add>, %85, %cst_9 [0] : vector<346x8xf32> to vector<8xf32>
    %87 = vector.shape_cast %86 : vector<8xf32> to vector<1x8xf32>
    %cst_10 = arith.constant 3.906250e-03 : f32
    %88 = vector.broadcast %cst_10 : f32 to vector<1x8xf32>
    %89 = arith.mulf %87, %88 : vector<1x8xf32>
    %90 = arith.mulf %84, %84 : vector<1x8xf32>
    %91 = arith.subf %89, %90 : vector<1x8xf32>
    %cst_11 = arith.constant 0.000000e+00 : f32
    %92 = vector.broadcast %cst_11 : f32 to vector<1x8xf32>
    %93 = arith.maximumf %91, %92 : vector<1x8xf32>
    %94 = vector.broadcast %84 : vector<1x8xf32> to vector<346x8xf32>
    %95 = arith.subf %57, %94 : vector<346x8xf32>
    %cst_12 = arith.constant 9.99999974E-6 : f32
    %96 = vector.broadcast %cst_12 : f32 to vector<1x8xf32>
    %97 = arith.addf %93, %96 : vector<1x8xf32>
    %98 = math.rsqrt %97 : vector<1x8xf32>
    %99 = vector.broadcast %98 : vector<1x8xf32> to vector<346x8xf32>
    %100 = arith.mulf %95, %99 : vector<346x8xf32>
    %cst_13 = arith.constant 0.000000e+00 : f32
    %101 = vector.broadcast %cst_13 : f32 to vector<346x8xf32>
    %102 = arith.maximumf %100, %101 : vector<346x8xf32>
    %103 = arith.truncf %102 : vector<346x8xf32> to vector<346x8xbf16>
    %c0_14 = arith.constant 0 : index
    %c0_15 = arith.constant 0 : index
    %c0_16 = arith.constant 0 : index
    %104 = vector.load %arg3[%c0_14, %c0_15, %c0_16] : memref<1x346x8xbf16, #tpu.memory_space<vmem>>, vector<1x346x8xbf16>
    %105 = vector.shape_cast %104 : vector<1x346x8xbf16> to vector<346x8xbf16>
    %106 = vector.shape_cast %103 : vector<346x8xbf16> to vector<1x346x8xbf16>
    tpu.vector_store %arg3[%c0_14, %c0_15, %c0_16], %106 {strides = array<i32>} : memref<1x346x8xbf16, #tpu.memory_space<vmem>>, vector<1x346x8xbf16>,
    return
  }
  func.func @transform_0(%arg0: i32) -> (i32, i32, i32) {
    %c0_i32 = arith.constant 0 : i32
    %c0_i32_0 = arith.constant 0 : i32
    %c0_i32_1 = arith.constant 0 : i32
    return %arg0, %c0_i32, %c0_i32_0 : i32, i32, i32
  }
  func.func @transform_1(%arg0: i32) -> (i32, i32) {
    %c0_i32 = arith.constant 0 : i32
    %c0_i32_0 = arith.constant 0 : i32
    %c0_i32_1 = arith.constant 0 : i32
    return %c0_i32, %c0_i32_0 : i32, i32
  }
  func.func @transform_2(%arg0: i32) -> (i32, i32, i32) {
    %c0_i32 = arith.constant 0 : i32
    %c0_i32_0 = arith.constant 0 : i32
    %c0_i32_1 = arith.constant 0 : i32
    return %arg0, %c0_i32, %c0_i32_0 : i32, i32, i32
  }
}

module attributes {stable_mosaic.version = 11 : i64} {
  func.func @_conv_in_kernel(%arg0: i32, %arg1: memref<1x81x32xbf16, #tpu.memory_space<vmem>>, %arg2: memref<128x16xbf16, #tpu.memory_space<vmem>>, %arg3: memref<1x71x16xbf16, #tpu.memory_space<vmem>>) attributes {dimension_semantics = [#tpu.dimension_semantics<parallel>], iteration_bounds = array<i64: 2>, scalar_prefetch = 0 : i64, scratch_operands = 0 : i64, tpu.core_type = #tpu.core_type<tc>, window_params = [{transform_indices = @transform_0, window_bounds = array<i64: 1, 81, 32>}, {pipeline_mode = #tpu.pipeline_mode<synchronous>, transform_indices = @transform_1, window_bounds = array<i64: 128, 16>}, {transform_indices = @transform_2, window_bounds = array<i64: 1, 71, 16>}]} {
    %c0 = arith.constant 0 : index
    %c0_0 = arith.constant 0 : index
    %c0_1 = arith.constant 0 : index
    %0 = vector.load %arg1[%c0, %c0_0, %c0_1] : memref<1x81x32xbf16, #tpu.memory_space<vmem>>, vector<1x81x32xbf16>
    %1 = vector.shape_cast %0 : vector<1x81x32xbf16> to vector<81x32xbf16>
    %2 = vector.extract_strided_slice %1 {offsets = [0, 0], sizes = [71, 32], strides = [1, 1]} : vector<81x32xbf16> to vector<71x32xbf16>
    %3 = vector.extract_strided_slice %1 {offsets = [1, 0], sizes = [71, 32], strides = [1, 1]} : vector<81x32xbf16> to vector<71x32xbf16>
    %4 = vector.extract_strided_slice %1 {offsets = [9, 0], sizes = [71, 32], strides = [1, 1]} : vector<81x32xbf16> to vector<71x32xbf16>
    %5 = vector.extract_strided_slice %1 {offsets = [10, 0], sizes = [71, 32], strides = [1, 1]} : vector<81x32xbf16> to vector<71x32xbf16>
    %6 = tpu.concatenate %2, %3, %4, %5 in 1 : vector<71x32xbf16>, vector<71x32xbf16>, vector<71x32xbf16>, vector<71x32xbf16> -> vector<71x128xbf16>
    %c0_2 = arith.constant 0 : index
    %c0_3 = arith.constant 0 : index
    %7 = vector.load %arg2[%c0_2, %c0_3] : memref<128x16xbf16, #tpu.memory_space<vmem>>, vector<128x16xbf16>
    %cst = arith.constant dense<0.000000e+00> : vector<71x16xf32>
    %8 = tpu.matmul %6, %7, %cst {dimension_numbers = #tpu.dot_dimension_numbers<[1], [0], [0], [1], [0, 0, 1, 1], [], []>} : vector<71x128xbf16>, vector<128x16xbf16>, vector<71x16xf32> -> vector<71x16xf32>
    %9 = tpu.iota {dimensions = array<i32: 0>} : vector<71x1xi32>
    %c9_i32 = arith.constant 9 : i32
    %c0_i32 = arith.constant 0 : i32
    %10 = arith.cmpi eq, %c9_i32, %c0_i32 : i32
    %c1_i32 = arith.constant 1 : i32
    %11 = arith.select %10, %c1_i32, %c9_i32 : i32
    %12 = vector.broadcast %11 : i32 to vector<71x1xi32>
    %13 = arith.remsi %9, %12 : vector<71x1xi32>
    %c0_i32_4 = arith.constant 0 : i32
    %14 = vector.broadcast %c0_i32_4 : i32 to vector<71x1xi32>
    %15 = arith.cmpi ne, %13, %14 : vector<71x1xi32>
    %c0_i32_5 = arith.constant 0 : i32
    %16 = vector.broadcast %c0_i32_5 : i32 to vector<71x1xi32>
    %17 = arith.cmpi slt, %13, %16 : vector<71x1xi32>
    %c0_i32_6 = arith.constant 0 : i32
    %18 = arith.cmpi slt, %11, %c0_i32_6 : i32
    %19 = vector.broadcast %18 : i1 to vector<71x1xi1>
    %20 = vector.broadcast %19 : vector<71x1xi1> to vector<71x1xi1>
    %21 = arith.xori %17, %20 : vector<71x1xi1>
    %22 = arith.andi %21, %15 : vector<71x1xi1>
    %23 = vector.broadcast %11 : i32 to vector<71x1xi32>
    %24 = arith.addi %13, %23 : vector<71x1xi32>
    %25 = arith.select %22, %24, %13 : vector<71x1xi1>, vector<71x1xi32>
    %c8_i32 = arith.constant 8 : i32
    %26 = vector.broadcast %c8_i32 : i32 to vector<71x1xi32>
    %27 = arith.cmpi slt, %25, %26 : vector<71x1xi32>
    %28 = arith.extui %27 : vector<71x1xi1> to vector<71x1xi32>
    %29 = arith.sitofp %28 : vector<71x1xi32> to vector<71x1xf32>
    %30 = vector.broadcast %29 : vector<71x1xf32> to vector<71x16xf32>
    %31 = arith.mulf %8, %30 : vector<71x16xf32>
    %cst_7 = arith.constant dense<0.000000e+00> : vector<16xf32>
    %32 = vector.multi_reduction <add>, %31, %cst_7 [0] : vector<71x16xf32> to vector<16xf32>
    %33 = vector.shape_cast %32 : vector<16xf32> to vector<1x16xf32>
    %cst_8 = arith.constant 1.562500e-02 : f32
    %34 = vector.broadcast %cst_8 : f32 to vector<1x16xf32>
    %35 = arith.mulf %33, %34 : vector<1x16xf32>
    %36 = arith.mulf %31, %8 : vector<71x16xf32>
    %cst_9 = arith.constant dense<0.000000e+00> : vector<16xf32>
    %37 = vector.multi_reduction <add>, %36, %cst_9 [0] : vector<71x16xf32> to vector<16xf32>
    %38 = vector.shape_cast %37 : vector<16xf32> to vector<1x16xf32>
    %cst_10 = arith.constant 1.562500e-02 : f32
    %39 = vector.broadcast %cst_10 : f32 to vector<1x16xf32>
    %40 = arith.mulf %38, %39 : vector<1x16xf32>
    %41 = arith.mulf %35, %35 : vector<1x16xf32>
    %42 = arith.subf %40, %41 : vector<1x16xf32>
    %cst_11 = arith.constant 0.000000e+00 : f32
    %43 = vector.broadcast %cst_11 : f32 to vector<1x16xf32>
    %44 = arith.maximumf %42, %43 : vector<1x16xf32>
    %45 = vector.broadcast %35 : vector<1x16xf32> to vector<71x16xf32>
    %46 = arith.subf %8, %45 : vector<71x16xf32>
    %cst_12 = arith.constant 9.99999974E-6 : f32
    %47 = vector.broadcast %cst_12 : f32 to vector<1x16xf32>
    %48 = arith.addf %44, %47 : vector<1x16xf32>
    %49 = math.rsqrt %48 : vector<1x16xf32>
    %50 = vector.broadcast %49 : vector<1x16xf32> to vector<71x16xf32>
    %51 = arith.mulf %46, %50 : vector<71x16xf32>
    %cst_13 = arith.constant 0.000000e+00 : f32
    %52 = vector.broadcast %cst_13 : f32 to vector<71x16xf32>
    %53 = arith.maximumf %51, %52 : vector<71x16xf32>
    %54 = arith.truncf %53 : vector<71x16xf32> to vector<71x16xbf16>
    %c0_14 = arith.constant 0 : index
    %c0_15 = arith.constant 0 : index
    %c0_16 = arith.constant 0 : index
    %55 = vector.load %arg3[%c0_14, %c0_15, %c0_16] : memref<1x71x16xbf16, #tpu.memory_space<vmem>>, vector<1x71x16xbf16>
    %56 = vector.shape_cast %55 : vector<1x71x16xbf16> to vector<71x16xbf16>
    %57 = vector.shape_cast %54 : vector<71x16xbf16> to vector<1x71x16xbf16>
    tpu.vector_store %arg3[%c0_14, %c0_15, %c0_16], %57 {strides = array<i32>} : memref<1x71x16xbf16, #tpu.memory_space<vmem>>, vector<1x71x16xbf16>,
    return
  }
  func.func @transform_0(%arg0: i32) -> (i32, i32, i32) {
    %c0_i32 = arith.constant 0 : i32
    %c0_i32_0 = arith.constant 0 : i32
    %c0_i32_1 = arith.constant 0 : i32
    return %arg0, %c0_i32, %c0_i32_0 : i32, i32, i32
  }
  func.func @transform_1(%arg0: i32) -> (i32, i32) {
    %c0_i32 = arith.constant 0 : i32
    %c0_i32_0 = arith.constant 0 : i32
    %c0_i32_1 = arith.constant 0 : i32
    return %c0_i32, %c0_i32_0 : i32, i32
  }
  func.func @transform_2(%arg0: i32) -> (i32, i32, i32) {
    %c0_i32 = arith.constant 0 : i32
    %c0_i32_0 = arith.constant 0 : i32
    %c0_i32_1 = arith.constant 0 : i32
    return %arg0, %c0_i32, %c0_i32_0 : i32, i32, i32
  }
}

module attributes {stable_mosaic.version = 11 : i64} {
  func.func @_conv_in_kernel(%arg0: i32, %arg1: memref<1x25x64xbf16, #tpu.memory_space<vmem>>, %arg2: memref<256x32xbf16, #tpu.memory_space<vmem>>, %arg3: memref<1x19x32xbf16, #tpu.memory_space<vmem>>) attributes {dimension_semantics = [#tpu.dimension_semantics<parallel>], iteration_bounds = array<i64: 2>, scalar_prefetch = 0 : i64, scratch_operands = 0 : i64, tpu.core_type = #tpu.core_type<tc>, window_params = [{transform_indices = @transform_0, window_bounds = array<i64: 1, 25, 64>}, {pipeline_mode = #tpu.pipeline_mode<synchronous>, transform_indices = @transform_1, window_bounds = array<i64: 256, 32>}, {transform_indices = @transform_2, window_bounds = array<i64: 1, 19, 32>}]} {
    %c0 = arith.constant 0 : index
    %c0_0 = arith.constant 0 : index
    %c0_1 = arith.constant 0 : index
    %0 = vector.load %arg1[%c0, %c0_0, %c0_1] : memref<1x25x64xbf16, #tpu.memory_space<vmem>>, vector<1x25x64xbf16>
    %1 = vector.shape_cast %0 : vector<1x25x64xbf16> to vector<25x64xbf16>
    %2 = vector.extract_strided_slice %1 {offsets = [0, 0], sizes = [19, 64], strides = [1, 1]} : vector<25x64xbf16> to vector<19x64xbf16>
    %3 = vector.extract_strided_slice %1 {offsets = [1, 0], sizes = [19, 64], strides = [1, 1]} : vector<25x64xbf16> to vector<19x64xbf16>
    %4 = vector.extract_strided_slice %1 {offsets = [5, 0], sizes = [19, 64], strides = [1, 1]} : vector<25x64xbf16> to vector<19x64xbf16>
    %5 = vector.extract_strided_slice %1 {offsets = [6, 0], sizes = [19, 64], strides = [1, 1]} : vector<25x64xbf16> to vector<19x64xbf16>
    %6 = tpu.concatenate %2, %3, %4, %5 in 1 : vector<19x64xbf16>, vector<19x64xbf16>, vector<19x64xbf16>, vector<19x64xbf16> -> vector<19x256xbf16>
    %c0_2 = arith.constant 0 : index
    %c0_3 = arith.constant 0 : index
    %7 = vector.load %arg2[%c0_2, %c0_3] : memref<256x32xbf16, #tpu.memory_space<vmem>>, vector<256x32xbf16>
    %cst = arith.constant dense<0.000000e+00> : vector<19x32xf32>
    %8 = tpu.matmul %6, %7, %cst {dimension_numbers = #tpu.dot_dimension_numbers<[1], [0], [0], [1], [0, 0, 1, 1], [], []>} : vector<19x256xbf16>, vector<256x32xbf16>, vector<19x32xf32> -> vector<19x32xf32>
    %9 = tpu.iota {dimensions = array<i32: 0>} : vector<19x1xi32>
    %c5_i32 = arith.constant 5 : i32
    %c0_i32 = arith.constant 0 : i32
    %10 = arith.cmpi eq, %c5_i32, %c0_i32 : i32
    %c1_i32 = arith.constant 1 : i32
    %11 = arith.select %10, %c1_i32, %c5_i32 : i32
    %12 = vector.broadcast %11 : i32 to vector<19x1xi32>
    %13 = arith.remsi %9, %12 : vector<19x1xi32>
    %c0_i32_4 = arith.constant 0 : i32
    %14 = vector.broadcast %c0_i32_4 : i32 to vector<19x1xi32>
    %15 = arith.cmpi ne, %13, %14 : vector<19x1xi32>
    %c0_i32_5 = arith.constant 0 : i32
    %16 = vector.broadcast %c0_i32_5 : i32 to vector<19x1xi32>
    %17 = arith.cmpi slt, %13, %16 : vector<19x1xi32>
    %c0_i32_6 = arith.constant 0 : i32
    %18 = arith.cmpi slt, %11, %c0_i32_6 : i32
    %19 = vector.broadcast %18 : i1 to vector<19x1xi1>
    %20 = vector.broadcast %19 : vector<19x1xi1> to vector<19x1xi1>
    %21 = arith.xori %17, %20 : vector<19x1xi1>
    %22 = arith.andi %21, %15 : vector<19x1xi1>
    %23 = vector.broadcast %11 : i32 to vector<19x1xi32>
    %24 = arith.addi %13, %23 : vector<19x1xi32>
    %25 = arith.select %22, %24, %13 : vector<19x1xi1>, vector<19x1xi32>
    %c4_i32 = arith.constant 4 : i32
    %26 = vector.broadcast %c4_i32 : i32 to vector<19x1xi32>
    %27 = arith.cmpi slt, %25, %26 : vector<19x1xi32>
    %28 = arith.extui %27 : vector<19x1xi1> to vector<19x1xi32>
    %29 = arith.sitofp %28 : vector<19x1xi32> to vector<19x1xf32>
    %30 = vector.broadcast %29 : vector<19x1xf32> to vector<19x32xf32>
    %31 = arith.mulf %8, %30 : vector<19x32xf32>
    %cst_7 = arith.constant dense<0.000000e+00> : vector<32xf32>
    %32 = vector.multi_reduction <add>, %31, %cst_7 [0] : vector<19x32xf32> to vector<32xf32>
    %33 = vector.shape_cast %32 : vector<32xf32> to vector<1x32xf32>
    %cst_8 = arith.constant 6.250000e-02 : f32
    %34 = vector.broadcast %cst_8 : f32 to vector<1x32xf32>
    %35 = arith.mulf %33, %34 : vector<1x32xf32>
    %36 = arith.mulf %31, %8 : vector<19x32xf32>
    %cst_9 = arith.constant dense<0.000000e+00> : vector<32xf32>
    %37 = vector.multi_reduction <add>, %36, %cst_9 [0] : vector<19x32xf32> to vector<32xf32>
    %38 = vector.shape_cast %37 : vector<32xf32> to vector<1x32xf32>
    %cst_10 = arith.constant 6.250000e-02 : f32
    %39 = vector.broadcast %cst_10 : f32 to vector<1x32xf32>
    %40 = arith.mulf %38, %39 : vector<1x32xf32>
    %41 = arith.mulf %35, %35 : vector<1x32xf32>
    %42 = arith.subf %40, %41 : vector<1x32xf32>
    %cst_11 = arith.constant 0.000000e+00 : f32
    %43 = vector.broadcast %cst_11 : f32 to vector<1x32xf32>
    %44 = arith.maximumf %42, %43 : vector<1x32xf32>
    %45 = vector.broadcast %35 : vector<1x32xf32> to vector<19x32xf32>
    %46 = arith.subf %8, %45 : vector<19x32xf32>
    %cst_12 = arith.constant 9.99999974E-6 : f32
    %47 = vector.broadcast %cst_12 : f32 to vector<1x32xf32>
    %48 = arith.addf %44, %47 : vector<1x32xf32>
    %49 = math.rsqrt %48 : vector<1x32xf32>
    %50 = vector.broadcast %49 : vector<1x32xf32> to vector<19x32xf32>
    %51 = arith.mulf %46, %50 : vector<19x32xf32>
    %cst_13 = arith.constant 0.000000e+00 : f32
    %52 = vector.broadcast %cst_13 : f32 to vector<19x32xf32>
    %53 = arith.maximumf %51, %52 : vector<19x32xf32>
    %54 = arith.truncf %53 : vector<19x32xf32> to vector<19x32xbf16>
    %c0_14 = arith.constant 0 : index
    %c0_15 = arith.constant 0 : index
    %c0_16 = arith.constant 0 : index
    %55 = vector.load %arg3[%c0_14, %c0_15, %c0_16] : memref<1x19x32xbf16, #tpu.memory_space<vmem>>, vector<1x19x32xbf16>
    %56 = vector.shape_cast %55 : vector<1x19x32xbf16> to vector<19x32xbf16>
    %57 = vector.shape_cast %54 : vector<19x32xbf16> to vector<1x19x32xbf16>
    tpu.vector_store %arg3[%c0_14, %c0_15, %c0_16], %57 {strides = array<i32>} : memref<1x19x32xbf16, #tpu.memory_space<vmem>>, vector<1x19x32xbf16>,
    return
  }
  func.func @transform_0(%arg0: i32) -> (i32, i32, i32) {
    %c0_i32 = arith.constant 0 : i32
    %c0_i32_0 = arith.constant 0 : i32
    %c0_i32_1 = arith.constant 0 : i32
    return %arg0, %c0_i32, %c0_i32_0 : i32, i32, i32
  }
  func.func @transform_1(%arg0: i32) -> (i32, i32) {
    %c0_i32 = arith.constant 0 : i32
    %c0_i32_0 = arith.constant 0 : i32
    %c0_i32_1 = arith.constant 0 : i32
    return %c0_i32, %c0_i32_0 : i32, i32
  }
  func.func @transform_2(%arg0: i32) -> (i32, i32, i32) {
    %c0_i32 = arith.constant 0 : i32
    %c0_i32_0 = arith.constant 0 : i32
    %c0_i32_1 = arith.constant 0 : i32
    return %arg0, %c0_i32, %c0_i32_0 : i32, i32, i32
  }
}

module attributes {stable_mosaic.version = 11 : i64} {
  func.func @_resnet_block_kernel(%arg0: i32, %arg1: memref<1x36x32xbf16, #tpu.memory_space<vmem>>, %arg2: memref<288x32xbf16, #tpu.memory_space<vmem>>, %arg3: memref<288x32xbf16, #tpu.memory_space<vmem>>, %arg4: memref<1x22x32xbf16, #tpu.memory_space<vmem>>, %arg5: memref<36x32xbf16, #tpu.memory_space<vmem>>) attributes {dimension_semantics = [#tpu.dimension_semantics<parallel>], iteration_bounds = array<i64: 2>, scalar_prefetch = 0 : i64, scratch_operands = 1 : i64, tpu.core_type = #tpu.core_type<tc>, window_params = [{transform_indices = @transform_0, window_bounds = array<i64: 1, 36, 32>}, {pipeline_mode = #tpu.pipeline_mode<synchronous>, transform_indices = @transform_1, window_bounds = array<i64: 288, 32>}, {pipeline_mode = #tpu.pipeline_mode<synchronous>, transform_indices = @transform_2, window_bounds = array<i64: 288, 32>}, {transform_indices = @transform_3, window_bounds = array<i64: 1, 22, 32>}]} {
    %c0 = arith.constant 0 : index
    %c0_0 = arith.constant 0 : index
    %c0_1 = arith.constant 0 : index
    %0 = vector.load %arg1[%c0, %c0_0, %c0_1] : memref<1x36x32xbf16, #tpu.memory_space<vmem>>, vector<1x36x32xbf16>
    %1 = vector.shape_cast %0 : vector<1x36x32xbf16> to vector<36x32xbf16>
    %2 = tpu.iota {dimensions = array<i32: 0>} : vector<22x1xi32>
    %c6_i32 = arith.constant 6 : i32
    %c0_i32 = arith.constant 0 : i32
    %3 = arith.cmpi eq, %c6_i32, %c0_i32 : i32
    %c1_i32 = arith.constant 1 : i32
    %4 = arith.select %3, %c1_i32, %c6_i32 : i32
    %5 = vector.broadcast %4 : i32 to vector<22x1xi32>
    %6 = arith.remsi %2, %5 : vector<22x1xi32>
    %c0_i32_2 = arith.constant 0 : i32
    %7 = vector.broadcast %c0_i32_2 : i32 to vector<22x1xi32>
    %8 = arith.cmpi ne, %6, %7 : vector<22x1xi32>
    %c0_i32_3 = arith.constant 0 : i32
    %9 = vector.broadcast %c0_i32_3 : i32 to vector<22x1xi32>
    %10 = arith.cmpi slt, %6, %9 : vector<22x1xi32>
    %c0_i32_4 = arith.constant 0 : i32
    %11 = arith.cmpi slt, %4, %c0_i32_4 : i32
    %12 = vector.broadcast %11 : i1 to vector<22x1xi1>
    %13 = vector.broadcast %12 : vector<22x1xi1> to vector<22x1xi1>
    %14 = arith.xori %10, %13 : vector<22x1xi1>
    %15 = arith.andi %14, %8 : vector<22x1xi1>
    %16 = vector.broadcast %4 : i32 to vector<22x1xi32>
    %17 = arith.addi %6, %16 : vector<22x1xi32>
    %18 = arith.select %15, %17, %6 : vector<22x1xi1>, vector<22x1xi32>
    %c4_i32 = arith.constant 4 : i32
    %19 = vector.broadcast %c4_i32 : i32 to vector<22x1xi32>
    %20 = arith.cmpi slt, %18, %19 : vector<22x1xi32>
    %21 = arith.extui %20 : vector<22x1xi1> to vector<22x1xi32>
    %22 = arith.sitofp %21 : vector<22x1xi32> to vector<22x1xf32>
    %23 = vector.extract_strided_slice %1 {offsets = [0, 0], sizes = [22, 32], strides = [1, 1]} : vector<36x32xbf16> to vector<22x32xbf16>
    %24 = vector.extract_strided_slice %1 {offsets = [1, 0], sizes = [22, 32], strides = [1, 1]} : vector<36x32xbf16> to vector<22x32xbf16>
    %25 = vector.extract_strided_slice %1 {offsets = [2, 0], sizes = [22, 32], strides = [1, 1]} : vector<36x32xbf16> to vector<22x32xbf16>
    %26 = vector.extract_strided_slice %1 {offsets = [6, 0], sizes = [22, 32], strides = [1, 1]} : vector<36x32xbf16> to vector<22x32xbf16>
    %27 = vector.extract_strided_slice %1 {offsets = [7, 0], sizes = [22, 32], strides = [1, 1]} : vector<36x32xbf16> to vector<22x32xbf16>
    %28 = vector.extract_strided_slice %1 {offsets = [8, 0], sizes = [22, 32], strides = [1, 1]} : vector<36x32xbf16> to vector<22x32xbf16>
    %29 = vector.extract_strided_slice %1 {offsets = [12, 0], sizes = [22, 32], strides = [1, 1]} : vector<36x32xbf16> to vector<22x32xbf16>
    %30 = vector.extract_strided_slice %1 {offsets = [13, 0], sizes = [22, 32], strides = [1, 1]} : vector<36x32xbf16> to vector<22x32xbf16>
    %31 = vector.extract_strided_slice %1 {offsets = [14, 0], sizes = [22, 32], strides = [1, 1]} : vector<36x32xbf16> to vector<22x32xbf16>
    %32 = tpu.concatenate %23, %24, %25, %26, %27, %28, %29, %30, %31 in 1 : vector<22x32xbf16>, vector<22x32xbf16>, vector<22x32xbf16>, vector<22x32xbf16>, vector<22x32xbf16>, vector<22x32xbf16>, vector<22x32xbf16>, vector<22x32xbf16>, vector<22x32xbf16> -> vector<22x288xbf16>
    %c0_5 = arith.constant 0 : index
    %c0_6 = arith.constant 0 : index
    %33 = vector.load %arg2[%c0_5, %c0_6] : memref<288x32xbf16, #tpu.memory_space<vmem>>, vector<288x32xbf16>
    %cst = arith.constant dense<0.000000e+00> : vector<22x32xf32>
    %34 = tpu.matmul %32, %33, %cst {dimension_numbers = #tpu.dot_dimension_numbers<[1], [0], [0], [1], [0, 0, 1, 1], [], []>} : vector<22x288xbf16>, vector<288x32xbf16>, vector<22x32xf32> -> vector<22x32xf32>
    %35 = vector.broadcast %22 : vector<22x1xf32> to vector<22x32xf32>
    %36 = arith.mulf %34, %35 : vector<22x32xf32>
    %cst_7 = arith.constant dense<0.000000e+00> : vector<32xf32>
    %37 = vector.multi_reduction <add>, %36, %cst_7 [0] : vector<22x32xf32> to vector<32xf32>
    %38 = vector.shape_cast %37 : vector<32xf32> to vector<1x32xf32>
    %cst_8 = arith.constant 6.250000e-02 : f32
    %39 = vector.broadcast %cst_8 : f32 to vector<1x32xf32>
    %40 = arith.mulf %38, %39 : vector<1x32xf32>
    %41 = arith.mulf %36, %34 : vector<22x32xf32>
    %cst_9 = arith.constant dense<0.000000e+00> : vector<32xf32>
    %42 = vector.multi_reduction <add>, %41, %cst_9 [0] : vector<22x32xf32> to vector<32xf32>
    %43 = vector.shape_cast %42 : vector<32xf32> to vector<1x32xf32>
    %cst_10 = arith.constant 6.250000e-02 : f32
    %44 = vector.broadcast %cst_10 : f32 to vector<1x32xf32>
    %45 = arith.mulf %43, %44 : vector<1x32xf32>
    %46 = arith.mulf %40, %40 : vector<1x32xf32>
    %47 = arith.subf %45, %46 : vector<1x32xf32>
    %cst_11 = arith.constant 0.000000e+00 : f32
    %48 = vector.broadcast %cst_11 : f32 to vector<1x32xf32>
    %49 = arith.maximumf %47, %48 : vector<1x32xf32>
    %50 = vector.broadcast %40 : vector<1x32xf32> to vector<22x32xf32>
    %51 = arith.subf %34, %50 : vector<22x32xf32>
    %cst_12 = arith.constant 9.99999974E-6 : f32
    %52 = vector.broadcast %cst_12 : f32 to vector<1x32xf32>
    %53 = arith.addf %49, %52 : vector<1x32xf32>
    %54 = math.rsqrt %53 : vector<1x32xf32>
    %55 = vector.broadcast %54 : vector<1x32xf32> to vector<22x32xf32>
    %56 = arith.mulf %51, %55 : vector<22x32xf32>
    %cst_13 = arith.constant 0.000000e+00 : f32
    %57 = vector.broadcast %cst_13 : f32 to vector<22x32xf32>
    %58 = arith.maximumf %56, %57 : vector<22x32xf32>
    %59 = arith.truncf %58 : vector<22x32xf32> to vector<22x32xbf16>
    %c7 = arith.constant 7 : index
    %c0_14 = arith.constant 0 : index
    %60 = vector.load %arg5[%c7, %c0_14] : memref<36x32xbf16, #tpu.memory_space<vmem>>, vector<22x32xbf16>
    tpu.vector_store %arg5[%c7, %c0_14], %59 {strides = array<i32>} : memref<36x32xbf16, #tpu.memory_space<vmem>>, vector<22x32xbf16>,
    %c8 = arith.constant 8 : index
    %c0_15 = arith.constant 0 : index
    %61 = vector.load %arg5[%c8, %c0_15] : memref<36x32xbf16, #tpu.memory_space<vmem>>, vector<1x32xbf16>
    %c6 = arith.constant 6 : index
    %c0_16 = arith.constant 0 : index
    %62 = vector.load %arg5[%c6, %c0_16] : memref<36x32xbf16, #tpu.memory_space<vmem>>, vector<1x32xbf16>
    tpu.vector_store %arg5[%c6, %c0_16], %61 {strides = array<i32>} : memref<36x32xbf16, #tpu.memory_space<vmem>>, vector<1x32xbf16>,
    %c9 = arith.constant 9 : index
    %c0_17 = arith.constant 0 : index
    %63 = vector.load %arg5[%c9, %c0_17] : memref<36x32xbf16, #tpu.memory_space<vmem>>, vector<1x32xbf16>
    %c11 = arith.constant 11 : index
    %c0_18 = arith.constant 0 : index
    %64 = vector.load %arg5[%c11, %c0_18] : memref<36x32xbf16, #tpu.memory_space<vmem>>, vector<1x32xbf16>
    tpu.vector_store %arg5[%c11, %c0_18], %63 {strides = array<i32>} : memref<36x32xbf16, #tpu.memory_space<vmem>>, vector<1x32xbf16>,
    %c14 = arith.constant 14 : index
    %c0_19 = arith.constant 0 : index
    %65 = vector.load %arg5[%c14, %c0_19] : memref<36x32xbf16, #tpu.memory_space<vmem>>, vector<1x32xbf16>
    %c12 = arith.constant 12 : index
    %c0_20 = arith.constant 0 : index
    %66 = vector.load %arg5[%c12, %c0_20] : memref<36x32xbf16, #tpu.memory_space<vmem>>, vector<1x32xbf16>
    tpu.vector_store %arg5[%c12, %c0_20], %65 {strides = array<i32>} : memref<36x32xbf16, #tpu.memory_space<vmem>>, vector<1x32xbf16>,
    %c15 = arith.constant 15 : index
    %c0_21 = arith.constant 0 : index
    %67 = vector.load %arg5[%c15, %c0_21] : memref<36x32xbf16, #tpu.memory_space<vmem>>, vector<1x32xbf16>
    %c17 = arith.constant 17 : index
    %c0_22 = arith.constant 0 : index
    %68 = vector.load %arg5[%c17, %c0_22] : memref<36x32xbf16, #tpu.memory_space<vmem>>, vector<1x32xbf16>
    tpu.vector_store %arg5[%c17, %c0_22], %67 {strides = array<i32>} : memref<36x32xbf16, #tpu.memory_space<vmem>>, vector<1x32xbf16>,
    %c20 = arith.constant 20 : index
    %c0_23 = arith.constant 0 : index
    %69 = vector.load %arg5[%c20, %c0_23] : memref<36x32xbf16, #tpu.memory_space<vmem>>, vector<1x32xbf16>
    %c18 = arith.constant 18 : index
    %c0_24 = arith.constant 0 : index
    %70 = vector.load %arg5[%c18, %c0_24] : memref<36x32xbf16, #tpu.memory_space<vmem>>, vector<1x32xbf16>
    tpu.vector_store %arg5[%c18, %c0_24], %69 {strides = array<i32>} : memref<36x32xbf16, #tpu.memory_space<vmem>>, vector<1x32xbf16>,
    %c21 = arith.constant 21 : index
    %c0_25 = arith.constant 0 : index
    %71 = vector.load %arg5[%c21, %c0_25] : memref<36x32xbf16, #tpu.memory_space<vmem>>, vector<1x32xbf16>
    %c23 = arith.constant 23 : index
    %c0_26 = arith.constant 0 : index
    %72 = vector.load %arg5[%c23, %c0_26] : memref<36x32xbf16, #tpu.memory_space<vmem>>, vector<1x32xbf16>
    tpu.vector_store %arg5[%c23, %c0_26], %71 {strides = array<i32>} : memref<36x32xbf16, #tpu.memory_space<vmem>>, vector<1x32xbf16>,
    %c26 = arith.constant 26 : index
    %c0_27 = arith.constant 0 : index
    %73 = vector.load %arg5[%c26, %c0_27] : memref<36x32xbf16, #tpu.memory_space<vmem>>, vector<1x32xbf16>
    %c24 = arith.constant 24 : index
    %c0_28 = arith.constant 0 : index
    %74 = vector.load %arg5[%c24, %c0_28] : memref<36x32xbf16, #tpu.memory_space<vmem>>, vector<1x32xbf16>
    tpu.vector_store %arg5[%c24, %c0_28], %73 {strides = array<i32>} : memref<36x32xbf16, #tpu.memory_space<vmem>>, vector<1x32xbf16>,
    %c27 = arith.constant 27 : index
    %c0_29 = arith.constant 0 : index
    %75 = vector.load %arg5[%c27, %c0_29] : memref<36x32xbf16, #tpu.memory_space<vmem>>, vector<1x32xbf16>
    %c29 = arith.constant 29 : index
    %c0_30 = arith.constant 0 : index
    %76 = vector.load %arg5[%c29, %c0_30] : memref<36x32xbf16, #tpu.memory_space<vmem>>, vector<1x32xbf16>
    tpu.vector_store %arg5[%c29, %c0_30], %75 {strides = array<i32>} : memref<36x32xbf16, #tpu.memory_space<vmem>>, vector<1x32xbf16>,
    %c12_31 = arith.constant 12 : index
    %c0_32 = arith.constant 0 : index
    %77 = vector.load %arg5[%c12_31, %c0_32] : memref<36x32xbf16, #tpu.memory_space<vmem>>, vector<6x32xbf16>
    %c0_33 = arith.constant 0 : index
    %c0_34 = arith.constant 0 : index
    %78 = vector.load %arg5[%c0_33, %c0_34] : memref<36x32xbf16, #tpu.memory_space<vmem>>, vector<6x32xbf16>
    tpu.vector_store %arg5[%c0_33, %c0_34], %77 {strides = array<i32>} : memref<36x32xbf16, #tpu.memory_space<vmem>>, vector<6x32xbf16>,
    %c18_35 = arith.constant 18 : index
    %c0_36 = arith.constant 0 : index
    %79 = vector.load %arg5[%c18_35, %c0_36] : memref<36x32xbf16, #tpu.memory_space<vmem>>, vector<6x32xbf16>
    %c30 = arith.constant 30 : index
    %c0_37 = arith.constant 0 : index
    %80 = vector.load %arg5[%c30, %c0_37] : memref<36x32xbf16, #tpu.memory_space<vmem>>, vector<6x32xbf16>
    tpu.vector_store %arg5[%c30, %c0_37], %79 {strides = array<i32>} : memref<36x32xbf16, #tpu.memory_space<vmem>>, vector<6x32xbf16>,
    %c0_38 = arith.constant 0 : index
    %c0_39 = arith.constant 0 : index
    %81 = vector.load %arg5[%c0_38, %c0_39] : memref<36x32xbf16, #tpu.memory_space<vmem>>, vector<22x32xbf16>
    %c1 = arith.constant 1 : index
    %c0_40 = arith.constant 0 : index
    %82 = vector.load %arg5[%c1, %c0_40] : memref<36x32xbf16, #tpu.memory_space<vmem>>, vector<22x32xbf16>
    %c2 = arith.constant 2 : index
    %c0_41 = arith.constant 0 : index
    %83 = vector.load %arg5[%c2, %c0_41] : memref<36x32xbf16, #tpu.memory_space<vmem>>, vector<22x32xbf16>
    %c6_42 = arith.constant 6 : index
    %c0_43 = arith.constant 0 : index
    %84 = vector.load %arg5[%c6_42, %c0_43] : memref<36x32xbf16, #tpu.memory_space<vmem>>, vector<22x32xbf16>
    %c7_44 = arith.constant 7 : index
    %c0_45 = arith.constant 0 : index
    %85 = vector.load %arg5[%c7_44, %c0_45] : memref<36x32xbf16, #tpu.memory_space<vmem>>, vector<22x32xbf16>
    %c8_46 = arith.constant 8 : index
    %c0_47 = arith.constant 0 : index
    %86 = vector.load %arg5[%c8_46, %c0_47] : memref<36x32xbf16, #tpu.memory_space<vmem>>, vector<22x32xbf16>
    %c12_48 = arith.constant 12 : index
    %c0_49 = arith.constant 0 : index
    %87 = vector.load %arg5[%c12_48, %c0_49] : memref<36x32xbf16, #tpu.memory_space<vmem>>, vector<22x32xbf16>
    %c13 = arith.constant 13 : index
    %c0_50 = arith.constant 0 : index
    %88 = vector.load %arg5[%c13, %c0_50] : memref<36x32xbf16, #tpu.memory_space<vmem>>, vector<22x32xbf16>
    %c14_51 = arith.constant 14 : index
    %c0_52 = arith.constant 0 : index
    %89 = vector.load %arg5[%c14_51, %c0_52] : memref<36x32xbf16, #tpu.memory_space<vmem>>, vector<22x32xbf16>
    %90 = tpu.concatenate %81, %82, %83, %84, %85, %86, %87, %88, %89 in 1 : vector<22x32xbf16>, vector<22x32xbf16>, vector<22x32xbf16>, vector<22x32xbf16>, vector<22x32xbf16>, vector<22x32xbf16>, vector<22x32xbf16>, vector<22x32xbf16>, vector<22x32xbf16> -> vector<22x288xbf16>
    %c0_53 = arith.constant 0 : index
    %c0_54 = arith.constant 0 : index
    %91 = vector.load %arg3[%c0_53, %c0_54] : memref<288x32xbf16, #tpu.memory_space<vmem>>, vector<288x32xbf16>
    %cst_55 = arith.constant dense<0.000000e+00> : vector<22x32xf32>
    %92 = tpu.matmul %90, %91, %cst_55 {dimension_numbers = #tpu.dot_dimension_numbers<[1], [0], [0], [1], [0, 0, 1, 1], [], []>} : vector<22x288xbf16>, vector<288x32xbf16>, vector<22x32xf32> -> vector<22x32xf32>
    %93 = vector.broadcast %22 : vector<22x1xf32> to vector<22x32xf32>
    %94 = arith.mulf %92, %93 : vector<22x32xf32>
    %cst_56 = arith.constant dense<0.000000e+00> : vector<32xf32>
    %95 = vector.multi_reduction <add>, %94, %cst_56 [0] : vector<22x32xf32> to vector<32xf32>
    %96 = vector.shape_cast %95 : vector<32xf32> to vector<1x32xf32>
    %cst_57 = arith.constant 6.250000e-02 : f32
    %97 = vector.broadcast %cst_57 : f32 to vector<1x32xf32>
    %98 = arith.mulf %96, %97 : vector<1x32xf32>
    %99 = arith.mulf %94, %92 : vector<22x32xf32>
    %cst_58 = arith.constant dense<0.000000e+00> : vector<32xf32>
    %100 = vector.multi_reduction <add>, %99, %cst_58 [0] : vector<22x32xf32> to vector<32xf32>
    %101 = vector.shape_cast %100 : vector<32xf32> to vector<1x32xf32>
    %cst_59 = arith.constant 6.250000e-02 : f32
    %102 = vector.broadcast %cst_59 : f32 to vector<1x32xf32>
    %103 = arith.mulf %101, %102 : vector<1x32xf32>
    %104 = arith.mulf %98, %98 : vector<1x32xf32>
    %105 = arith.subf %103, %104 : vector<1x32xf32>
    %cst_60 = arith.constant 0.000000e+00 : f32
    %106 = vector.broadcast %cst_60 : f32 to vector<1x32xf32>
    %107 = arith.maximumf %105, %106 : vector<1x32xf32>
    %108 = vector.broadcast %98 : vector<1x32xf32> to vector<22x32xf32>
    %109 = arith.subf %92, %108 : vector<22x32xf32>
    %cst_61 = arith.constant 9.99999974E-6 : f32
    %110 = vector.broadcast %cst_61 : f32 to vector<1x32xf32>
    %111 = arith.addf %107, %110 : vector<1x32xf32>
    %112 = math.rsqrt %111 : vector<1x32xf32>
    %113 = vector.broadcast %112 : vector<1x32xf32> to vector<22x32xf32>
    %114 = arith.mulf %109, %113 : vector<22x32xf32>
    %115 = vector.extract_strided_slice %1 {offsets = [7, 0], sizes = [22, 32], strides = [1, 1]} : vector<36x32xbf16> to vector<22x32xbf16>
    %116 = arith.extf %115 : vector<22x32xbf16> to vector<22x32xf32>
    %117 = arith.addf %114, %116 : vector<22x32xf32>
    %118 = arith.truncf %117 : vector<22x32xf32> to vector<22x32xbf16>
    %c0_62 = arith.constant 0 : index
    %c0_63 = arith.constant 0 : index
    %c0_64 = arith.constant 0 : index
    %119 = vector.load %arg4[%c0_62, %c0_63, %c0_64] : memref<1x22x32xbf16, #tpu.memory_space<vmem>>, vector<1x22x32xbf16>
    %120 = vector.shape_cast %119 : vector<1x22x32xbf16> to vector<22x32xbf16>
    %121 = vector.shape_cast %118 : vector<22x32xbf16> to vector<1x22x32xbf16>
    tpu.vector_store %arg4[%c0_62, %c0_63, %c0_64], %121 {strides = array<i32>} : memref<1x22x32xbf16, #tpu.memory_space<vmem>>, vector<1x22x32xbf16>,
    return
  }
  func.func @transform_0(%arg0: i32) -> (i32, i32, i32) {
    %c0_i32 = arith.constant 0 : i32
    %c0_i32_0 = arith.constant 0 : i32
    %c0_i32_1 = arith.constant 0 : i32
    return %arg0, %c0_i32, %c0_i32_0 : i32, i32, i32
  }
  func.func @transform_1(%arg0: i32) -> (i32, i32) {
    %c0_i32 = arith.constant 0 : i32
    %c0_i32_0 = arith.constant 0 : i32
    %c0_i32_1 = arith.constant 0 : i32
    return %c0_i32, %c0_i32_0 : i32, i32
  }
  func.func @transform_2(%arg0: i32) -> (i32, i32) {
    %c0_i32 = arith.constant 0 : i32
    %c0_i32_0 = arith.constant 0 : i32
    %c0_i32_1 = arith.constant 0 : i32
    return %c0_i32, %c0_i32_0 : i32, i32
  }
  func.func @transform_3(%arg0: i32) -> (i32, i32, i32) {
    %c0_i32 = arith.constant 0 : i32
    %c0_i32_0 = arith.constant 0 : i32
    %c0_i32_1 = arith.constant 0 : i32
    return %arg0, %c0_i32, %c0_i32_0 : i32, i32, i32
  }
}

module attributes {stable_mosaic.version = 11 : i64} {
  func.func @_resnet_block_kernel(%arg0: i32, %arg1: memref<1x36x32xbf16, #tpu.memory_space<vmem>>, %arg2: memref<288x32xbf16, #tpu.memory_space<vmem>>, %arg3: memref<288x32xbf16, #tpu.memory_space<vmem>>, %arg4: memref<1x22x32xf32, #tpu.memory_space<vmem>>, %arg5: memref<36x32xbf16, #tpu.memory_space<vmem>>) attributes {dimension_semantics = [#tpu.dimension_semantics<parallel>], iteration_bounds = array<i64: 2>, scalar_prefetch = 0 : i64, scratch_operands = 1 : i64, tpu.core_type = #tpu.core_type<tc>, window_params = [{transform_indices = @transform_0, window_bounds = array<i64: 1, 36, 32>}, {pipeline_mode = #tpu.pipeline_mode<synchronous>, transform_indices = @transform_1, window_bounds = array<i64: 288, 32>}, {pipeline_mode = #tpu.pipeline_mode<synchronous>, transform_indices = @transform_2, window_bounds = array<i64: 288, 32>}, {transform_indices = @transform_3, window_bounds = array<i64: 1, 22, 32>}]} {
    %c0 = arith.constant 0 : index
    %c0_0 = arith.constant 0 : index
    %c0_1 = arith.constant 0 : index
    %0 = vector.load %arg1[%c0, %c0_0, %c0_1] : memref<1x36x32xbf16, #tpu.memory_space<vmem>>, vector<1x36x32xbf16>
    %1 = vector.shape_cast %0 : vector<1x36x32xbf16> to vector<36x32xbf16>
    %2 = tpu.iota {dimensions = array<i32: 0>} : vector<22x1xi32>
    %c6_i32 = arith.constant 6 : i32
    %c0_i32 = arith.constant 0 : i32
    %3 = arith.cmpi eq, %c6_i32, %c0_i32 : i32
    %c1_i32 = arith.constant 1 : i32
    %4 = arith.select %3, %c1_i32, %c6_i32 : i32
    %5 = vector.broadcast %4 : i32 to vector<22x1xi32>
    %6 = arith.remsi %2, %5 : vector<22x1xi32>
    %c0_i32_2 = arith.constant 0 : i32
    %7 = vector.broadcast %c0_i32_2 : i32 to vector<22x1xi32>
    %8 = arith.cmpi ne, %6, %7 : vector<22x1xi32>
    %c0_i32_3 = arith.constant 0 : i32
    %9 = vector.broadcast %c0_i32_3 : i32 to vector<22x1xi32>
    %10 = arith.cmpi slt, %6, %9 : vector<22x1xi32>
    %c0_i32_4 = arith.constant 0 : i32
    %11 = arith.cmpi slt, %4, %c0_i32_4 : i32
    %12 = vector.broadcast %11 : i1 to vector<22x1xi1>
    %13 = vector.broadcast %12 : vector<22x1xi1> to vector<22x1xi1>
    %14 = arith.xori %10, %13 : vector<22x1xi1>
    %15 = arith.andi %14, %8 : vector<22x1xi1>
    %16 = vector.broadcast %4 : i32 to vector<22x1xi32>
    %17 = arith.addi %6, %16 : vector<22x1xi32>
    %18 = arith.select %15, %17, %6 : vector<22x1xi1>, vector<22x1xi32>
    %c4_i32 = arith.constant 4 : i32
    %19 = vector.broadcast %c4_i32 : i32 to vector<22x1xi32>
    %20 = arith.cmpi slt, %18, %19 : vector<22x1xi32>
    %21 = arith.extui %20 : vector<22x1xi1> to vector<22x1xi32>
    %22 = arith.sitofp %21 : vector<22x1xi32> to vector<22x1xf32>
    %23 = vector.extract_strided_slice %1 {offsets = [0, 0], sizes = [22, 32], strides = [1, 1]} : vector<36x32xbf16> to vector<22x32xbf16>
    %24 = vector.extract_strided_slice %1 {offsets = [1, 0], sizes = [22, 32], strides = [1, 1]} : vector<36x32xbf16> to vector<22x32xbf16>
    %25 = vector.extract_strided_slice %1 {offsets = [2, 0], sizes = [22, 32], strides = [1, 1]} : vector<36x32xbf16> to vector<22x32xbf16>
    %26 = vector.extract_strided_slice %1 {offsets = [6, 0], sizes = [22, 32], strides = [1, 1]} : vector<36x32xbf16> to vector<22x32xbf16>
    %27 = vector.extract_strided_slice %1 {offsets = [7, 0], sizes = [22, 32], strides = [1, 1]} : vector<36x32xbf16> to vector<22x32xbf16>
    %28 = vector.extract_strided_slice %1 {offsets = [8, 0], sizes = [22, 32], strides = [1, 1]} : vector<36x32xbf16> to vector<22x32xbf16>
    %29 = vector.extract_strided_slice %1 {offsets = [12, 0], sizes = [22, 32], strides = [1, 1]} : vector<36x32xbf16> to vector<22x32xbf16>
    %30 = vector.extract_strided_slice %1 {offsets = [13, 0], sizes = [22, 32], strides = [1, 1]} : vector<36x32xbf16> to vector<22x32xbf16>
    %31 = vector.extract_strided_slice %1 {offsets = [14, 0], sizes = [22, 32], strides = [1, 1]} : vector<36x32xbf16> to vector<22x32xbf16>
    %32 = tpu.concatenate %23, %24, %25, %26, %27, %28, %29, %30, %31 in 1 : vector<22x32xbf16>, vector<22x32xbf16>, vector<22x32xbf16>, vector<22x32xbf16>, vector<22x32xbf16>, vector<22x32xbf16>, vector<22x32xbf16>, vector<22x32xbf16>, vector<22x32xbf16> -> vector<22x288xbf16>
    %c0_5 = arith.constant 0 : index
    %c0_6 = arith.constant 0 : index
    %33 = vector.load %arg2[%c0_5, %c0_6] : memref<288x32xbf16, #tpu.memory_space<vmem>>, vector<288x32xbf16>
    %cst = arith.constant dense<0.000000e+00> : vector<22x32xf32>
    %34 = tpu.matmul %32, %33, %cst {dimension_numbers = #tpu.dot_dimension_numbers<[1], [0], [0], [1], [0, 0, 1, 1], [], []>} : vector<22x288xbf16>, vector<288x32xbf16>, vector<22x32xf32> -> vector<22x32xf32>
    %35 = vector.broadcast %22 : vector<22x1xf32> to vector<22x32xf32>
    %36 = arith.mulf %34, %35 : vector<22x32xf32>
    %cst_7 = arith.constant dense<0.000000e+00> : vector<32xf32>
    %37 = vector.multi_reduction <add>, %36, %cst_7 [0] : vector<22x32xf32> to vector<32xf32>
    %38 = vector.shape_cast %37 : vector<32xf32> to vector<1x32xf32>
    %cst_8 = arith.constant 6.250000e-02 : f32
    %39 = vector.broadcast %cst_8 : f32 to vector<1x32xf32>
    %40 = arith.mulf %38, %39 : vector<1x32xf32>
    %41 = arith.mulf %36, %34 : vector<22x32xf32>
    %cst_9 = arith.constant dense<0.000000e+00> : vector<32xf32>
    %42 = vector.multi_reduction <add>, %41, %cst_9 [0] : vector<22x32xf32> to vector<32xf32>
    %43 = vector.shape_cast %42 : vector<32xf32> to vector<1x32xf32>
    %cst_10 = arith.constant 6.250000e-02 : f32
    %44 = vector.broadcast %cst_10 : f32 to vector<1x32xf32>
    %45 = arith.mulf %43, %44 : vector<1x32xf32>
    %46 = arith.mulf %40, %40 : vector<1x32xf32>
    %47 = arith.subf %45, %46 : vector<1x32xf32>
    %cst_11 = arith.constant 0.000000e+00 : f32
    %48 = vector.broadcast %cst_11 : f32 to vector<1x32xf32>
    %49 = arith.maximumf %47, %48 : vector<1x32xf32>
    %50 = vector.broadcast %40 : vector<1x32xf32> to vector<22x32xf32>
    %51 = arith.subf %34, %50 : vector<22x32xf32>
    %cst_12 = arith.constant 9.99999974E-6 : f32
    %52 = vector.broadcast %cst_12 : f32 to vector<1x32xf32>
    %53 = arith.addf %49, %52 : vector<1x32xf32>
    %54 = math.rsqrt %53 : vector<1x32xf32>
    %55 = vector.broadcast %54 : vector<1x32xf32> to vector<22x32xf32>
    %56 = arith.mulf %51, %55 : vector<22x32xf32>
    %cst_13 = arith.constant 0.000000e+00 : f32
    %57 = vector.broadcast %cst_13 : f32 to vector<22x32xf32>
    %58 = arith.maximumf %56, %57 : vector<22x32xf32>
    %59 = arith.truncf %58 : vector<22x32xf32> to vector<22x32xbf16>
    %c7 = arith.constant 7 : index
    %c0_14 = arith.constant 0 : index
    %60 = vector.load %arg5[%c7, %c0_14] : memref<36x32xbf16, #tpu.memory_space<vmem>>, vector<22x32xbf16>
    tpu.vector_store %arg5[%c7, %c0_14], %59 {strides = array<i32>} : memref<36x32xbf16, #tpu.memory_space<vmem>>, vector<22x32xbf16>,
    %c8 = arith.constant 8 : index
    %c0_15 = arith.constant 0 : index
    %61 = vector.load %arg5[%c8, %c0_15] : memref<36x32xbf16, #tpu.memory_space<vmem>>, vector<1x32xbf16>
    %c6 = arith.constant 6 : index
    %c0_16 = arith.constant 0 : index
    %62 = vector.load %arg5[%c6, %c0_16] : memref<36x32xbf16, #tpu.memory_space<vmem>>, vector<1x32xbf16>
    tpu.vector_store %arg5[%c6, %c0_16], %61 {strides = array<i32>} : memref<36x32xbf16, #tpu.memory_space<vmem>>, vector<1x32xbf16>,
    %c9 = arith.constant 9 : index
    %c0_17 = arith.constant 0 : index
    %63 = vector.load %arg5[%c9, %c0_17] : memref<36x32xbf16, #tpu.memory_space<vmem>>, vector<1x32xbf16>
    %c11 = arith.constant 11 : index
    %c0_18 = arith.constant 0 : index
    %64 = vector.load %arg5[%c11, %c0_18] : memref<36x32xbf16, #tpu.memory_space<vmem>>, vector<1x32xbf16>
    tpu.vector_store %arg5[%c11, %c0_18], %63 {strides = array<i32>} : memref<36x32xbf16, #tpu.memory_space<vmem>>, vector<1x32xbf16>,
    %c14 = arith.constant 14 : index
    %c0_19 = arith.constant 0 : index
    %65 = vector.load %arg5[%c14, %c0_19] : memref<36x32xbf16, #tpu.memory_space<vmem>>, vector<1x32xbf16>
    %c12 = arith.constant 12 : index
    %c0_20 = arith.constant 0 : index
    %66 = vector.load %arg5[%c12, %c0_20] : memref<36x32xbf16, #tpu.memory_space<vmem>>, vector<1x32xbf16>
    tpu.vector_store %arg5[%c12, %c0_20], %65 {strides = array<i32>} : memref<36x32xbf16, #tpu.memory_space<vmem>>, vector<1x32xbf16>,
    %c15 = arith.constant 15 : index
    %c0_21 = arith.constant 0 : index
    %67 = vector.load %arg5[%c15, %c0_21] : memref<36x32xbf16, #tpu.memory_space<vmem>>, vector<1x32xbf16>
    %c17 = arith.constant 17 : index
    %c0_22 = arith.constant 0 : index
    %68 = vector.load %arg5[%c17, %c0_22] : memref<36x32xbf16, #tpu.memory_space<vmem>>, vector<1x32xbf16>
    tpu.vector_store %arg5[%c17, %c0_22], %67 {strides = array<i32>} : memref<36x32xbf16, #tpu.memory_space<vmem>>, vector<1x32xbf16>,
    %c20 = arith.constant 20 : index
    %c0_23 = arith.constant 0 : index
    %69 = vector.load %arg5[%c20, %c0_23] : memref<36x32xbf16, #tpu.memory_space<vmem>>, vector<1x32xbf16>
    %c18 = arith.constant 18 : index
    %c0_24 = arith.constant 0 : index
    %70 = vector.load %arg5[%c18, %c0_24] : memref<36x32xbf16, #tpu.memory_space<vmem>>, vector<1x32xbf16>
    tpu.vector_store %arg5[%c18, %c0_24], %69 {strides = array<i32>} : memref<36x32xbf16, #tpu.memory_space<vmem>>, vector<1x32xbf16>,
    %c21 = arith.constant 21 : index
    %c0_25 = arith.constant 0 : index
    %71 = vector.load %arg5[%c21, %c0_25] : memref<36x32xbf16, #tpu.memory_space<vmem>>, vector<1x32xbf16>
    %c23 = arith.constant 23 : index
    %c0_26 = arith.constant 0 : index
    %72 = vector.load %arg5[%c23, %c0_26] : memref<36x32xbf16, #tpu.memory_space<vmem>>, vector<1x32xbf16>
    tpu.vector_store %arg5[%c23, %c0_26], %71 {strides = array<i32>} : memref<36x32xbf16, #tpu.memory_space<vmem>>, vector<1x32xbf16>,
    %c26 = arith.constant 26 : index
    %c0_27 = arith.constant 0 : index
    %73 = vector.load %arg5[%c26, %c0_27] : memref<36x32xbf16, #tpu.memory_space<vmem>>, vector<1x32xbf16>
    %c24 = arith.constant 24 : index
    %c0_28 = arith.constant 0 : index
    %74 = vector.load %arg5[%c24, %c0_28] : memref<36x32xbf16, #tpu.memory_space<vmem>>, vector<1x32xbf16>
    tpu.vector_store %arg5[%c24, %c0_28], %73 {strides = array<i32>} : memref<36x32xbf16, #tpu.memory_space<vmem>>, vector<1x32xbf16>,
    %c27 = arith.constant 27 : index
    %c0_29 = arith.constant 0 : index
    %75 = vector.load %arg5[%c27, %c0_29] : memref<36x32xbf16, #tpu.memory_space<vmem>>, vector<1x32xbf16>
    %c29 = arith.constant 29 : index
    %c0_30 = arith.constant 0 : index
    %76 = vector.load %arg5[%c29, %c0_30] : memref<36x32xbf16, #tpu.memory_space<vmem>>, vector<1x32xbf16>
    tpu.vector_store %arg5[%c29, %c0_30], %75 {strides = array<i32>} : memref<36x32xbf16, #tpu.memory_space<vmem>>, vector<1x32xbf16>,
    %c12_31 = arith.constant 12 : index
    %c0_32 = arith.constant 0 : index
    %77 = vector.load %arg5[%c12_31, %c0_32] : memref<36x32xbf16, #tpu.memory_space<vmem>>, vector<6x32xbf16>
    %c0_33 = arith.constant 0 : index
    %c0_34 = arith.constant 0 : index
    %78 = vector.load %arg5[%c0_33, %c0_34] : memref<36x32xbf16, #tpu.memory_space<vmem>>, vector<6x32xbf16>
    tpu.vector_store %arg5[%c0_33, %c0_34], %77 {strides = array<i32>} : memref<36x32xbf16, #tpu.memory_space<vmem>>, vector<6x32xbf16>,
    %c18_35 = arith.constant 18 : index
    %c0_36 = arith.constant 0 : index
    %79 = vector.load %arg5[%c18_35, %c0_36] : memref<36x32xbf16, #tpu.memory_space<vmem>>, vector<6x32xbf16>
    %c30 = arith.constant 30 : index
    %c0_37 = arith.constant 0 : index
    %80 = vector.load %arg5[%c30, %c0_37] : memref<36x32xbf16, #tpu.memory_space<vmem>>, vector<6x32xbf16>
    tpu.vector_store %arg5[%c30, %c0_37], %79 {strides = array<i32>} : memref<36x32xbf16, #tpu.memory_space<vmem>>, vector<6x32xbf16>,
    %c0_38 = arith.constant 0 : index
    %c0_39 = arith.constant 0 : index
    %81 = vector.load %arg5[%c0_38, %c0_39] : memref<36x32xbf16, #tpu.memory_space<vmem>>, vector<22x32xbf16>
    %c1 = arith.constant 1 : index
    %c0_40 = arith.constant 0 : index
    %82 = vector.load %arg5[%c1, %c0_40] : memref<36x32xbf16, #tpu.memory_space<vmem>>, vector<22x32xbf16>
    %c2 = arith.constant 2 : index
    %c0_41 = arith.constant 0 : index
    %83 = vector.load %arg5[%c2, %c0_41] : memref<36x32xbf16, #tpu.memory_space<vmem>>, vector<22x32xbf16>
    %c6_42 = arith.constant 6 : index
    %c0_43 = arith.constant 0 : index
    %84 = vector.load %arg5[%c6_42, %c0_43] : memref<36x32xbf16, #tpu.memory_space<vmem>>, vector<22x32xbf16>
    %c7_44 = arith.constant 7 : index
    %c0_45 = arith.constant 0 : index
    %85 = vector.load %arg5[%c7_44, %c0_45] : memref<36x32xbf16, #tpu.memory_space<vmem>>, vector<22x32xbf16>
    %c8_46 = arith.constant 8 : index
    %c0_47 = arith.constant 0 : index
    %86 = vector.load %arg5[%c8_46, %c0_47] : memref<36x32xbf16, #tpu.memory_space<vmem>>, vector<22x32xbf16>
    %c12_48 = arith.constant 12 : index
    %c0_49 = arith.constant 0 : index
    %87 = vector.load %arg5[%c12_48, %c0_49] : memref<36x32xbf16, #tpu.memory_space<vmem>>, vector<22x32xbf16>
    %c13 = arith.constant 13 : index
    %c0_50 = arith.constant 0 : index
    %88 = vector.load %arg5[%c13, %c0_50] : memref<36x32xbf16, #tpu.memory_space<vmem>>, vector<22x32xbf16>
    %c14_51 = arith.constant 14 : index
    %c0_52 = arith.constant 0 : index
    %89 = vector.load %arg5[%c14_51, %c0_52] : memref<36x32xbf16, #tpu.memory_space<vmem>>, vector<22x32xbf16>
    %90 = tpu.concatenate %81, %82, %83, %84, %85, %86, %87, %88, %89 in 1 : vector<22x32xbf16>, vector<22x32xbf16>, vector<22x32xbf16>, vector<22x32xbf16>, vector<22x32xbf16>, vector<22x32xbf16>, vector<22x32xbf16>, vector<22x32xbf16>, vector<22x32xbf16> -> vector<22x288xbf16>
    %c0_53 = arith.constant 0 : index
    %c0_54 = arith.constant 0 : index
    %91 = vector.load %arg3[%c0_53, %c0_54] : memref<288x32xbf16, #tpu.memory_space<vmem>>, vector<288x32xbf16>
    %cst_55 = arith.constant dense<0.000000e+00> : vector<22x32xf32>
    %92 = tpu.matmul %90, %91, %cst_55 {dimension_numbers = #tpu.dot_dimension_numbers<[1], [0], [0], [1], [0, 0, 1, 1], [], []>} : vector<22x288xbf16>, vector<288x32xbf16>, vector<22x32xf32> -> vector<22x32xf32>
    %93 = vector.broadcast %22 : vector<22x1xf32> to vector<22x32xf32>
    %94 = arith.mulf %92, %93 : vector<22x32xf32>
    %cst_56 = arith.constant dense<0.000000e+00> : vector<32xf32>
    %95 = vector.multi_reduction <add>, %94, %cst_56 [0] : vector<22x32xf32> to vector<32xf32>
    %96 = vector.shape_cast %95 : vector<32xf32> to vector<1x32xf32>
    %cst_57 = arith.constant 6.250000e-02 : f32
    %97 = vector.broadcast %cst_57 : f32 to vector<1x32xf32>
    %98 = arith.mulf %96, %97 : vector<1x32xf32>
    %99 = arith.mulf %94, %92 : vector<22x32xf32>
    %cst_58 = arith.constant dense<0.000000e+00> : vector<32xf32>
    %100 = vector.multi_reduction <add>, %99, %cst_58 [0] : vector<22x32xf32> to vector<32xf32>
    %101 = vector.shape_cast %100 : vector<32xf32> to vector<1x32xf32>
    %cst_59 = arith.constant 6.250000e-02 : f32
    %102 = vector.broadcast %cst_59 : f32 to vector<1x32xf32>
    %103 = arith.mulf %101, %102 : vector<1x32xf32>
    %104 = arith.mulf %98, %98 : vector<1x32xf32>
    %105 = arith.subf %103, %104 : vector<1x32xf32>
    %cst_60 = arith.constant 0.000000e+00 : f32
    %106 = vector.broadcast %cst_60 : f32 to vector<1x32xf32>
    %107 = arith.maximumf %105, %106 : vector<1x32xf32>
    %108 = vector.broadcast %98 : vector<1x32xf32> to vector<22x32xf32>
    %109 = arith.subf %92, %108 : vector<22x32xf32>
    %cst_61 = arith.constant 9.99999974E-6 : f32
    %110 = vector.broadcast %cst_61 : f32 to vector<1x32xf32>
    %111 = arith.addf %107, %110 : vector<1x32xf32>
    %112 = math.rsqrt %111 : vector<1x32xf32>
    %113 = vector.broadcast %112 : vector<1x32xf32> to vector<22x32xf32>
    %114 = arith.mulf %109, %113 : vector<22x32xf32>
    %115 = vector.extract_strided_slice %1 {offsets = [7, 0], sizes = [22, 32], strides = [1, 1]} : vector<36x32xbf16> to vector<22x32xbf16>
    %116 = arith.extf %115 : vector<22x32xbf16> to vector<22x32xf32>
    %117 = arith.addf %114, %116 : vector<22x32xf32>
    %c0_62 = arith.constant 0 : index
    %c0_63 = arith.constant 0 : index
    %c0_64 = arith.constant 0 : index
    %118 = vector.load %arg4[%c0_62, %c0_63, %c0_64] : memref<1x22x32xf32, #tpu.memory_space<vmem>>, vector<1x22x32xf32>
    %119 = vector.shape_cast %118 : vector<1x22x32xf32> to vector<22x32xf32>
    %120 = vector.shape_cast %117 : vector<22x32xf32> to vector<1x22x32xf32>
    tpu.vector_store %arg4[%c0_62, %c0_63, %c0_64], %120 {strides = array<i32>} : memref<1x22x32xf32, #tpu.memory_space<vmem>>, vector<1x22x32xf32>,
    return
  }
  func.func @transform_0(%arg0: i32) -> (i32, i32, i32) {
    %c0_i32 = arith.constant 0 : i32
    %c0_i32_0 = arith.constant 0 : i32
    %c0_i32_1 = arith.constant 0 : i32
    return %arg0, %c0_i32, %c0_i32_0 : i32, i32, i32
  }
  func.func @transform_1(%arg0: i32) -> (i32, i32) {
    %c0_i32 = arith.constant 0 : i32
    %c0_i32_0 = arith.constant 0 : i32
    %c0_i32_1 = arith.constant 0 : i32
    return %c0_i32, %c0_i32_0 : i32, i32
  }
  func.func @transform_2(%arg0: i32) -> (i32, i32) {
    %c0_i32 = arith.constant 0 : i32
    %c0_i32_0 = arith.constant 0 : i32
    %c0_i32_1 = arith.constant 0 : i32
    return %c0_i32, %c0_i32_0 : i32, i32
  }
  func.func @transform_3(%arg0: i32) -> (i32, i32, i32) {
    %c0_i32 = arith.constant 0 : i32
    %c0_i32_0 = arith.constant 0 : i32
    %c0_i32_1 = arith.constant 0 : i32
    return %arg0, %c0_i32, %c0_i32_0 : i32, i32, i32
  }
}

</mosaic_0001>

<llo_original>
// kernel: hdr_resnet_encoder_clear.7
$region0: #{hdr_resnet_encoder_clear.7}
  #allocation0 [shape = 'u32[]', space=smem, size = 0x4, offset = 0x4, fixed_abs, tag = 'smem constant byte address 0x4 - core index']
  #allocation1 [shape = 'u32[144,128]{1,0:T(1,128)}', space=vmem, size = 0x12000, scoped, tag = 'internal scratch']
  %s0 = inlined_call_operand.vmem [shape: bf16[2,81,32], index: 0, kind: input, shape index: {}]
  %s1 = inlined_call_operand.vmem [shape: bf16[128,16], index: 1, kind: input, shape index: {}]
  %s2 = inlined_call_operand.vmem [shape: bf16[2,71,16], index: 2, kind: output, shape index: {}]
  %s3 = sld [smem:[#allocation0]]
  $region41: #{hdr_resnet_encoder_clear.7} parent=0
    _
  %s5 = ssub.s32 1, %s3
  %s6 = scalar_select 0, %s5, %s3
  loop: start=0, step=1, limit=4
  $region2: #{hdr_resnet_encoder_clear.7} parent=0 // loop_pre_header
    _
  $region3: #{hdr_resnet_encoder_clear.7} parent=0 // loop_header
    %s8 = sphi 0, %s12
    %p9 = scmp.ge.s32.totalorder %s8, 4
    %s18 = sphi 0, %s20
    %s21 = sphi 0, %s18
    %s22 = sphi 0, %s21
    %s38 = sphi 0, %s22
    %s42 = sphi 0, %s42
    %s44 = sphi 0, %s42
    %s45 = sphi 0, %s44
    %s59 = sphi 0, %s45
    %s65 = sphi 0, %s67
    %s68 = sphi 0, %s65
    %s69 = sphi 0, %s68
    %s85 = sphi 0, %s69
  $region4: #{hdr_resnet_encoder_clear.7} parent=0 // loop_header_branch
    %11 = sbr.rel (%p9) target = $region8
  $region5: #{hdr_resnet_encoder_clear.7} parent=0 // loop_body
    %s13 = ssub.s32 %s8, 1
    %s14 = ssub.s32 %s8, 2
    %s15 = sadd.s32 %s8, 1
    %s16 = ssub.s32 %s8, %s15
    %p17 = scmp.eq.s32.totalorder %s16, 0
    %s19 = sadd.s32 %s18, 1
    %s20 = scalar_select %p17, %s18, %s19
    %p23 = pneg %p17
    %p24 = scmp.eq.s32.totalorder %s8, 1
    %p25 = por %p23, %p24
    %p26 = scmp.ne.s32.totalorder %s18, %s21
    %p27 = scmp.eq.s32.totalorder %s8, 0
    %p28 = por %p26, %p27
    %p29 = scmp.ne.s32.totalorder %s18, %s21
    %p30 = scmp.eq.s32.totalorder %s13, 1
    %p31 = por %p29, %p30
    %p32 = scmp.ne.s32.totalorder %s21, %s22
    %p33 = scmp.eq.s32.totalorder %s13, 0
    %p34 = por %p32, %p33
    %p35 = scmp.ne.s32.totalorder %s21, %s22
    %p36 = scmp.eq.s32.totalorder %s14, 1
    %p37 = por %p35, %p36
    %p39 = scmp.ne.s32.totalorder %s22, %s38
    %p40 = scmp.eq.s32.totalorder %s14, 0
    %p41 = por %p39, %p40
    %s43 = sadd.s32 %s42, 1
    %p46 = scmp.eq.s32.totalorder %s8, 1
    %p47 = scmp.ne.s32.totalorder %s42, %s44
    %p48 = scmp.eq.s32.totalorder %s8, 0
    %p49 = por %p47, %p48
    %p50 = scmp.ne.s32.totalorder %s42, %s44
    %p51 = scmp.eq.s32.totalorder %s13, 1
    %p52 = por %p50, %p51
    %p53 = scmp.ne.s32.totalorder %s44, %s45
    %p54 = scmp.eq.s32.totalorder %s13, 0
    %p55 = por %p53, %p54
    %p56 = scmp.ne.s32.totalorder %s44, %s45
    %p57 = scmp.eq.s32.totalorder %s14, 1
    %p58 = por %p56, %p57
    %p60 = scmp.ne.s32.totalorder %s45, %s59
    %p61 = scmp.eq.s32.totalorder %s14, 0
    %p62 = por %p60, %p61
    %s63 = ssub.s32 %s8, %s15
    %p64 = scmp.eq.s32.totalorder %s63, 0
    %s66 = sadd.s32 %s65, 1
    %s67 = scalar_select %p64, %s65, %s66
    %p70 = pneg %p64
    %p71 = scmp.eq.s32.totalorder %s8, 1
    %p72 = por %p70, %p71
    %p73 = scmp.ne.s32.totalorder %s65, %s68
    %p74 = scmp.eq.s32.totalorder %s8, 0
    %p75 = por %p73, %p74
    %p76 = scmp.ne.s32.totalorder %s65, %s68
    %p77 = scmp.eq.s32.totalorder %s13, 1
    %p78 = por %p76, %p77
    %p79 = scmp.ne.s32.totalorder %s68, %s69
    %p80 = scmp.eq.s32.totalorder %s13, 0
    %p81 = por %p79, %p80
    %p82 = scmp.ne.s32.totalorder %s68, %s69
    %p83 = scmp.eq.s32.totalorder %s14, 1
    %p84 = por %p82, %p83
    %p86 = scmp.ne.s32.totalorder %s69, %s85
    %p87 = scmp.eq.s32.totalorder %s14, 0
    %p88 = por %p86, %p87
    %p89 = scmp.le.s32.totalorder 1, %s8
    %p90 = scmp.lt.s32.totalorder %s8, 3
    %p91 = pnand %p89, %p90
    %p92 = pneg %p91
    // Predicated region
    $region9: #{hdr_resnet_encoder_clear.7} parent=5 // pred_check
      _
    $region10: #{hdr_resnet_encoder_clear.7} parent=5 // pred_check_branch
      %94 = sbr.rel (%p91) target = $region12
    $region11: #{hdr_resnet_encoder_clear.7} parent=5 // pred_region
      %s95 = ssub.s32 %s8, 1
      // Predicated region
      $region13: #{hdr_resnet_encoder_clear.7} parent=11 // pred_check
        %p96 = pneg %p55
      $region14: #{hdr_resnet_encoder_clear.7} parent=11 // pred_check_branch
        %98 = sbr.rel (%p96) target = $region16
      $region15: #{hdr_resnet_encoder_clear.7} parent=11 // pred_region
        _
      $region16: #{hdr_resnet_encoder_clear.7} parent=11 // pred_fallthru
        _
    $region12: #{hdr_resnet_encoder_clear.7} parent=5 // pred_fallthru
      _
    %p99 = scmp.lt.s32.totalorder %s8, 2
    // Predicated region
    $region17: #{hdr_resnet_encoder_clear.7} parent=5 // pred_check
      %p100 = pneg %p99
    $region18: #{hdr_resnet_encoder_clear.7} parent=5 // pred_check_branch
      %102 = sbr.rel (%p100) target = $region20
    $region19: #{hdr_resnet_encoder_clear.7} parent=5 // pred_region
      // Predicated region
      $region21: #{hdr_resnet_encoder_clear.7} parent=19 // pred_check
        %p103 = pneg %p28
      $region22: #{hdr_resnet_encoder_clear.7} parent=19 // pred_check_branch
        %105 = sbr.rel (%p103) target = $region24
      $region23: #{hdr_resnet_encoder_clear.7} parent=19 // pred_region
        %p106 = scmp.lt.s32.totalorder %s8, 1
        %s107 = scalar_select %p106, %s8, 1
        %s108 = smul.addr %s107, 11
        %s109 = smul.addr %s108, 4
        %s110 = scalar_lea.vmem %s0, %s109
      $region24: #{hdr_resnet_encoder_clear.7} parent=19 // pred_fallthru
        _
    $region20: #{hdr_resnet_encoder_clear.7} parent=5 // pred_fallthru
      _
    %p111 = scmp.le.s32.totalorder 1, %s8
    %p112 = scmp.lt.s32.totalorder %s8, 3
    %p113 = pnand %p111, %p112
    %p114 = pneg %p113
    // Predicated region
    $region25: #{hdr_resnet_encoder_clear.7} parent=5 // pred_check
      _
    $region26: #{hdr_resnet_encoder_clear.7} parent=5 // pred_check_branch
      %116 = sbr.rel (%p113) target = $region28
    $region27: #{hdr_resnet_encoder_clear.7} parent=5 // pred_region
      %s117 = ssub.s32 %s8, 1
      %p118 = scmp.lt.s32.totalorder %s13, 1
      %s119 = scalar_select %p118, %s13, 1
      %s120 = smul.addr %s119, 11
      %s121 = smul.addr %s120, 4
      %s122 = scalar_lea.vmem %s0, %s121
      %p123 = pneg %p34
      %p124 = pneg %p31
      %p125 = pneg %p55
      %p126 = pneg %p52
      %p127 = pneg %p81
      %p128 = pneg %p78
      %p129 = scmp.lt.s32.totalorder %s13, 1
      %s130 = scalar_select %p129, %s13, 1
      %s131 = smul.addr %s130, 9
      %s132 = smul.addr %s131, 4
      %s133 = scalar_lea.vmem %s2, %s132
      %p134 = scmp.lt.s32.totalorder %s13, 1
      %s135 = scalar_select %p134, %s13, 1
      %s136 = smul.addr %s135, 11
      %s137 = smul.addr %s136, 4
      %s138 = scalar_lea.vmem %s0, %s137
      %p139 = scmp.lt.s32.totalorder %s13, 1
      %s140 = scalar_select %p139, %s13, 1
      %s141 = smul.addr %s140, 9
      %s142 = smul.addr %s141, 4
      %s143 = scalar_lea.vmem %s2, %s142
      %v145 = vld [vmem:[%s138] sm:$0xf]
      %v146 = vld [vmem:[%s138 + $0x4] sm:$0xf]
      %v147 = vld [vmem:[%s138 + $0x8] sm:$0xf]
      %v148 = vld [vmem:[%s138 + $0xc] sm:$0xf]
      %v149 = vld [vmem:[%s138 + $0x10] sm:$0xf]
      %v150 = vld [vmem:[%s138 + $0x14] sm:$0xf]
      %v151 = vld [vmem:[%s138 + $0x18] sm:$0xf]
      %v152 = vld [vmem:[%s138 + $0x1c] sm:$0xf]
      %v153 = vld [vmem:[%s138 + $0x20] sm:$0xf]
      %v154 = vld [vmem:[%s138 + $0x24] sm:$0xf]
      %v155 = vld [vmem:[%s138 + $0x28] sm:$0x1]
      %v165 = vunpack.c.l.b16 %v145
      %v166 = vunpack.c.l.b16 %v146
      %v167 = vunpack.c.l.b16 %v147
      %v168 = vunpack.c.l.b16 %v148
      %v169 = vunpack.c.l.b16 %v149
      %v170 = vunpack.c.l.b16 %v150
      %v171 = vunpack.c.l.b16 %v151
      %v172 = vunpack.c.l.b16 %v152
      %v173 = vunpack.c.l.b16 %v153
      %v174 = vpack.c.b16 %v166, %v165
      %v175 = vpack.c.b16 %v168, %v167
      %v176 = vpack.c.b16 %v170, %v169
      %v177 = vpack.c.b16 %v172, %v171
      %v178 = vpack.c.b16 %v173, %v173
      %vm179 = vsmask.f32 7424
      %v181 = vshrl.u32 %v174, 16
      %v183 = vshll.u32 %v174, 16
      %v185 = vrot.slane %v183, 1
      %v186 = vor.u32 %v181, %v185
      %v188 = vshll.u32 %v175, 16
      %v190 = vrot.slane %v188, 1
      %v191 = vsel %vm179, %v186, %v190
      %v192 = vshrl.u32 %v175, 16
      %v194 = vor.u32 %v192, %v190
      %v196 = vshll.u32 %v176, 16
      %v198 = vrot.slane %v196, 1
      %v199 = vsel %vm179, %v194, %v198
      %v200 = vshrl.u32 %v176, 16
      %v202 = vor.u32 %v200, %v198
      %v204 = vshll.u32 %v177, 16
      %v206 = vrot.slane %v204, 1
      %v207 = vsel %vm179, %v202, %v206
      %v208 = vshrl.u32 %v177, 16
      %v210 = vor.u32 %v208, %v206
      %v212 = vshll.u32 %v178, 16
      %v214 = vrot.slane %v212, 1
      %v215 = vsel %vm179, %v210, %v214
      %v216 = vshrl.u32 %v178, 16
      %v218 = vor.u32 %v216, %v214
      %219 = vrot.lane.b32.xlu0 %v191, 32
      %v220 = vpop.permute.xlu0 %219
      %221 = vrot.lane.b32.xlu0 %v199, 32
      %v222 = vpop.permute.xlu0 %221
      %223 = vrot.lane.b32.xlu0 %v207, 32
      %v224 = vpop.permute.xlu0 %223
      %225 = vrot.lane.b32.xlu0 %v215, 32
      %v226 = vpop.permute.xlu0 %225
      %227 = vrot.lane.b32.xlu0 %v218, 32
      %v228 = vpop.permute.xlu0 %227
      %v230 = vunpack.c.l.b16 %v154
      %v231 = vpack.c.b16 %v167, %v166
      %v232 = vpack.c.b16 %v169, %v168
      %v233 = vpack.c.b16 %v171, %v170
      %v234 = vpack.c.b16 %v173, %v172
      %v235 = vpack.c.b16 %v230, %v230
      %v237 = vshrl.u32 %v231, 16
      %v239 = vshll.u32 %v231, 16
      %v241 = vrot.slane %v239, 1
      %v242 = vor.u32 %v237, %v241
      %v244 = vshll.u32 %v232, 16
      %v246 = vrot.slane %v244, 1
      %v247 = vsel %vm179, %v242, %v246
      %v248 = vshrl.u32 %v232, 16
      %v250 = vor.u32 %v248, %v246
      %v252 = vshll.u32 %v233, 16
      %v254 = vrot.slane %v252, 1
      %v255 = vsel %vm179, %v250, %v254
      %v256 = vshrl.u32 %v233, 16
      %v258 = vor.u32 %v256, %v254
      %v260 = vshll.u32 %v234, 16
      %v262 = vrot.slane %v260, 1
      %v263 = vsel %vm179, %v258, %v262
      %v264 = vshrl.u32 %v234, 16
      %v266 = vor.u32 %v264, %v262
      %v268 = vshll.u32 %v235, 16
      %v270 = vrot.slane %v268, 1
      %v271 = vsel %vm179, %v266, %v270
      %v272 = vshrl.u32 %v235, 16
      %v274 = vor.u32 %v272, %v270
      %275 = vrot.lane.b32.xlu0 %v247, 64
      %v276 = vpop.permute.xlu0 %275
      %277 = vrot.lane.b32.xlu0 %v255, 64
      %v278 = vpop.permute.xlu0 %277
      %279 = vrot.lane.b32.xlu0 %v263, 64
      %v280 = vpop.permute.xlu0 %279
      %281 = vrot.lane.b32.xlu0 %v271, 64
      %v282 = vpop.permute.xlu0 %281
      %283 = vrot.lane.b32.xlu0 %v274, 64
      %v284 = vpop.permute.xlu0 %283
      %v286 = vunpack.c.l.b16 %v155
      %v287 = vpack.c.b16 %v286, %v230
      %vm288 = vcmask 1046528
      %v289 = vrot.slane %v231, 1
      %v290 = vrot.slane %v232, 1
      %v291 = vsel %vm288, %v289, %v290
      %v292 = vrot.slane %v233, 1
      %v293 = vsel %vm288, %v290, %v292
      %v294 = vrot.slane %v234, 1
      %v295 = vsel %vm288, %v292, %v294
      %v296 = vrot.slane %v287, 1
      %v297 = vsel %vm288, %v294, %v296
      %298 = vrot.lane.b32.xlu0 %v291, 96
      %v299 = vpop.permute.xlu0 %298
      %300 = vrot.lane.b32.xlu0 %v293, 96
      %v301 = vpop.permute.xlu0 %300
      %302 = vrot.lane.b32.xlu0 %v295, 96
      %v303 = vpop.permute.xlu0 %302
      %304 = vrot.lane.b32.xlu0 %v297, 96
      %v305 = vpop.permute.xlu0 %304
      %306 = vrot.lane.b32.xlu0 %v296, 96
      %v307 = vpop.permute.xlu0 %306
      %vm308 = vcmask 261120
      %v310 = vsel %vm308, %v174, %v220
      %v312 = vsel %vm308, %v175, %v222
      %v314 = vsel %vm308, %v176, %v224
      %v316 = vsel %vm308, %v177, %v226
      %v318 = vsel %vm308, %v178, %v228
      %vm319 = vcmask 523264
      %v321 = vsel %vm319, %v310, %v276
      %v323 = vsel %vm319, %v312, %v278
      %v325 = vsel %vm319, %v314, %v280
      %v327 = vsel %vm319, %v316, %v282
      %v329 = vsel %vm319, %v318, %v284
      %vm330 = vcmask 785408
      %v332 = vsel %vm330, %v321, %v299
      %v335 = vsel %vm330, %v323, %v301
      %v338 = vsel %vm330, %v325, %v303
      %v341 = vsel %vm330, %v327, %v305
      %v344 = vsel %vm330, %v329, %v307
      %v346 = vld [vmem:[%s1] sm:$0xf]
      %v347 = vld [vmem:[%s1 + $0x4] sm:$0xf]
      %v348 = vld [vmem:[%s1 + $0x8] sm:$0xf]
      %v349 = vld [vmem:[%s1 + $0xc] sm:$0xf]
      %v350 = vld [vmem:[%s1 + $0x10] sm:$0xf]
      %v351 = vld [vmem:[%s1 + $0x14] sm:$0xf]
      %v352 = vld [vmem:[%s1 + $0x18] sm:$0xf]
      %v353 = vld [vmem:[%s1 + $0x1c] sm:$0xf]
      %v354 = vld [vmem:[%s1 + $0x20] sm:$0xf]
      %v355 = vld [vmem:[%s1 + $0x24] sm:$0xf]
      %v356 = vld [vmem:[%s1 + $0x28] sm:$0xf]
      %v357 = vld [vmem:[%s1 + $0x2c] sm:$0xf]
      %v358 = vld [vmem:[%s1 + $0x30] sm:$0xf]
      %v359 = vld [vmem:[%s1 + $0x34] sm:$0xf]
      %v360 = vld [vmem:[%s1 + $0x38] sm:$0xf]
      %v361 = vld [vmem:[%s1 + $0x3c] sm:$0xf]
      %v378 = vunpack.c.l.b16 %v346
      %v379 = vunpack.c.l.b16 %v347
      %v380 = vunpack.c.l.b16 %v348
      %v381 = vunpack.c.l.b16 %v349
      %v382 = vunpack.c.l.b16 %v350
      %v383 = vunpack.c.l.b16 %v351
      %v384 = vunpack.c.l.b16 %v352
      %v385 = vunpack.c.l.b16 %v353
      %v386 = vunpack.c.l.b16 %v354
      %v387 = vunpack.c.l.b16 %v355
      %v388 = vunpack.c.l.b16 %v356
      %v389 = vunpack.c.l.b16 %v357
      %v390 = vunpack.c.l.b16 %v358
      %v391 = vunpack.c.l.b16 %v359
      %v392 = vunpack.c.l.b16 %v360
      %v393 = vunpack.c.l.b16 %v361
      %v394 = vpack.c.b16 %v379, %v378
      %v395 = vpack.c.b16 %v381, %v380
      %v396 = vpack.c.b16 %v383, %v382
      %v397 = vpack.c.b16 %v385, %v384
      %v398 = vpack.c.b16 %v387, %v386
      %v399 = vpack.c.b16 %v389, %v388
      %v400 = vpack.c.b16 %v391, %v390
      %v401 = vpack.c.b16 %v393, %v392
      %410 = vmatprep.subr.bf16.mxu0 0
      %411 = vmatpush1.bf16.msra.mxu0 %v394
      %412 = vmatprep.subr.bf16.mxu0 0
      %413 = vmatpush1.bf16.msra.mxu0 %v395
      %414 = vmatprep.subr.bf16.mxu0 0
      %415 = vmatpush1.bf16.msra.mxu0 %v396
      %416 = vmatprep.subr.bf16.mxu0 0
      %417 = vmatpush1.bf16.msra.mxu0 %v397
      %418 = vmatprep.subr.bf16.mxu0 0
      %419 = vmatpush1.bf16.msra.mxu0 %v398
      %420 = vmatprep.subr.bf16.mxu0 0
      %421 = vmatpush1.bf16.msra.mxu0 %v399
      %422 = vmatprep.subr.bf16.mxu0 0
      %423 = vmatpush1.bf16.msra.mxu0 %v400
      %424 = vmatprep.subr.bf16.mxu0 0
      %425 = vmatpush1.bf16.msra.mxu0 %v401
      %426 = vmatprep.subr.bf16.mxu0 0
      %427 = vmatpush1.bf16.msra.mxu0 0
      %428 = vmatprep.subr.bf16.mxu0 0
      %429 = vmatpush1.bf16.msra.mxu0 0
      %430 = vmatprep.subr.bf16.mxu0 0
      %431 = vmatpush1.bf16.msra.mxu0 0
      %432 = vmatprep.subr.bf16.mxu0 0
      %433 = vmatpush1.bf16.msra.mxu0 0
      %434 = vmatprep.subr.bf16.mxu0 0
      %435 = vmatpush1.bf16.msra.mxu0 0
      %436 = vmatprep.subr.bf16.mxu0 0
      %437 = vmatpush1.bf16.msra.mxu0 0
      %438 = vmatprep.subr.bf16.mxu0 0
      %439 = vmatpush1.bf16.msra.mxu0 0
      %440 = vmatprep.subr.bf16.mxu0 0
      %441 = vmatpush1.bf16.msra.mxu0 0
      %442 = vmatprep.mubr.bf16.mxu0 0
      %443 = vmatmul.mubr.bf16.gmra.mrb[0].mxu0 %v332
      %v444 = vpop.f32.mrb[0].mxu0
      %v445 = vadd.f32 0.0, %v444
      %v446 = vpop.f32.mrb[0].mxu0
      %v447 = vpop.f32.mrb[0].mxu0
      %v448 = vadd.f32 0.0, %v447
      %v449 = vpop.f32.mrb[0].mxu0
      %450 = vmatprep.mubr.bf16.mxu0 0
      %451 = vmatmul.mubr.bf16.gmra.mrb[0].mxu0 %v335
      %v452 = vpop.f32.mrb[0].mxu0
      %v453 = vadd.f32 0.0, %v452
      %v454 = vpop.f32.mrb[0].mxu0
      %v455 = vpop.f32.mrb[0].mxu0
      %v456 = vadd.f32 0.0, %v455
      %v457 = vpop.f32.mrb[0].mxu0
      %458 = vmatprep.mubr.bf16.mxu0 0
      %459 = vmatmul.mubr.bf16.gmra.mrb[0].mxu0 %v338
      %v460 = vpop.f32.mrb[0].mxu0
      %v461 = vadd.f32 0.0, %v460
      %v462 = vpop.f32.mrb[0].mxu0
      %v463 = vpop.f32.mrb[0].mxu0
      %v464 = vadd.f32 0.0, %v463
      %v465 = vpop.f32.mrb[0].mxu0
      %466 = vmatprep.mubr.bf16.mxu0 0
      %467 = vmatmul.mubr.bf16.gmra.mrb[0].mxu0 %v341
      %v468 = vpop.f32.mrb[0].mxu0
      %v469 = vadd.f32 0.0, %v468
      %v470 = vpop.f32.mrb[0].mxu0
      %v471 = vpop.f32.mrb[0].mxu0
      %v472 = vadd.f32 0.0, %v471
      %v473 = vpop.f32.mrb[0].mxu0
      %474 = vmatprep.mubr.bf16.mxu0 0
      %475 = vmatmul.mubr.bf16.gmra.mrb[0].mxu0 %v344
      %v476 = vpop.f32.mrb[0].mxu0
      %v477 = vadd.f32 0.0, %v476
      %v478 = vpop.f32.mrb[0].mxu0
      %v479 = vpop.f32.mrb[0].mxu0
      %v480 = vpop.f32.mrb[0].mxu0
      %481 = vdwg.mxu0
      %v482 = vlaneseq
      %v483 = vshrl.u32 %v482, 7
      %v484 = vadd.s32 %v483, 8
      %v485 = vadd.s32 %v483, 16
      %v486 = vadd.s32 %v483, 24
      %v487 = vadd.s32 %v483, 32
      %v488 = vadd.s32 %v483, 40
      %v489 = vadd.s32 %v483, 48
      %v490 = vadd.s32 %v483, 56
      %v491 = vadd.s32 %v483, 64
      %vm492 = vcmp.lt.s32.totalorder %v483, 0
      %v493 = vsub.s32 0, %v483
      %v494 = vsel %vm492, %v493, %v483
      %v495 = vmul.u32.u64.compose %v494, 3817748708
      %v496 = vextract.low.u32 %v495
      %v497 = vextract.high.u32 %v495
      %v498 = vshrl.u32 %v497, 3
      %v499 = vmul.u32 %v498, 9
      %v500 = vsub.s32 %v494, %v499
      %v501 = vsub.s32 0, %v500
      %v502 = vsel %vm492, %v501, %v500
      %vm503 = vcmp.lt.s32.totalorder %v484, 0
      %v504 = vsub.s32 0, %v484
      %v505 = vsel %vm503, %v504, %v484
      %v506 = vmul.u32.u64.compose %v505, 3817748708
      %v507 = vextract.low.u32 %v506
      %v508 = vextract.high.u32 %v506
      %v509 = vshrl.u32 %v508, 3
      %v510 = vmul.u32 %v509, 9
      %v511 = vsub.s32 %v505, %v510
      %v512 = vsub.s32 0, %v511
      %v513 = vsel %vm503, %v512, %v511
      %vm514 = vcmp.lt.s32.totalorder %v485, 0
      %v515 = vsub.s32 0, %v485
      %v516 = vsel %vm514, %v515, %v485
      %v517 = vmul.u32.u64.compose %v516, 3817748708
      %v518 = vextract.low.u32 %v517
      %v519 = vextract.high.u32 %v517
      %v520 = vshrl.u32 %v519, 3
      %v521 = vmul.u32 %v520, 9
      %v522 = vsub.s32 %v516, %v521
      %v523 = vsub.s32 0, %v522
      %v524 = vsel %vm514, %v523, %v522
      %vm525 = vcmp.lt.s32.totalorder %v486, 0
      %v526 = vsub.s32 0, %v486
      %v527 = vsel %vm525, %v526, %v486
      %v528 = vmul.u32.u64.compose %v527, 3817748708
      %v529 = vextract.low.u32 %v528
      %v530 = vextract.high.u32 %v528
      %v531 = vshrl.u32 %v530, 3
      %v532 = vmul.u32 %v531, 9
      %v533 = vsub.s32 %v527, %v532
      %v534 = vsub.s32 0, %v533
      %v535 = vsel %vm525, %v534, %v533
      %vm536 = vcmp.lt.s32.totalorder %v487, 0
      %v537 = vsub.s32 0, %v487
      %v538 = vsel %vm536, %v537, %v487
      %v539 = vmul.u32.u64.compose %v538, 3817748708
      %v540 = vextract.low.u32 %v539
      %v541 = vextract.high.u32 %v539
      %v542 = vshrl.u32 %v541, 3
      %v543 = vmul.u32 %v542, 9
      %v544 = vsub.s32 %v538, %v543
      %v545 = vsub.s32 0, %v544
      %v546 = vsel %vm536, %v545, %v544
      %vm547 = vcmp.lt.s32.totalorder %v488, 0
      %v548 = vsub.s32 0, %v488
      %v549 = vsel %vm547, %v548, %v488
      %v550 = vmul.u32.u64.compose %v549, 3817748708
      %v551 = vextract.low.u32 %v550
      %v552 = vextract.high.u32 %v550
      %v553 = vshrl.u32 %v552, 3
      %v554 = vmul.u32 %v553, 9
      %v555 = vsub.s32 %v549, %v554
      %v556 = vsub.s32 0, %v555
      %v557 = vsel %vm547, %v556, %v555
      %vm558 = vcmp.lt.s32.totalorder %v489, 0
      %v559 = vsub.s32 0, %v489
      %v560 = vsel %vm558, %v559, %v489
      %v561 = vmul.u32.u64.compose %v560, 3817748708
      %v562 = vextract.low.u32 %v561
      %v563 = vextract.high.u32 %v561
      %v564 = vshrl.u32 %v563, 3
      %v565 = vmul.u32 %v564, 9
      %v566 = vsub.s32 %v560, %v565
      %v567 = vsub.s32 0, %v566
      %v568 = vsel %vm558, %v567, %v566
      %vm569 = vcmp.lt.s32.totalorder %v490, 0
      %v570 = vsub.s32 0, %v490
      %v571 = vsel %vm569, %v570, %v490
      %v572 = vmul.u32.u64.compose %v571, 3817748708
      %v573 = vextract.low.u32 %v572
      %v574 = vextract.high.u32 %v572
      %v575 = vshrl.u32 %v574, 3
      %v576 = vmul.u32 %v575, 9
      %v577 = vsub.s32 %v571, %v576
      %v578 = vsub.s32 0, %v577
      %v579 = vsel %vm569, %v578, %v577
      %vm580 = vcmp.lt.s32.totalorder %v491, 0
      %v581 = vsub.s32 0, %v491
      %v582 = vsel %vm580, %v581, %v491
      %v583 = vmul.u32.u64.compose %v582, 3817748708
      %v584 = vextract.low.u32 %v583
      %v585 = vextract.high.u32 %v583
      %v586 = vshrl.u32 %v585, 3
      %v587 = vmul.u32 %v586, 9
      %v588 = vsub.s32 %v582, %v587
      %v589 = vsub.s32 0, %v588
      %v590 = vsel %vm580, %v589, %v588
      %vm591 = vcmp.ne.s32.totalorder %v502, 0
      %vm592 = vcmp.ne.s32.totalorder %v513, 0
      %vm593 = vcmp.ne.s32.totalorder %v524, 0
      %vm594 = vcmp.ne.s32.totalorder %v535, 0
      %vm595 = vcmp.ne.s32.totalorder %v546, 0
      %vm596 = vcmp.ne.s32.totalorder %v557, 0
      %vm597 = vcmp.ne.s32.totalorder %v568, 0
      %vm598 = vcmp.ne.s32.totalorder %v579, 0
      %vm599 = vcmp.ne.s32.totalorder %v590, 0
      %vm600 = vcmp.lt.s32.totalorder %v502, 0
      %vm601 = vcmp.lt.s32.totalorder %v513, 0
      %vm602 = vcmp.lt.s32.totalorder %v524, 0
      %vm603 = vcmp.lt.s32.totalorder %v535, 0
      %vm604 = vcmp.lt.s32.totalorder %v546, 0
      %vm605 = vcmp.lt.s32.totalorder %v557, 0
      %vm606 = vcmp.lt.s32.totalorder %v568, 0
      %vm607 = vcmp.lt.s32.totalorder %v579, 0
      %vm608 = vcmp.lt.s32.totalorder %v590, 0
      %vm609 = vmand %vm600, %vm591
      %vm610 = vmand %vm601, %vm592
      %vm611 = vmand %vm602, %vm593
      %vm612 = vmand %vm603, %vm594
      %vm613 = vmand %vm604, %vm595
      %vm614 = vmand %vm605, %vm596
      %vm615 = vmand %vm606, %vm597
      %vm616 = vmand %vm607, %vm598
      %vm617 = vmand %vm608, %vm599
      %v618 = vadd.s32 %v502, 9
      %v619 = vadd.s32 %v513, 9
      %v620 = vadd.s32 %v524, 9
      %v621 = vadd.s32 %v535, 9
      %v622 = vadd.s32 %v546, 9
      %v623 = vadd.s32 %v557, 9
      %v624 = vadd.s32 %v568, 9
      %v625 = vadd.s32 %v579, 9
      %v626 = vadd.s32 %v590, 9
      %v627 = vsel %vm609, %v618, %v502
      %v628 = vsel %vm610, %v619, %v513
      %v629 = vsel %vm611, %v620, %v524
      %v630 = vsel %vm612, %v621, %v535
      %v631 = vsel %vm613, %v622, %v546
      %v632 = vsel %vm614, %v623, %v557
      %v633 = vsel %vm615, %v624, %v568
      %v634 = vsel %vm616, %v625, %v579
      %v635 = vsel %vm617, %v626, %v590
      %vm636 = vcmp.lt.s32.totalorder %v627, 8
      %vm637 = vcmp.lt.s32.totalorder %v628, 8
      %vm638 = vcmp.lt.s32.totalorder %v629, 8
      %vm639 = vcmp.lt.s32.totalorder %v630, 8
      %vm640 = vcmp.lt.s32.totalorder %v631, 8
      %vm641 = vcmp.lt.s32.totalorder %v632, 8
      %vm642 = vcmp.lt.s32.totalorder %v633, 8
      %vm643 = vcmp.lt.s32.totalorder %v634, 8
      %vm644 = vcmp.lt.s32.totalorder %v635, 8
      %v645 = vsel %vm636, 1, 0
      %v646 = vsel %vm637, 1, 0
      %v647 = vsel %vm638, 1, 0
      %v648 = vsel %vm639, 1, 0
      %v649 = vsel %vm640, 1, 0
      %v650 = vsel %vm641, 1, 0
      %v651 = vsel %vm642, 1, 0
      %v652 = vsel %vm643, 1, 0
      %v653 = vsel %vm644, 1, 0
      %v654 = vcvt.s32.f32 %v645
      %v655 = vcvt.s32.f32 %v646
      %v656 = vcvt.s32.f32 %v647
      %v657 = vcvt.s32.f32 %v648
      %v658 = vcvt.s32.f32 %v649
      %v659 = vcvt.s32.f32 %v650
      %v660 = vcvt.s32.f32 %v651
      %v661 = vcvt.s32.f32 %v652
      %v662 = vcvt.s32.f32 %v653
      %v663 = vmul.f32 %v445, %v654
      %v664 = vmul.f32 %v448, %v655
      %v665 = vmul.f32 %v453, %v656
      %v666 = vmul.f32 %v456, %v657
      %v667 = vmul.f32 %v461, %v658
      %v668 = vmul.f32 %v464, %v659
      %v669 = vmul.f32 %v469, %v660
      %v670 = vmul.f32 %v472, %v661
      %v671 = vmul.f32 %v477, %v662
      %vm672 = vcmask 130048
      %v673 = vsel %vm672, %v663, 0.0
      %v674 = vsel %vm672, %v664, 0.0
      %v675 = vadd.f32 %v673, %v674
      %v676 = vsel %vm672, %v665, 0.0
      %v677 = vadd.f32 %v675, %v676
      %v678 = vsel %vm672, %v666, 0.0
      %v679 = vadd.f32 %v677, %v678
      %v680 = vsel %vm672, %v667, 0.0
      %v681 = vadd.f32 %v679, %v680
      %v682 = vsel %vm672, %v668, 0.0
      %v683 = vadd.f32 %v681, %v682
      %v684 = vsel %vm672, %v669, 0.0
      %v685 = vadd.f32 %v683, %v684
      %v686 = vsel %vm672, %v670, 0.0
      %v687 = vadd.f32 %v685, %v686
      %vm688 = vcmask 129024
      %v689 = vsel %vm688, %v671, 0.0
      %v690 = vadd.f32 %v687, %v689
      %v691 = vrot.slane %v690, 4
      %v692 = vadd.f32 %v690, %v691
      %v693 = vrot.slane %v692, 2
      %v694 = vadd.f32 %v692, %v693
      %v695 = vrot.slane %v694, 1
      %v696 = vadd.f32 %v694, %v695
      %v697 = vmul.f32 %v696, 0.015625
      %v698 = vmul.f32 %v663, %v445
      %v699 = vmul.f32 %v664, %v448
      %v700 = vmul.f32 %v665, %v453
      %v701 = vmul.f32 %v666, %v456
      %v702 = vmul.f32 %v667, %v461
      %v703 = vmul.f32 %v668, %v464
      %v704 = vmul.f32 %v669, %v469
      %v705 = vmul.f32 %v670, %v472
      %v706 = vmul.f32 %v671, %v477
      %v707 = vsel %vm672, %v698, 0.0
      %v708 = vsel %vm672, %v699, 0.0
      %v709 = vadd.f32 %v707, %v708
      %v710 = vsel %vm672, %v700, 0.0
      %v711 = vadd.f32 %v709, %v710
      %v712 = vsel %vm672, %v701, 0.0
      %v713 = vadd.f32 %v711, %v712
      %v714 = vsel %vm672, %v702, 0.0
      %v715 = vadd.f32 %v713, %v714
      %v716 = vsel %vm672, %v703, 0.0
      %v717 = vadd.f32 %v715, %v716
      %v718 = vsel %vm672, %v704, 0.0
      %v719 = vadd.f32 %v717, %v718
      %v720 = vsel %vm672, %v705, 0.0
      %v721 = vadd.f32 %v719, %v720
      %v722 = vsel %vm688, %v706, 0.0
      %v723 = vadd.f32 %v721, %v722
      %v724 = vrot.slane %v723, 4
      %v725 = vadd.f32 %v723, %v724
      %v726 = vrot.slane %v725, 2
      %v727 = vadd.f32 %v725, %v726
      %v728 = vrot.slane %v727, 1
      %v729 = vadd.f32 %v727, %v728
      %v730 = vmul.f32 %v729, 0.015625
      %v731 = vmul.f32 %v697, %v697
      %v732 = vsub.f32 %v730, %v731
      %v733 = vmax.f32 %v732, 0.0
      %v734 = vsub.f32 %v445, %v697
      %v735 = vsub.f32 %v448, %v697
      %v736 = vsub.f32 %v453, %v697
      %v737 = vsub.f32 %v456, %v697
      %v738 = vsub.f32 %v461, %v697
      %v739 = vsub.f32 %v464, %v697
      %v740 = vsub.f32 %v469, %v697
      %v741 = vsub.f32 %v472, %v697
      %v742 = vsub.f32 %v477, %v697
      %v743 = vadd.f32 %v733, 1e-05
      %v744 = vrsqrt.pop %v743
      %v745 = vmul.f32 %v734, %v744
      %v746 = vmul.f32 %v735, %v744
      %v747 = vmul.f32 %v736, %v744
      %v748 = vmul.f32 %v737, %v744
      %v749 = vmul.f32 %v738, %v744
      %v750 = vmul.f32 %v739, %v744
      %v751 = vmul.f32 %v740, %v744
      %v752 = vmul.f32 %v741, %v744
      %v753 = vmul.f32 %v742, %v744
      %v754 = vmax.f32 %v745, 0.0
      %v755 = vmax.f32 %v746, 0.0
      %v756 = vmax.f32 %v747, 0.0
      %v757 = vmax.f32 %v748, 0.0
      %v758 = vmax.f32 %v749, 0.0
      %v759 = vmax.f32 %v750, 0.0
      %v760 = vmax.f32 %v751, 0.0
      %v761 = vmax.f32 %v752, 0.0
      %v762 = vmax.f32 %v753, 0.0
      %v763 = vpack.c.bf16 %v755, %v754
      %v764 = vpack.c.bf16 %v757, %v756
      %v765 = vpack.c.bf16 %v759, %v758
      %v766 = vpack.c.bf16 %v761, %v760
      %v767 = vpack.c.bf16 %v762, %v762
      %v773 = vunpack.c.l.b16 %v763
      %v774 = vunpack.c.h.b16 %v763
      %v775 = vunpack.c.l.b16 %v764
      %v776 = vunpack.c.h.b16 %v764
      %v777 = vunpack.c.l.b16 %v765
      %v778 = vunpack.c.h.b16 %v765
      %v779 = vunpack.c.l.b16 %v766
      %v780 = vunpack.c.h.b16 %v766
      %v781 = vunpack.c.l.b16 %v767
      %v782 = vpack.c.b16 %v773, %v773
      %v783 = vpack.c.b16 %v774, %v774
      %v784 = vpack.c.b16 %v775, %v775
      %v785 = vpack.c.b16 %v776, %v776
      %v786 = vpack.c.b16 %v777, %v777
      %v787 = vpack.c.b16 %v778, %v778
      %v788 = vpack.c.b16 %v779, %v779
      %v789 = vpack.c.b16 %v780, %v780
      %v790 = vpack.c.b16 %v781, %v781
      %vm800 = vcmask 125952
      %801 = vst.msk [vmem:[%s143] sm:$0xf] %vm800, %v782
      %802 = vst.msk [vmem:[%s143 + $0x4] sm:$0xf] %vm800, %v783
      %803 = vst.msk [vmem:[%s143 + $0x8] sm:$0xf] %vm800, %v784
      %804 = vst.msk [vmem:[%s143 + $0xc] sm:$0xf] %vm800, %v785
      %805 = vst.msk [vmem:[%s143 + $0x10] sm:$0xf] %vm800, %v786
      %806 = vst.msk [vmem:[%s143 + $0x14] sm:$0xf] %vm800, %v787
      %807 = vst.msk [vmem:[%s143 + $0x18] sm:$0xf] %vm800, %v788
      %808 = vst.msk [vmem:[%s143 + $0x1c] sm:$0xf] %vm800, %v789
      %vm809 = vcmask 125952
      %vm810 = vsmask.f32 3328
      %vm811 = vmand %vm809, %vm810
      %v812 = vld [vmem:[%s143 + $0x20] sm:$0xf]
      %v813 = vsel %vm811, %v790, %v812
      %814 = vst [vmem:[%s143 + $0x20] sm:$0xf] %v813
      %p815 = scmp.lt.s32.totalorder %s13, 1
      %s816 = scalar_select %p815, %s13, 1
      %s817 = smul.addr %s816, 9
      %s818 = smul.addr %s817, 4
      %s819 = scalar_lea.vmem %s2, %s818
      // Predicated region
      $region29: #{hdr_resnet_encoder_clear.7} parent=27 // pred_check
        %p820 = pneg %p78
      $region30: #{hdr_resnet_encoder_clear.7} parent=27 // pred_check_branch
        %822 = sbr.rel (%p820) target = $region32
      $region31: #{hdr_resnet_encoder_clear.7} parent=27 // pred_region
        _
      $region32: #{hdr_resnet_encoder_clear.7} parent=27 // pred_fallthru
        _
    $region28: #{hdr_resnet_encoder_clear.7} parent=5 // pred_fallthru
      _
    %p823 = scmp.le.s32.totalorder 2, %s8
    // Predicated region
    $region33: #{hdr_resnet_encoder_clear.7} parent=5 // pred_check
      %p824 = pneg %p823
    $region34: #{hdr_resnet_encoder_clear.7} parent=5 // pred_check_branch
      %826 = sbr.rel (%p824) target = $region36
    $region35: #{hdr_resnet_encoder_clear.7} parent=5 // pred_region
      %s827 = ssub.s32 %s8, 2
      // Predicated region
      $region37: #{hdr_resnet_encoder_clear.7} parent=35 // pred_check
        %p828 = pneg %p84
      $region38: #{hdr_resnet_encoder_clear.7} parent=35 // pred_check_branch
        %830 = sbr.rel (%p828) target = $region40
      $region39: #{hdr_resnet_encoder_clear.7} parent=35 // pred_region
        %p831 = scmp.lt.s32.totalorder %s14, 1
        %s832 = scalar_select %p831, %s14, 1
        %s833 = smul.addr %s832, 9
        %s834 = smul.addr %s833, 4
        %s835 = scalar_lea.vmem %s2, %s834
      $region40: #{hdr_resnet_encoder_clear.7} parent=35 // pred_fallthru
        _
    $region36: #{hdr_resnet_encoder_clear.7} parent=5 // pred_fallthru
      _
  $region6: #{hdr_resnet_encoder_clear.7} parent=0 // loop_footer
    %s12 = sadd.s32 1, %s8
  $region7: #{hdr_resnet_encoder_clear.7} parent=0 // loop_footer_branch
    %7 = sbr.rel target = $region3
  $region8: #{hdr_resnet_encoder_clear.7} parent=0 // loop_exit
    _

// kernel: hdr_resnet_encoder_clear.8
$region0: #{hdr_resnet_encoder_clear.8}
  #allocation0 [shape = 'u32[]', space=smem, size = 0x4, offset = 0x4, fixed_abs, tag = 'smem constant byte address 0x4 - core index']
  #allocation1 [shape = 'u32[144,128]{1,0:T(1,128)}', space=vmem, size = 0x12000, scoped, tag = 'internal scratch']
  %s0 = inlined_call_operand.vmem [shape: bf16[2,25,64], index: 0, kind: input, shape index: {}]
  %s1 = inlined_call_operand.vmem [shape: bf16[256,32], index: 1, kind: input, shape index: {}]
  %s2 = inlined_call_operand.vmem [shape: bf16[2,19,32], index: 2, kind: output, shape index: {}]
  %s3 = sld [smem:[#allocation0]]
  $region41: #{hdr_resnet_encoder_clear.8} parent=0
    _
  %s5 = ssub.s32 1, %s3
  %s6 = scalar_select 0, %s5, %s3
  loop: start=0, step=1, limit=4
  $region2: #{hdr_resnet_encoder_clear.8} parent=0 // loop_pre_header
    _
  $region3: #{hdr_resnet_encoder_clear.8} parent=0 // loop_header
    %s8 = sphi 0, %s12
    %p9 = scmp.ge.s32.totalorder %s8, 4
    %s18 = sphi 0, %s20
    %s21 = sphi 0, %s18
    %s22 = sphi 0, %s21
    %s38 = sphi 0, %s22
    %s42 = sphi 0, %s42
    %s44 = sphi 0, %s42
    %s45 = sphi 0, %s44
    %s59 = sphi 0, %s45
    %s65 = sphi 0, %s67
    %s68 = sphi 0, %s65
    %s69 = sphi 0, %s68
    %s85 = sphi 0, %s69
  $region4: #{hdr_resnet_encoder_clear.8} parent=0 // loop_header_branch
    %11 = sbr.rel (%p9) target = $region8
  $region5: #{hdr_resnet_encoder_clear.8} parent=0 // loop_body
    %s13 = ssub.s32 %s8, 1
    %s14 = ssub.s32 %s8, 2
    %s15 = sadd.s32 %s8, 1
    %s16 = ssub.s32 %s8, %s15
    %p17 = scmp.eq.s32.totalorder %s16, 0
    %s19 = sadd.s32 %s18, 1
    %s20 = scalar_select %p17, %s18, %s19
    %p23 = pneg %p17
    %p24 = scmp.eq.s32.totalorder %s8, 1
    %p25 = por %p23, %p24
    %p26 = scmp.ne.s32.totalorder %s18, %s21
    %p27 = scmp.eq.s32.totalorder %s8, 0
    %p28 = por %p26, %p27
    %p29 = scmp.ne.s32.totalorder %s18, %s21
    %p30 = scmp.eq.s32.totalorder %s13, 1
    %p31 = por %p29, %p30
    %p32 = scmp.ne.s32.totalorder %s21, %s22
    %p33 = scmp.eq.s32.totalorder %s13, 0
    %p34 = por %p32, %p33
    %p35 = scmp.ne.s32.totalorder %s21, %s22
    %p36 = scmp.eq.s32.totalorder %s14, 1
    %p37 = por %p35, %p36
    %p39 = scmp.ne.s32.totalorder %s22, %s38
    %p40 = scmp.eq.s32.totalorder %s14, 0
    %p41 = por %p39, %p40
    %s43 = sadd.s32 %s42, 1
    %p46 = scmp.eq.s32.totalorder %s8, 1
    %p47 = scmp.ne.s32.totalorder %s42, %s44
    %p48 = scmp.eq.s32.totalorder %s8, 0
    %p49 = por %p47, %p48
    %p50 = scmp.ne.s32.totalorder %s42, %s44
    %p51 = scmp.eq.s32.totalorder %s13, 1
    %p52 = por %p50, %p51
    %p53 = scmp.ne.s32.totalorder %s44, %s45
    %p54 = scmp.eq.s32.totalorder %s13, 0
    %p55 = por %p53, %p54
    %p56 = scmp.ne.s32.totalorder %s44, %s45
    %p57 = scmp.eq.s32.totalorder %s14, 1
    %p58 = por %p56, %p57
    %p60 = scmp.ne.s32.totalorder %s45, %s59
    %p61 = scmp.eq.s32.totalorder %s14, 0
    %p62 = por %p60, %p61
    %s63 = ssub.s32 %s8, %s15
    %p64 = scmp.eq.s32.totalorder %s63, 0
    %s66 = sadd.s32 %s65, 1
    %s67 = scalar_select %p64, %s65, %s66
    %p70 = pneg %p64
    %p71 = scmp.eq.s32.totalorder %s8, 1
    %p72 = por %p70, %p71
    %p73 = scmp.ne.s32.totalorder %s65, %s68
    %p74 = scmp.eq.s32.totalorder %s8, 0
    %p75 = por %p73, %p74
    %p76 = scmp.ne.s32.totalorder %s65, %s68
    %p77 = scmp.eq.s32.totalorder %s13, 1
    %p78 = por %p76, %p77
    %p79 = scmp.ne.s32.totalorder %s68, %s69
    %p80 = scmp.eq.s32.totalorder %s13, 0
    %p81 = por %p79, %p80
    %p82 = scmp.ne.s32.totalorder %s68, %s69
    %p83 = scmp.eq.s32.totalorder %s14, 1
    %p84 = por %p82, %p83
    %p86 = scmp.ne.s32.totalorder %s69, %s85
    %p87 = scmp.eq.s32.totalorder %s14, 0
    %p88 = por %p86, %p87
    %p89 = scmp.le.s32.totalorder 1, %s8
    %p90 = scmp.lt.s32.totalorder %s8, 3
    %p91 = pnand %p89, %p90
    %p92 = pneg %p91
    // Predicated region
    $region9: #{hdr_resnet_encoder_clear.8} parent=5 // pred_check
      _
    $region10: #{hdr_resnet_encoder_clear.8} parent=5 // pred_check_branch
      %94 = sbr.rel (%p91) target = $region12
    $region11: #{hdr_resnet_encoder_clear.8} parent=5 // pred_region
      %s95 = ssub.s32 %s8, 1
      // Predicated region
      $region13: #{hdr_resnet_encoder_clear.8} parent=11 // pred_check
        %p96 = pneg %p55
      $region14: #{hdr_resnet_encoder_clear.8} parent=11 // pred_check_branch
        %98 = sbr.rel (%p96) target = $region16
      $region15: #{hdr_resnet_encoder_clear.8} parent=11 // pred_region
        _
      $region16: #{hdr_resnet_encoder_clear.8} parent=11 // pred_fallthru
        _
    $region12: #{hdr_resnet_encoder_clear.8} parent=5 // pred_fallthru
      _
    %p99 = scmp.lt.s32.totalorder %s8, 2
    // Predicated region
    $region17: #{hdr_resnet_encoder_clear.8} parent=5 // pred_check
      %p100 = pneg %p99
    $region18: #{hdr_resnet_encoder_clear.8} parent=5 // pred_check_branch
      %102 = sbr.rel (%p100) target = $region20
    $region19: #{hdr_resnet_encoder_clear.8} parent=5 // pred_region
      // Predicated region
      $region21: #{hdr_resnet_encoder_clear.8} parent=19 // pred_check
        %p103 = pneg %p28
      $region22: #{hdr_resnet_encoder_clear.8} parent=19 // pred_check_branch
        %105 = sbr.rel (%p103) target = $region24
      $region23: #{hdr_resnet_encoder_clear.8} parent=19 // pred_region
        %p106 = scmp.lt.s32.totalorder %s8, 1
        %s107 = scalar_select %p106, %s8, 1
        %s108 = smul.addr %s107, 4
        %s109 = smul.addr %s108, 4
        %s110 = scalar_lea.vmem %s0, %s109
      $region24: #{hdr_resnet_encoder_clear.8} parent=19 // pred_fallthru
        _
    $region20: #{hdr_resnet_encoder_clear.8} parent=5 // pred_fallthru
      _
    %p111 = scmp.le.s32.totalorder 1, %s8
    %p112 = scmp.lt.s32.totalorder %s8, 3
    %p113 = pnand %p111, %p112
    %p114 = pneg %p113
    // Predicated region
    $region25: #{hdr_resnet_encoder_clear.8} parent=5 // pred_check
      _
    $region26: #{hdr_resnet_encoder_clear.8} parent=5 // pred_check_branch
      %116 = sbr.rel (%p113) target = $region28
    $region27: #{hdr_resnet_encoder_clear.8} parent=5 // pred_region
      %s117 = ssub.s32 %s8, 1
      %p118 = scmp.lt.s32.totalorder %s13, 1
      %s119 = scalar_select %p118, %s13, 1
      %s120 = smul.addr %s119, 4
      %s121 = smul.addr %s120, 4
      %s122 = scalar_lea.vmem %s0, %s121
      %p123 = pneg %p34
      %p124 = pneg %p31
      %p125 = pneg %p55
      %p126 = pneg %p52
      %p127 = pneg %p81
      %p128 = pneg %p78
      %p129 = scmp.lt.s32.totalorder %s13, 1
      %s130 = scalar_select %p129, %s13, 1
      %s131 = smul.addr %s130, 3
      %s132 = smul.addr %s131, 4
      %s133 = scalar_lea.vmem %s2, %s132
      %p134 = scmp.lt.s32.totalorder %s13, 1
      %s135 = scalar_select %p134, %s13, 1
      %s136 = smul.addr %s135, 4
      %s137 = smul.addr %s136, 4
      %s138 = scalar_lea.vmem %s0, %s137
      %p139 = scmp.lt.s32.totalorder %s13, 1
      %s140 = scalar_select %p139, %s13, 1
      %s141 = smul.addr %s140, 3
      %s142 = smul.addr %s141, 4
      %s143 = scalar_lea.vmem %s2, %s142
      %v145 = vld [vmem:[%s138] sm:$0xf]
      %v146 = vld [vmem:[%s138 + $0x4] sm:$0xf]
      %v147 = vld [vmem:[%s138 + $0x8] sm:$0xf]
      %v148 = vld [vmem:[%s138 + $0xc] sm:$0x1]
      %v152 = vunpack.c.l.b16 %v145
      %v153 = vunpack.c.l.b16 %v146
      %v154 = vunpack.c.l.b16 %v147
      %v155 = vpack.c.b16 %v153, %v152
      %v156 = vpack.c.b16 %v154, %v154
      %vm157 = vsmask.f32 7424
      %v159 = vshrl.u32 %v155, 16
      %v161 = vshll.u32 %v155, 16
      %v163 = vrot.slane %v161, 1
      %v164 = vor.u32 %v159, %v163
      %v166 = vshll.u32 %v156, 16
      %v168 = vrot.slane %v166, 1
      %v169 = vsel %vm157, %v164, %v168
      %v170 = vshrl.u32 %v156, 16
      %v172 = vor.u32 %v170, %v168
      %173 = vrot.lane.b32.xlu0 %v169, 64
      %v174 = vpop.permute.xlu0 %173
      %175 = vrot.lane.b32.xlu0 %v172, 64
      %v176 = vpop.permute.xlu0 %175
      %vm177 = vsmask.f32 5376
      %v178 = vrot.slane %v159, 2
      %v179 = vrot.slane %v161, 3
      %v180 = vor.u32 %v178, %v179
      %v181 = vrot.slane %v170, 2
      %v182 = vrot.slane %v166, 3
      %v183 = vor.u32 %v181, %v182
      %v184 = vsel %vm177, %v180, %v183
      %v186 = vunpack.c.l.b16 %v148
      %v187 = vpack.c.b16 %v186, %v154
      %vm188 = vcmask 1044480
      %v189 = vrot.slane %v155, 3
      %v190 = vrot.slane %v187, 3
      %v191 = vsel %vm188, %v189, %v190
      %192 = vrot.lane.b32.xlu0 %v191, 64
      %v193 = vpop.permute.xlu0 %192
      %194 = vrot.lane.b32.xlu0 %v190, 64
      %v195 = vpop.permute.xlu0 %194
      %vm196 = vcmask 523264
      %v198 = vsel %vm196, %v155, %v174
      %v201 = vsel %vm196, %v156, %v176
      %v205 = vsel %vm196, %v184, %v193
      %v209 = vsel %vm196, %v183, %v195
      %v211 = vld [vmem:[%s1] sm:$0xf]
      %v212 = vld [vmem:[%s1 + $0x4] sm:$0xf]
      %v213 = vld [vmem:[%s1 + $0x8] sm:$0xf]
      %v214 = vld [vmem:[%s1 + $0xc] sm:$0xf]
      %v215 = vld [vmem:[%s1 + $0x10] sm:$0xf]
      %v216 = vld [vmem:[%s1 + $0x14] sm:$0xf]
      %v217 = vld [vmem:[%s1 + $0x18] sm:$0xf]
      %v218 = vld [vmem:[%s1 + $0x1c] sm:$0xf]
      %v219 = vld [vmem:[%s1 + $0x20] sm:$0xf]
      %v220 = vld [vmem:[%s1 + $0x24] sm:$0xf]
      %v221 = vld [vmem:[%s1 + $0x28] sm:$0xf]
      %v222 = vld [vmem:[%s1 + $0x2c] sm:$0xf]
      %v223 = vld [vmem:[%s1 + $0x30] sm:$0xf]
      %v224 = vld [vmem:[%s1 + $0x34] sm:$0xf]
      %v225 = vld [vmem:[%s1 + $0x38] sm:$0xf]
      %v226 = vld [vmem:[%s1 + $0x3c] sm:$0xf]
      %v227 = vld [vmem:[%s1 + $0x40] sm:$0xf]
      %v228 = vld [vmem:[%s1 + $0x44] sm:$0xf]
      %v229 = vld [vmem:[%s1 + $0x48] sm:$0xf]
      %v230 = vld [vmem:[%s1 + $0x4c] sm:$0xf]
      %v231 = vld [vmem:[%s1 + $0x50] sm:$0xf]
      %v232 = vld [vmem:[%s1 + $0x54] sm:$0xf]
      %v233 = vld [vmem:[%s1 + $0x58] sm:$0xf]
      %v234 = vld [vmem:[%s1 + $0x5c] sm:$0xf]
      %v235 = vld [vmem:[%s1 + $0x60] sm:$0xf]
      %v236 = vld [vmem:[%s1 + $0x64] sm:$0xf]
      %v237 = vld [vmem:[%s1 + $0x68] sm:$0xf]
      %v238 = vld [vmem:[%s1 + $0x6c] sm:$0xf]
      %v239 = vld [vmem:[%s1 + $0x70] sm:$0xf]
      %v240 = vld [vmem:[%s1 + $0x74] sm:$0xf]
      %v241 = vld [vmem:[%s1 + $0x78] sm:$0xf]
      %v242 = vld [vmem:[%s1 + $0x7c] sm:$0xf]
      %v275 = vunpack.c.l.b16 %v211
      %v276 = vunpack.c.l.b16 %v212
      %v277 = vunpack.c.l.b16 %v213
      %v278 = vunpack.c.l.b16 %v214
      %v279 = vunpack.c.l.b16 %v215
      %v280 = vunpack.c.l.b16 %v216
      %v281 = vunpack.c.l.b16 %v217
      %v282 = vunpack.c.l.b16 %v218
      %v283 = vunpack.c.l.b16 %v219
      %v284 = vunpack.c.l.b16 %v220
      %v285 = vunpack.c.l.b16 %v221
      %v286 = vunpack.c.l.b16 %v222
      %v287 = vunpack.c.l.b16 %v223
      %v288 = vunpack.c.l.b16 %v224
      %v289 = vunpack.c.l.b16 %v225
      %v290 = vunpack.c.l.b16 %v226
      %v291 = vunpack.c.l.b16 %v227
      %v292 = vunpack.c.l.b16 %v228
      %v293 = vunpack.c.l.b16 %v229
      %v294 = vunpack.c.l.b16 %v230
      %v295 = vunpack.c.l.b16 %v231
      %v296 = vunpack.c.l.b16 %v232
      %v297 = vunpack.c.l.b16 %v233
      %v298 = vunpack.c.l.b16 %v234
      %v299 = vunpack.c.l.b16 %v235
      %v300 = vunpack.c.l.b16 %v236
      %v301 = vunpack.c.l.b16 %v237
      %v302 = vunpack.c.l.b16 %v238
      %v303 = vunpack.c.l.b16 %v239
      %v304 = vunpack.c.l.b16 %v240
      %v305 = vunpack.c.l.b16 %v241
      %v306 = vunpack.c.l.b16 %v242
      %v307 = vpack.c.b16 %v276, %v275
      %v308 = vpack.c.b16 %v278, %v277
      %v309 = vpack.c.b16 %v280, %v279
      %v310 = vpack.c.b16 %v282, %v281
      %v311 = vpack.c.b16 %v284, %v283
      %v312 = vpack.c.b16 %v286, %v285
      %v313 = vpack.c.b16 %v288, %v287
      %v314 = vpack.c.b16 %v290, %v289
      %v315 = vpack.c.b16 %v292, %v291
      %v316 = vpack.c.b16 %v294, %v293
      %v317 = vpack.c.b16 %v296, %v295
      %v318 = vpack.c.b16 %v298, %v297
      %v319 = vpack.c.b16 %v300, %v299
      %v320 = vpack.c.b16 %v302, %v301
      %v321 = vpack.c.b16 %v304, %v303
      %v322 = vpack.c.b16 %v306, %v305
      %339 = vmatprep.subr.bf16.mxu0 0
      %340 = vmatpush1.bf16.msra.mxu0 %v307
      %341 = vmatprep.subr.bf16.mxu0 0
      %342 = vmatpush1.bf16.msra.mxu0 %v308
      %343 = vmatprep.subr.bf16.mxu0 0
      %344 = vmatpush1.bf16.msra.mxu0 %v309
      %345 = vmatprep.subr.bf16.mxu0 0
      %346 = vmatpush1.bf16.msra.mxu0 %v310
      %347 = vmatprep.subr.bf16.mxu0 0
      %348 = vmatpush1.bf16.msra.mxu0 %v311
      %349 = vmatprep.subr.bf16.mxu0 0
      %350 = vmatpush1.bf16.msra.mxu0 %v312
      %351 = vmatprep.subr.bf16.mxu0 0
      %352 = vmatpush1.bf16.msra.mxu0 %v313
      %353 = vmatprep.subr.bf16.mxu0 0
      %354 = vmatpush1.bf16.msra.mxu0 %v314
      %355 = vmatprep.subr.bf16.mxu0 0
      %356 = vmatpush1.bf16.msra.mxu0 %v315
      %357 = vmatprep.subr.bf16.mxu0 0
      %358 = vmatpush1.bf16.msra.mxu0 %v316
      %359 = vmatprep.subr.bf16.mxu0 0
      %360 = vmatpush1.bf16.msra.mxu0 %v317
      %361 = vmatprep.subr.bf16.mxu0 0
      %362 = vmatpush1.bf16.msra.mxu0 %v318
      %363 = vmatprep.subr.bf16.mxu0 0
      %364 = vmatpush1.bf16.msra.mxu0 %v319
      %365 = vmatprep.subr.bf16.mxu0 0
      %366 = vmatpush1.bf16.msra.mxu0 %v320
      %367 = vmatprep.subr.bf16.mxu0 0
      %368 = vmatpush1.bf16.msra.mxu0 %v321
      %369 = vmatprep.subr.bf16.mxu0 0
      %370 = vmatpush1.bf16.msra.mxu0 %v322
      %371 = vmatprep.mubr.bf16.mxu0 %v205
      %372 = vmatmul.mubr.bf16.gmra.mrb[0].mxu0 %v198
      %v373 = vpop.f32.mrb[0].mxu0
      %v374 = vadd.f32 0.0, %v373
      %v375 = vpop.f32.mrb[0].mxu0
      %v376 = vpop.f32.mrb[0].mxu0
      %v377 = vadd.f32 0.0, %v376
      %v378 = vpop.f32.mrb[0].mxu0
      %379 = vmatprep.mubr.bf16.mxu0 %v209
      %380 = vmatmul.mubr.bf16.gmra.mrb[0].mxu0 %v201
      %v381 = vpop.f32.mrb[0].mxu0
      %v382 = vadd.f32 0.0, %v381
      %v383 = vpop.f32.mrb[0].mxu0
      %v384 = vpop.f32.mrb[0].mxu0
      %v385 = vpop.f32.mrb[0].mxu0
      %386 = vdwg.mxu0
      %v387 = vlaneseq
      %v388 = vshrl.u32 %v387, 7
      %v389 = vadd.s32 %v388, 8
      %v390 = vadd.s32 %v388, 16
      %vm391 = vcmp.lt.s32.totalorder %v388, 0
      %v392 = vsub.s32 0, %v388
      %v393 = vsel %vm391, %v392, %v388
      %v394 = vmul.u32.u64.compose %v393, 3435973837
      %v395 = vextract.low.u32 %v394
      %v396 = vextract.high.u32 %v394
      %v397 = vshrl.u32 %v396, 2
      %v398 = vmul.u32 %v397, 5
      %v399 = vsub.s32 %v393, %v398
      %v400 = vsub.s32 0, %v399
      %v401 = vsel %vm391, %v400, %v399
      %vm402 = vcmp.lt.s32.totalorder %v389, 0
      %v403 = vsub.s32 0, %v389
      %v404 = vsel %vm402, %v403, %v389
      %v405 = vmul.u32.u64.compose %v404, 3435973837
      %v406 = vextract.low.u32 %v405
      %v407 = vextract.high.u32 %v405
      %v408 = vshrl.u32 %v407, 2
      %v409 = vmul.u32 %v408, 5
      %v410 = vsub.s32 %v404, %v409
      %v411 = vsub.s32 0, %v410
      %v412 = vsel %vm402, %v411, %v410
      %vm413 = vcmp.lt.s32.totalorder %v390, 0
      %v414 = vsub.s32 0, %v390
      %v415 = vsel %vm413, %v414, %v390
      %v416 = vmul.u32.u64.compose %v415, 3435973837
      %v417 = vextract.low.u32 %v416
      %v418 = vextract.high.u32 %v416
      %v419 = vshrl.u32 %v418, 2
      %v420 = vmul.u32 %v419, 5
      %v421 = vsub.s32 %v415, %v420
      %v422 = vsub.s32 0, %v421
      %v423 = vsel %vm413, %v422, %v421
      %vm424 = vcmp.ne.s32.totalorder %v401, 0
      %vm425 = vcmp.ne.s32.totalorder %v412, 0
      %vm426 = vcmp.ne.s32.totalorder %v423, 0
      %vm427 = vcmp.lt.s32.totalorder %v401, 0
      %vm428 = vcmp.lt.s32.totalorder %v412, 0
      %vm429 = vcmp.lt.s32.totalorder %v423, 0
      %vm430 = vmand %vm427, %vm424
      %vm431 = vmand %vm428, %vm425
      %vm432 = vmand %vm429, %vm426
      %v433 = vadd.s32 %v401, 5
      %v434 = vadd.s32 %v412, 5
      %v435 = vadd.s32 %v423, 5
      %v436 = vsel %vm430, %v433, %v401
      %v437 = vsel %vm431, %v434, %v412
      %v438 = vsel %vm432, %v435, %v423
      %vm439 = vcmp.lt.s32.totalorder %v436, 4
      %vm440 = vcmp.lt.s32.totalorder %v437, 4
      %vm441 = vcmp.lt.s32.totalorder %v438, 4
      %v442 = vsel %vm439, 1, 0
      %v443 = vsel %vm440, 1, 0
      %v444 = vsel %vm441, 1, 0
      %v445 = vcvt.s32.f32 %v442
      %v446 = vcvt.s32.f32 %v443
      %v447 = vcvt.s32.f32 %v444
      %v448 = vmul.f32 %v374, %v445
      %v449 = vmul.f32 %v377, %v446
      %v450 = vmul.f32 %v382, %v447
      %vm451 = vcmask 261120
      %v452 = vsel %vm451, %v448, 0.0
      %v453 = vsel %vm451, %v449, 0.0
      %v454 = vadd.f32 %v452, %v453
      %vm455 = vcmask 256000
      %v456 = vsel %vm455, %v450, 0.0
      %v457 = vadd.f32 %v454, %v456
      %v458 = vrot.slane %v457, 4
      %v459 = vadd.f32 %v457, %v458
      %v460 = vrot.slane %v459, 2
      %v461 = vadd.f32 %v459, %v460
      %v462 = vrot.slane %v461, 1
      %v463 = vadd.f32 %v461, %v462
      %v464 = vmul.f32 %v463, 0.0625
      %v465 = vmul.f32 %v448, %v374
      %v466 = vmul.f32 %v449, %v377
      %v467 = vmul.f32 %v450, %v382
      %v468 = vsel %vm451, %v465, 0.0
      %v469 = vsel %vm451, %v466, 0.0
      %v470 = vadd.f32 %v468, %v469
      %v471 = vsel %vm455, %v467, 0.0
      %v472 = vadd.f32 %v470, %v471
      %v473 = vrot.slane %v472, 4
      %v474 = vadd.f32 %v472, %v473
      %v475 = vrot.slane %v474, 2
      %v476 = vadd.f32 %v474, %v475
      %v477 = vrot.slane %v476, 1
      %v478 = vadd.f32 %v476, %v477
      %v479 = vmul.f32 %v478, 0.0625
      %v480 = vmul.f32 %v464, %v464
      %v481 = vsub.f32 %v479, %v480
      %v482 = vmax.f32 %v481, 0.0
      %v483 = vsub.f32 %v374, %v464
      %v484 = vsub.f32 %v377, %v464
      %v485 = vsub.f32 %v382, %v464
      %v486 = vadd.f32 %v482, 1e-05
      %v487 = vrsqrt.pop %v486
      %v488 = vmul.f32 %v483, %v487
      %v489 = vmul.f32 %v484, %v487
      %v490 = vmul.f32 %v485, %v487
      %v491 = vmax.f32 %v488, 0.0
      %v492 = vmax.f32 %v489, 0.0
      %v493 = vmax.f32 %v490, 0.0
      %v494 = vpack.c.bf16 %v492, %v491
      %v495 = vpack.c.bf16 %v493, %v493
      %v498 = vunpack.c.l.b16 %v494
      %v499 = vunpack.c.h.b16 %v494
      %v500 = vunpack.c.l.b16 %v495
      %v501 = vpack.c.b16 %v498, %v498
      %v502 = vpack.c.b16 %v499, %v499
      %v503 = vpack.c.b16 %v500, %v500
      %vm507 = vcmask 257024
      %508 = vst.msk [vmem:[%s143] sm:$0xf] %vm507, %v501
      %509 = vst.msk [vmem:[%s143 + $0x4] sm:$0xf] %vm507, %v502
      %vm510 = vcmask 254976
      %vm511 = vsmask.f32 1280
      %vm512 = vmand %vm510, %vm511
      %v513 = vld [vmem:[%s143 + $0x8] sm:$0x3]
      %v514 = vsel %vm512, %v503, %v513
      %515 = vst [vmem:[%s143 + $0x8] sm:$0x3] %v514
      %p516 = scmp.lt.s32.totalorder %s13, 1
      %s517 = scalar_select %p516, %s13, 1
      %s518 = smul.addr %s517, 3
      %s519 = smul.addr %s518, 4
      %s520 = scalar_lea.vmem %s2, %s519
      // Predicated region
      $region29: #{hdr_resnet_encoder_clear.8} parent=27 // pred_check
        %p521 = pneg %p78
      $region30: #{hdr_resnet_encoder_clear.8} parent=27 // pred_check_branch
        %523 = sbr.rel (%p521) target = $region32
      $region31: #{hdr_resnet_encoder_clear.8} parent=27 // pred_region
        _
      $region32: #{hdr_resnet_encoder_clear.8} parent=27 // pred_fallthru
        _
    $region28: #{hdr_resnet_encoder_clear.8} parent=5 // pred_fallthru
      _
    %p524 = scmp.le.s32.totalorder 2, %s8
    // Predicated region
    $region33: #{hdr_resnet_encoder_clear.8} parent=5 // pred_check
      %p525 = pneg %p524
    $region34: #{hdr_resnet_encoder_clear.8} parent=5 // pred_check_branch
      %527 = sbr.rel (%p525) target = $region36
    $region35: #{hdr_resnet_encoder_clear.8} parent=5 // pred_region
      %s528 = ssub.s32 %s8, 2
      // Predicated region
      $region37: #{hdr_resnet_encoder_clear.8} parent=35 // pred_check
        %p529 = pneg %p84
      $region38: #{hdr_resnet_encoder_clear.8} parent=35 // pred_check_branch
        %531 = sbr.rel (%p529) target = $region40
      $region39: #{hdr_resnet_encoder_clear.8} parent=35 // pred_region
        %p532 = scmp.lt.s32.totalorder %s14, 1
        %s533 = scalar_select %p532, %s14, 1
        %s534 = smul.addr %s533, 3
        %s535 = smul.addr %s534, 4
        %s536 = scalar_lea.vmem %s2, %s535
      $region40: #{hdr_resnet_encoder_clear.8} parent=35 // pred_fallthru
        _
    $region36: #{hdr_resnet_encoder_clear.8} parent=5 // pred_fallthru
      _
  $region6: #{hdr_resnet_encoder_clear.8} parent=0 // loop_footer
    %s12 = sadd.s32 1, %s8
  $region7: #{hdr_resnet_encoder_clear.8} parent=0 // loop_footer_branch
    %7 = sbr.rel target = $region3
  $region8: #{hdr_resnet_encoder_clear.8} parent=0 // loop_exit
    _

// kernel: hdr_resnet_encoder_clear.9
$region0: #{hdr_resnet_encoder_clear.9}
  #allocation0 [shape = 'u32[]', space=smem, size = 0x4, offset = 0x4, fixed_abs, tag = 'smem constant byte address 0x4 - core index']
  #allocation1 [shape = 'u32[144,128]{1,0:T(1,128)}', space=vmem, size = 0x12000, scoped, tag = 'internal scratch']
  #allocation2 [shape = 'bf16[36,32]{1,0:T(8,128)(2,1)}', space=vmem, size = 0x2800, scoped, tag = 'scratch operand']
  %s0 = inlined_call_operand.vmem [shape: bf16[2,36,32], index: 0, kind: input, shape index: {}]
  %s1 = inlined_call_operand.vmem [shape: bf16[288,32], index: 1, kind: input, shape index: {}]
  %s2 = inlined_call_operand.vmem [shape: bf16[288,32], index: 2, kind: input, shape index: {}]
  %s3 = inlined_call_operand.vmem [shape: bf16[2,22,32], index: 3, kind: output, shape index: {}]
  %s4 = sld [smem:[#allocation0]]
  $region45: #{hdr_resnet_encoder_clear.9} parent=0
    _
  %s6 = ssub.s32 1, %s4
  %s7 = scalar_select 0, %s6, %s4
  loop: start=0, step=1, limit=4
  $region2: #{hdr_resnet_encoder_clear.9} parent=0 // loop_pre_header
    _
  $region3: #{hdr_resnet_encoder_clear.9} parent=0 // loop_header
    %s9 = sphi 0, %s13
    %p10 = scmp.ge.s32.totalorder %s9, 4
    %s19 = sphi 0, %s21
    %s22 = sphi 0, %s19
    %s23 = sphi 0, %s22
    %s39 = sphi 0, %s23
    %s43 = sphi 0, %s43
    %s45 = sphi 0, %s43
    %s46 = sphi 0, %s45
    %s60 = sphi 0, %s46
    %s64 = sphi 0, %s64
    %s66 = sphi 0, %s64
    %s67 = sphi 0, %s66
    %s81 = sphi 0, %s67
    %s87 = sphi 0, %s89
    %s90 = sphi 0, %s87
    %s91 = sphi 0, %s90
    %s107 = sphi 0, %s91
  $region4: #{hdr_resnet_encoder_clear.9} parent=0 // loop_header_branch
    %12 = sbr.rel (%p10) target = $region8
  $region5: #{hdr_resnet_encoder_clear.9} parent=0 // loop_body
    %s14 = ssub.s32 %s9, 1
    %s15 = ssub.s32 %s9, 2
    %s16 = sadd.s32 %s9, 1
    %s17 = ssub.s32 %s9, %s16
    %p18 = scmp.eq.s32.totalorder %s17, 0
    %s20 = sadd.s32 %s19, 1
    %s21 = scalar_select %p18, %s19, %s20
    %p24 = pneg %p18
    %p25 = scmp.eq.s32.totalorder %s9, 1
    %p26 = por %p24, %p25
    %p27 = scmp.ne.s32.totalorder %s19, %s22
    %p28 = scmp.eq.s32.totalorder %s9, 0
    %p29 = por %p27, %p28
    %p30 = scmp.ne.s32.totalorder %s19, %s22
    %p31 = scmp.eq.s32.totalorder %s14, 1
    %p32 = por %p30, %p31
    %p33 = scmp.ne.s32.totalorder %s22, %s23
    %p34 = scmp.eq.s32.totalorder %s14, 0
    %p35 = por %p33, %p34
    %p36 = scmp.ne.s32.totalorder %s22, %s23
    %p37 = scmp.eq.s32.totalorder %s15, 1
    %p38 = por %p36, %p37
    %p40 = scmp.ne.s32.totalorder %s23, %s39
    %p41 = scmp.eq.s32.totalorder %s15, 0
    %p42 = por %p40, %p41
    %s44 = sadd.s32 %s43, 1
    %p47 = scmp.eq.s32.totalorder %s9, 1
    %p48 = scmp.ne.s32.totalorder %s43, %s45
    %p49 = scmp.eq.s32.totalorder %s9, 0
    %p50 = por %p48, %p49
    %p51 = scmp.ne.s32.totalorder %s43, %s45
    %p52 = scmp.eq.s32.totalorder %s14, 1
    %p53 = por %p51, %p52
    %p54 = scmp.ne.s32.totalorder %s45, %s46
    %p55 = scmp.eq.s32.totalorder %s14, 0
    %p56 = por %p54, %p55
    %p57 = scmp.ne.s32.totalorder %s45, %s46
    %p58 = scmp.eq.s32.totalorder %s15, 1
    %p59 = por %p57, %p58
    %p61 = scmp.ne.s32.totalorder %s46, %s60
    %p62 = scmp.eq.s32.totalorder %s15, 0
    %p63 = por %p61, %p62
    %s65 = sadd.s32 %s64, 1
    %p68 = scmp.eq.s32.totalorder %s9, 1
    %p69 = scmp.ne.s32.totalorder %s64, %s66
    %p70 = scmp.eq.s32.totalorder %s9, 0
    %p71 = por %p69, %p70
    %p72 = scmp.ne.s32.totalorder %s64, %s66
    %p73 = scmp.eq.s32.totalorder %s14, 1
    %p74 = por %p72, %p73
    %p75 = scmp.ne.s32.totalorder %s66, %s67
    %p76 = scmp.eq.s32.totalorder %s14, 0
    %p77 = por %p75, %p76
    %p78 = scmp.ne.s32.totalorder %s66, %s67
    %p79 = scmp.eq.s32.totalorder %s15, 1
    %p80 = por %p78, %p79
    %p82 = scmp.ne.s32.totalorder %s67, %s81
    %p83 = scmp.eq.s32.totalorder %s15, 0
    %p84 = por %p82, %p83
    %s85 = ssub.s32 %s9, %s16
    %p86 = scmp.eq.s32.totalorder %s85, 0
    %s88 = sadd.s32 %s87, 1
    %s89 = scalar_select %p86, %s87, %s88
    %p92 = pneg %p86
    %p93 = scmp.eq.s32.totalorder %s9, 1
    %p94 = por %p92, %p93
    %p95 = scmp.ne.s32.totalorder %s87, %s90
    %p96 = scmp.eq.s32.totalorder %s9, 0
    %p97 = por %p95, %p96
    %p98 = scmp.ne.s32.totalorder %s87, %s90
    %p99 = scmp.eq.s32.totalorder %s14, 1
    %p100 = por %p98, %p99
    %p101 = scmp.ne.s32.totalorder %s90, %s91
    %p102 = scmp.eq.s32.totalorder %s14, 0
    %p103 = por %p101, %p102
    %p104 = scmp.ne.s32.totalorder %s90, %s91
    %p105 = scmp.eq.s32.totalorder %s15, 1
    %p106 = por %p104, %p105
    %p108 = scmp.ne.s32.totalorder %s91, %s107
    %p109 = scmp.eq.s32.totalorder %s15, 0
    %p110 = por %p108, %p109
    %p111 = scmp.le.s32.totalorder 1, %s9
    %p112 = scmp.lt.s32.totalorder %s9, 3
    %p113 = pnand %p111, %p112
    %p114 = pneg %p113
    // Predicated region
    $region9: #{hdr_resnet_encoder_clear.9} parent=5 // pred_check
      _
    $region10: #{hdr_resnet_encoder_clear.9} parent=5 // pred_check_branch
      %116 = sbr.rel (%p113) target = $region12
    $region11: #{hdr_resnet_encoder_clear.9} parent=5 // pred_region
      %s117 = ssub.s32 %s9, 1
      // Predicated region
      $region13: #{hdr_resnet_encoder_clear.9} parent=11 // pred_check
        %p118 = pneg %p56
      $region14: #{hdr_resnet_encoder_clear.9} parent=11 // pred_check_branch
        %120 = sbr.rel (%p118) target = $region16
      $region15: #{hdr_resnet_encoder_clear.9} parent=11 // pred_region
        _
      $region16: #{hdr_resnet_encoder_clear.9} parent=11 // pred_fallthru
        _
      // Predicated region
      $region17: #{hdr_resnet_encoder_clear.9} parent=11 // pred_check
        %p121 = pneg %p77
      $region18: #{hdr_resnet_encoder_clear.9} parent=11 // pred_check_branch
        %123 = sbr.rel (%p121) target = $region20
      $region19: #{hdr_resnet_encoder_clear.9} parent=11 // pred_region
        _
      $region20: #{hdr_resnet_encoder_clear.9} parent=11 // pred_fallthru
        _
    $region12: #{hdr_resnet_encoder_clear.9} parent=5 // pred_fallthru
      _
    %p124 = scmp.lt.s32.totalorder %s9, 2
    // Predicated region
    $region21: #{hdr_resnet_encoder_clear.9} parent=5 // pred_check
      %p125 = pneg %p124
    $region22: #{hdr_resnet_encoder_clear.9} parent=5 // pred_check_branch
      %127 = sbr.rel (%p125) target = $region24
    $region23: #{hdr_resnet_encoder_clear.9} parent=5 // pred_region
      // Predicated region
      $region25: #{hdr_resnet_encoder_clear.9} parent=23 // pred_check
        %p128 = pneg %p29
      $region26: #{hdr_resnet_encoder_clear.9} parent=23 // pred_check_branch
        %130 = sbr.rel (%p128) target = $region28
      $region27: #{hdr_resnet_encoder_clear.9} parent=23 // pred_region
        %p131 = scmp.lt.s32.totalorder %s9, 1
        %s132 = scalar_select %p131, %s9, 1
        %s133 = smul.addr %s132, 5
        %s134 = smul.addr %s133, 4
        %s135 = scalar_lea.vmem %s0, %s134
      $region28: #{hdr_resnet_encoder_clear.9} parent=23 // pred_fallthru
        _
    $region24: #{hdr_resnet_encoder_clear.9} parent=5 // pred_fallthru
      _
    %p136 = scmp.le.s32.totalorder 1, %s9
    %p137 = scmp.lt.s32.totalorder %s9, 3
    %p138 = pnand %p136, %p137
    %p139 = pneg %p138
    // Predicated region
    $region29: #{hdr_resnet_encoder_clear.9} parent=5 // pred_check
      _
    $region30: #{hdr_resnet_encoder_clear.9} parent=5 // pred_check_branch
      %141 = sbr.rel (%p138) target = $region32
    $region31: #{hdr_resnet_encoder_clear.9} parent=5 // pred_region
      %s142 = ssub.s32 %s9, 1
      %p143 = scmp.lt.s32.totalorder %s14, 1
      %s144 = scalar_select %p143, %s14, 1
      %s145 = smul.addr %s144, 5
      %s146 = smul.addr %s145, 4
      %s147 = scalar_lea.vmem %s0, %s146
      %p148 = pneg %p35
      %p149 = pneg %p32
      %p150 = pneg %p56
      %p151 = pneg %p53
      %p152 = pneg %p77
      %p153 = pneg %p74
      %p154 = pneg %p103
      %p155 = pneg %p100
      %p156 = scmp.lt.s32.totalorder %s14, 1
      %s157 = scalar_select %p156, %s14, 1
      %s158 = smul.addr %s157, 3
      %s159 = smul.addr %s158, 4
      %s160 = scalar_lea.vmem %s3, %s159
      %p161 = scmp.lt.s32.totalorder %s14, 1
      %s162 = scalar_select %p161, %s14, 1
      %s163 = smul.addr %s162, 5
      %s164 = smul.addr %s163, 4
      %s165 = scalar_lea.vmem %s0, %s164
      %p166 = scmp.lt.s32.totalorder %s14, 1
      %s167 = scalar_select %p166, %s14, 1
      %s168 = smul.addr %s167, 3
      %s169 = smul.addr %s168, 4
      %s170 = scalar_lea.vmem %s3, %s169
      %v172 = vld [vmem:[%s165] sm:$0xf]
      %v173 = vld [vmem:[%s165 + $0x4] sm:$0xf]
      %v174 = vld [vmem:[%s165 + $0x8] sm:$0xf]
      %v175 = vld [vmem:[%s165 + $0xc] sm:$0xf]
      %v176 = vld [vmem:[%s165 + $0x10] sm:$0x3]
      %v177 = vlaneseq
      %v178 = vshrl.u32 %v177, 7
      %v179 = vadd.s32 %v178, 8
      %v180 = vadd.s32 %v178, 16
      %vm181 = vcmp.lt.s32.totalorder %v178, 0
      %v182 = vsub.s32 0, %v178
      %v183 = vsel %vm181, %v182, %v178
      %v184 = vmul.u32.u64.compose %v183, 2863311531
      %v185 = vextract.low.u32 %v184
      %v186 = vextract.high.u32 %v184
      %v187 = vshrl.u32 %v186, 2
      %v188 = vmul.u32 %v187, 6
      %v189 = vsub.s32 %v183, %v188
      %v190 = vsub.s32 0, %v189
      %v191 = vsel %vm181, %v190, %v189
      %vm192 = vcmp.lt.s32.totalorder %v179, 0
      %v193 = vsub.s32 0, %v179
      %v194 = vsel %vm192, %v193, %v179
      %v195 = vmul.u32.u64.compose %v194, 2863311531
      %v196 = vextract.low.u32 %v195
      %v197 = vextract.high.u32 %v195
      %v198 = vshrl.u32 %v197, 2
      %v199 = vmul.u32 %v198, 6
      %v200 = vsub.s32 %v194, %v199
      %v201 = vsub.s32 0, %v200
      %v202 = vsel %vm192, %v201, %v200
      %vm203 = vcmp.lt.s32.totalorder %v180, 0
      %v204 = vsub.s32 0, %v180
      %v205 = vsel %vm203, %v204, %v180
      %v206 = vmul.u32.u64.compose %v205, 2863311531
      %v207 = vextract.low.u32 %v206
      %v208 = vextract.high.u32 %v206
      %v209 = vshrl.u32 %v208, 2
      %v210 = vmul.u32 %v209, 6
      %v211 = vsub.s32 %v205, %v210
      %v212 = vsub.s32 0, %v211
      %v213 = vsel %vm203, %v212, %v211
      %vm214 = vcmp.ne.s32.totalorder %v191, 0
      %vm215 = vcmp.ne.s32.totalorder %v202, 0
      %vm216 = vcmp.ne.s32.totalorder %v213, 0
      %vm217 = vcmp.lt.s32.totalorder %v191, 0
      %vm218 = vcmp.lt.s32.totalorder %v202, 0
      %vm219 = vcmp.lt.s32.totalorder %v213, 0
      %vm220 = vmand %vm217, %vm214
      %vm221 = vmand %vm218, %vm215
      %vm222 = vmand %vm219, %vm216
      %v223 = vadd.s32 %v191, 6
      %v224 = vadd.s32 %v202, 6
      %v225 = vadd.s32 %v213, 6
      %v226 = vsel %vm220, %v223, %v191
      %v227 = vsel %vm221, %v224, %v202
      %v228 = vsel %vm222, %v225, %v213
      %vm229 = vcmp.lt.s32.totalorder %v226, 4
      %vm230 = vcmp.lt.s32.totalorder %v227, 4
      %vm231 = vcmp.lt.s32.totalorder %v228, 4
      %v232 = vsel %vm229, 1, 0
      %v233 = vsel %vm230, 1, 0
      %v234 = vsel %vm231, 1, 0
      %v235 = vcvt.s32.f32 %v232
      %v236 = vcvt.s32.f32 %v233
      %v237 = vcvt.s32.f32 %v234
      %v241 = vunpack.c.l.b16 %v172
      %v242 = vunpack.c.l.b16 %v173
      %v243 = vunpack.c.l.b16 %v174
      %v244 = vpack.c.b16 %v242, %v241
      %v245 = vpack.c.b16 %v243, %v243
      %vm246 = vsmask.f32 7424
      %v248 = vshrl.u32 %v244, 16
      %v250 = vshll.u32 %v244, 16
      %v252 = vrot.slane %v250, 1
      %v253 = vor.u32 %v248, %v252
      %v255 = vshll.u32 %v245, 16
      %v257 = vrot.slane %v255, 1
      %v258 = vsel %vm246, %v253, %v257
      %v259 = vshrl.u32 %v245, 16
      %v261 = vor.u32 %v259, %v257
      %262 = vrot.lane.b32.xlu0 %v258, 32
      %v263 = vpop.permute.xlu0 %262
      %264 = vrot.lane.b32.xlu0 %v261, 32
      %v265 = vpop.permute.xlu0 %264
      %vm266 = vcmask 1046528
      %v267 = vrot.slane %v244, 1
      %v268 = vrot.slane %v245, 1
      %v269 = vsel %vm266, %v267, %v268
      %270 = vrot.lane.b32.xlu0 %v269, 64
      %v271 = vpop.permute.xlu0 %270
      %272 = vrot.lane.b32.xlu0 %v268, 64
      %v273 = vpop.permute.xlu0 %272
      %v275 = vunpack.c.l.b16 %v175
      %v276 = vpack.c.b16 %v275, %v243
      %vm277 = vcmask 1044480
      %v278 = vrot.slane %v244, 3
      %v279 = vrot.slane %v276, 3
      %v280 = vsel %vm277, %v278, %v279
      %281 = vrot.lane.b32.xlu0 %v280, 96
      %v282 = vpop.permute.xlu0 %281
      %283 = vrot.lane.b32.xlu0 %v279, 96
      %v284 = vpop.permute.xlu0 %283
      %vm285 = vsmask.f32 4352
      %v286 = vrot.slane %v248, 3
      %v287 = vrot.slane %v250, 4
      %v288 = vor.u32 %v286, %v287
      %v290 = vshrl.u32 %v276, 16
      %v292 = vrot.slane %v290, 3
      %v293 = vshll.u32 %v276, 16
      %v295 = vrot.slane %v293, 4
      %v296 = vor.u32 %v292, %v295
      %v297 = vsel %vm285, %v288, %v296
      %v298 = vpack.c.b16 %v243, %v242
      %v299 = vpack.c.b16 %v275, %v275
      %300 = vrot.lane.b32.xlu0 %v298, 32
      %v301 = vpop.permute.xlu0 %300
      %302 = vrot.lane.b32.xlu0 %v299, 32
      %v303 = vpop.permute.xlu0 %302
      %v305 = vunpack.c.l.b16 %v176
      %v306 = vpack.c.b16 %v305, %v275
      %vm307 = vcmask 1045504
      %v308 = vrot.slane %v298, 2
      %v309 = vrot.slane %v306, 2
      %v310 = vsel %vm307, %v308, %v309
      %311 = vrot.lane.b32.xlu0 %v310, 64
      %v312 = vpop.permute.xlu0 %311
      %313 = vrot.lane.b32.xlu0 %v309, 64
      %v314 = vpop.permute.xlu0 %313
      %vm315 = vsmask.f32 5376
      %v317 = vshrl.u32 %v298, 16
      %v319 = vrot.slane %v317, 2
      %v320 = vshll.u32 %v298, 16
      %v322 = vrot.slane %v320, 3
      %v323 = vor.u32 %v319, %v322
      %v325 = vshrl.u32 %v306, 16
      %v327 = vrot.slane %v325, 2
      %v328 = vshll.u32 %v306, 16
      %v330 = vrot.slane %v328, 3
      %v331 = vor.u32 %v327, %v330
      %v332 = vsel %vm315, %v323, %v331
      %333 = vrot.lane.b32.xlu0 %v332, 96
      %v334 = vpop.permute.xlu0 %333
      %335 = vrot.lane.b32.xlu0 %v331, 96
      %v336 = vpop.permute.xlu0 %335
      %v337 = vrot.slane %v298, 3
      %v338 = vrot.slane %v306, 3
      %v339 = vsel %vm277, %v337, %v338
      %vm340 = vcmask 261120
      %v342 = vsel %vm340, %v244, %v263
      %v344 = vsel %vm340, %v245, %v265
      %vm345 = vcmask 523264
      %v347 = vsel %vm345, %v342, %v271
      %v349 = vsel %vm345, %v344, %v273
      %vm350 = vcmask 785408
      %v352 = vsel %vm350, %v347, %v282
      %v355 = vsel %vm350, %v349, %v284
      %v359 = vsel %vm340, %v297, %v301
      %v362 = vsel %vm340, %v296, %v303
      %v364 = vsel %vm345, %v359, %v312
      %v366 = vsel %vm345, %v362, %v314
      %v368 = vsel %vm350, %v364, %v334
      %v371 = vsel %vm350, %v366, %v336
      %v373 = vld [vmem:[%s1] sm:$0xf]
      %v374 = vld [vmem:[%s1 + $0x4] sm:$0xf]
      %v375 = vld [vmem:[%s1 + $0x8] sm:$0xf]
      %v376 = vld [vmem:[%s1 + $0xc] sm:$0xf]
      %v377 = vld [vmem:[%s1 + $0x10] sm:$0xf]
      %v378 = vld [vmem:[%s1 + $0x14] sm:$0xf]
      %v379 = vld [vmem:[%s1 + $0x18] sm:$0xf]
      %v380 = vld [vmem:[%s1 + $0x1c] sm:$0xf]
      %v381 = vld [vmem:[%s1 + $0x20] sm:$0xf]
      %v382 = vld [vmem:[%s1 + $0x24] sm:$0xf]
      %v383 = vld [vmem:[%s1 + $0x28] sm:$0xf]
      %v384 = vld [vmem:[%s1 + $0x2c] sm:$0xf]
      %v385 = vld [vmem:[%s1 + $0x30] sm:$0xf]
      %v386 = vld [vmem:[%s1 + $0x34] sm:$0xf]
      %v387 = vld [vmem:[%s1 + $0x38] sm:$0xf]
      %v388 = vld [vmem:[%s1 + $0x3c] sm:$0xf]
      %v389 = vld [vmem:[%s1 + $0x40] sm:$0xf]
      %v390 = vld [vmem:[%s1 + $0x44] sm:$0xf]
      %v391 = vld [vmem:[%s1 + $0x48] sm:$0xf]
      %v392 = vld [vmem:[%s1 + $0x4c] sm:$0xf]
      %v393 = vld [vmem:[%s1 + $0x50] sm:$0xf]
      %v394 = vld [vmem:[%s1 + $0x54] sm:$0xf]
      %v395 = vld [vmem:[%s1 + $0x58] sm:$0xf]
      %v396 = vld [vmem:[%s1 + $0x5c] sm:$0xf]
      %v397 = vld [vmem:[%s1 + $0x60] sm:$0xf]
      %v398 = vld [vmem:[%s1 + $0x64] sm:$0xf]
      %v399 = vld [vmem:[%s1 + $0x68] sm:$0xf]
      %v400 = vld [vmem:[%s1 + $0x6c] sm:$0xf]
      %v401 = vld [vmem:[%s1 + $0x70] sm:$0xf]
      %v402 = vld [vmem:[%s1 + $0x74] sm:$0xf]
      %v403 = vld [vmem:[%s1 + $0x78] sm:$0xf]
      %v404 = vld [vmem:[%s1 + $0x7c] sm:$0xf]
      %v405 = vld [vmem:[%s1 + $0x80] sm:$0xf]
      %v406 = vld [vmem:[%s1 + $0x84] sm:$0xf]
      %v407 = vld [vmem:[%s1 + $0x88] sm:$0xf]
      %v408 = vld [vmem:[%s1 + $0x8c] sm:$0xf]
      %v445 = vunpack.c.l.b16 %v373
      %v446 = vunpack.c.l.b16 %v374
      %v447 = vunpack.c.l.b16 %v375
      %v448 = vunpack.c.l.b16 %v376
      %v449 = vunpack.c.l.b16 %v377
      %v450 = vunpack.c.l.b16 %v378
      %v451 = vunpack.c.l.b16 %v379
      %v452 = vunpack.c.l.b16 %v380
      %v453 = vunpack.c.l.b16 %v381
      %v454 = vunpack.c.l.b16 %v382
      %v455 = vunpack.c.l.b16 %v383
      %v456 = vunpack.c.l.b16 %v384
      %v457 = vunpack.c.l.b16 %v385
      %v458 = vunpack.c.l.b16 %v386
      %v459 = vunpack.c.l.b16 %v387
      %v460 = vunpack.c.l.b16 %v388
      %v461 = vunpack.c.l.b16 %v389
      %v462 = vunpack.c.l.b16 %v390
      %v463 = vunpack.c.l.b16 %v391
      %v464 = vunpack.c.l.b16 %v392
      %v465 = vunpack.c.l.b16 %v393
      %v466 = vunpack.c.l.b16 %v394
      %v467 = vunpack.c.l.b16 %v395
      %v468 = vunpack.c.l.b16 %v396
      %v469 = vunpack.c.l.b16 %v397
      %v470 = vunpack.c.l.b16 %v398
      %v471 = vunpack.c.l.b16 %v399
      %v472 = vunpack.c.l.b16 %v400
      %v473 = vunpack.c.l.b16 %v401
      %v474 = vunpack.c.l.b16 %v402
      %v475 = vunpack.c.l.b16 %v403
      %v476 = vunpack.c.l.b16 %v404
      %v477 = vunpack.c.l.b16 %v405
      %v478 = vunpack.c.l.b16 %v406
      %v479 = vunpack.c.l.b16 %v407
      %v480 = vunpack.c.l.b16 %v408
      %v481 = vpack.c.b16 %v446, %v445
      %v482 = vpack.c.b16 %v448, %v447
      %v483 = vpack.c.b16 %v450, %v449
      %v484 = vpack.c.b16 %v452, %v451
      %v485 = vpack.c.b16 %v454, %v453
      %v486 = vpack.c.b16 %v456, %v455
      %v487 = vpack.c.b16 %v458, %v457
      %v488 = vpack.c.b16 %v460, %v459
      %v489 = vpack.c.b16 %v462, %v461
      %v490 = vpack.c.b16 %v464, %v463
      %v491 = vpack.c.b16 %v466, %v465
      %v492 = vpack.c.b16 %v468, %v467
      %v493 = vpack.c.b16 %v470, %v469
      %v494 = vpack.c.b16 %v472, %v471
      %v495 = vpack.c.b16 %v474, %v473
      %v496 = vpack.c.b16 %v476, %v475
      %v497 = vpack.c.b16 %v478, %v477
      %v498 = vpack.c.b16 %v480, %v479
      %v518 = vsel %vm340, %v339, 0
      %v521 = vsel %vm340, %v338, 0
      %523 = vmatprep.subr.bf16.mxu0 0
      %524 = vmatpush1.bf16.msra.mxu0 %v481
      %525 = vmatprep.subr.bf16.mxu0 0
      %526 = vmatpush1.bf16.msra.mxu0 %v482
      %527 = vmatprep.subr.bf16.mxu0 0
      %528 = vmatpush1.bf16.msra.mxu0 %v483
      %529 = vmatprep.subr.bf16.mxu0 0
      %530 = vmatpush1.bf16.msra.mxu0 %v484
      %531 = vmatprep.subr.bf16.mxu0 0
      %532 = vmatpush1.bf16.msra.mxu0 %v485
      %533 = vmatprep.subr.bf16.mxu0 0
      %534 = vmatpush1.bf16.msra.mxu0 %v486
      %535 = vmatprep.subr.bf16.mxu0 0
      %536 = vmatpush1.bf16.msra.mxu0 %v487
      %537 = vmatprep.subr.bf16.mxu0 0
      %538 = vmatpush1.bf16.msra.mxu0 %v488
      %539 = vmatprep.subr.bf16.mxu0 0
      %540 = vmatpush1.bf16.msra.mxu0 %v489
      %541 = vmatprep.subr.bf16.mxu0 0
      %542 = vmatpush1.bf16.msra.mxu0 %v490
      %543 = vmatprep.subr.bf16.mxu0 0
      %544 = vmatpush1.bf16.msra.mxu0 %v491
      %545 = vmatprep.subr.bf16.mxu0 0
      %546 = vmatpush1.bf16.msra.mxu0 %v492
      %547 = vmatprep.subr.bf16.mxu0 0
      %548 = vmatpush1.bf16.msra.mxu0 %v493
      %549 = vmatprep.subr.bf16.mxu0 0
      %550 = vmatpush1.bf16.msra.mxu0 %v494
      %551 = vmatprep.subr.bf16.mxu0 0
      %552 = vmatpush1.bf16.msra.mxu0 %v495
      %553 = vmatprep.subr.bf16.mxu0 0
      %554 = vmatpush1.bf16.msra.mxu0 %v496
      %555 = vmatprep.mubr.bf16.mxu0 %v368
      %556 = vmatmul.mubr.bf16.gmra.mrb[0].mxu0 %v352
      %v557 = vpop.f32.mrb[0].mxu0
      %v558 = vadd.f32 0.0, %v557
      %v559 = vpop.f32.mrb[0].mxu0
      %v560 = vpop.f32.mrb[0].mxu0
      %v561 = vadd.f32 0.0, %v560
      %v562 = vpop.f32.mrb[0].mxu0
      %563 = vmatprep.mubr.bf16.mxu0 %v371
      %564 = vmatmul.mubr.bf16.gmra.mrb[0].mxu0 %v355
      %v565 = vpop.f32.mrb[0].mxu0
      %v566 = vadd.f32 0.0, %v565
      %v567 = vpop.f32.mrb[0].mxu0
      %v568 = vpop.f32.mrb[0].mxu0
      %v569 = vpop.f32.mrb[0].mxu0
      %570 = vdwg.mxu0
      %571 = vmatprep.subr.bf16.mxu0 0
      %572 = vmatpush1.bf16.msra.mxu0 %v497
      %573 = vmatprep.subr.bf16.mxu0 0
      %574 = vmatpush1.bf16.msra.mxu0 %v498
      %575 = vmatprep.subr.bf16.mxu0 0
      %576 = vmatpush1.bf16.msra.mxu0 0
      %577 = vmatprep.subr.bf16.mxu0 0
      %578 = vmatpush1.bf16.msra.mxu0 0
      %579 = vmatprep.subr.bf16.mxu0 0
      %580 = vmatpush1.bf16.msra.mxu0 0
      %581 = vmatprep.subr.bf16.mxu0 0
      %582 = vmatpush1.bf16.msra.mxu0 0
      %583 = vmatprep.subr.bf16.mxu0 0
      %584 = vmatpush1.bf16.msra.mxu0 0
      %585 = vmatprep.subr.bf16.mxu0 0
      %586 = vmatpush1.bf16.msra.mxu0 0
      %587 = vmatprep.subr.bf16.mxu0 0
      %588 = vmatpush1.bf16.msra.mxu0 0
      %589 = vmatprep.subr.bf16.mxu0 0
      %590 = vmatpush1.bf16.msra.mxu0 0
      %591 = vmatprep.subr.bf16.mxu0 0
      %592 = vmatpush1.bf16.msra.mxu0 0
      %593 = vmatprep.subr.bf16.mxu0 0
      %594 = vmatpush1.bf16.msra.mxu0 0
      %595 = vmatprep.subr.bf16.mxu0 0
      %596 = vmatpush1.bf16.msra.mxu0 0
      %597 = vmatprep.subr.bf16.mxu0 0
      %598 = vmatpush1.bf16.msra.mxu0 0
      %599 = vmatprep.subr.bf16.mxu0 0
      %600 = vmatpush1.bf16.msra.mxu0 0
      %601 = vmatprep.subr.bf16.mxu0 0
      %602 = vmatpush1.bf16.msra.mxu0 0
      %603 = vmatprep.mubr.bf16.mxu0 0
      %604 = vmatmul.mubr.bf16.gmra.mrb[0].mxu0 %v518
      %v605 = vpop.f32.mrb[0].mxu0
      %v606 = vadd.f32 %v558, %v605
      %v607 = vpop.f32.mrb[0].mxu0
      %v608 = vpop.f32.mrb[0].mxu0
      %v609 = vadd.f32 %v561, %v608
      %v610 = vpop.f32.mrb[0].mxu0
      %611 = vmatprep.mubr.bf16.mxu0 0
      %612 = vmatmul.mubr.bf16.gmra.mrb[0].mxu0 %v521
      %v613 = vpop.f32.mrb[0].mxu0
      %v614 = vadd.f32 %v566, %v613
      %v615 = vpop.f32.mrb[0].mxu0
      %v616 = vpop.f32.mrb[0].mxu0
      %v617 = vpop.f32.mrb[0].mxu0
      %618 = vdwg.mxu0
      %v619 = vmul.f32 %v606, %v235
      %v620 = vmul.f32 %v609, %v236
      %v621 = vmul.f32 %v614, %v237
      %v622 = vsel %vm340, %v619, 0.0
      %v623 = vsel %vm340, %v620, 0.0
      %v624 = vadd.f32 %v622, %v623
      %vm625 = vcmask 259072
      %v626 = vsel %vm625, %v621, 0.0
      %v627 = vadd.f32 %v624, %v626
      %v628 = vrot.slane %v627, 4
      %v629 = vadd.f32 %v627, %v628
      %v630 = vrot.slane %v629, 2
      %v631 = vadd.f32 %v629, %v630
      %v632 = vrot.slane %v631, 1
      %v633 = vadd.f32 %v631, %v632
      %v634 = vmul.f32 %v633, 0.0625
      %v635 = vmul.f32 %v619, %v606
      %v636 = vmul.f32 %v620, %v609
      %v637 = vmul.f32 %v621, %v614
      %v638 = vsel %vm340, %v635, 0.0
      %v639 = vsel %vm340, %v636, 0.0
      %v640 = vadd.f32 %v638, %v639
      %v641 = vsel %vm625, %v637, 0.0
      %v642 = vadd.f32 %v640, %v641
      %v643 = vrot.slane %v642, 4
      %v644 = vadd.f32 %v642, %v643
      %v645 = vrot.slane %v644, 2
      %v646 = vadd.f32 %v644, %v645
      %v647 = vrot.slane %v646, 1
      %v648 = vadd.f32 %v646, %v647
      %v649 = vmul.f32 %v648, 0.0625
      %v650 = vmul.f32 %v634, %v634
      %v651 = vsub.f32 %v649, %v650
      %v652 = vmax.f32 %v651, 0.0
      %v653 = vsub.f32 %v606, %v634
      %v654 = vsub.f32 %v609, %v634
      %v655 = vsub.f32 %v614, %v634
      %v656 = vadd.f32 %v652, 1e-05
      %v657 = vrsqrt.pop %v656
      %v658 = vmul.f32 %v653, %v657
      %v659 = vmul.f32 %v654, %v657
      %v660 = vmul.f32 %v655, %v657
      %v661 = vmax.f32 %v658, 0.0
      %v662 = vmax.f32 %v659, 0.0
      %v663 = vmax.f32 %v660, 0.0
      %v664 = vpack.c.bf16 %v662, %v661
      %v665 = vpack.c.bf16 %v663, %v663
      %v668 = vunpack.c.l.b16 %v664
      %v669 = vunpack.c.h.b16 %v664
      %v670 = vunpack.c.l.b16 %v665
      %v671 = vpack.c.b16 %v668, %v668
      %v672 = vpack.c.b16 %v669, %v669
      %v673 = vpack.c.b16 %v670, %v670
      %vm674 = vsmask.f32 3328
      %vm675 = vsmask.f32 7440
      %vm676 = vmor %vm674, %vm675
      %v678 = vshll.u32 %v671, 16
      %v680 = vrot.slane %v678, 5
      %v681 = vshrl.u32 %v671, 16
      %v683 = vrot.slane %v681, 4
      %v684 = vor.u32 %v683, %v680
      %v685 = vrot.slane %v684, 4
      %v687 = vshll.u32 %v672, 16
      %v689 = vrot.slane %v687, 5
      %v690 = vsel %vm676, %v685, %v689
      %v691 = vshrl.u32 %v672, 16
      %v693 = vrot.slane %v691, 4
      %v694 = vor.u32 %v693, %v689
      %v695 = vrot.slane %v694, 4
      %v697 = vshll.u32 %v673, 16
      %v699 = vrot.slane %v697, 5
      %v700 = vsel %vm676, %v695, %v699
      %v701 = vshrl.u32 %v673, 16
      %v703 = vrot.slane %v701, 4
      %v704 = vor.u32 %v703, %v699
      %v705 = vrot.slane %v704, 4
      %vm710 = vcmask 257027
      %vm711 = vsmask.f32 7950
      %vm712 = vmand %vm710, %vm711
      %v713 = vld [vmem:[#allocation2] sm:$0x8]
      %v714 = vsel %vm712, %v680, %v713
      %715 = vst [vmem:[#allocation2] sm:$0x8] %v714
      %vm716 = vcmask 257024
      %717 = vst.msk [vmem:[#allocation2 + $0x4] sm:$0xf] %vm716, %v690
      %718 = vst.msk [vmem:[#allocation2 + $0x8] sm:$0xf] %vm716, %v700
      %vm719 = vcmask 256000
      %vm720 = vsmask.f32 2304
      %vm721 = vmand %vm719, %vm720
      %v722 = vld [vmem:[#allocation2 + $0xc] sm:$0x7]
      %v723 = vsel %vm721, %v705, %v722
      %724 = vst [vmem:[#allocation2 + $0xc] sm:$0x7] %v723
      %v725 = vld [vmem:[#allocation2 + $0x4] sm:$0x1]
      %v727 = vrot.slane %v725, 5
      %vm729 = vmand %vm710, %vm674
      %v730 = vld [vmem:[#allocation2] sm:$0x8]
      %v731 = vsel %vm729, %v727, %v730
      %732 = vst [vmem:[#allocation2] sm:$0x8] %v731
      %v733 = vld [vmem:[#allocation2 + $0x4] sm:$0x1]
      %v735 = vrot.slane %v733, 7
      %vm737 = vcmask 254977
      %vm738 = vsmask.f32 7942
      %vm739 = vmand %vm737, %vm738
      %v740 = vld [vmem:[#allocation2 + $0x4] sm:$0x2]
      %v741 = vsel %vm739, %v735, %v740
      %742 = vst [vmem:[#allocation2 + $0x4] sm:$0x2] %v741
      %v743 = vld [vmem:[#allocation2 + $0x4] sm:$0x8]
      %v745 = vrot.slane %v743, 5
      %v746 = vrot.slane %v745, 4
      %vm748 = vcmask 256002
      %vm749 = vmand %vm748, %vm720
      %v750 = vld [vmem:[#allocation2 + $0x4] sm:$0x4]
      %v751 = vsel %vm749, %v746, %v750
      %752 = vst [vmem:[#allocation2 + $0x4] sm:$0x4] %v751
      %v753 = vld [vmem:[#allocation2 + $0x4] sm:$0x8]
      %v755 = vrot.slane %v753, 7
      %v756 = vrot.slane %v755, 4
      %vm758 = vcmask 253952
      %vm759 = vsmask.f32 7938
      %vm760 = vmand %vm758, %vm759
      %v761 = vld [vmem:[#allocation2 + $0x8] sm:$0x1]
      %v762 = vsel %vm760, %v756, %v761
      %763 = vst [vmem:[#allocation2 + $0x8] sm:$0x1] %v762
      %v764 = vld [vmem:[#allocation2 + $0x8] sm:$0x4]
      %v766 = vrot.slane %v764, 5
      %v767 = vrot.slane %v766, 4
      %vm769 = vsmask.f32 1280
      %vm770 = vmand %vm737, %vm769
      %v771 = vld [vmem:[#allocation2 + $0x8] sm:$0x2]
      %v772 = vsel %vm770, %v767, %v771
      %773 = vst [vmem:[#allocation2 + $0x8] sm:$0x2] %v772
      %v774 = vld [vmem:[#allocation2 + $0x8] sm:$0x4]
      %v776 = vrot.slane %v774, 7
      %v778 = vld [vmem:[#allocation2 + $0x8] sm:$0x8]
      %v779 = vsel %vm712, %v776, %v778
      %780 = vst [vmem:[#allocation2 + $0x8] sm:$0x8] %v779
      %v781 = vld [vmem:[#allocation2 + $0xc] sm:$0x2]
      %v783 = vrot.slane %v781, 5
      %v784 = vrot.slane %v783, 4
      %vm786 = vsmask.f32 256
      %vm787 = vmand %vm758, %vm786
      %v788 = vld [vmem:[#allocation2 + $0xc] sm:$0x1]
      %v789 = vsel %vm787, %v784, %v788
      %790 = vst [vmem:[#allocation2 + $0xc] sm:$0x1] %v789
      %v791 = vld [vmem:[#allocation2 + $0xc] sm:$0x2]
      %v793 = vrot.slane %v791, 7
      %vm795 = vsmask.f32 7946
      %vm796 = vmand %vm748, %vm795
      %v797 = vld [vmem:[#allocation2 + $0xc] sm:$0x4]
      %v798 = vsel %vm796, %v793, %v797
      %799 = vst [vmem:[#allocation2 + $0xc] sm:$0x4] %v798
      %v800 = vld [vmem:[#allocation2 + $0x4] sm:$0xc]
      %v801 = vld [vmem:[#allocation2 + $0x8] sm:$0x1]
      %vm804 = vcmask 1041408
      %vm805 = vcmask 1045508
      %vm806 = vmor %vm804, %vm805
      %v807 = vrot.slane %v800, 6
      %v808 = vrot.slane %v807, 4
      %v809 = vrot.slane %v801, 6
      %v810 = vsel %vm806, %v808, %v809
      %vm812 = vcmask 256000
      %813 = vst.msk [vmem:[#allocation2] sm:$0x7] %vm812, %v810
      %v814 = vld [vmem:[#allocation2 + $0x8] sm:$0xe]
      %v816 = vrot.slane %v814, 6
      %v817 = vrot.slane %v816, 4
      %vm820 = vcmask 257027
      %821 = vst.msk [vmem:[#allocation2 + $0xc] sm:$0x8] %vm820, %v816
      %vm822 = vcmask 254976
      %823 = vst.msk [vmem:[#allocation2 + $0x10] sm:$0x3] %vm822, %v817
      %v824 = vld [vmem:[#allocation2] sm:$0xf]
      %v825 = vld [vmem:[#allocation2 + $0x4] sm:$0xf]
      %v826 = vld [vmem:[#allocation2 + $0x8] sm:$0x7]
      %v827 = vld [vmem:[#allocation2 + $0x8] sm:$0xf]
      %v828 = vld [vmem:[#allocation2] sm:$0xe]
      %v829 = vld [vmem:[#allocation2] sm:$0x8]
      %v830 = vld [vmem:[#allocation2 + $0xc] sm:$0x3]
      %v831 = vld [vmem:[#allocation2 + $0xc] sm:$0x7]
      %v832 = vld [vmem:[#allocation2 + $0x4] sm:$0xc]
      %v833 = vld [vmem:[#allocation2 + $0xc] sm:$0xf]
      %v834 = vld [vmem:[#allocation2 + $0x10] sm:$0x1]
      %v835 = vld [vmem:[#allocation2 + $0x10] sm:$0x3]
      %v836 = vld [vmem:[#allocation2 + $0x4] sm:$0x8]
      %v840 = vunpack.c.l.b16 %v824
      %v841 = vunpack.c.l.b16 %v825
      %v842 = vunpack.c.l.b16 %v826
      %v843 = vpack.c.b16 %v841, %v840
      %v844 = vpack.c.b16 %v842, %v842
      %v846 = vunpack.c.l.b16 %v827
      %v847 = vpack.c.b16 %v846, %v846
      %v849 = vshrl.u32 %v843, 16
      %v851 = vshll.u32 %v843, 16
      %v853 = vrot.slane %v851, 1
      %v854 = vor.u32 %v849, %v853
      %v856 = vshll.u32 %v847, 16
      %v858 = vrot.slane %v856, 1
      %v859 = vsel %vm246, %v854, %v858
      %v860 = vshrl.u32 %v847, 16
      %v862 = vor.u32 %v860, %v858
      %863 = vrot.lane.b32.xlu0 %v859, 32
      %v864 = vpop.permute.xlu0 %863
      %865 = vrot.lane.b32.xlu0 %v862, 32
      %v866 = vpop.permute.xlu0 %865
      %v868 = vunpack.c.l.b16 %v828
      %v869 = vpack.c.b16 %v841, %v868
      %v870 = vrot.slane %v869, 1
      %v871 = vrot.slane %v847, 1
      %v872 = vsel %vm266, %v870, %v871
      %873 = vrot.lane.b32.xlu0 %v872, 64
      %v874 = vpop.permute.xlu0 %873
      %875 = vrot.lane.b32.xlu0 %v871, 64
      %v876 = vpop.permute.xlu0 %875
      %v879 = vunpack.c.l.b16 %v829
      %v880 = vunpack.c.l.b16 %v830
      %v881 = vpack.c.b16 %v841, %v879
      %v882 = vpack.c.b16 %v880, %v846
      %v883 = vrot.slane %v881, 3
      %v884 = vrot.slane %v882, 3
      %v885 = vsel %vm277, %v883, %v884
      %886 = vrot.lane.b32.xlu0 %v885, 96
      %v887 = vpop.permute.xlu0 %886
      %888 = vrot.lane.b32.xlu0 %v884, 96
      %v889 = vpop.permute.xlu0 %888
      %v891 = vunpack.c.l.b16 %v831
      %v892 = vpack.c.b16 %v891, %v846
      %v894 = vshrl.u32 %v881, 16
      %v896 = vrot.slane %v894, 3
      %v897 = vshll.u32 %v881, 16
      %v899 = vrot.slane %v897, 4
      %v900 = vor.u32 %v896, %v899
      %v902 = vshrl.u32 %v892, 16
      %v904 = vrot.slane %v902, 3
      %v905 = vshll.u32 %v892, 16
      %v907 = vrot.slane %v905, 4
      %v908 = vor.u32 %v904, %v907
      %v909 = vsel %vm285, %v900, %v908
      %v910 = vpack.c.b16 %v846, %v841
      %v911 = vpack.c.b16 %v891, %v891
      %912 = vrot.lane.b32.xlu0 %v910, 32
      %v913 = vpop.permute.xlu0 %912
      %914 = vrot.lane.b32.xlu0 %v911, 32
      %v915 = vpop.permute.xlu0 %914
      %v919 = vunpack.c.l.b16 %v832
      %v920 = vunpack.c.l.b16 %v833
      %v921 = vunpack.c.l.b16 %v834
      %v922 = vpack.c.b16 %v846, %v919
      %v923 = vpack.c.b16 %v921, %v920
      %v924 = vrot.slane %v922, 2
      %v925 = vrot.slane %v923, 2
      %v926 = vsel %vm307, %v924, %v925
      %927 = vrot.lane.b32.xlu0 %v926, 64
      %v928 = vpop.permute.xlu0 %927
      %929 = vrot.lane.b32.xlu0 %v925, 64
      %v930 = vpop.permute.xlu0 %929
      %v932 = vunpack.c.l.b16 %v835
      %v933 = vpack.c.b16 %v932, %v920
      %v935 = vshrl.u32 %v922, 16
      %v937 = vrot.slane %v935, 2
      %v938 = vshll.u32 %v922, 16
      %v940 = vrot.slane %v938, 3
      %v941 = vor.u32 %v937, %v940
      %v943 = vshrl.u32 %v933, 16
      %v945 = vrot.slane %v943, 2
      %v946 = vshll.u32 %v933, 16
      %v948 = vrot.slane %v946, 3
      %v949 = vor.u32 %v945, %v948
      %v950 = vsel %vm315, %v941, %v949
      %951 = vrot.lane.b32.xlu0 %v950, 96
      %v952 = vpop.permute.xlu0 %951
      %953 = vrot.lane.b32.xlu0 %v949, 96
      %v954 = vpop.permute.xlu0 %953
      %v956 = vunpack.c.l.b16 %v836
      %v957 = vpack.c.b16 %v846, %v956
      %v958 = vrot.slane %v957, 3
      %v959 = vrot.slane %v933, 3
      %v960 = vsel %vm277, %v958, %v959
      %v962 = vsel %vm340, %v843, %v864
      %v965 = vsel %vm340, %v844, %v866
      %v967 = vsel %vm345, %v962, %v874
      %v969 = vsel %vm345, %v965, %v876
      %v971 = vsel %vm350, %v967, %v887
      %v974 = vsel %vm350, %v969, %v889
      %v978 = vsel %vm340, %v909, %v913
      %v981 = vsel %vm340, %v908, %v915
      %v983 = vsel %vm345, %v978, %v928
      %v985 = vsel %vm345, %v981, %v930
      %v987 = vsel %vm350, %v983, %v952
      %v990 = vsel %vm350, %v985, %v954
      %v992 = vld [vmem:[%s2] sm:$0xf]
      %v993 = vld [vmem:[%s2 + $0x4] sm:$0xf]
      %v994 = vld [vmem:[%s2 + $0x8] sm:$0xf]
      %v995 = vld [vmem:[%s2 + $0xc] sm:$0xf]
      %v996 = vld [vmem:[%s2 + $0x10] sm:$0xf]
      %v997 = vld [vmem:[%s2 + $0x14] sm:$0xf]
      %v998 = vld [vmem:[%s2 + $0x18] sm:$0xf]
      %v999 = vld [vmem:[%s2 + $0x1c] sm:$0xf]
      %v1000 = vld [vmem:[%s2 + $0x20] sm:$0xf]
      %v1001 = vld [vmem:[%s2 + $0x24] sm:$0xf]
      %v1002 = vld [vmem:[%s2 + $0x28] sm:$0xf]
      %v1003 = vld [vmem:[%s2 + $0x2c] sm:$0xf]
      %v1004 = vld [vmem:[%s2 + $0x30] sm:$0xf]
      %v1005 = vld [vmem:[%s2 + $0x34] sm:$0xf]
      %v1006 = vld [vmem:[%s2 + $0x38] sm:$0xf]
      %v1007 = vld [vmem:[%s2 + $0x3c] sm:$0xf]
      %v1008 = vld [vmem:[%s2 + $0x40] sm:$0xf]
      %v1009 = vld [vmem:[%s2 + $0x44] sm:$0xf]
      %v1010 = vld [vmem:[%s2 + $0x48] sm:$0xf]
      %v1011 = vld [vmem:[%s2 + $0x4c] sm:$0xf]
      %v1012 = vld [vmem:[%s2 + $0x50] sm:$0xf]
      %v1013 = vld [vmem:[%s2 + $0x54] sm:$0xf]
      %v1014 = vld [vmem:[%s2 + $0x58] sm:$0xf]
      %v1015 = vld [vmem:[%s2 + $0x5c] sm:$0xf]
      %v1016 = vld [vmem:[%s2 + $0x60] sm:$0xf]
      %v1017 = vld [vmem:[%s2 + $0x64] sm:$0xf]
      %v1018 = vld [vmem:[%s2 + $0x68] sm:$0xf]
      %v1019 = vld [vmem:[%s2 + $0x6c] sm:$0xf]
      %v1020 = vld [vmem:[%s2 + $0x70] sm:$0xf]
      %v1021 = vld [vmem:[%s2 + $0x74] sm:$0xf]
      %v1022 = vld [vmem:[%s2 + $0x78] sm:$0xf]
      %v1023 = vld [vmem:[%s2 + $0x7c] sm:$0xf]
      %v1024 = vld [vmem:[%s2 + $0x80] sm:$0xf]
      %v1025 = vld [vmem:[%s2 + $0x84] sm:$0xf]
      %v1026 = vld [vmem:[%s2 + $0x88] sm:$0xf]
      %v1027 = vld [vmem:[%s2 + $0x8c] sm:$0xf]
      %v1064 = vunpack.c.l.b16 %v992
      %v1065 = vunpack.c.l.b16 %v993
      %v1066 = vunpack.c.l.b16 %v994
      %v1067 = vunpack.c.l.b16 %v995
      %v1068 = vunpack.c.l.b16 %v996
      %v1069 = vunpack.c.l.b16 %v997
      %v1070 = vunpack.c.l.b16 %v998
      %v1071 = vunpack.c.l.b16 %v999
      %v1072 = vunpack.c.l.b16 %v1000
      %v1073 = vunpack.c.l.b16 %v1001
      %v1074 = vunpack.c.l.b16 %v1002
      %v1075 = vunpack.c.l.b16 %v1003
      %v1076 = vunpack.c.l.b16 %v1004
      %v1077 = vunpack.c.l.b16 %v1005
      %v1078 = vunpack.c.l.b16 %v1006
      %v1079 = vunpack.c.l.b16 %v1007
      %v1080 = vunpack.c.l.b16 %v1008
      %v1081 = vunpack.c.l.b16 %v1009
      %v1082 = vunpack.c.l.b16 %v1010
      %v1083 = vunpack.c.l.b16 %v1011
      %v1084 = vunpack.c.l.b16 %v1012
      %v1085 = vunpack.c.l.b16 %v1013
      %v1086 = vunpack.c.l.b16 %v1014
      %v1087 = vunpack.c.l.b16 %v1015
      %v1088 = vunpack.c.l.b16 %v1016
      %v1089 = vunpack.c.l.b16 %v1017
      %v1090 = vunpack.c.l.b16 %v1018
      %v1091 = vunpack.c.l.b16 %v1019
      %v1092 = vunpack.c.l.b16 %v1020
      %v1093 = vunpack.c.l.b16 %v1021
      %v1094 = vunpack.c.l.b16 %v1022
      %v1095 = vunpack.c.l.b16 %v1023
      %v1096 = vunpack.c.l.b16 %v1024
      %v1097 = vunpack.c.l.b16 %v1025
      %v1098 = vunpack.c.l.b16 %v1026
      %v1099 = vunpack.c.l.b16 %v1027
      %v1100 = vpack.c.b16 %v1065, %v1064
      %v1101 = vpack.c.b16 %v1067, %v1066
      %v1102 = vpack.c.b16 %v1069, %v1068
      %v1103 = vpack.c.b16 %v1071, %v1070
      %v1104 = vpack.c.b16 %v1073, %v1072
      %v1105 = vpack.c.b16 %v1075, %v1074
      %v1106 = vpack.c.b16 %v1077, %v1076
      %v1107 = vpack.c.b16 %v1079, %v1078
      %v1108 = vpack.c.b16 %v1081, %v1080
      %v1109 = vpack.c.b16 %v1083, %v1082
      %v1110 = vpack.c.b16 %v1085, %v1084
      %v1111 = vpack.c.b16 %v1087, %v1086
      %v1112 = vpack.c.b16 %v1089, %v1088
      %v1113 = vpack.c.b16 %v1091, %v1090
      %v1114 = vpack.c.b16 %v1093, %v1092
      %v1115 = vpack.c.b16 %v1095, %v1094
      %v1116 = vpack.c.b16 %v1097, %v1096
      %v1117 = vpack.c.b16 %v1099, %v1098
      %v1137 = vsel %vm340, %v960, 0
      %v1140 = vsel %vm340, %v959, 0
      %1142 = vmatprep.subr.bf16.mxu0 0
      %1143 = vmatpush1.bf16.msra.mxu0 %v1100
      %1144 = vmatprep.subr.bf16.mxu0 0
      %1145 = vmatpush1.bf16.msra.mxu0 %v1101
      %1146 = vmatprep.subr.bf16.mxu0 0
      %1147 = vmatpush1.bf16.msra.mxu0 %v1102
      %1148 = vmatprep.subr.bf16.mxu0 0
      %1149 = vmatpush1.bf16.msra.mxu0 %v1103
      %1150 = vmatprep.subr.bf16.mxu0 0
      %1151 = vmatpush1.bf16.msra.mxu0 %v1104
      %1152 = vmatprep.subr.bf16.mxu0 0
      %1153 = vmatpush1.bf16.msra.mxu0 %v1105
      %1154 = vmatprep.subr.bf16.mxu0 0
      %1155 = vmatpush1.bf16.msra.mxu0 %v1106
      %1156 = vmatprep.subr.bf16.mxu0 0
      %1157 = vmatpush1.bf16.msra.mxu0 %v1107
      %1158 = vmatprep.subr.bf16.mxu0 0
      %1159 = vmatpush1.bf16.msra.mxu0 %v1108
      %1160 = vmatprep.subr.bf16.mxu0 0
      %1161 = vmatpush1.bf16.msra.mxu0 %v1109
      %1162 = vmatprep.subr.bf16.mxu0 0
      %1163 = vmatpush1.bf16.msra.mxu0 %v1110
      %1164 = vmatprep.subr.bf16.mxu0 0
      %1165 = vmatpush1.bf16.msra.mxu0 %v1111
      %1166 = vmatprep.subr.bf16.mxu0 0
      %1167 = vmatpush1.bf16.msra.mxu0 %v1112
      %1168 = vmatprep.subr.bf16.mxu0 0
      %1169 = vmatpush1.bf16.msra.mxu0 %v1113
      %1170 = vmatprep.subr.bf16.mxu0 0
      %1171 = vmatpush1.bf16.msra.mxu0 %v1114
      %1172 = vmatprep.subr.bf16.mxu0 0
      %1173 = vmatpush1.bf16.msra.mxu0 %v1115
      %1174 = vmatprep.mubr.bf16.mxu0 %v987
      %1175 = vmatmul.mubr.bf16.gmra.mrb[0].mxu0 %v971
      %v1176 = vpop.f32.mrb[0].mxu0
      %v1177 = vadd.f32 0.0, %v1176
      %v1178 = vpop.f32.mrb[0].mxu0
      %v1179 = vpop.f32.mrb[0].mxu0
      %v1180 = vadd.f32 0.0, %v1179
      %v1181 = vpop.f32.mrb[0].mxu0
      %1182 = vmatprep.mubr.bf16.mxu0 %v990
      %1183 = vmatmul.mubr.bf16.gmra.mrb[0].mxu0 %v974
      %v1184 = vpop.f32.mrb[0].mxu0
      %v1185 = vadd.f32 0.0, %v1184
      %v1186 = vpop.f32.mrb[0].mxu0
      %v1187 = vpop.f32.mrb[0].mxu0
      %v1188 = vpop.f32.mrb[0].mxu0
      %1189 = vdwg.mxu0
      %1190 = vmatprep.subr.bf16.mxu0 0
      %1191 = vmatpush1.bf16.msra.mxu0 %v1116
      %1192 = vmatprep.subr.bf16.mxu0 0
      %1193 = vmatpush1.bf16.msra.mxu0 %v1117
      %1194 = vmatprep.subr.bf16.mxu0 0
      %1195 = vmatpush1.bf16.msra.mxu0 0
      %1196 = vmatprep.subr.bf16.mxu0 0
      %1197 = vmatpush1.bf16.msra.mxu0 0
      %1198 = vmatprep.subr.bf16.mxu0 0
      %1199 = vmatpush1.bf16.msra.mxu0 0
      %1200 = vmatprep.subr.bf16.mxu0 0
      %1201 = vmatpush1.bf16.msra.mxu0 0
      %1202 = vmatprep.subr.bf16.mxu0 0
      %1203 = vmatpush1.bf16.msra.mxu0 0
      %1204 = vmatprep.subr.bf16.mxu0 0
      %1205 = vmatpush1.bf16.msra.mxu0 0
      %1206 = vmatprep.subr.bf16.mxu0 0
      %1207 = vmatpush1.bf16.msra.mxu0 0
      %1208 = vmatprep.subr.bf16.mxu0 0
      %1209 = vmatpush1.bf16.msra.mxu0 0
      %1210 = vmatprep.subr.bf16.mxu0 0
      %1211 = vmatpush1.bf16.msra.mxu0 0
      %1212 = vmatprep.subr.bf16.mxu0 0
      %1213 = vmatpush1.bf16.msra.mxu0 0
      %1214 = vmatprep.subr.bf16.mxu0 0
      %1215 = vmatpush1.bf16.msra.mxu0 0
      %1216 = vmatprep.subr.bf16.mxu0 0
      %1217 = vmatpush1.bf16.msra.mxu0 0
      %1218 = vmatprep.subr.bf16.mxu0 0
      %1219 = vmatpush1.bf16.msra.mxu0 0
      %1220 = vmatprep.subr.bf16.mxu0 0
      %1221 = vmatpush1.bf16.msra.mxu0 0
      %1222 = vmatprep.mubr.bf16.mxu0 0
      %1223 = vmatmul.mubr.bf16.gmra.mrb[0].mxu0 %v1137
      %v1224 = vpop.f32.mrb[0].mxu0
      %v1225 = vadd.f32 %v1177, %v1224
      %v1226 = vpop.f32.mrb[0].mxu0
      %v1227 = vpop.f32.mrb[0].mxu0
      %v1228 = vadd.f32 %v1180, %v1227
      %v1229 = vpop.f32.mrb[0].mxu0
      %1230 = vmatprep.mubr.bf16.mxu0 0
      %1231 = vmatmul.mubr.bf16.gmra.mrb[0].mxu0 %v1140
      %v1232 = vpop.f32.mrb[0].mxu0
      %v1233 = vadd.f32 %v1185, %v1232
      %v1234 = vpop.f32.mrb[0].mxu0
      %v1235 = vpop.f32.mrb[0].mxu0
      %v1236 = vpop.f32.mrb[0].mxu0
      %1237 = vdwg.mxu0
      %v1238 = vmul.f32 %v1225, %v235
      %v1239 = vmul.f32 %v1228, %v236
      %v1240 = vmul.f32 %v1233, %v237
      %v1241 = vsel %vm340, %v1238, 0.0
      %v1242 = vsel %vm340, %v1239, 0.0
      %v1243 = vadd.f32 %v1241, %v1242
      %v1244 = vsel %vm625, %v1240, 0.0
      %v1245 = vadd.f32 %v1243, %v1244
      %v1246 = vrot.slane %v1245, 4
      %v1247 = vadd.f32 %v1245, %v1246
      %v1248 = vrot.slane %v1247, 2
      %v1249 = vadd.f32 %v1247, %v1248
      %v1250 = vrot.slane %v1249, 1
      %v1251 = vadd.f32 %v1249, %v1250
      %v1252 = vmul.f32 %v1251, 0.0625
      %v1253 = vmul.f32 %v1238, %v1225
      %v1254 = vmul.f32 %v1239, %v1228
      %v1255 = vmul.f32 %v1240, %v1233
      %v1256 = vsel %vm340, %v1253, 0.0
      %v1257 = vsel %vm340, %v1254, 0.0
      %v1258 = vadd.f32 %v1256, %v1257
      %v1259 = vsel %vm625, %v1255, 0.0
      %v1260 = vadd.f32 %v1258, %v1259
      %v1261 = vrot.slane %v1260, 4
      %v1262 = vadd.f32 %v1260, %v1261
      %v1263 = vrot.slane %v1262, 2
      %v1264 = vadd.f32 %v1262, %v1263
      %v1265 = vrot.slane %v1264, 1
      %v1266 = vadd.f32 %v1264, %v1265
      %v1267 = vmul.f32 %v1266, 0.0625
      %v1268 = vmul.f32 %v1252, %v1252
      %v1269 = vsub.f32 %v1267, %v1268
      %v1270 = vmax.f32 %v1269, 0.0
      %v1271 = vsub.f32 %v1225, %v1252
      %v1272 = vsub.f32 %v1228, %v1252
      %v1273 = vsub.f32 %v1233, %v1252
      %v1274 = vadd.f32 %v1270, 1e-05
      %v1275 = vrsqrt.pop %v1274
      %v1276 = vmul.f32 %v1271, %v1275
      %v1277 = vmul.f32 %v1272, %v1275
      %v1278 = vmul.f32 %v1273, %v1275
      %v1279 = vunpack.c.l.bf16 %v172
      %v1280 = vunpack.c.l.bf16 %v173
      %v1281 = vunpack.c.l.bf16 %v174
      %v1282 = vunpack.c.l.bf16 %v175
      %vm1287 = vcmask 1040384
      %v1288 = vrot.slane %v1279, 7
      %v1289 = vrot.slane %v1280, 7
      %v1290 = vsel %vm1287, %v1288, %v1289
      %v1291 = vrot.slane %v1281, 7
      %v1292 = vsel %vm1287, %v1289, %v1291
      %v1293 = vrot.slane %v1282, 7
      %v1294 = vsel %vm1287, %v1291, %v1293
      %v1298 = vadd.f32 %v1276, %v1290
      %v1299 = vadd.f32 %v1277, %v1292
      %v1300 = vadd.f32 %v1278, %v1294
      %v1301 = vpack.c.bf16 %v1299, %v1298
      %v1302 = vpack.c.bf16 %v1300, %v1300
      %v1305 = vunpack.c.l.b16 %v1301
      %v1306 = vunpack.c.h.b16 %v1301
      %v1307 = vunpack.c.l.b16 %v1302
      %v1308 = vpack.c.b16 %v1305, %v1305
      %v1309 = vpack.c.b16 %v1306, %v1306
      %v1310 = vpack.c.b16 %v1307, %v1307
      %1314 = vst.msk [vmem:[%s170] sm:$0xf] %vm716, %v1308
      %1315 = vst.msk [vmem:[%s170 + $0x4] sm:$0xf] %vm716, %v1309
      %1316 = vst.msk [vmem:[%s170 + $0x8] sm:$0x7] %vm812, %v1310
      %p1317 = scmp.lt.s32.totalorder %s14, 1
      %s1318 = scalar_select %p1317, %s14, 1
      %s1319 = smul.addr %s1318, 3
      %s1320 = smul.addr %s1319, 4
      %s1321 = scalar_lea.vmem %s3, %s1320
      // Predicated region
      $region33: #{hdr_resnet_encoder_clear.9} parent=31 // pred_check
        %p1322 = pneg %p100
      $region34: #{hdr_resnet_encoder_clear.9} parent=31 // pred_check_branch
        %1324 = sbr.rel (%p1322) target = $region36
      $region35: #{hdr_resnet_encoder_clear.9} parent=31 // pred_region
        _
      $region36: #{hdr_resnet_encoder_clear.9} parent=31 // pred_fallthru
        _
    $region32: #{hdr_resnet_encoder_clear.9} parent=5 // pred_fallthru
      _
    %p1325 = scmp.le.s32.totalorder 2, %s9
    // Predicated region
    $region37: #{hdr_resnet_encoder_clear.9} parent=5 // pred_check
      %p1326 = pneg %p1325
    $region38: #{hdr_resnet_encoder_clear.9} parent=5 // pred_check_branch
      %1328 = sbr.rel (%p1326) target = $region40
    $region39: #{hdr_resnet_encoder_clear.9} parent=5 // pred_region
      %s1329 = ssub.s32 %s9, 2
      // Predicated region
      $region41: #{hdr_resnet_encoder_clear.9} parent=39 // pred_check
        %p1330 = pneg %p106
      $region42: #{hdr_resnet_encoder_clear.9} parent=39 // pred_check_branch
        %1332 = sbr.rel (%p1330) target = $region44
      $region43: #{hdr_resnet_encoder_clear.9} parent=39 // pred_region
        %p1333 = scmp.lt.s32.totalorder %s15, 1
        %s1334 = scalar_select %p1333, %s15, 1
        %s1335 = smul.addr %s1334, 3
        %s1336 = smul.addr %s1335, 4
        %s1337 = scalar_lea.vmem %s3, %s1336
      $region44: #{hdr_resnet_encoder_clear.9} parent=39 // pred_fallthru
        _
    $region40: #{hdr_resnet_encoder_clear.9} parent=5 // pred_fallthru
      _
  $region6: #{hdr_resnet_encoder_clear.9} parent=0 // loop_footer
    %s13 = sadd.s32 1, %s9
  $region7: #{hdr_resnet_encoder_clear.9} parent=0 // loop_footer_branch
    %8 = sbr.rel target = $region3
  $region8: #{hdr_resnet_encoder_clear.9} parent=0 // loop_exit
    _

// kernel: hdr_resnet_encoder_clear.11
$region0: #{hdr_resnet_encoder_clear.11}
  #allocation0 [shape = 'u32[]', space=smem, size = 0x4, offset = 0x4, fixed_abs, tag = 'smem constant byte address 0x4 - core index']
  #allocation1 [shape = 'u32[144,128]{1,0:T(1,128)}', space=vmem, size = 0x12000, scoped, tag = 'internal scratch']
  #allocation2 [shape = 'bf16[36,32]{1,0:T(8,128)(2,1)}', space=vmem, size = 0x2800, scoped, tag = 'scratch operand']
  %s0 = inlined_call_operand.vmem [shape: bf16[2,36,32], index: 0, kind: input, shape index: {}]
  %s1 = inlined_call_operand.vmem [shape: bf16[288,32], index: 1, kind: input, shape index: {}]
  %s2 = inlined_call_operand.vmem [shape: bf16[288,32], index: 2, kind: input, shape index: {}]
  %s3 = inlined_call_operand.vmem [shape: f32[2,22,32], index: 3, kind: output, shape index: {}]
  %s4 = sld [smem:[#allocation0]]
  $region45: #{hdr_resnet_encoder_clear.11} parent=0
    _
  %s6 = ssub.s32 1, %s4
  %s7 = scalar_select 0, %s6, %s4
  loop: start=0, step=1, limit=4
  $region2: #{hdr_resnet_encoder_clear.11} parent=0 // loop_pre_header
    _
  $region3: #{hdr_resnet_encoder_clear.11} parent=0 // loop_header
    %s9 = sphi 0, %s13
    %p10 = scmp.ge.s32.totalorder %s9, 4
    %s19 = sphi 0, %s21
    %s22 = sphi 0, %s19
    %s23 = sphi 0, %s22
    %s39 = sphi 0, %s23
    %s43 = sphi 0, %s43
    %s45 = sphi 0, %s43
    %s46 = sphi 0, %s45
    %s60 = sphi 0, %s46
    %s64 = sphi 0, %s64
    %s66 = sphi 0, %s64
    %s67 = sphi 0, %s66
    %s81 = sphi 0, %s67
    %s87 = sphi 0, %s89
    %s90 = sphi 0, %s87
    %s91 = sphi 0, %s90
    %s107 = sphi 0, %s91
  $region4: #{hdr_resnet_encoder_clear.11} parent=0 // loop_header_branch
    %12 = sbr.rel (%p10) target = $region8
  $region5: #{hdr_resnet_encoder_clear.11} parent=0 // loop_body
    %s14 = ssub.s32 %s9, 1
    %s15 = ssub.s32 %s9, 2
    %s16 = sadd.s32 %s9, 1
    %s17 = ssub.s32 %s9, %s16
    %p18 = scmp.eq.s32.totalorder %s17, 0
    %s20 = sadd.s32 %s19, 1
    %s21 = scalar_select %p18, %s19, %s20
    %p24 = pneg %p18
    %p25 = scmp.eq.s32.totalorder %s9, 1
    %p26 = por %p24, %p25
    %p27 = scmp.ne.s32.totalorder %s19, %s22
    %p28 = scmp.eq.s32.totalorder %s9, 0
    %p29 = por %p27, %p28
    %p30 = scmp.ne.s32.totalorder %s19, %s22
    %p31 = scmp.eq.s32.totalorder %s14, 1
    %p32 = por %p30, %p31
    %p33 = scmp.ne.s32.totalorder %s22, %s23
    %p34 = scmp.eq.s32.totalorder %s14, 0
    %p35 = por %p33, %p34
    %p36 = scmp.ne.s32.totalorder %s22, %s23
    %p37 = scmp.eq.s32.totalorder %s15, 1
    %p38 = por %p36, %p37
    %p40 = scmp.ne.s32.totalorder %s23, %s39
    %p41 = scmp.eq.s32.totalorder %s15, 0
    %p42 = por %p40, %p41
    %s44 = sadd.s32 %s43, 1
    %p47 = scmp.eq.s32.totalorder %s9, 1
    %p48 = scmp.ne.s32.totalorder %s43, %s45
    %p49 = scmp.eq.s32.totalorder %s9, 0
    %p50 = por %p48, %p49
    %p51 = scmp.ne.s32.totalorder %s43, %s45
    %p52 = scmp.eq.s32.totalorder %s14, 1
    %p53 = por %p51, %p52
    %p54 = scmp.ne.s32.totalorder %s45, %s46
    %p55 = scmp.eq.s32.totalorder %s14, 0
    %p56 = por %p54, %p55
    %p57 = scmp.ne.s32.totalorder %s45, %s46
    %p58 = scmp.eq.s32.totalorder %s15, 1
    %p59 = por %p57, %p58
    %p61 = scmp.ne.s32.totalorder %s46, %s60
    %p62 = scmp.eq.s32.totalorder %s15, 0
    %p63 = por %p61, %p62
    %s65 = sadd.s32 %s64, 1
    %p68 = scmp.eq.s32.totalorder %s9, 1
    %p69 = scmp.ne.s32.totalorder %s64, %s66
    %p70 = scmp.eq.s32.totalorder %s9, 0
    %p71 = por %p69, %p70
    %p72 = scmp.ne.s32.totalorder %s64, %s66
    %p73 = scmp.eq.s32.totalorder %s14, 1
    %p74 = por %p72, %p73
    %p75 = scmp.ne.s32.totalorder %s66, %s67
    %p76 = scmp.eq.s32.totalorder %s14, 0
    %p77 = por %p75, %p76
    %p78 = scmp.ne.s32.totalorder %s66, %s67
    %p79 = scmp.eq.s32.totalorder %s15, 1
    %p80 = por %p78, %p79
    %p82 = scmp.ne.s32.totalorder %s67, %s81
    %p83 = scmp.eq.s32.totalorder %s15, 0
    %p84 = por %p82, %p83
    %s85 = ssub.s32 %s9, %s16
    %p86 = scmp.eq.s32.totalorder %s85, 0
    %s88 = sadd.s32 %s87, 1
    %s89 = scalar_select %p86, %s87, %s88
    %p92 = pneg %p86
    %p93 = scmp.eq.s32.totalorder %s9, 1
    %p94 = por %p92, %p93
    %p95 = scmp.ne.s32.totalorder %s87, %s90
    %p96 = scmp.eq.s32.totalorder %s9, 0
    %p97 = por %p95, %p96
    %p98 = scmp.ne.s32.totalorder %s87, %s90
    %p99 = scmp.eq.s32.totalorder %s14, 1
    %p100 = por %p98, %p99
    %p101 = scmp.ne.s32.totalorder %s90, %s91
    %p102 = scmp.eq.s32.totalorder %s14, 0
    %p103 = por %p101, %p102
    %p104 = scmp.ne.s32.totalorder %s90, %s91
    %p105 = scmp.eq.s32.totalorder %s15, 1
    %p106 = por %p104, %p105
    %p108 = scmp.ne.s32.totalorder %s91, %s107
    %p109 = scmp.eq.s32.totalorder %s15, 0
    %p110 = por %p108, %p109
    %p111 = scmp.le.s32.totalorder 1, %s9
    %p112 = scmp.lt.s32.totalorder %s9, 3
    %p113 = pnand %p111, %p112
    %p114 = pneg %p113
    // Predicated region
    $region9: #{hdr_resnet_encoder_clear.11} parent=5 // pred_check
      _
    $region10: #{hdr_resnet_encoder_clear.11} parent=5 // pred_check_branch
      %116 = sbr.rel (%p113) target = $region12
    $region11: #{hdr_resnet_encoder_clear.11} parent=5 // pred_region
      %s117 = ssub.s32 %s9, 1
      // Predicated region
      $region13: #{hdr_resnet_encoder_clear.11} parent=11 // pred_check
        %p118 = pneg %p56
      $region14: #{hdr_resnet_encoder_clear.11} parent=11 // pred_check_branch
        %120 = sbr.rel (%p118) target = $region16
      $region15: #{hdr_resnet_encoder_clear.11} parent=11 // pred_region
        _
      $region16: #{hdr_resnet_encoder_clear.11} parent=11 // pred_fallthru
        _
      // Predicated region
      $region17: #{hdr_resnet_encoder_clear.11} parent=11 // pred_check
        %p121 = pneg %p77
      $region18: #{hdr_resnet_encoder_clear.11} parent=11 // pred_check_branch
        %123 = sbr.rel (%p121) target = $region20
      $region19: #{hdr_resnet_encoder_clear.11} parent=11 // pred_region
        _
      $region20: #{hdr_resnet_encoder_clear.11} parent=11 // pred_fallthru
        _
    $region12: #{hdr_resnet_encoder_clear.11} parent=5 // pred_fallthru
      _
    %p124 = scmp.lt.s32.totalorder %s9, 2
    // Predicated region
    $region21: #{hdr_resnet_encoder_clear.11} parent=5 // pred_check
      %p125 = pneg %p124
    $region22: #{hdr_resnet_encoder_clear.11} parent=5 // pred_check_branch
      %127 = sbr.rel (%p125) target = $region24
    $region23: #{hdr_resnet_encoder_clear.11} parent=5 // pred_region
      // Predicated region
      $region25: #{hdr_resnet_encoder_clear.11} parent=23 // pred_check
        %p128 = pneg %p29
      $region26: #{hdr_resnet_encoder_clear.11} parent=23 // pred_check_branch
        %130 = sbr.rel (%p128) target = $region28
      $region27: #{hdr_resnet_encoder_clear.11} parent=23 // pred_region
        %p131 = scmp.lt.s32.totalorder %s9, 1
        %s132 = scalar_select %p131, %s9, 1
        %s133 = smul.addr %s132, 5
        %s134 = smul.addr %s133, 4
        %s135 = scalar_lea.vmem %s0, %s134
      $region28: #{hdr_resnet_encoder_clear.11} parent=23 // pred_fallthru
        _
    $region24: #{hdr_resnet_encoder_clear.11} parent=5 // pred_fallthru
      _
    %p136 = scmp.le.s32.totalorder 1, %s9
    %p137 = scmp.lt.s32.totalorder %s9, 3
    %p138 = pnand %p136, %p137
    %p139 = pneg %p138
    // Predicated region
    $region29: #{hdr_resnet_encoder_clear.11} parent=5 // pred_check
      _
    $region30: #{hdr_resnet_encoder_clear.11} parent=5 // pred_check_branch
      %141 = sbr.rel (%p138) target = $region32
    $region31: #{hdr_resnet_encoder_clear.11} parent=5 // pred_region
      %s142 = ssub.s32 %s9, 1
      %p143 = scmp.lt.s32.totalorder %s14, 1
      %s144 = scalar_select %p143, %s14, 1
      %s145 = smul.addr %s144, 5
      %s146 = smul.addr %s145, 4
      %s147 = scalar_lea.vmem %s0, %s146
      %p148 = pneg %p35
      %p149 = pneg %p32
      %p150 = pneg %p56
      %p151 = pneg %p53
      %p152 = pneg %p77
      %p153 = pneg %p74
      %p154 = pneg %p103
      %p155 = pneg %p100
      %p156 = scmp.lt.s32.totalorder %s14, 1
      %s157 = scalar_select %p156, %s14, 1
      %s158 = smul.addr %s157, 3
      %s159 = smul.addr %s158, 8
      %s160 = scalar_lea.vmem %s3, %s159
      %p161 = scmp.lt.s32.totalorder %s14, 1
      %s162 = scalar_select %p161, %s14, 1
      %s163 = smul.addr %s162, 5
      %s164 = smul.addr %s163, 4
      %s165 = scalar_lea.vmem %s0, %s164
      %p166 = scmp.lt.s32.totalorder %s14, 1
      %s167 = scalar_select %p166, %s14, 1
      %s168 = smul.addr %s167, 3
      %s169 = smul.addr %s168, 8
      %s170 = scalar_lea.vmem %s3, %s169
      %v172 = vld [vmem:[%s165] sm:$0xf]
      %v173 = vld [vmem:[%s165 + $0x4] sm:$0xf]
      %v174 = vld [vmem:[%s165 + $0x8] sm:$0xf]
      %v175 = vld [vmem:[%s165 + $0xc] sm:$0xf]
      %v176 = vld [vmem:[%s165 + $0x10] sm:$0x3]
      %v177 = vlaneseq
      %v178 = vshrl.u32 %v177, 7
      %v179 = vadd.s32 %v178, 8
      %v180 = vadd.s32 %v178, 16
      %vm181 = vcmp.lt.s32.totalorder %v178, 0
      %v182 = vsub.s32 0, %v178
      %v183 = vsel %vm181, %v182, %v178
      %v184 = vmul.u32.u64.compose %v183, 2863311531
      %v185 = vextract.low.u32 %v184
      %v186 = vextract.high.u32 %v184
      %v187 = vshrl.u32 %v186, 2
      %v188 = vmul.u32 %v187, 6
      %v189 = vsub.s32 %v183, %v188
      %v190 = vsub.s32 0, %v189
      %v191 = vsel %vm181, %v190, %v189
      %vm192 = vcmp.lt.s32.totalorder %v179, 0
      %v193 = vsub.s32 0, %v179
      %v194 = vsel %vm192, %v193, %v179
      %v195 = vmul.u32.u64.compose %v194, 2863311531
      %v196 = vextract.low.u32 %v195
      %v197 = vextract.high.u32 %v195
      %v198 = vshrl.u32 %v197, 2
      %v199 = vmul.u32 %v198, 6
      %v200 = vsub.s32 %v194, %v199
      %v201 = vsub.s32 0, %v200
      %v202 = vsel %vm192, %v201, %v200
      %vm203 = vcmp.lt.s32.totalorder %v180, 0
      %v204 = vsub.s32 0, %v180
      %v205 = vsel %vm203, %v204, %v180
      %v206 = vmul.u32.u64.compose %v205, 2863311531
      %v207 = vextract.low.u32 %v206
      %v208 = vextract.high.u32 %v206
      %v209 = vshrl.u32 %v208, 2
      %v210 = vmul.u32 %v209, 6
      %v211 = vsub.s32 %v205, %v210
      %v212 = vsub.s32 0, %v211
      %v213 = vsel %vm203, %v212, %v211
      %vm214 = vcmp.ne.s32.totalorder %v191, 0
      %vm215 = vcmp.ne.s32.totalorder %v202, 0
      %vm216 = vcmp.ne.s32.totalorder %v213, 0
      %vm217 = vcmp.lt.s32.totalorder %v191, 0
      %vm218 = vcmp.lt.s32.totalorder %v202, 0
      %vm219 = vcmp.lt.s32.totalorder %v213, 0
      %vm220 = vmand %vm217, %vm214
      %vm221 = vmand %vm218, %vm215
      %vm222 = vmand %vm219, %vm216
      %v223 = vadd.s32 %v191, 6
      %v224 = vadd.s32 %v202, 6
      %v225 = vadd.s32 %v213, 6
      %v226 = vsel %vm220, %v223, %v191
      %v227 = vsel %vm221, %v224, %v202
      %v228 = vsel %vm222, %v225, %v213
      %vm229 = vcmp.lt.s32.totalorder %v226, 4
      %vm230 = vcmp.lt.s32.totalorder %v227, 4
      %vm231 = vcmp.lt.s32.totalorder %v228, 4
      %v232 = vsel %vm229, 1, 0
      %v233 = vsel %vm230, 1, 0
      %v234 = vsel %vm231, 1, 0
      %v235 = vcvt.s32.f32 %v232
      %v236 = vcvt.s32.f32 %v233
      %v237 = vcvt.s32.f32 %v234
      %v241 = vunpack.c.l.b16 %v172
      %v242 = vunpack.c.l.b16 %v173
      %v243 = vunpack.c.l.b16 %v174
      %v244 = vpack.c.b16 %v242, %v241
      %v245 = vpack.c.b16 %v243, %v243
      %vm246 = vsmask.f32 7424
      %v248 = vshrl.u32 %v244, 16
      %v250 = vshll.u32 %v244, 16
      %v252 = vrot.slane %v250, 1
      %v253 = vor.u32 %v248, %v252
      %v255 = vshll.u32 %v245, 16
      %v257 = vrot.slane %v255, 1
      %v258 = vsel %vm246, %v253, %v257
      %v259 = vshrl.u32 %v245, 16
      %v261 = vor.u32 %v259, %v257
      %262 = vrot.lane.b32.xlu0 %v258, 32
      %v263 = vpop.permute.xlu0 %262
      %264 = vrot.lane.b32.xlu0 %v261, 32
      %v265 = vpop.permute.xlu0 %264
      %vm266 = vcmask 1046528
      %v267 = vrot.slane %v244, 1
      %v268 = vrot.slane %v245, 1
      %v269 = vsel %vm266, %v267, %v268
      %270 = vrot.lane.b32.xlu0 %v269, 64
      %v271 = vpop.permute.xlu0 %270
      %272 = vrot.lane.b32.xlu0 %v268, 64
      %v273 = vpop.permute.xlu0 %272
      %v275 = vunpack.c.l.b16 %v175
      %v276 = vpack.c.b16 %v275, %v243
      %vm277 = vcmask 1044480
      %v278 = vrot.slane %v244, 3
      %v279 = vrot.slane %v276, 3
      %v280 = vsel %vm277, %v278, %v279
      %281 = vrot.lane.b32.xlu0 %v280, 96
      %v282 = vpop.permute.xlu0 %281
      %283 = vrot.lane.b32.xlu0 %v279, 96
      %v284 = vpop.permute.xlu0 %283
      %vm285 = vsmask.f32 4352
      %v286 = vrot.slane %v248, 3
      %v287 = vrot.slane %v250, 4
      %v288 = vor.u32 %v286, %v287
      %v290 = vshrl.u32 %v276, 16
      %v292 = vrot.slane %v290, 3
      %v293 = vshll.u32 %v276, 16
      %v295 = vrot.slane %v293, 4
      %v296 = vor.u32 %v292, %v295
      %v297 = vsel %vm285, %v288, %v296
      %v298 = vpack.c.b16 %v243, %v242
      %v299 = vpack.c.b16 %v275, %v275
      %300 = vrot.lane.b32.xlu0 %v298, 32
      %v301 = vpop.permute.xlu0 %300
      %302 = vrot.lane.b32.xlu0 %v299, 32
      %v303 = vpop.permute.xlu0 %302
      %v305 = vunpack.c.l.b16 %v176
      %v306 = vpack.c.b16 %v305, %v275
      %vm307 = vcmask 1045504
      %v308 = vrot.slane %v298, 2
      %v309 = vrot.slane %v306, 2
      %v310 = vsel %vm307, %v308, %v309
      %311 = vrot.lane.b32.xlu0 %v310, 64
      %v312 = vpop.permute.xlu0 %311
      %313 = vrot.lane.b32.xlu0 %v309, 64
      %v314 = vpop.permute.xlu0 %313
      %vm315 = vsmask.f32 5376
      %v317 = vshrl.u32 %v298, 16
      %v319 = vrot.slane %v317, 2
      %v320 = vshll.u32 %v298, 16
      %v322 = vrot.slane %v320, 3
      %v323 = vor.u32 %v319, %v322
      %v325 = vshrl.u32 %v306, 16
      %v327 = vrot.slane %v325, 2
      %v328 = vshll.u32 %v306, 16
      %v330 = vrot.slane %v328, 3
      %v331 = vor.u32 %v327, %v330
      %v332 = vsel %vm315, %v323, %v331
      %333 = vrot.lane.b32.xlu0 %v332, 96
      %v334 = vpop.permute.xlu0 %333
      %335 = vrot.lane.b32.xlu0 %v331, 96
      %v336 = vpop.permute.xlu0 %335
      %v337 = vrot.slane %v298, 3
      %v338 = vrot.slane %v306, 3
      %v339 = vsel %vm277, %v337, %v338
      %vm340 = vcmask 261120
      %v342 = vsel %vm340, %v244, %v263
      %v344 = vsel %vm340, %v245, %v265
      %vm345 = vcmask 523264
      %v347 = vsel %vm345, %v342, %v271
      %v349 = vsel %vm345, %v344, %v273
      %vm350 = vcmask 785408
      %v352 = vsel %vm350, %v347, %v282
      %v355 = vsel %vm350, %v349, %v284
      %v359 = vsel %vm340, %v297, %v301
      %v362 = vsel %vm340, %v296, %v303
      %v364 = vsel %vm345, %v359, %v312
      %v366 = vsel %vm345, %v362, %v314
      %v368 = vsel %vm350, %v364, %v334
      %v371 = vsel %vm350, %v366, %v336
      %v373 = vld [vmem:[%s1] sm:$0xf]
      %v374 = vld [vmem:[%s1 + $0x4] sm:$0xf]
      %v375 = vld [vmem:[%s1 + $0x8] sm:$0xf]
      %v376 = vld [vmem:[%s1 + $0xc] sm:$0xf]
      %v377 = vld [vmem:[%s1 + $0x10] sm:$0xf]
      %v378 = vld [vmem:[%s1 + $0x14] sm:$0xf]
      %v379 = vld [vmem:[%s1 + $0x18] sm:$0xf]
      %v380 = vld [vmem:[%s1 + $0x1c] sm:$0xf]
      %v381 = vld [vmem:[%s1 + $0x20] sm:$0xf]
      %v382 = vld [vmem:[%s1 + $0x24] sm:$0xf]
      %v383 = vld [vmem:[%s1 + $0x28] sm:$0xf]
      %v384 = vld [vmem:[%s1 + $0x2c] sm:$0xf]
      %v385 = vld [vmem:[%s1 + $0x30] sm:$0xf]
      %v386 = vld [vmem:[%s1 + $0x34] sm:$0xf]
      %v387 = vld [vmem:[%s1 + $0x38] sm:$0xf]
      %v388 = vld [vmem:[%s1 + $0x3c] sm:$0xf]
      %v389 = vld [vmem:[%s1 + $0x40] sm:$0xf]
      %v390 = vld [vmem:[%s1 + $0x44] sm:$0xf]
      %v391 = vld [vmem:[%s1 + $0x48] sm:$0xf]
      %v392 = vld [vmem:[%s1 + $0x4c] sm:$0xf]
      %v393 = vld [vmem:[%s1 + $0x50] sm:$0xf]
      %v394 = vld [vmem:[%s1 + $0x54] sm:$0xf]
      %v395 = vld [vmem:[%s1 + $0x58] sm:$0xf]
      %v396 = vld [vmem:[%s1 + $0x5c] sm:$0xf]
      %v397 = vld [vmem:[%s1 + $0x60] sm:$0xf]
      %v398 = vld [vmem:[%s1 + $0x64] sm:$0xf]
      %v399 = vld [vmem:[%s1 + $0x68] sm:$0xf]
      %v400 = vld [vmem:[%s1 + $0x6c] sm:$0xf]
      %v401 = vld [vmem:[%s1 + $0x70] sm:$0xf]
      %v402 = vld [vmem:[%s1 + $0x74] sm:$0xf]
      %v403 = vld [vmem:[%s1 + $0x78] sm:$0xf]
      %v404 = vld [vmem:[%s1 + $0x7c] sm:$0xf]
      %v405 = vld [vmem:[%s1 + $0x80] sm:$0xf]
      %v406 = vld [vmem:[%s1 + $0x84] sm:$0xf]
      %v407 = vld [vmem:[%s1 + $0x88] sm:$0xf]
      %v408 = vld [vmem:[%s1 + $0x8c] sm:$0xf]
      %v445 = vunpack.c.l.b16 %v373
      %v446 = vunpack.c.l.b16 %v374
      %v447 = vunpack.c.l.b16 %v375
      %v448 = vunpack.c.l.b16 %v376
      %v449 = vunpack.c.l.b16 %v377
      %v450 = vunpack.c.l.b16 %v378
      %v451 = vunpack.c.l.b16 %v379
      %v452 = vunpack.c.l.b16 %v380
      %v453 = vunpack.c.l.b16 %v381
      %v454 = vunpack.c.l.b16 %v382
      %v455 = vunpack.c.l.b16 %v383
      %v456 = vunpack.c.l.b16 %v384
      %v457 = vunpack.c.l.b16 %v385
      %v458 = vunpack.c.l.b16 %v386
      %v459 = vunpack.c.l.b16 %v387
      %v460 = vunpack.c.l.b16 %v388
      %v461 = vunpack.c.l.b16 %v389
      %v462 = vunpack.c.l.b16 %v390
      %v463 = vunpack.c.l.b16 %v391
      %v464 = vunpack.c.l.b16 %v392
      %v465 = vunpack.c.l.b16 %v393
      %v466 = vunpack.c.l.b16 %v394
      %v467 = vunpack.c.l.b16 %v395
      %v468 = vunpack.c.l.b16 %v396
      %v469 = vunpack.c.l.b16 %v397
      %v470 = vunpack.c.l.b16 %v398
      %v471 = vunpack.c.l.b16 %v399
      %v472 = vunpack.c.l.b16 %v400
      %v473 = vunpack.c.l.b16 %v401
      %v474 = vunpack.c.l.b16 %v402
      %v475 = vunpack.c.l.b16 %v403
      %v476 = vunpack.c.l.b16 %v404
      %v477 = vunpack.c.l.b16 %v405
      %v478 = vunpack.c.l.b16 %v406
      %v479 = vunpack.c.l.b16 %v407
      %v480 = vunpack.c.l.b16 %v408
      %v481 = vpack.c.b16 %v446, %v445
      %v482 = vpack.c.b16 %v448, %v447
      %v483 = vpack.c.b16 %v450, %v449
      %v484 = vpack.c.b16 %v452, %v451
      %v485 = vpack.c.b16 %v454, %v453
      %v486 = vpack.c.b16 %v456, %v455
      %v487 = vpack.c.b16 %v458, %v457
      %v488 = vpack.c.b16 %v460, %v459
      %v489 = vpack.c.b16 %v462, %v461
      %v490 = vpack.c.b16 %v464, %v463
      %v491 = vpack.c.b16 %v466, %v465
      %v492 = vpack.c.b16 %v468, %v467
      %v493 = vpack.c.b16 %v470, %v469
      %v494 = vpack.c.b16 %v472, %v471
      %v495 = vpack.c.b16 %v474, %v473
      %v496 = vpack.c.b16 %v476, %v475
      %v497 = vpack.c.b16 %v478, %v477
      %v498 = vpack.c.b16 %v480, %v479
      %v518 = vsel %vm340, %v339, 0
      %v521 = vsel %vm340, %v338, 0
      %523 = vmatprep.subr.bf16.mxu0 0
      %524 = vmatpush1.bf16.msra.mxu0 %v481
      %525 = vmatprep.subr.bf16.mxu0 0
      %526 = vmatpush1.bf16.msra.mxu0 %v482
      %527 = vmatprep.subr.bf16.mxu0 0
      %528 = vmatpush1.bf16.msra.mxu0 %v483
      %529 = vmatprep.subr.bf16.mxu0 0
      %530 = vmatpush1.bf16.msra.mxu0 %v484
      %531 = vmatprep.subr.bf16.mxu0 0
      %532 = vmatpush1.bf16.msra.mxu0 %v485
      %533 = vmatprep.subr.bf16.mxu0 0
      %534 = vmatpush1.bf16.msra.mxu0 %v486
      %535 = vmatprep.subr.bf16.mxu0 0
      %536 = vmatpush1.bf16.msra.mxu0 %v487
      %537 = vmatprep.subr.bf16.mxu0 0
      %538 = vmatpush1.bf16.msra.mxu0 %v488
      %539 = vmatprep.subr.bf16.mxu0 0
      %540 = vmatpush1.bf16.msra.mxu0 %v489
      %541 = vmatprep.subr.bf16.mxu0 0
      %542 = vmatpush1.bf16.msra.mxu0 %v490
      %543 = vmatprep.subr.bf16.mxu0 0
      %544 = vmatpush1.bf16.msra.mxu0 %v491
      %545 = vmatprep.subr.bf16.mxu0 0
      %546 = vmatpush1.bf16.msra.mxu0 %v492
      %547 = vmatprep.subr.bf16.mxu0 0
      %548 = vmatpush1.bf16.msra.mxu0 %v493
      %549 = vmatprep.subr.bf16.mxu0 0
      %550 = vmatpush1.bf16.msra.mxu0 %v494
      %551 = vmatprep.subr.bf16.mxu0 0
      %552 = vmatpush1.bf16.msra.mxu0 %v495
      %553 = vmatprep.subr.bf16.mxu0 0
      %554 = vmatpush1.bf16.msra.mxu0 %v496
      %555 = vmatprep.mubr.bf16.mxu0 %v368
      %556 = vmatmul.mubr.bf16.gmra.mrb[0].mxu0 %v352
      %v557 = vpop.f32.mrb[0].mxu0
      %v558 = vadd.f32 0.0, %v557
      %v559 = vpop.f32.mrb[0].mxu0
      %v560 = vpop.f32.mrb[0].mxu0
      %v561 = vadd.f32 0.0, %v560
      %v562 = vpop.f32.mrb[0].mxu0
      %563 = vmatprep.mubr.bf16.mxu0 %v371
      %564 = vmatmul.mubr.bf16.gmra.mrb[0].mxu0 %v355
      %v565 = vpop.f32.mrb[0].mxu0
      %v566 = vadd.f32 0.0, %v565
      %v567 = vpop.f32.mrb[0].mxu0
      %v568 = vpop.f32.mrb[0].mxu0
      %v569 = vpop.f32.mrb[0].mxu0
      %570 = vdwg.mxu0
      %571 = vmatprep.subr.bf16.mxu0 0
      %572 = vmatpush1.bf16.msra.mxu0 %v497
      %573 = vmatprep.subr.bf16.mxu0 0
      %574 = vmatpush1.bf16.msra.mxu0 %v498
      %575 = vmatprep.subr.bf16.mxu0 0
      %576 = vmatpush1.bf16.msra.mxu0 0
      %577 = vmatprep.subr.bf16.mxu0 0
      %578 = vmatpush1.bf16.msra.mxu0 0
      %579 = vmatprep.subr.bf16.mxu0 0
      %580 = vmatpush1.bf16.msra.mxu0 0
      %581 = vmatprep.subr.bf16.mxu0 0
      %582 = vmatpush1.bf16.msra.mxu0 0
      %583 = vmatprep.subr.bf16.mxu0 0
      %584 = vmatpush1.bf16.msra.mxu0 0
      %585 = vmatprep.subr.bf16.mxu0 0
      %586 = vmatpush1.bf16.msra.mxu0 0
      %587 = vmatprep.subr.bf16.mxu0 0
      %588 = vmatpush1.bf16.msra.mxu0 0
      %589 = vmatprep.subr.bf16.mxu0 0
      %590 = vmatpush1.bf16.msra.mxu0 0
      %591 = vmatprep.subr.bf16.mxu0 0
      %592 = vmatpush1.bf16.msra.mxu0 0
      %593 = vmatprep.subr.bf16.mxu0 0
      %594 = vmatpush1.bf16.msra.mxu0 0
      %595 = vmatprep.subr.bf16.mxu0 0
      %596 = vmatpush1.bf16.msra.mxu0 0
      %597 = vmatprep.subr.bf16.mxu0 0
      %598 = vmatpush1.bf16.msra.mxu0 0
      %599 = vmatprep.subr.bf16.mxu0 0
      %600 = vmatpush1.bf16.msra.mxu0 0
      %601 = vmatprep.subr.bf16.mxu0 0
      %602 = vmatpush1.bf16.msra.mxu0 0
      %603 = vmatprep.mubr.bf16.mxu0 0
      %604 = vmatmul.mubr.bf16.gmra.mrb[0].mxu0 %v518
      %v605 = vpop.f32.mrb[0].mxu0
      %v606 = vadd.f32 %v558, %v605
      %v607 = vpop.f32.mrb[0].mxu0
      %v608 = vpop.f32.mrb[0].mxu0
      %v609 = vadd.f32 %v561, %v608
      %v610 = vpop.f32.mrb[0].mxu0
      %611 = vmatprep.mubr.bf16.mxu0 0
      %612 = vmatmul.mubr.bf16.gmra.mrb[0].mxu0 %v521
      %v613 = vpop.f32.mrb[0].mxu0
      %v614 = vadd.f32 %v566, %v613
      %v615 = vpop.f32.mrb[0].mxu0
      %v616 = vpop.f32.mrb[0].mxu0
      %v617 = vpop.f32.mrb[0].mxu0
      %618 = vdwg.mxu0
      %v619 = vmul.f32 %v606, %v235
      %v620 = vmul.f32 %v609, %v236
      %v621 = vmul.f32 %v614, %v237
      %v622 = vsel %vm340, %v619, 0.0
      %v623 = vsel %vm340, %v620, 0.0
      %v624 = vadd.f32 %v622, %v623
      %vm625 = vcmask 259072
      %v626 = vsel %vm625, %v621, 0.0
      %v627 = vadd.f32 %v624, %v626
      %v628 = vrot.slane %v627, 4
      %v629 = vadd.f32 %v627, %v628
      %v630 = vrot.slane %v629, 2
      %v631 = vadd.f32 %v629, %v630
      %v632 = vrot.slane %v631, 1
      %v633 = vadd.f32 %v631, %v632
      %v634 = vmul.f32 %v633, 0.0625
      %v635 = vmul.f32 %v619, %v606
      %v636 = vmul.f32 %v620, %v609
      %v637 = vmul.f32 %v621, %v614
      %v638 = vsel %vm340, %v635, 0.0
      %v639 = vsel %vm340, %v636, 0.0
      %v640 = vadd.f32 %v638, %v639
      %v641 = vsel %vm625, %v637, 0.0
      %v642 = vadd.f32 %v640, %v641
      %v643 = vrot.slane %v642, 4
      %v644 = vadd.f32 %v642, %v643
      %v645 = vrot.slane %v644, 2
      %v646 = vadd.f32 %v644, %v645
      %v647 = vrot.slane %v646, 1
      %v648 = vadd.f32 %v646, %v647
      %v649 = vmul.f32 %v648, 0.0625
      %v650 = vmul.f32 %v634, %v634
      %v651 = vsub.f32 %v649, %v650
      %v652 = vmax.f32 %v651, 0.0
      %v653 = vsub.f32 %v606, %v634
      %v654 = vsub.f32 %v609, %v634
      %v655 = vsub.f32 %v614, %v634
      %v656 = vadd.f32 %v652, 1e-05
      %v657 = vrsqrt.pop %v656
      %v658 = vmul.f32 %v653, %v657
      %v659 = vmul.f32 %v654, %v657
      %v660 = vmul.f32 %v655, %v657
      %v661 = vmax.f32 %v658, 0.0
      %v662 = vmax.f32 %v659, 0.0
      %v663 = vmax.f32 %v660, 0.0
      %v664 = vpack.c.bf16 %v662, %v661
      %v665 = vpack.c.bf16 %v663, %v663
      %v668 = vunpack.c.l.b16 %v664
      %v669 = vunpack.c.h.b16 %v664
      %v670 = vunpack.c.l.b16 %v665
      %v671 = vpack.c.b16 %v668, %v668
      %v672 = vpack.c.b16 %v669, %v669
      %v673 = vpack.c.b16 %v670, %v670
      %vm674 = vsmask.f32 3328
      %vm675 = vsmask.f32 7440
      %vm676 = vmor %vm674, %vm675
      %v678 = vshll.u32 %v671, 16
      %v680 = vrot.slane %v678, 5
      %v681 = vshrl.u32 %v671, 16
      %v683 = vrot.slane %v681, 4
      %v684 = vor.u32 %v683, %v680
      %v685 = vrot.slane %v684, 4
      %v687 = vshll.u32 %v672, 16
      %v689 = vrot.slane %v687, 5
      %v690 = vsel %vm676, %v685, %v689
      %v691 = vshrl.u32 %v672, 16
      %v693 = vrot.slane %v691, 4
      %v694 = vor.u32 %v693, %v689
      %v695 = vrot.slane %v694, 4
      %v697 = vshll.u32 %v673, 16
      %v699 = vrot.slane %v697, 5
      %v700 = vsel %vm676, %v695, %v699
      %v701 = vshrl.u32 %v673, 16
      %v703 = vrot.slane %v701, 4
      %v704 = vor.u32 %v703, %v699
      %v705 = vrot.slane %v704, 4
      %vm710 = vcmask 257027
      %vm711 = vsmask.f32 7950
      %vm712 = vmand %vm710, %vm711
      %v713 = vld [vmem:[#allocation2] sm:$0x8]
      %v714 = vsel %vm712, %v680, %v713
      %715 = vst [vmem:[#allocation2] sm:$0x8] %v714
      %vm716 = vcmask 257024
      %717 = vst.msk [vmem:[#allocation2 + $0x4] sm:$0xf] %vm716, %v690
      %718 = vst.msk [vmem:[#allocation2 + $0x8] sm:$0xf] %vm716, %v700
      %vm719 = vcmask 256000
      %vm720 = vsmask.f32 2304
      %vm721 = vmand %vm719, %vm720
      %v722 = vld [vmem:[#allocation2 + $0xc] sm:$0x7]
      %v723 = vsel %vm721, %v705, %v722
      %724 = vst [vmem:[#allocation2 + $0xc] sm:$0x7] %v723
      %v725 = vld [vmem:[#allocation2 + $0x4] sm:$0x1]
      %v727 = vrot.slane %v725, 5
      %vm729 = vmand %vm710, %vm674
      %v730 = vld [vmem:[#allocation2] sm:$0x8]
      %v731 = vsel %vm729, %v727, %v730
      %732 = vst [vmem:[#allocation2] sm:$0x8] %v731
      %v733 = vld [vmem:[#allocation2 + $0x4] sm:$0x1]
      %v735 = vrot.slane %v733, 7
      %vm737 = vcmask 254977
      %vm738 = vsmask.f32 7942
      %vm739 = vmand %vm737, %vm738
      %v740 = vld [vmem:[#allocation2 + $0x4] sm:$0x2]
      %v741 = vsel %vm739, %v735, %v740
      %742 = vst [vmem:[#allocation2 + $0x4] sm:$0x2] %v741
      %v743 = vld [vmem:[#allocation2 + $0x4] sm:$0x8]
      %v745 = vrot.slane %v743, 5
      %v746 = vrot.slane %v745, 4
      %vm748 = vcmask 256002
      %vm749 = vmand %vm748, %vm720
      %v750 = vld [vmem:[#allocation2 + $0x4] sm:$0x4]
      %v751 = vsel %vm749, %v746, %v750
      %752 = vst [vmem:[#allocation2 + $0x4] sm:$0x4] %v751
      %v753 = vld [vmem:[#allocation2 + $0x4] sm:$0x8]
      %v755 = vrot.slane %v753, 7
      %v756 = vrot.slane %v755, 4
      %vm758 = vcmask 253952
      %vm759 = vsmask.f32 7938
      %vm760 = vmand %vm758, %vm759
      %v761 = vld [vmem:[#allocation2 + $0x8] sm:$0x1]
      %v762 = vsel %vm760, %v756, %v761
      %763 = vst [vmem:[#allocation2 + $0x8] sm:$0x1] %v762
      %v764 = vld [vmem:[#allocation2 + $0x8] sm:$0x4]
      %v766 = vrot.slane %v764, 5
      %v767 = vrot.slane %v766, 4
      %vm769 = vsmask.f32 1280
      %vm770 = vmand %vm737, %vm769
      %v771 = vld [vmem:[#allocation2 + $0x8] sm:$0x2]
      %v772 = vsel %vm770, %v767, %v771
      %773 = vst [vmem:[#allocation2 + $0x8] sm:$0x2] %v772
      %v774 = vld [vmem:[#allocation2 + $0x8] sm:$0x4]
      %v776 = vrot.slane %v774, 7
      %v778 = vld [vmem:[#allocation2 + $0x8] sm:$0x8]
      %v779 = vsel %vm712, %v776, %v778
      %780 = vst [vmem:[#allocation2 + $0x8] sm:$0x8] %v779
      %v781 = vld [vmem:[#allocation2 + $0xc] sm:$0x2]
      %v783 = vrot.slane %v781, 5
      %v784 = vrot.slane %v783, 4
      %vm786 = vsmask.f32 256
      %vm787 = vmand %vm758, %vm786
      %v788 = vld [vmem:[#allocation2 + $0xc] sm:$0x1]
      %v789 = vsel %vm787, %v784, %v788
      %790 = vst [vmem:[#allocation2 + $0xc] sm:$0x1] %v789
      %v791 = vld [vmem:[#allocation2 + $0xc] sm:$0x2]
      %v793 = vrot.slane %v791, 7
      %vm795 = vsmask.f32 7946
      %vm796 = vmand %vm748, %vm795
      %v797 = vld [vmem:[#allocation2 + $0xc] sm:$0x4]
      %v798 = vsel %vm796, %v793, %v797
      %799 = vst [vmem:[#allocation2 + $0xc] sm:$0x4] %v798
      %v800 = vld [vmem:[#allocation2 + $0x4] sm:$0xc]
      %v801 = vld [vmem:[#allocation2 + $0x8] sm:$0x1]
      %vm804 = vcmask 1041408
      %vm805 = vcmask 1045508
      %vm806 = vmor %vm804, %vm805
      %v807 = vrot.slane %v800, 6
      %v808 = vrot.slane %v807, 4
      %v809 = vrot.slane %v801, 6
      %v810 = vsel %vm806, %v808, %v809
      %vm812 = vcmask 256000
      %813 = vst.msk [vmem:[#allocation2] sm:$0x7] %vm812, %v810
      %v814 = vld [vmem:[#allocation2 + $0x8] sm:$0xe]
      %v816 = vrot.slane %v814, 6
      %v817 = vrot.slane %v816, 4
      %vm820 = vcmask 257027
      %821 = vst.msk [vmem:[#allocation2 + $0xc] sm:$0x8] %vm820, %v816
      %vm822 = vcmask 254976
      %823 = vst.msk [vmem:[#allocation2 + $0x10] sm:$0x3] %vm822, %v817
      %v824 = vld [vmem:[#allocation2] sm:$0xf]
      %v825 = vld [vmem:[#allocation2 + $0x4] sm:$0xf]
      %v826 = vld [vmem:[#allocation2 + $0x8] sm:$0x7]
      %v827 = vld [vmem:[#allocation2 + $0x8] sm:$0xf]
      %v828 = vld [vmem:[#allocation2] sm:$0xe]
      %v829 = vld [vmem:[#allocation2] sm:$0x8]
      %v830 = vld [vmem:[#allocation2 + $0xc] sm:$0x3]
      %v831 = vld [vmem:[#allocation2 + $0xc] sm:$0x7]
      %v832 = vld [vmem:[#allocation2 + $0x4] sm:$0xc]
      %v833 = vld [vmem:[#allocation2 + $0xc] sm:$0xf]
      %v834 = vld [vmem:[#allocation2 + $0x10] sm:$0x1]
      %v835 = vld [vmem:[#allocation2 + $0x10] sm:$0x3]
      %v836 = vld [vmem:[#allocation2 + $0x4] sm:$0x8]
      %v840 = vunpack.c.l.b16 %v824
      %v841 = vunpack.c.l.b16 %v825
      %v842 = vunpack.c.l.b16 %v826
      %v843 = vpack.c.b16 %v841, %v840
      %v844 = vpack.c.b16 %v842, %v842
      %v846 = vunpack.c.l.b16 %v827
      %v847 = vpack.c.b16 %v846, %v846
      %v849 = vshrl.u32 %v843, 16
      %v851 = vshll.u32 %v843, 16
      %v853 = vrot.slane %v851, 1
      %v854 = vor.u32 %v849, %v853
      %v856 = vshll.u32 %v847, 16
      %v858 = vrot.slane %v856, 1
      %v859 = vsel %vm246, %v854, %v858
      %v860 = vshrl.u32 %v847, 16
      %v862 = vor.u32 %v860, %v858
      %863 = vrot.lane.b32.xlu0 %v859, 32
      %v864 = vpop.permute.xlu0 %863
      %865 = vrot.lane.b32.xlu0 %v862, 32
      %v866 = vpop.permute.xlu0 %865
      %v868 = vunpack.c.l.b16 %v828
      %v869 = vpack.c.b16 %v841, %v868
      %v870 = vrot.slane %v869, 1
      %v871 = vrot.slane %v847, 1
      %v872 = vsel %vm266, %v870, %v871
      %873 = vrot.lane.b32.xlu0 %v872, 64
      %v874 = vpop.permute.xlu0 %873
      %875 = vrot.lane.b32.xlu0 %v871, 64
      %v876 = vpop.permute.xlu0 %875
      %v879 = vunpack.c.l.b16 %v829
      %v880 = vunpack.c.l.b16 %v830
      %v881 = vpack.c.b16 %v841, %v879
      %v882 = vpack.c.b16 %v880, %v846
      %v883 = vrot.slane %v881, 3
      %v884 = vrot.slane %v882, 3
      %v885 = vsel %vm277, %v883, %v884
      %886 = vrot.lane.b32.xlu0 %v885, 96
      %v887 = vpop.permute.xlu0 %886
      %888 = vrot.lane.b32.xlu0 %v884, 96
      %v889 = vpop.permute.xlu0 %888
      %v891 = vunpack.c.l.b16 %v831
      %v892 = vpack.c.b16 %v891, %v846
      %v894 = vshrl.u32 %v881, 16
      %v896 = vrot.slane %v894, 3
      %v897 = vshll.u32 %v881, 16
      %v899 = vrot.slane %v897, 4
      %v900 = vor.u32 %v896, %v899
      %v902 = vshrl.u32 %v892, 16
      %v904 = vrot.slane %v902, 3
      %v905 = vshll.u32 %v892, 16
      %v907 = vrot.slane %v905, 4
      %v908 = vor.u32 %v904, %v907
      %v909 = vsel %vm285, %v900, %v908
      %v910 = vpack.c.b16 %v846, %v841
      %v911 = vpack.c.b16 %v891, %v891
      %912 = vrot.lane.b32.xlu0 %v910, 32
      %v913 = vpop.permute.xlu0 %912
      %914 = vrot.lane.b32.xlu0 %v911, 32
      %v915 = vpop.permute.xlu0 %914
      %v919 = vunpack.c.l.b16 %v832
      %v920 = vunpack.c.l.b16 %v833
      %v921 = vunpack.c.l.b16 %v834
      %v922 = vpack.c.b16 %v846, %v919
      %v923 = vpack.c.b16 %v921, %v920
      %v924 = vrot.slane %v922, 2
      %v925 = vrot.slane %v923, 2
      %v926 = vsel %vm307, %v924, %v925
      %927 = vrot.lane.b32.xlu0 %v926, 64
      %v928 = vpop.permute.xlu0 %927
      %929 = vrot.lane.b32.xlu0 %v925, 64
      %v930 = vpop.permute.xlu0 %929
      %v932 = vunpack.c.l.b16 %v835
      %v933 = vpack.c.b16 %v932, %v920
      %v935 = vshrl.u32 %v922, 16
      %v937 = vrot.slane %v935, 2
      %v938 = vshll.u32 %v922, 16
      %v940 = vrot.slane %v938, 3
      %v941 = vor.u32 %v937, %v940
      %v943 = vshrl.u32 %v933, 16
      %v945 = vrot.slane %v943, 2
      %v946 = vshll.u32 %v933, 16
      %v948 = vrot.slane %v946, 3
      %v949 = vor.u32 %v945, %v948
      %v950 = vsel %vm315, %v941, %v949
      %951 = vrot.lane.b32.xlu0 %v950, 96
      %v952 = vpop.permute.xlu0 %951
      %953 = vrot.lane.b32.xlu0 %v949, 96
      %v954 = vpop.permute.xlu0 %953
      %v956 = vunpack.c.l.b16 %v836
      %v957 = vpack.c.b16 %v846, %v956
      %v958 = vrot.slane %v957, 3
      %v959 = vrot.slane %v933, 3
      %v960 = vsel %vm277, %v958, %v959
      %v962 = vsel %vm340, %v843, %v864
      %v965 = vsel %vm340, %v844, %v866
      %v967 = vsel %vm345, %v962, %v874
      %v969 = vsel %vm345, %v965, %v876
      %v971 = vsel %vm350, %v967, %v887
      %v974 = vsel %vm350, %v969, %v889
      %v978 = vsel %vm340, %v909, %v913
      %v981 = vsel %vm340, %v908, %v915
      %v983 = vsel %vm345, %v978, %v928
      %v985 = vsel %vm345, %v981, %v930
      %v987 = vsel %vm350, %v983, %v952
      %v990 = vsel %vm350, %v985, %v954
      %v992 = vld [vmem:[%s2] sm:$0xf]
      %v993 = vld [vmem:[%s2 + $0x4] sm:$0xf]
      %v994 = vld [vmem:[%s2 + $0x8] sm:$0xf]
      %v995 = vld [vmem:[%s2 + $0xc] sm:$0xf]
      %v996 = vld [vmem:[%s2 + $0x10] sm:$0xf]
      %v997 = vld [vmem:[%s2 + $0x14] sm:$0xf]
      %v998 = vld [vmem:[%s2 + $0x18] sm:$0xf]
      %v999 = vld [vmem:[%s2 + $0x1c] sm:$0xf]
      %v1000 = vld [vmem:[%s2 + $0x20] sm:$0xf]
      %v1001 = vld [vmem:[%s2 + $0x24] sm:$0xf]
      %v1002 = vld [vmem:[%s2 + $0x28] sm:$0xf]
      %v1003 = vld [vmem:[%s2 + $0x2c] sm:$0xf]
      %v1004 = vld [vmem:[%s2 + $0x30] sm:$0xf]
      %v1005 = vld [vmem:[%s2 + $0x34] sm:$0xf]
      %v1006 = vld [vmem:[%s2 + $0x38] sm:$0xf]
      %v1007 = vld [vmem:[%s2 + $0x3c] sm:$0xf]
      %v1008 = vld [vmem:[%s2 + $0x40] sm:$0xf]
      %v1009 = vld [vmem:[%s2 + $0x44] sm:$0xf]
      %v1010 = vld [vmem:[%s2 + $0x48] sm:$0xf]
      %v1011 = vld [vmem:[%s2 + $0x4c] sm:$0xf]
      %v1012 = vld [vmem:[%s2 + $0x50] sm:$0xf]
      %v1013 = vld [vmem:[%s2 + $0x54] sm:$0xf]
      %v1014 = vld [vmem:[%s2 + $0x58] sm:$0xf]
      %v1015 = vld [vmem:[%s2 + $0x5c] sm:$0xf]
      %v1016 = vld [vmem:[%s2 + $0x60] sm:$0xf]
      %v1017 = vld [vmem:[%s2 + $0x64] sm:$0xf]
      %v1018 = vld [vmem:[%s2 + $0x68] sm:$0xf]
      %v1019 = vld [vmem:[%s2 + $0x6c] sm:$0xf]
      %v1020 = vld [vmem:[%s2 + $0x70] sm:$0xf]
      %v1021 = vld [vmem:[%s2 + $0x74] sm:$0xf]
      %v1022 = vld [vmem:[%s2 + $0x78] sm:$0xf]
      %v1023 = vld [vmem:[%s2 + $0x7c] sm:$0xf]
      %v1024 = vld [vmem:[%s2 + $0x80] sm:$0xf]
      %v1025 = vld [vmem:[%s2 + $0x84] sm:$0xf]
      %v1026 = vld [vmem:[%s2 + $0x88] sm:$0xf]
      %v1027 = vld [vmem:[%s2 + $0x8c] sm:$0xf]
      %v1064 = vunpack.c.l.b16 %v992
      %v1065 = vunpack.c.l.b16 %v993
      %v1066 = vunpack.c.l.b16 %v994
      %v1067 = vunpack.c.l.b16 %v995
      %v1068 = vunpack.c.l.b16 %v996
      %v1069 = vunpack.c.l.b16 %v997
      %v1070 = vunpack.c.l.b16 %v998
      %v1071 = vunpack.c.l.b16 %v999
      %v1072 = vunpack.c.l.b16 %v1000
      %v1073 = vunpack.c.l.b16 %v1001
      %v1074 = vunpack.c.l.b16 %v1002
      %v1075 = vunpack.c.l.b16 %v1003
      %v1076 = vunpack.c.l.b16 %v1004
      %v1077 = vunpack.c.l.b16 %v1005
      %v1078 = vunpack.c.l.b16 %v1006
      %v1079 = vunpack.c.l.b16 %v1007
      %v1080 = vunpack.c.l.b16 %v1008
      %v1081 = vunpack.c.l.b16 %v1009
      %v1082 = vunpack.c.l.b16 %v1010
      %v1083 = vunpack.c.l.b16 %v1011
      %v1084 = vunpack.c.l.b16 %v1012
      %v1085 = vunpack.c.l.b16 %v1013
      %v1086 = vunpack.c.l.b16 %v1014
      %v1087 = vunpack.c.l.b16 %v1015
      %v1088 = vunpack.c.l.b16 %v1016
      %v1089 = vunpack.c.l.b16 %v1017
      %v1090 = vunpack.c.l.b16 %v1018
      %v1091 = vunpack.c.l.b16 %v1019
      %v1092 = vunpack.c.l.b16 %v1020
      %v1093 = vunpack.c.l.b16 %v1021
      %v1094 = vunpack.c.l.b16 %v1022
      %v1095 = vunpack.c.l.b16 %v1023
      %v1096 = vunpack.c.l.b16 %v1024
      %v1097 = vunpack.c.l.b16 %v1025
      %v1098 = vunpack.c.l.b16 %v1026
      %v1099 = vunpack.c.l.b16 %v1027
      %v1100 = vpack.c.b16 %v1065, %v1064
      %v1101 = vpack.c.b16 %v1067, %v1066
      %v1102 = vpack.c.b16 %v1069, %v1068
      %v1103 = vpack.c.b16 %v1071, %v1070
      %v1104 = vpack.c.b16 %v1073, %v1072
      %v1105 = vpack.c.b16 %v1075, %v1074
      %v1106 = vpack.c.b16 %v1077, %v1076
      %v1107 = vpack.c.b16 %v1079, %v1078
      %v1108 = vpack.c.b16 %v1081, %v1080
      %v1109 = vpack.c.b16 %v1083, %v1082
      %v1110 = vpack.c.b16 %v1085, %v1084
      %v1111 = vpack.c.b16 %v1087, %v1086
      %v1112 = vpack.c.b16 %v1089, %v1088
      %v1113 = vpack.c.b16 %v1091, %v1090
      %v1114 = vpack.c.b16 %v1093, %v1092
      %v1115 = vpack.c.b16 %v1095, %v1094
      %v1116 = vpack.c.b16 %v1097, %v1096
      %v1117 = vpack.c.b16 %v1099, %v1098
      %v1137 = vsel %vm340, %v960, 0
      %v1140 = vsel %vm340, %v959, 0
      %1142 = vmatprep.subr.bf16.mxu0 0
      %1143 = vmatpush1.bf16.msra.mxu0 %v1100
      %1144 = vmatprep.subr.bf16.mxu0 0
      %1145 = vmatpush1.bf16.msra.mxu0 %v1101
      %1146 = vmatprep.subr.bf16.mxu0 0
      %1147 = vmatpush1.bf16.msra.mxu0 %v1102
      %1148 = vmatprep.subr.bf16.mxu0 0
      %1149 = vmatpush1.bf16.msra.mxu0 %v1103
      %1150 = vmatprep.subr.bf16.mxu0 0
      %1151 = vmatpush1.bf16.msra.mxu0 %v1104
      %1152 = vmatprep.subr.bf16.mxu0 0
      %1153 = vmatpush1.bf16.msra.mxu0 %v1105
      %1154 = vmatprep.subr.bf16.mxu0 0
      %1155 = vmatpush1.bf16.msra.mxu0 %v1106
      %1156 = vmatprep.subr.bf16.mxu0 0
      %1157 = vmatpush1.bf16.msra.mxu0 %v1107
      %1158 = vmatprep.subr.bf16.mxu0 0
      %1159 = vmatpush1.bf16.msra.mxu0 %v1108
      %1160 = vmatprep.subr.bf16.mxu0 0
      %1161 = vmatpush1.bf16.msra.mxu0 %v1109
      %1162 = vmatprep.subr.bf16.mxu0 0
      %1163 = vmatpush1.bf16.msra.mxu0 %v1110
      %1164 = vmatprep.subr.bf16.mxu0 0
      %1165 = vmatpush1.bf16.msra.mxu0 %v1111
      %1166 = vmatprep.subr.bf16.mxu0 0
      %1167 = vmatpush1.bf16.msra.mxu0 %v1112
      %1168 = vmatprep.subr.bf16.mxu0 0
      %1169 = vmatpush1.bf16.msra.mxu0 %v1113
      %1170 = vmatprep.subr.bf16.mxu0 0
      %1171 = vmatpush1.bf16.msra.mxu0 %v1114
      %1172 = vmatprep.subr.bf16.mxu0 0
      %1173 = vmatpush1.bf16.msra.mxu0 %v1115
      %1174 = vmatprep.mubr.bf16.mxu0 %v987
      %1175 = vmatmul.mubr.bf16.gmra.mrb[0].mxu0 %v971
      %v1176 = vpop.f32.mrb[0].mxu0
      %v1177 = vadd.f32 0.0, %v1176
      %v1178 = vpop.f32.mrb[0].mxu0
      %v1179 = vpop.f32.mrb[0].mxu0
      %v1180 = vadd.f32 0.0, %v1179
      %v1181 = vpop.f32.mrb[0].mxu0
      %1182 = vmatprep.mubr.bf16.mxu0 %v990
      %1183 = vmatmul.mubr.bf16.gmra.mrb[0].mxu0 %v974
      %v1184 = vpop.f32.mrb[0].mxu0
      %v1185 = vadd.f32 0.0, %v1184
      %v1186 = vpop.f32.mrb[0].mxu0
      %v1187 = vpop.f32.mrb[0].mxu0
      %v1188 = vpop.f32.mrb[0].mxu0
      %1189 = vdwg.mxu0
      %1190 = vmatprep.subr.bf16.mxu0 0
      %1191 = vmatpush1.bf16.msra.mxu0 %v1116
      %1192 = vmatprep.subr.bf16.mxu0 0
      %1193 = vmatpush1.bf16.msra.mxu0 %v1117
      %1194 = vmatprep.subr.bf16.mxu0 0
      %1195 = vmatpush1.bf16.msra.mxu0 0
      %1196 = vmatprep.subr.bf16.mxu0 0
      %1197 = vmatpush1.bf16.msra.mxu0 0
      %1198 = vmatprep.subr.bf16.mxu0 0
      %1199 = vmatpush1.bf16.msra.mxu0 0
      %1200 = vmatprep.subr.bf16.mxu0 0
      %1201 = vmatpush1.bf16.msra.mxu0 0
      %1202 = vmatprep.subr.bf16.mxu0 0
      %1203 = vmatpush1.bf16.msra.mxu0 0
      %1204 = vmatprep.subr.bf16.mxu0 0
      %1205 = vmatpush1.bf16.msra.mxu0 0
      %1206 = vmatprep.subr.bf16.mxu0 0
      %1207 = vmatpush1.bf16.msra.mxu0 0
      %1208 = vmatprep.subr.bf16.mxu0 0
      %1209 = vmatpush1.bf16.msra.mxu0 0
      %1210 = vmatprep.subr.bf16.mxu0 0
      %1211 = vmatpush1.bf16.msra.mxu0 0
      %1212 = vmatprep.subr.bf16.mxu0 0
      %1213 = vmatpush1.bf16.msra.mxu0 0
      %1214 = vmatprep.subr.bf16.mxu0 0
      %1215 = vmatpush1.bf16.msra.mxu0 0
      %1216 = vmatprep.subr.bf16.mxu0 0
      %1217 = vmatpush1.bf16.msra.mxu0 0
      %1218 = vmatprep.subr.bf16.mxu0 0
      %1219 = vmatpush1.bf16.msra.mxu0 0
      %1220 = vmatprep.subr.bf16.mxu0 0
      %1221 = vmatpush1.bf16.msra.mxu0 0
      %1222 = vmatprep.mubr.bf16.mxu0 0
      %1223 = vmatmul.mubr.bf16.gmra.mrb[0].mxu0 %v1137
      %v1224 = vpop.f32.mrb[0].mxu0
      %v1225 = vadd.f32 %v1177, %v1224
      %v1226 = vpop.f32.mrb[0].mxu0
      %v1227 = vpop.f32.mrb[0].mxu0
      %v1228 = vadd.f32 %v1180, %v1227
      %v1229 = vpop.f32.mrb[0].mxu0
      %1230 = vmatprep.mubr.bf16.mxu0 0
      %1231 = vmatmul.mubr.bf16.gmra.mrb[0].mxu0 %v1140
      %v1232 = vpop.f32.mrb[0].mxu0
      %v1233 = vadd.f32 %v1185, %v1232
      %v1234 = vpop.f32.mrb[0].mxu0
      %v1235 = vpop.f32.mrb[0].mxu0
      %v1236 = vpop.f32.mrb[0].mxu0
      %1237 = vdwg.mxu0
      %v1238 = vmul.f32 %v1225, %v235
      %v1239 = vmul.f32 %v1228, %v236
      %v1240 = vmul.f32 %v1233, %v237
      %v1241 = vsel %vm340, %v1238, 0.0
      %v1242 = vsel %vm340, %v1239, 0.0
      %v1243 = vadd.f32 %v1241, %v1242
      %v1244 = vsel %vm625, %v1240, 0.0
      %v1245 = vadd.f32 %v1243, %v1244
      %v1246 = vrot.slane %v1245, 4
      %v1247 = vadd.f32 %v1245, %v1246
      %v1248 = vrot.slane %v1247, 2
      %v1249 = vadd.f32 %v1247, %v1248
      %v1250 = vrot.slane %v1249, 1
      %v1251 = vadd.f32 %v1249, %v1250
      %v1252 = vmul.f32 %v1251, 0.0625
      %v1253 = vmul.f32 %v1238, %v1225
      %v1254 = vmul.f32 %v1239, %v1228
      %v1255 = vmul.f32 %v1240, %v1233
      %v1256 = vsel %vm340, %v1253, 0.0
      %v1257 = vsel %vm340, %v1254, 0.0
      %v1258 = vadd.f32 %v1256, %v1257
      %v1259 = vsel %vm625, %v1255, 0.0
      %v1260 = vadd.f32 %v1258, %v1259
      %v1261 = vrot.slane %v1260, 4
      %v1262 = vadd.f32 %v1260, %v1261
      %v1263 = vrot.slane %v1262, 2
      %v1264 = vadd.f32 %v1262, %v1263
      %v1265 = vrot.slane %v1264, 1
      %v1266 = vadd.f32 %v1264, %v1265
      %v1267 = vmul.f32 %v1266, 0.0625
      %v1268 = vmul.f32 %v1252, %v1252
      %v1269 = vsub.f32 %v1267, %v1268
      %v1270 = vmax.f32 %v1269, 0.0
      %v1271 = vsub.f32 %v1225, %v1252
      %v1272 = vsub.f32 %v1228, %v1252
      %v1273 = vsub.f32 %v1233, %v1252
      %v1274 = vadd.f32 %v1270, 1e-05
      %v1275 = vrsqrt.pop %v1274
      %v1276 = vmul.f32 %v1271, %v1275
      %v1277 = vmul.f32 %v1272, %v1275
      %v1278 = vmul.f32 %v1273, %v1275
      %v1279 = vunpack.c.l.bf16 %v172
      %v1280 = vunpack.c.l.bf16 %v173
      %v1281 = vunpack.c.l.bf16 %v174
      %v1282 = vunpack.c.l.bf16 %v175
      %vm1287 = vcmask 1040384
      %v1288 = vrot.slane %v1279, 7
      %v1289 = vrot.slane %v1280, 7
      %v1290 = vsel %vm1287, %v1288, %v1289
      %v1291 = vrot.slane %v1281, 7
      %v1292 = vsel %vm1287, %v1289, %v1291
      %v1293 = vrot.slane %v1282, 7
      %v1294 = vsel %vm1287, %v1291, %v1293
      %v1298 = vadd.f32 %v1276, %v1290
      %v1299 = vadd.f32 %v1277, %v1292
      %v1300 = vadd.f32 %v1278, %v1294
      %1301 = vst.msk [vmem:[%s170] sm:$0xff] %vm340, %v1298
      %1302 = vst.msk [vmem:[%s170 + $0x8] sm:$0xff] %vm340, %v1299
      %1303 = vst.msk [vmem:[%s170 + $0x10] sm:$0x3f] %vm625, %v1300
      %p1304 = scmp.lt.s32.totalorder %s14, 1
      %s1305 = scalar_select %p1304, %s14, 1
      %s1306 = smul.addr %s1305, 3
      %s1307 = smul.addr %s1306, 8
      %s1308 = scalar_lea.vmem %s3, %s1307
      // Predicated region
      $region33: #{hdr_resnet_encoder_clear.11} parent=31 // pred_check
        %p1309 = pneg %p100
      $region34: #{hdr_resnet_encoder_clear.11} parent=31 // pred_check_branch
        %1311 = sbr.rel (%p1309) target = $region36
      $region35: #{hdr_resnet_encoder_clear.11} parent=31 // pred_region
        _
      $region36: #{hdr_resnet_encoder_clear.11} parent=31 // pred_fallthru
        _
    $region32: #{hdr_resnet_encoder_clear.11} parent=5 // pred_fallthru
      _
    %p1312 = scmp.le.s32.totalorder 2, %s9
    // Predicated region
    $region37: #{hdr_resnet_encoder_clear.11} parent=5 // pred_check
      %p1313 = pneg %p1312
    $region38: #{hdr_resnet_encoder_clear.11} parent=5 // pred_check_branch
      %1315 = sbr.rel (%p1313) target = $region40
    $region39: #{hdr_resnet_encoder_clear.11} parent=5 // pred_region
      %s1316 = ssub.s32 %s9, 2
      // Predicated region
      $region41: #{hdr_resnet_encoder_clear.11} parent=39 // pred_check
        %p1317 = pneg %p106
      $region42: #{hdr_resnet_encoder_clear.11} parent=39 // pred_check_branch
        %1319 = sbr.rel (%p1317) target = $region44
      $region43: #{hdr_resnet_encoder_clear.11} parent=39 // pred_region
        %p1320 = scmp.lt.s32.totalorder %s15, 1
        %s1321 = scalar_select %p1320, %s15, 1
        %s1322 = smul.addr %s1321, 3
        %s1323 = smul.addr %s1322, 8
        %s1324 = scalar_lea.vmem %s3, %s1323
      $region44: #{hdr_resnet_encoder_clear.11} parent=39 // pred_fallthru
        _
    $region40: #{hdr_resnet_encoder_clear.11} parent=5 // pred_fallthru
      _
  $region6: #{hdr_resnet_encoder_clear.11} parent=0 // loop_footer
    %s13 = sadd.s32 1, %s9
  $region7: #{hdr_resnet_encoder_clear.11} parent=0 // loop_footer_branch
    %8 = sbr.rel target = $region3
  $region8: #{hdr_resnet_encoder_clear.11} parent=0 // loop_exit
    _

// kernel: hdr_resnet_encoder_clear.6
$region0: #{hdr_resnet_encoder_clear.6}
  #allocation0 [shape = 'u32[]', space=smem, size = 0x4, offset = 0x4, fixed_abs, tag = 'smem constant byte address 0x4 - core index']
  #allocation1 [shape = 'u32[144,128]{1,0:T(1,128)}', space=vmem, size = 0x12000, scoped, tag = 'internal scratch']
  %s0 = inlined_call_operand.vmem [shape: f32[2,484,4], index: 0, kind: input, shape index: {}]
  %s1 = inlined_call_operand.vmem [shape: bf16[196,8], index: 1, kind: input, shape index: {}]
  %s2 = inlined_call_operand.vmem [shape: bf16[2,346,8], index: 2, kind: output, shape index: {}]
  %s3 = sld [smem:[#allocation0]]
  $region41: #{hdr_resnet_encoder_clear.6} parent=0
    _
  %s5 = ssub.s32 1, %s3
  %s6 = scalar_select 0, %s5, %s3
  loop: start=0, step=1, limit=4
  $region2: #{hdr_resnet_encoder_clear.6} parent=0 // loop_pre_header
    _
  $region3: #{hdr_resnet_encoder_clear.6} parent=0 // loop_header
    %s8 = sphi 0, %s12
    %p9 = scmp.ge.s32.totalorder %s8, 4
    %s18 = sphi 0, %s20
    %s21 = sphi 0, %s18
    %s22 = sphi 0, %s21
    %s38 = sphi 0, %s22
    %s42 = sphi 0, %s42
    %s44 = sphi 0, %s42
    %s45 = sphi 0, %s44
    %s59 = sphi 0, %s45
    %s65 = sphi 0, %s67
    %s68 = sphi 0, %s65
    %s69 = sphi 0, %s68
    %s85 = sphi 0, %s69
  $region4: #{hdr_resnet_encoder_clear.6} parent=0 // loop_header_branch
    %11 = sbr.rel (%p9) target = $region8
  $region5: #{hdr_resnet_encoder_clear.6} parent=0 // loop_body
    %s13 = ssub.s32 %s8, 1
    %s14 = ssub.s32 %s8, 2
    %s15 = sadd.s32 %s8, 1
    %s16 = ssub.s32 %s8, %s15
    %p17 = scmp.eq.s32.totalorder %s16, 0
    %s19 = sadd.s32 %s18, 1
    %s20 = scalar_select %p17, %s18, %s19
    %p23 = pneg %p17
    %p24 = scmp.eq.s32.totalorder %s8, 1
    %p25 = por %p23, %p24
    %p26 = scmp.ne.s32.totalorder %s18, %s21
    %p27 = scmp.eq.s32.totalorder %s8, 0
    %p28 = por %p26, %p27
    %p29 = scmp.ne.s32.totalorder %s18, %s21
    %p30 = scmp.eq.s32.totalorder %s13, 1
    %p31 = por %p29, %p30
    %p32 = scmp.ne.s32.totalorder %s21, %s22
    %p33 = scmp.eq.s32.totalorder %s13, 0
    %p34 = por %p32, %p33
    %p35 = scmp.ne.s32.totalorder %s21, %s22
    %p36 = scmp.eq.s32.totalorder %s14, 1
    %p37 = por %p35, %p36
    %p39 = scmp.ne.s32.totalorder %s22, %s38
    %p40 = scmp.eq.s32.totalorder %s14, 0
    %p41 = por %p39, %p40
    %s43 = sadd.s32 %s42, 1
    %p46 = scmp.eq.s32.totalorder %s8, 1
    %p47 = scmp.ne.s32.totalorder %s42, %s44
    %p48 = scmp.eq.s32.totalorder %s8, 0
    %p49 = por %p47, %p48
    %p50 = scmp.ne.s32.totalorder %s42, %s44
    %p51 = scmp.eq.s32.totalorder %s13, 1
    %p52 = por %p50, %p51
    %p53 = scmp.ne.s32.totalorder %s44, %s45
    %p54 = scmp.eq.s32.totalorder %s13, 0
    %p55 = por %p53, %p54
    %p56 = scmp.ne.s32.totalorder %s44, %s45
    %p57 = scmp.eq.s32.totalorder %s14, 1
    %p58 = por %p56, %p57
    %p60 = scmp.ne.s32.totalorder %s45, %s59
    %p61 = scmp.eq.s32.totalorder %s14, 0
    %p62 = por %p60, %p61
    %s63 = ssub.s32 %s8, %s15
    %p64 = scmp.eq.s32.totalorder %s63, 0
    %s66 = sadd.s32 %s65, 1
    %s67 = scalar_select %p64, %s65, %s66
    %p70 = pneg %p64
    %p71 = scmp.eq.s32.totalorder %s8, 1
    %p72 = por %p70, %p71
    %p73 = scmp.ne.s32.totalorder %s65, %s68
    %p74 = scmp.eq.s32.totalorder %s8, 0
    %p75 = por %p73, %p74
    %p76 = scmp.ne.s32.totalorder %s65, %s68
    %p77 = scmp.eq.s32.totalorder %s13, 1
    %p78 = por %p76, %p77
    %p79 = scmp.ne.s32.totalorder %s68, %s69
    %p80 = scmp.eq.s32.totalorder %s13, 0
    %p81 = por %p79, %p80
    %p82 = scmp.ne.s32.totalorder %s68, %s69
    %p83 = scmp.eq.s32.totalorder %s14, 1
    %p84 = por %p82, %p83
    %p86 = scmp.ne.s32.totalorder %s69, %s85
    %p87 = scmp.eq.s32.totalorder %s14, 0
    %p88 = por %p86, %p87
    %p89 = scmp.le.s32.totalorder 1, %s8
    %p90 = scmp.lt.s32.totalorder %s8, 3
    %p91 = pnand %p89, %p90
    %p92 = pneg %p91
    // Predicated region
    $region9: #{hdr_resnet_encoder_clear.6} parent=5 // pred_check
      _
    $region10: #{hdr_resnet_encoder_clear.6} parent=5 // pred_check_branch
      %94 = sbr.rel (%p91) target = $region12
    $region11: #{hdr_resnet_encoder_clear.6} parent=5 // pred_region
      %s95 = ssub.s32 %s8, 1
      // Predicated region
      $region13: #{hdr_resnet_encoder_clear.6} parent=11 // pred_check
        %p96 = pneg %p55
      $region14: #{hdr_resnet_encoder_clear.6} parent=11 // pred_check_branch
        %98 = sbr.rel (%p96) target = $region16
      $region15: #{hdr_resnet_encoder_clear.6} parent=11 // pred_region
        _
      $region16: #{hdr_resnet_encoder_clear.6} parent=11 // pred_fallthru
        _
    $region12: #{hdr_resnet_encoder_clear.6} parent=5 // pred_fallthru
      _
    %p99 = scmp.lt.s32.totalorder %s8, 2
    // Predicated region
    $region17: #{hdr_resnet_encoder_clear.6} parent=5 // pred_check
      %p100 = pneg %p99
    $region18: #{hdr_resnet_encoder_clear.6} parent=5 // pred_check_branch
      %102 = sbr.rel (%p100) target = $region20
    $region19: #{hdr_resnet_encoder_clear.6} parent=5 // pred_region
      // Predicated region
      $region21: #{hdr_resnet_encoder_clear.6} parent=19 // pred_check
        %p103 = pneg %p28
      $region22: #{hdr_resnet_encoder_clear.6} parent=19 // pred_check_branch
        %105 = sbr.rel (%p103) target = $region24
      $region23: #{hdr_resnet_encoder_clear.6} parent=19 // pred_region
        %p106 = scmp.lt.s32.totalorder %s8, 1
        %s107 = scalar_select %p106, %s8, 1
        %s108 = smul.addr %s107, 61
        %s109 = smul.addr %s108, 8
        %s110 = scalar_lea.vmem %s0, %s109
      $region24: #{hdr_resnet_encoder_clear.6} parent=19 // pred_fallthru
        _
    $region20: #{hdr_resnet_encoder_clear.6} parent=5 // pred_fallthru
      _
    %p111 = scmp.le.s32.totalorder 1, %s8
    %p112 = scmp.lt.s32.totalorder %s8, 3
    %p113 = pnand %p111, %p112
    %p114 = pneg %p113
    // Predicated region
    $region25: #{hdr_resnet_encoder_clear.6} parent=5 // pred_check
      _
    $region26: #{hdr_resnet_encoder_clear.6} parent=5 // pred_check_branch
      %116 = sbr.rel (%p113) target = $region28
    $region27: #{hdr_resnet_encoder_clear.6} parent=5 // pred_region
      %s117 = ssub.s32 %s8, 1
      %p118 = scmp.lt.s32.totalorder %s13, 1
      %s119 = scalar_select %p118, %s13, 1
      %s120 = smul.addr %s119, 61
      %s121 = smul.addr %s120, 8
      %s122 = scalar_lea.vmem %s0, %s121
      %p123 = pneg %p34
      %p124 = pneg %p31
      %p125 = pneg %p55
      %p126 = pneg %p52
      %p127 = pneg %p81
      %p128 = pneg %p78
      %p129 = scmp.lt.s32.totalorder %s13, 1
      %s130 = scalar_select %p129, %s13, 1
      %s131 = smul.addr %s130, 44
      %s132 = smul.addr %s131, 4
      %s133 = scalar_lea.vmem %s2, %s132
      %p134 = scmp.lt.s32.totalorder %s13, 1
      %s135 = scalar_select %p134, %s13, 1
      %s136 = smul.addr %s135, 61
      %s137 = smul.addr %s136, 8
      %s138 = scalar_lea.vmem %s0, %s137
      %p139 = scmp.lt.s32.totalorder %s13, 1
      %s140 = scalar_select %p139, %s13, 1
      %s141 = smul.addr %s140, 44
      %s142 = smul.addr %s141, 4
      %s143 = scalar_lea.vmem %s2, %s142
      %v145 = vld [vmem:[%s138] sm:$0xff]
      %v146 = vld [vmem:[%s138 + $0x8] sm:$0xff]
      %v147 = vld [vmem:[%s138 + $0x10] sm:$0xff]
      %v148 = vld [vmem:[%s138 + $0x18] sm:$0xff]
      %v149 = vld [vmem:[%s138 + $0x20] sm:$0xff]
      %v150 = vld [vmem:[%s138 + $0x28] sm:$0xff]
      %v151 = vld [vmem:[%s138 + $0x30] sm:$0xff]
      %v152 = vld [vmem:[%s138 + $0x38] sm:$0xff]
      %v153 = vld [vmem:[%s138 + $0x40] sm:$0xff]
      %v154 = vld [vmem:[%s138 + $0x48] sm:$0xff]
      %v155 = vld [vmem:[%s138 + $0x50] sm:$0xff]
      %v156 = vld [vmem:[%s138 + $0x58] sm:$0xff]
      %v157 = vld [vmem:[%s138 + $0x60] sm:$0xff]
      %v158 = vld [vmem:[%s138 + $0x68] sm:$0xff]
      %v159 = vld [vmem:[%s138 + $0x70] sm:$0xff]
      %v160 = vld [vmem:[%s138 + $0x78] sm:$0xff]
      %v161 = vld [vmem:[%s138 + $0x80] sm:$0xff]
      %v162 = vld [vmem:[%s138 + $0x88] sm:$0xff]
      %v163 = vld [vmem:[%s138 + $0x90] sm:$0xff]
      %v164 = vld [vmem:[%s138 + $0x98] sm:$0xff]
      %v165 = vld [vmem:[%s138 + $0xa0] sm:$0xff]
      %v166 = vld [vmem:[%s138 + $0xa8] sm:$0xff]
      %v167 = vld [vmem:[%s138 + $0xb0] sm:$0xff]
      %v168 = vld [vmem:[%s138 + $0xb8] sm:$0xff]
      %v169 = vld [vmem:[%s138 + $0xc0] sm:$0xff]
      %v170 = vld [vmem:[%s138 + $0xc8] sm:$0xff]
      %v171 = vld [vmem:[%s138 + $0xd0] sm:$0xff]
      %v172 = vld [vmem:[%s138 + $0xd8] sm:$0xff]
      %v173 = vld [vmem:[%s138 + $0xe0] sm:$0xff]
      %v174 = vld [vmem:[%s138 + $0xe8] sm:$0xff]
      %v175 = vld [vmem:[%s138 + $0xf0] sm:$0xff]
      %v176 = vld [vmem:[%s138 + $0xf8] sm:$0xff]
      %v177 = vld [vmem:[%s138 + $0x100] sm:$0xff]
      %v178 = vld [vmem:[%s138 + $0x108] sm:$0xff]
      %v179 = vld [vmem:[%s138 + $0x110] sm:$0xff]
      %v180 = vld [vmem:[%s138 + $0x118] sm:$0xff]
      %v181 = vld [vmem:[%s138 + $0x120] sm:$0xff]
      %v182 = vld [vmem:[%s138 + $0x128] sm:$0xff]
      %v183 = vld [vmem:[%s138 + $0x130] sm:$0xff]
      %v184 = vld [vmem:[%s138 + $0x138] sm:$0xff]
      %v185 = vld [vmem:[%s138 + $0x140] sm:$0xff]
      %v186 = vld [vmem:[%s138 + $0x148] sm:$0xff]
      %v187 = vld [vmem:[%s138 + $0x150] sm:$0xff]
      %v188 = vld [vmem:[%s138 + $0x158] sm:$0xff]
      %v189 = vld [vmem:[%s138 + $0x160] sm:$0xff]
      %v190 = vld [vmem:[%s138 + $0x168] sm:$0xff]
      %v191 = vld [vmem:[%s138 + $0x170] sm:$0xff]
      %v192 = vld [vmem:[%s138 + $0x178] sm:$0xff]
      %v193 = vld [vmem:[%s138 + $0x180] sm:$0xff]
      %v194 = vld [vmem:[%s138 + $0x188] sm:$0xff]
      %v195 = vld [vmem:[%s138 + $0x190] sm:$0xff]
      %v196 = vld [vmem:[%s138 + $0x198] sm:$0xff]
      %v197 = vld [vmem:[%s138 + $0x1a0] sm:$0xff]
      %v198 = vld [vmem:[%s138 + $0x1a8] sm:$0xff]
      %v199 = vld [vmem:[%s138 + $0x1b0] sm:$0xff]
      %v200 = vld [vmem:[%s138 + $0x1b8] sm:$0xff]
      %v201 = vld [vmem:[%s138 + $0x1c0] sm:$0xff]
      %v202 = vld [vmem:[%s138 + $0x1c8] sm:$0xff]
      %v203 = vld [vmem:[%s138 + $0x1d0] sm:$0xff]
      %v204 = vld [vmem:[%s138 + $0x1d8] sm:$0xff]
      %v205 = vld [vmem:[%s138 + $0x1e0] sm:$0xf]
      %v206 = vpack.c.bf16 %v146, %v145
      %v207 = vpack.c.bf16 %v148, %v147
      %v208 = vpack.c.bf16 %v150, %v149
      %v209 = vpack.c.bf16 %v152, %v151
      %v210 = vpack.c.bf16 %v154, %v153
      %v211 = vpack.c.bf16 %v156, %v155
      %v212 = vpack.c.bf16 %v158, %v157
      %v213 = vpack.c.bf16 %v160, %v159
      %v214 = vpack.c.bf16 %v162, %v161
      %v215 = vpack.c.bf16 %v164, %v163
      %v216 = vpack.c.bf16 %v166, %v165
      %v217 = vpack.c.bf16 %v168, %v167
      %v218 = vpack.c.bf16 %v170, %v169
      %v219 = vpack.c.bf16 %v172, %v171
      %v220 = vpack.c.bf16 %v174, %v173
      %v221 = vpack.c.bf16 %v176, %v175
      %v222 = vpack.c.bf16 %v178, %v177
      %v223 = vpack.c.bf16 %v180, %v179
      %v224 = vpack.c.bf16 %v182, %v181
      %v225 = vpack.c.bf16 %v184, %v183
      %v226 = vpack.c.bf16 %v186, %v185
      %v227 = vpack.c.bf16 %v188, %v187
      %v228 = vpack.c.bf16 %v190, %v189
      %v229 = vpack.c.bf16 %v192, %v191
      %v230 = vpack.c.bf16 %v194, %v193
      %v231 = vpack.c.bf16 %v196, %v195
      %v232 = vpack.c.bf16 %v198, %v197
      %v233 = vpack.c.bf16 %v200, %v199
      %v234 = vpack.c.bf16 %v202, %v201
      %v235 = vpack.c.bf16 %v204, %v203
      %v236 = vpack.c.bf16 %v205, %v205
      %vm237 = vsmask.f32 7424
      %v239 = vshrl.u32 %v206, 16
      %v241 = vshll.u32 %v206, 16
      %v243 = vrot.slane %v241, 1
      %v244 = vor.u32 %v239, %v243
      %v246 = vshll.u32 %v207, 16
      %v248 = vrot.slane %v246, 1
      %v249 = vsel %vm237, %v244, %v248
      %v250 = vshrl.u32 %v207, 16
      %v252 = vor.u32 %v250, %v248
      %v254 = vshll.u32 %v208, 16
      %v256 = vrot.slane %v254, 1
      %v257 = vsel %vm237, %v252, %v256
      %v258 = vshrl.u32 %v208, 16
      %v260 = vor.u32 %v258, %v256
      %v262 = vshll.u32 %v209, 16
      %v264 = vrot.slane %v262, 1
      %v265 = vsel %vm237, %v260, %v264
      %v266 = vshrl.u32 %v209, 16
      %v268 = vor.u32 %v266, %v264
      %v270 = vshll.u32 %v210, 16
      %v272 = vrot.slane %v270, 1
      %v273 = vsel %vm237, %v268, %v272
      %v274 = vshrl.u32 %v210, 16
      %v276 = vor.u32 %v274, %v272
      %v278 = vshll.u32 %v211, 16
      %v280 = vrot.slane %v278, 1
      %v281 = vsel %vm237, %v276, %v280
      %v282 = vshrl.u32 %v211, 16
      %v284 = vor.u32 %v282, %v280
      %v286 = vshll.u32 %v212, 16
      %v288 = vrot.slane %v286, 1
      %v289 = vsel %vm237, %v284, %v288
      %v290 = vshrl.u32 %v212, 16
      %v292 = vor.u32 %v290, %v288
      %v294 = vshll.u32 %v213, 16
      %v296 = vrot.slane %v294, 1
      %v297 = vsel %vm237, %v292, %v296
      %v298 = vshrl.u32 %v213, 16
      %v300 = vor.u32 %v298, %v296
      %v302 = vshll.u32 %v214, 16
      %v304 = vrot.slane %v302, 1
      %v305 = vsel %vm237, %v300, %v304
      %v306 = vshrl.u32 %v214, 16
      %v308 = vor.u32 %v306, %v304
      %v310 = vshll.u32 %v215, 16
      %v312 = vrot.slane %v310, 1
      %v313 = vsel %vm237, %v308, %v312
      %v314 = vshrl.u32 %v215, 16
      %v316 = vor.u32 %v314, %v312
      %v318 = vshll.u32 %v216, 16
      %v320 = vrot.slane %v318, 1
      %v321 = vsel %vm237, %v316, %v320
      %v322 = vshrl.u32 %v216, 16
      %v324 = vor.u32 %v322, %v320
      %v326 = vshll.u32 %v217, 16
      %v328 = vrot.slane %v326, 1
      %v329 = vsel %vm237, %v324, %v328
      %v330 = vshrl.u32 %v217, 16
      %v332 = vor.u32 %v330, %v328
      %v334 = vshll.u32 %v218, 16
      %v336 = vrot.slane %v334, 1
      %v337 = vsel %vm237, %v332, %v336
      %v338 = vshrl.u32 %v218, 16
      %v340 = vor.u32 %v338, %v336
      %v342 = vshll.u32 %v219, 16
      %v344 = vrot.slane %v342, 1
      %v345 = vsel %vm237, %v340, %v344
      %v346 = vshrl.u32 %v219, 16
      %v348 = vor.u32 %v346, %v344
      %v350 = vshll.u32 %v220, 16
      %v352 = vrot.slane %v350, 1
      %v353 = vsel %vm237, %v348, %v352
      %v354 = vshrl.u32 %v220, 16
      %v356 = vor.u32 %v354, %v352
      %v358 = vshll.u32 %v221, 16
      %v360 = vrot.slane %v358, 1
      %v361 = vsel %vm237, %v356, %v360
      %v362 = vshrl.u32 %v221, 16
      %v364 = vor.u32 %v362, %v360
      %v366 = vshll.u32 %v222, 16
      %v368 = vrot.slane %v366, 1
      %v369 = vsel %vm237, %v364, %v368
      %v370 = vshrl.u32 %v222, 16
      %v372 = vor.u32 %v370, %v368
      %v374 = vshll.u32 %v223, 16
      %v376 = vrot.slane %v374, 1
      %v377 = vsel %vm237, %v372, %v376
      %v378 = vshrl.u32 %v223, 16
      %v380 = vor.u32 %v378, %v376
      %v382 = vshll.u32 %v224, 16
      %v384 = vrot.slane %v382, 1
      %v385 = vsel %vm237, %v380, %v384
      %v386 = vshrl.u32 %v224, 16
      %v388 = vor.u32 %v386, %v384
      %v390 = vshll.u32 %v225, 16
      %v392 = vrot.slane %v390, 1
      %v393 = vsel %vm237, %v388, %v392
      %v394 = vshrl.u32 %v225, 16
      %v396 = vor.u32 %v394, %v392
      %v398 = vshll.u32 %v226, 16
      %v400 = vrot.slane %v398, 1
      %v401 = vsel %vm237, %v396, %v400
      %v402 = vshrl.u32 %v226, 16
      %v404 = vor.u32 %v402, %v400
      %v406 = vshll.u32 %v227, 16
      %v408 = vrot.slane %v406, 1
      %v409 = vsel %vm237, %v404, %v408
      %v410 = vshrl.u32 %v227, 16
      %v412 = vor.u32 %v410, %v408
      %413 = vrot.lane.b32.xlu0 %v249, 4
      %v414 = vpop.permute.xlu0 %413
      %415 = vrot.lane.b32.xlu0 %v257, 4
      %v416 = vpop.permute.xlu0 %415
      %417 = vrot.lane.b32.xlu0 %v265, 4
      %v418 = vpop.permute.xlu0 %417
      %419 = vrot.lane.b32.xlu0 %v273, 4
      %v420 = vpop.permute.xlu0 %419
      %421 = vrot.lane.b32.xlu0 %v281, 4
      %v422 = vpop.permute.xlu0 %421
      %423 = vrot.lane.b32.xlu0 %v289, 4
      %v424 = vpop.permute.xlu0 %423
      %425 = vrot.lane.b32.xlu0 %v297, 4
      %v426 = vpop.permute.xlu0 %425
      %427 = vrot.lane.b32.xlu0 %v305, 4
      %v428 = vpop.permute.xlu0 %427
      %429 = vrot.lane.b32.xlu0 %v313, 4
      %v430 = vpop.permute.xlu0 %429
      %431 = vrot.lane.b32.xlu0 %v321, 4
      %v432 = vpop.permute.xlu0 %431
      %433 = vrot.lane.b32.xlu0 %v329, 4
      %v434 = vpop.permute.xlu0 %433
      %435 = vrot.lane.b32.xlu0 %v337, 4
      %v436 = vpop.permute.xlu0 %435
      %437 = vrot.lane.b32.xlu0 %v345, 4
      %v438 = vpop.permute.xlu0 %437
      %439 = vrot.lane.b32.xlu0 %v353, 4
      %v440 = vpop.permute.xlu0 %439
      %441 = vrot.lane.b32.xlu0 %v361, 4
      %v442 = vpop.permute.xlu0 %441
      %443 = vrot.lane.b32.xlu0 %v369, 4
      %v444 = vpop.permute.xlu0 %443
      %445 = vrot.lane.b32.xlu0 %v377, 4
      %v446 = vpop.permute.xlu0 %445
      %447 = vrot.lane.b32.xlu0 %v385, 4
      %v448 = vpop.permute.xlu0 %447
      %449 = vrot.lane.b32.xlu0 %v393, 4
      %v450 = vpop.permute.xlu0 %449
      %451 = vrot.lane.b32.xlu0 %v401, 4
      %v452 = vpop.permute.xlu0 %451
      %453 = vrot.lane.b32.xlu0 %v409, 4
      %v454 = vpop.permute.xlu0 %453
      %455 = vrot.lane.b32.xlu0 %v412, 4
      %v456 = vpop.permute.xlu0 %455
      %vm479 = vcmask 1046528
      %v480 = vrot.slane %v206, 1
      %v481 = vrot.slane %v207, 1
      %v482 = vsel %vm479, %v480, %v481
      %v483 = vrot.slane %v208, 1
      %v484 = vsel %vm479, %v481, %v483
      %v485 = vrot.slane %v209, 1
      %v486 = vsel %vm479, %v483, %v485
      %v487 = vrot.slane %v210, 1
      %v488 = vsel %vm479, %v485, %v487
      %v489 = vrot.slane %v211, 1
      %v490 = vsel %vm479, %v487, %v489
      %v491 = vrot.slane %v212, 1
      %v492 = vsel %vm479, %v489, %v491
      %v493 = vrot.slane %v213, 1
      %v494 = vsel %vm479, %v491, %v493
      %v495 = vrot.slane %v214, 1
      %v496 = vsel %vm479, %v493, %v495
      %v497 = vrot.slane %v215, 1
      %v498 = vsel %vm479, %v495, %v497
      %v499 = vrot.slane %v216, 1
      %v500 = vsel %vm479, %v497, %v499
      %v501 = vrot.slane %v217, 1
      %v502 = vsel %vm479, %v499, %v501
      %v503 = vrot.slane %v218, 1
      %v504 = vsel %vm479, %v501, %v503
      %v505 = vrot.slane %v219, 1
      %v506 = vsel %vm479, %v503, %v505
      %v507 = vrot.slane %v220, 1
      %v508 = vsel %vm479, %v505, %v507
      %v509 = vrot.slane %v221, 1
      %v510 = vsel %vm479, %v507, %v509
      %v511 = vrot.slane %v222, 1
      %v512 = vsel %vm479, %v509, %v511
      %v513 = vrot.slane %v223, 1
      %v514 = vsel %vm479, %v511, %v513
      %v515 = vrot.slane %v224, 1
      %v516 = vsel %vm479, %v513, %v515
      %v517 = vrot.slane %v225, 1
      %v518 = vsel %vm479, %v515, %v517
      %v519 = vrot.slane %v226, 1
      %v520 = vsel %vm479, %v517, %v519
      %v521 = vrot.slane %v227, 1
      %v522 = vsel %vm479, %v519, %v521
      %523 = vrot.lane.b32.xlu0 %v482, 8
      %v524 = vpop.permute.xlu0 %523
      %525 = vrot.lane.b32.xlu0 %v484, 8
      %v526 = vpop.permute.xlu0 %525
      %527 = vrot.lane.b32.xlu0 %v486, 8
      %v528 = vpop.permute.xlu0 %527
      %529 = vrot.lane.b32.xlu0 %v488, 8
      %v530 = vpop.permute.xlu0 %529
      %531 = vrot.lane.b32.xlu0 %v490, 8
      %v532 = vpop.permute.xlu0 %531
      %533 = vrot.lane.b32.xlu0 %v492, 8
      %v534 = vpop.permute.xlu0 %533
      %535 = vrot.lane.b32.xlu0 %v494, 8
      %v536 = vpop.permute.xlu0 %535
      %537 = vrot.lane.b32.xlu0 %v496, 8
      %v538 = vpop.permute.xlu0 %537
      %539 = vrot.lane.b32.xlu0 %v498, 8
      %v540 = vpop.permute.xlu0 %539
      %541 = vrot.lane.b32.xlu0 %v500, 8
      %v542 = vpop.permute.xlu0 %541
      %543 = vrot.lane.b32.xlu0 %v502, 8
      %v544 = vpop.permute.xlu0 %543
      %545 = vrot.lane.b32.xlu0 %v504, 8
      %v546 = vpop.permute.xlu0 %545
      %547 = vrot.lane.b32.xlu0 %v506, 8
      %v548 = vpop.permute.xlu0 %547
      %549 = vrot.lane.b32.xlu0 %v508, 8
      %v550 = vpop.permute.xlu0 %549
      %551 = vrot.lane.b32.xlu0 %v510, 8
      %v552 = vpop.permute.xlu0 %551
      %553 = vrot.lane.b32.xlu0 %v512, 8
      %v554 = vpop.permute.xlu0 %553
      %555 = vrot.lane.b32.xlu0 %v514, 8
      %v556 = vpop.permute.xlu0 %555
      %557 = vrot.lane.b32.xlu0 %v516, 8
      %v558 = vpop.permute.xlu0 %557
      %559 = vrot.lane.b32.xlu0 %v518, 8
      %v560 = vpop.permute.xlu0 %559
      %561 = vrot.lane.b32.xlu0 %v520, 8
      %v562 = vpop.permute.xlu0 %561
      %563 = vrot.lane.b32.xlu0 %v522, 8
      %v564 = vpop.permute.xlu0 %563
      %565 = vrot.lane.b32.xlu0 %v521, 8
      %v566 = vpop.permute.xlu0 %565
      %vm567 = vsmask.f32 6400
      %v568 = vrot.slane %v239, 1
      %v569 = vrot.slane %v241, 2
      %v570 = vor.u32 %v568, %v569
      %v571 = vrot.slane %v250, 1
      %v572 = vrot.slane %v246, 2
      %v573 = vor.u32 %v571, %v572
      %v574 = vsel %vm567, %v570, %v573
      %v575 = vrot.slane %v258, 1
      %v576 = vrot.slane %v254, 2
      %v577 = vor.u32 %v575, %v576
      %v578 = vsel %vm567, %v573, %v577
      %v579 = vrot.slane %v266, 1
      %v580 = vrot.slane %v262, 2
      %v581 = vor.u32 %v579, %v580
      %v582 = vsel %vm567, %v577, %v581
      %v583 = vrot.slane %v274, 1
      %v584 = vrot.slane %v270, 2
      %v585 = vor.u32 %v583, %v584
      %v586 = vsel %vm567, %v581, %v585
      %v587 = vrot.slane %v282, 1
      %v588 = vrot.slane %v278, 2
      %v589 = vor.u32 %v587, %v588
      %v590 = vsel %vm567, %v585, %v589
      %v591 = vrot.slane %v290, 1
      %v592 = vrot.slane %v286, 2
      %v593 = vor.u32 %v591, %v592
      %v594 = vsel %vm567, %v589, %v593
      %v595 = vrot.slane %v298, 1
      %v596 = vrot.slane %v294, 2
      %v597 = vor.u32 %v595, %v596
      %v598 = vsel %vm567, %v593, %v597
      %v599 = vrot.slane %v306, 1
      %v600 = vrot.slane %v302, 2
      %v601 = vor.u32 %v599, %v600
      %v602 = vsel %vm567, %v597, %v601
      %v603 = vrot.slane %v314, 1
      %v604 = vrot.slane %v310, 2
      %v605 = vor.u32 %v603, %v604
      %v606 = vsel %vm567, %v601, %v605
      %v607 = vrot.slane %v322, 1
      %v608 = vrot.slane %v318, 2
      %v609 = vor.u32 %v607, %v608
      %v610 = vsel %vm567, %v605, %v609
      %v611 = vrot.slane %v330, 1
      %v612 = vrot.slane %v326, 2
      %v613 = vor.u32 %v611, %v612
      %v614 = vsel %vm567, %v609, %v613
      %v615 = vrot.slane %v338, 1
      %v616 = vrot.slane %v334, 2
      %v617 = vor.u32 %v615, %v616
      %v618 = vsel %vm567, %v613, %v617
      %v619 = vrot.slane %v346, 1
      %v620 = vrot.slane %v342, 2
      %v621 = vor.u32 %v619, %v620
      %v622 = vsel %vm567, %v617, %v621
      %v623 = vrot.slane %v354, 1
      %v624 = vrot.slane %v350, 2
      %v625 = vor.u32 %v623, %v624
      %v626 = vsel %vm567, %v621, %v625
      %v627 = vrot.slane %v362, 1
      %v628 = vrot.slane %v358, 2
      %v629 = vor.u32 %v627, %v628
      %v630 = vsel %vm567, %v625, %v629
      %v631 = vrot.slane %v370, 1
      %v632 = vrot.slane %v366, 2
      %v633 = vor.u32 %v631, %v632
      %v634 = vsel %vm567, %v629, %v633
      %v635 = vrot.slane %v378, 1
      %v636 = vrot.slane %v374, 2
      %v637 = vor.u32 %v635, %v636
      %v638 = vsel %vm567, %v633, %v637
      %v639 = vrot.slane %v386, 1
      %v640 = vrot.slane %v382, 2
      %v641 = vor.u32 %v639, %v640
      %v642 = vsel %vm567, %v637, %v641
      %v643 = vrot.slane %v394, 1
      %v644 = vrot.slane %v390, 2
      %v645 = vor.u32 %v643, %v644
      %v646 = vsel %vm567, %v641, %v645
      %v647 = vrot.slane %v402, 1
      %v648 = vrot.slane %v398, 2
      %v649 = vor.u32 %v647, %v648
      %v650 = vsel %vm567, %v645, %v649
      %v651 = vrot.slane %v410, 1
      %v652 = vrot.slane %v406, 2
      %v653 = vor.u32 %v651, %v652
      %v654 = vsel %vm567, %v649, %v653
      %655 = vrot.lane.b32.xlu0 %v574, 12
      %v656 = vpop.permute.xlu0 %655
      %657 = vrot.lane.b32.xlu0 %v578, 12
      %v658 = vpop.permute.xlu0 %657
      %659 = vrot.lane.b32.xlu0 %v582, 12
      %v660 = vpop.permute.xlu0 %659
      %661 = vrot.lane.b32.xlu0 %v586, 12
      %v662 = vpop.permute.xlu0 %661
      %663 = vrot.lane.b32.xlu0 %v590, 12
      %v664 = vpop.permute.xlu0 %663
      %665 = vrot.lane.b32.xlu0 %v594, 12
      %v666 = vpop.permute.xlu0 %665
      %667 = vrot.lane.b32.xlu0 %v598, 12
      %v668 = vpop.permute.xlu0 %667
      %669 = vrot.lane.b32.xlu0 %v602, 12
      %v670 = vpop.permute.xlu0 %669
      %671 = vrot.lane.b32.xlu0 %v606, 12
      %v672 = vpop.permute.xlu0 %671
      %673 = vrot.lane.b32.xlu0 %v610, 12
      %v674 = vpop.permute.xlu0 %673
      %675 = vrot.lane.b32.xlu0 %v614, 12
      %v676 = vpop.permute.xlu0 %675
      %677 = vrot.lane.b32.xlu0 %v618, 12
      %v678 = vpop.permute.xlu0 %677
      %679 = vrot.lane.b32.xlu0 %v622, 12
      %v680 = vpop.permute.xlu0 %679
      %681 = vrot.lane.b32.xlu0 %v626, 12
      %v682 = vpop.permute.xlu0 %681
      %683 = vrot.lane.b32.xlu0 %v630, 12
      %v684 = vpop.permute.xlu0 %683
      %685 = vrot.lane.b32.xlu0 %v634, 12
      %v686 = vpop.permute.xlu0 %685
      %687 = vrot.lane.b32.xlu0 %v638, 12
      %v688 = vpop.permute.xlu0 %687
      %689 = vrot.lane.b32.xlu0 %v642, 12
      %v690 = vpop.permute.xlu0 %689
      %691 = vrot.lane.b32.xlu0 %v646, 12
      %v692 = vpop.permute.xlu0 %691
      %693 = vrot.lane.b32.xlu0 %v650, 12
      %v694 = vpop.permute.xlu0 %693
      %695 = vrot.lane.b32.xlu0 %v654, 12
      %v696 = vpop.permute.xlu0 %695
      %697 = vrot.lane.b32.xlu0 %v653, 12
      %v698 = vpop.permute.xlu0 %697
      %vm699 = vcmask 1045504
      %v700 = vrot.slane %v206, 2
      %v701 = vrot.slane %v207, 2
      %v702 = vsel %vm699, %v700, %v701
      %v703 = vrot.slane %v208, 2
      %v704 = vsel %vm699, %v701, %v703
      %v705 = vrot.slane %v209, 2
      %v706 = vsel %vm699, %v703, %v705
      %v707 = vrot.slane %v210, 2
      %v708 = vsel %vm699, %v705, %v707
      %v709 = vrot.slane %v211, 2
      %v710 = vsel %vm699, %v707, %v709
      %v711 = vrot.slane %v212, 2
      %v712 = vsel %vm699, %v709, %v711
      %v713 = vrot.slane %v213, 2
      %v714 = vsel %vm699, %v711, %v713
      %v715 = vrot.slane %v214, 2
      %v716 = vsel %vm699, %v713, %v715
      %v717 = vrot.slane %v215, 2
      %v718 = vsel %vm699, %v715, %v717
      %v719 = vrot.slane %v216, 2
      %v720 = vsel %vm699, %v717, %v719
      %v721 = vrot.slane %v217, 2
      %v722 = vsel %vm699, %v719, %v721
      %v723 = vrot.slane %v218, 2
      %v724 = vsel %vm699, %v721, %v723
      %v725 = vrot.slane %v219, 2
      %v726 = vsel %vm699, %v723, %v725
      %v727 = vrot.slane %v220, 2
      %v728 = vsel %vm699, %v725, %v727
      %v729 = vrot.slane %v221, 2
      %v730 = vsel %vm699, %v727, %v729
      %v731 = vrot.slane %v222, 2
      %v732 = vsel %vm699, %v729, %v731
      %v733 = vrot.slane %v223, 2
      %v734 = vsel %vm699, %v731, %v733
      %v735 = vrot.slane %v224, 2
      %v736 = vsel %vm699, %v733, %v735
      %v737 = vrot.slane %v225, 2
      %v738 = vsel %vm699, %v735, %v737
      %v739 = vrot.slane %v226, 2
      %v740 = vsel %vm699, %v737, %v739
      %v741 = vrot.slane %v227, 2
      %v742 = vsel %vm699, %v739, %v741
      %743 = vrot.lane.b32.xlu0 %v702, 16
      %v744 = vpop.permute.xlu0 %743
      %745 = vrot.lane.b32.xlu0 %v704, 16
      %v746 = vpop.permute.xlu0 %745
      %747 = vrot.lane.b32.xlu0 %v706, 16
      %v748 = vpop.permute.xlu0 %747
      %749 = vrot.lane.b32.xlu0 %v708, 16
      %v750 = vpop.permute.xlu0 %749
      %751 = vrot.lane.b32.xlu0 %v710, 16
      %v752 = vpop.permute.xlu0 %751
      %753 = vrot.lane.b32.xlu0 %v712, 16
      %v754 = vpop.permute.xlu0 %753
      %755 = vrot.lane.b32.xlu0 %v714, 16
      %v756 = vpop.permute.xlu0 %755
      %757 = vrot.lane.b32.xlu0 %v716, 16
      %v758 = vpop.permute.xlu0 %757
      %759 = vrot.lane.b32.xlu0 %v718, 16
      %v760 = vpop.permute.xlu0 %759
      %761 = vrot.lane.b32.xlu0 %v720, 16
      %v762 = vpop.permute.xlu0 %761
      %763 = vrot.lane.b32.xlu0 %v722, 16
      %v764 = vpop.permute.xlu0 %763
      %765 = vrot.lane.b32.xlu0 %v724, 16
      %v766 = vpop.permute.xlu0 %765
      %767 = vrot.lane.b32.xlu0 %v726, 16
      %v768 = vpop.permute.xlu0 %767
      %769 = vrot.lane.b32.xlu0 %v728, 16
      %v770 = vpop.permute.xlu0 %769
      %771 = vrot.lane.b32.xlu0 %v730, 16
      %v772 = vpop.permute.xlu0 %771
      %773 = vrot.lane.b32.xlu0 %v732, 16
      %v774 = vpop.permute.xlu0 %773
      %775 = vrot.lane.b32.xlu0 %v734, 16
      %v776 = vpop.permute.xlu0 %775
      %777 = vrot.lane.b32.xlu0 %v736, 16
      %v778 = vpop.permute.xlu0 %777
      %779 = vrot.lane.b32.xlu0 %v738, 16
      %v780 = vpop.permute.xlu0 %779
      %781 = vrot.lane.b32.xlu0 %v740, 16
      %v782 = vpop.permute.xlu0 %781
      %783 = vrot.lane.b32.xlu0 %v742, 16
      %v784 = vpop.permute.xlu0 %783
      %785 = vrot.lane.b32.xlu0 %v741, 16
      %v786 = vpop.permute.xlu0 %785
      %vm787 = vsmask.f32 5376
      %v788 = vrot.slane %v239, 2
      %v789 = vrot.slane %v241, 3
      %v790 = vor.u32 %v788, %v789
      %v791 = vrot.slane %v250, 2
      %v792 = vrot.slane %v246, 3
      %v793 = vor.u32 %v791, %v792
      %v794 = vsel %vm787, %v790, %v793
      %v795 = vrot.slane %v258, 2
      %v796 = vrot.slane %v254, 3
      %v797 = vor.u32 %v795, %v796
      %v798 = vsel %vm787, %v793, %v797
      %v799 = vrot.slane %v266, 2
      %v800 = vrot.slane %v262, 3
      %v801 = vor.u32 %v799, %v800
      %v802 = vsel %vm787, %v797, %v801
      %v803 = vrot.slane %v274, 2
      %v804 = vrot.slane %v270, 3
      %v805 = vor.u32 %v803, %v804
      %v806 = vsel %vm787, %v801, %v805
      %v807 = vrot.slane %v282, 2
      %v808 = vrot.slane %v278, 3
      %v809 = vor.u32 %v807, %v808
      %v810 = vsel %vm787, %v805, %v809
      %v811 = vrot.slane %v290, 2
      %v812 = vrot.slane %v286, 3
      %v813 = vor.u32 %v811, %v812
      %v814 = vsel %vm787, %v809, %v813
      %v815 = vrot.slane %v298, 2
      %v816 = vrot.slane %v294, 3
      %v817 = vor.u32 %v815, %v816
      %v818 = vsel %vm787, %v813, %v817
      %v819 = vrot.slane %v306, 2
      %v820 = vrot.slane %v302, 3
      %v821 = vor.u32 %v819, %v820
      %v822 = vsel %vm787, %v817, %v821
      %v823 = vrot.slane %v314, 2
      %v824 = vrot.slane %v310, 3
      %v825 = vor.u32 %v823, %v824
      %v826 = vsel %vm787, %v821, %v825
      %v827 = vrot.slane %v322, 2
      %v828 = vrot.slane %v318, 3
      %v829 = vor.u32 %v827, %v828
      %v830 = vsel %vm787, %v825, %v829
      %v831 = vrot.slane %v330, 2
      %v832 = vrot.slane %v326, 3
      %v833 = vor.u32 %v831, %v832
      %v834 = vsel %vm787, %v829, %v833
      %v835 = vrot.slane %v338, 2
      %v836 = vrot.slane %v334, 3
      %v837 = vor.u32 %v835, %v836
      %v838 = vsel %vm787, %v833, %v837
      %v839 = vrot.slane %v346, 2
      %v840 = vrot.slane %v342, 3
      %v841 = vor.u32 %v839, %v840
      %v842 = vsel %vm787, %v837, %v841
      %v843 = vrot.slane %v354, 2
      %v844 = vrot.slane %v350, 3
      %v845 = vor.u32 %v843, %v844
      %v846 = vsel %vm787, %v841, %v845
      %v847 = vrot.slane %v362, 2
      %v848 = vrot.slane %v358, 3
      %v849 = vor.u32 %v847, %v848
      %v850 = vsel %vm787, %v845, %v849
      %v851 = vrot.slane %v370, 2
      %v852 = vrot.slane %v366, 3
      %v853 = vor.u32 %v851, %v852
      %v854 = vsel %vm787, %v849, %v853
      %v855 = vrot.slane %v378, 2
      %v856 = vrot.slane %v374, 3
      %v857 = vor.u32 %v855, %v856
      %v858 = vsel %vm787, %v853, %v857
      %v859 = vrot.slane %v386, 2
      %v860 = vrot.slane %v382, 3
      %v861 = vor.u32 %v859, %v860
      %v862 = vsel %vm787, %v857, %v861
      %v863 = vrot.slane %v394, 2
      %v864 = vrot.slane %v390, 3
      %v865 = vor.u32 %v863, %v864
      %v866 = vsel %vm787, %v861, %v865
      %v867 = vrot.slane %v402, 2
      %v868 = vrot.slane %v398, 3
      %v869 = vor.u32 %v867, %v868
      %v870 = vsel %vm787, %v865, %v869
      %v871 = vrot.slane %v410, 2
      %v872 = vrot.slane %v406, 3
      %v873 = vor.u32 %v871, %v872
      %v874 = vsel %vm787, %v869, %v873
      %875 = vrot.lane.b32.xlu0 %v794, 20
      %v876 = vpop.permute.xlu0 %875
      %877 = vrot.lane.b32.xlu0 %v798, 20
      %v878 = vpop.permute.xlu0 %877
      %879 = vrot.lane.b32.xlu0 %v802, 20
      %v880 = vpop.permute.xlu0 %879
      %881 = vrot.lane.b32.xlu0 %v806, 20
      %v882 = vpop.permute.xlu0 %881
      %883 = vrot.lane.b32.xlu0 %v810, 20
      %v884 = vpop.permute.xlu0 %883
      %885 = vrot.lane.b32.xlu0 %v814, 20
      %v886 = vpop.permute.xlu0 %885
      %887 = vrot.lane.b32.xlu0 %v818, 20
      %v888 = vpop.permute.xlu0 %887
      %889 = vrot.lane.b32.xlu0 %v822, 20
      %v890 = vpop.permute.xlu0 %889
      %891 = vrot.lane.b32.xlu0 %v826, 20
      %v892 = vpop.permute.xlu0 %891
      %893 = vrot.lane.b32.xlu0 %v830, 20
      %v894 = vpop.permute.xlu0 %893
      %895 = vrot.lane.b32.xlu0 %v834, 20
      %v896 = vpop.permute.xlu0 %895
      %897 = vrot.lane.b32.xlu0 %v838, 20
      %v898 = vpop.permute.xlu0 %897
      %899 = vrot.lane.b32.xlu0 %v842, 20
      %v900 = vpop.permute.xlu0 %899
      %901 = vrot.lane.b32.xlu0 %v846, 20
      %v902 = vpop.permute.xlu0 %901
      %903 = vrot.lane.b32.xlu0 %v850, 20
      %v904 = vpop.permute.xlu0 %903
      %905 = vrot.lane.b32.xlu0 %v854, 20
      %v906 = vpop.permute.xlu0 %905
      %907 = vrot.lane.b32.xlu0 %v858, 20
      %v908 = vpop.permute.xlu0 %907
      %909 = vrot.lane.b32.xlu0 %v862, 20
      %v910 = vpop.permute.xlu0 %909
      %911 = vrot.lane.b32.xlu0 %v866, 20
      %v912 = vpop.permute.xlu0 %911
      %913 = vrot.lane.b32.xlu0 %v870, 20
      %v914 = vpop.permute.xlu0 %913
      %915 = vrot.lane.b32.xlu0 %v874, 20
      %v916 = vpop.permute.xlu0 %915
      %917 = vrot.lane.b32.xlu0 %v873, 20
      %v918 = vpop.permute.xlu0 %917
      %vm919 = vcmask 1044480
      %v920 = vrot.slane %v206, 3
      %v921 = vrot.slane %v207, 3
      %v922 = vsel %vm919, %v920, %v921
      %v923 = vrot.slane %v208, 3
      %v924 = vsel %vm919, %v921, %v923
      %v925 = vrot.slane %v209, 3
      %v926 = vsel %vm919, %v923, %v925
      %v927 = vrot.slane %v210, 3
      %v928 = vsel %vm919, %v925, %v927
      %v929 = vrot.slane %v211, 3
      %v930 = vsel %vm919, %v927, %v929
      %v931 = vrot.slane %v212, 3
      %v932 = vsel %vm919, %v929, %v931
      %v933 = vrot.slane %v213, 3
      %v934 = vsel %vm919, %v931, %v933
      %v935 = vrot.slane %v214, 3
      %v936 = vsel %vm919, %v933, %v935
      %v937 = vrot.slane %v215, 3
      %v938 = vsel %vm919, %v935, %v937
      %v939 = vrot.slane %v216, 3
      %v940 = vsel %vm919, %v937, %v939
      %v941 = vrot.slane %v217, 3
      %v942 = vsel %vm919, %v939, %v941
      %v943 = vrot.slane %v218, 3
      %v944 = vsel %vm919, %v941, %v943
      %v945 = vrot.slane %v219, 3
      %v946 = vsel %vm919, %v943, %v945
      %v947 = vrot.slane %v220, 3
      %v948 = vsel %vm919, %v945, %v947
      %v949 = vrot.slane %v221, 3
      %v950 = vsel %vm919, %v947, %v949
      %v951 = vrot.slane %v222, 3
      %v952 = vsel %vm919, %v949, %v951
      %v953 = vrot.slane %v223, 3
      %v954 = vsel %vm919, %v951, %v953
      %v955 = vrot.slane %v224, 3
      %v956 = vsel %vm919, %v953, %v955
      %v957 = vrot.slane %v225, 3
      %v958 = vsel %vm919, %v955, %v957
      %v959 = vrot.slane %v226, 3
      %v960 = vsel %vm919, %v957, %v959
      %v961 = vrot.slane %v227, 3
      %v962 = vsel %vm919, %v959, %v961
      %963 = vrot.lane.b32.xlu0 %v922, 24
      %v964 = vpop.permute.xlu0 %963
      %965 = vrot.lane.b32.xlu0 %v924, 24
      %v966 = vpop.permute.xlu0 %965
      %967 = vrot.lane.b32.xlu0 %v926, 24
      %v968 = vpop.permute.xlu0 %967
      %969 = vrot.lane.b32.xlu0 %v928, 24
      %v970 = vpop.permute.xlu0 %969
      %971 = vrot.lane.b32.xlu0 %v930, 24
      %v972 = vpop.permute.xlu0 %971
      %973 = vrot.lane.b32.xlu0 %v932, 24
      %v974 = vpop.permute.xlu0 %973
      %975 = vrot.lane.b32.xlu0 %v934, 24
      %v976 = vpop.permute.xlu0 %975
      %977 = vrot.lane.b32.xlu0 %v936, 24
      %v978 = vpop.permute.xlu0 %977
      %979 = vrot.lane.b32.xlu0 %v938, 24
      %v980 = vpop.permute.xlu0 %979
      %981 = vrot.lane.b32.xlu0 %v940, 24
      %v982 = vpop.permute.xlu0 %981
      %983 = vrot.lane.b32.xlu0 %v942, 24
      %v984 = vpop.permute.xlu0 %983
      %985 = vrot.lane.b32.xlu0 %v944, 24
      %v986 = vpop.permute.xlu0 %985
      %987 = vrot.lane.b32.xlu0 %v946, 24
      %v988 = vpop.permute.xlu0 %987
      %989 = vrot.lane.b32.xlu0 %v948, 24
      %v990 = vpop.permute.xlu0 %989
      %991 = vrot.lane.b32.xlu0 %v950, 24
      %v992 = vpop.permute.xlu0 %991
      %993 = vrot.lane.b32.xlu0 %v952, 24
      %v994 = vpop.permute.xlu0 %993
      %995 = vrot.lane.b32.xlu0 %v954, 24
      %v996 = vpop.permute.xlu0 %995
      %997 = vrot.lane.b32.xlu0 %v956, 24
      %v998 = vpop.permute.xlu0 %997
      %999 = vrot.lane.b32.xlu0 %v958, 24
      %v1000 = vpop.permute.xlu0 %999
      %1001 = vrot.lane.b32.xlu0 %v960, 24
      %v1002 = vpop.permute.xlu0 %1001
      %1003 = vrot.lane.b32.xlu0 %v962, 24
      %v1004 = vpop.permute.xlu0 %1003
      %1005 = vrot.lane.b32.xlu0 %v961, 24
      %v1006 = vpop.permute.xlu0 %1005
      %v1008 = vrot.slane %v228, 3
      %v1009 = vsel %vm919, %v961, %v1008
      %1010 = vrot.lane.b32.xlu0 %v924, 28
      %v1011 = vpop.permute.xlu0 %1010
      %1012 = vrot.lane.b32.xlu0 %v926, 28
      %v1013 = vpop.permute.xlu0 %1012
      %1014 = vrot.lane.b32.xlu0 %v928, 28
      %v1015 = vpop.permute.xlu0 %1014
      %1016 = vrot.lane.b32.xlu0 %v930, 28
      %v1017 = vpop.permute.xlu0 %1016
      %1018 = vrot.lane.b32.xlu0 %v932, 28
      %v1019 = vpop.permute.xlu0 %1018
      %1020 = vrot.lane.b32.xlu0 %v934, 28
      %v1021 = vpop.permute.xlu0 %1020
      %1022 = vrot.lane.b32.xlu0 %v936, 28
      %v1023 = vpop.permute.xlu0 %1022
      %1024 = vrot.lane.b32.xlu0 %v938, 28
      %v1025 = vpop.permute.xlu0 %1024
      %1026 = vrot.lane.b32.xlu0 %v940, 28
      %v1027 = vpop.permute.xlu0 %1026
      %1028 = vrot.lane.b32.xlu0 %v942, 28
      %v1029 = vpop.permute.xlu0 %1028
      %1030 = vrot.lane.b32.xlu0 %v944, 28
      %v1031 = vpop.permute.xlu0 %1030
      %1032 = vrot.lane.b32.xlu0 %v946, 28
      %v1033 = vpop.permute.xlu0 %1032
      %1034 = vrot.lane.b32.xlu0 %v948, 28
      %v1035 = vpop.permute.xlu0 %1034
      %1036 = vrot.lane.b32.xlu0 %v950, 28
      %v1037 = vpop.permute.xlu0 %1036
      %1038 = vrot.lane.b32.xlu0 %v952, 28
      %v1039 = vpop.permute.xlu0 %1038
      %1040 = vrot.lane.b32.xlu0 %v954, 28
      %v1041 = vpop.permute.xlu0 %1040
      %1042 = vrot.lane.b32.xlu0 %v956, 28
      %v1043 = vpop.permute.xlu0 %1042
      %1044 = vrot.lane.b32.xlu0 %v958, 28
      %v1045 = vpop.permute.xlu0 %1044
      %1046 = vrot.lane.b32.xlu0 %v960, 28
      %v1047 = vpop.permute.xlu0 %1046
      %1048 = vrot.lane.b32.xlu0 %v962, 28
      %v1049 = vpop.permute.xlu0 %1048
      %1050 = vrot.lane.b32.xlu0 %v1009, 28
      %v1051 = vpop.permute.xlu0 %1050
      %1052 = vrot.lane.b32.xlu0 %v1008, 28
      %v1053 = vpop.permute.xlu0 %1052
      %vm1054 = vsmask.f32 4352
      %v1055 = vrot.slane %v250, 3
      %v1056 = vrot.slane %v246, 4
      %v1057 = vor.u32 %v1055, %v1056
      %v1058 = vrot.slane %v258, 3
      %v1059 = vrot.slane %v254, 4
      %v1060 = vor.u32 %v1058, %v1059
      %v1061 = vsel %vm1054, %v1057, %v1060
      %v1062 = vrot.slane %v266, 3
      %v1063 = vrot.slane %v262, 4
      %v1064 = vor.u32 %v1062, %v1063
      %v1065 = vsel %vm1054, %v1060, %v1064
      %v1066 = vrot.slane %v274, 3
      %v1067 = vrot.slane %v270, 4
      %v1068 = vor.u32 %v1066, %v1067
      %v1069 = vsel %vm1054, %v1064, %v1068
      %v1070 = vrot.slane %v282, 3
      %v1071 = vrot.slane %v278, 4
      %v1072 = vor.u32 %v1070, %v1071
      %v1073 = vsel %vm1054, %v1068, %v1072
      %v1074 = vrot.slane %v290, 3
      %v1075 = vrot.slane %v286, 4
      %v1076 = vor.u32 %v1074, %v1075
      %v1077 = vsel %vm1054, %v1072, %v1076
      %v1078 = vrot.slane %v298, 3
      %v1079 = vrot.slane %v294, 4
      %v1080 = vor.u32 %v1078, %v1079
      %v1081 = vsel %vm1054, %v1076, %v1080
      %v1082 = vrot.slane %v306, 3
      %v1083 = vrot.slane %v302, 4
      %v1084 = vor.u32 %v1082, %v1083
      %v1085 = vsel %vm1054, %v1080, %v1084
      %v1086 = vrot.slane %v314, 3
      %v1087 = vrot.slane %v310, 4
      %v1088 = vor.u32 %v1086, %v1087
      %v1089 = vsel %vm1054, %v1084, %v1088
      %v1090 = vrot.slane %v322, 3
      %v1091 = vrot.slane %v318, 4
      %v1092 = vor.u32 %v1090, %v1091
      %v1093 = vsel %vm1054, %v1088, %v1092
      %v1094 = vrot.slane %v330, 3
      %v1095 = vrot.slane %v326, 4
      %v1096 = vor.u32 %v1094, %v1095
      %v1097 = vsel %vm1054, %v1092, %v1096
      %v1098 = vrot.slane %v338, 3
      %v1099 = vrot.slane %v334, 4
      %v1100 = vor.u32 %v1098, %v1099
      %v1101 = vsel %vm1054, %v1096, %v1100
      %v1102 = vrot.slane %v346, 3
      %v1103 = vrot.slane %v342, 4
      %v1104 = vor.u32 %v1102, %v1103
      %v1105 = vsel %vm1054, %v1100, %v1104
      %v1106 = vrot.slane %v354, 3
      %v1107 = vrot.slane %v350, 4
      %v1108 = vor.u32 %v1106, %v1107
      %v1109 = vsel %vm1054, %v1104, %v1108
      %v1110 = vrot.slane %v362, 3
      %v1111 = vrot.slane %v358, 4
      %v1112 = vor.u32 %v1110, %v1111
      %v1113 = vsel %vm1054, %v1108, %v1112
      %v1114 = vrot.slane %v370, 3
      %v1115 = vrot.slane %v366, 4
      %v1116 = vor.u32 %v1114, %v1115
      %v1117 = vsel %vm1054, %v1112, %v1116
      %v1118 = vrot.slane %v378, 3
      %v1119 = vrot.slane %v374, 4
      %v1120 = vor.u32 %v1118, %v1119
      %v1121 = vsel %vm1054, %v1116, %v1120
      %v1122 = vrot.slane %v386, 3
      %v1123 = vrot.slane %v382, 4
      %v1124 = vor.u32 %v1122, %v1123
      %v1125 = vsel %vm1054, %v1120, %v1124
      %v1126 = vrot.slane %v394, 3
      %v1127 = vrot.slane %v390, 4
      %v1128 = vor.u32 %v1126, %v1127
      %v1129 = vsel %vm1054, %v1124, %v1128
      %v1130 = vrot.slane %v402, 3
      %v1131 = vrot.slane %v398, 4
      %v1132 = vor.u32 %v1130, %v1131
      %v1133 = vsel %vm1054, %v1128, %v1132
      %v1134 = vrot.slane %v410, 3
      %v1135 = vrot.slane %v406, 4
      %v1136 = vor.u32 %v1134, %v1135
      %v1137 = vsel %vm1054, %v1132, %v1136
      %v1139 = vshrl.u32 %v228, 16
      %v1141 = vrot.slane %v1139, 3
      %v1142 = vshll.u32 %v228, 16
      %v1144 = vrot.slane %v1142, 4
      %v1145 = vor.u32 %v1141, %v1144
      %v1146 = vsel %vm1054, %v1136, %v1145
      %v1148 = vshll.u32 %v229, 16
      %v1150 = vrot.slane %v1148, 4
      %v1151 = vsel %vm1054, %v1145, %v1150
      %1152 = vrot.lane.b32.xlu0 %v1061, 32
      %v1153 = vpop.permute.xlu0 %1152
      %1154 = vrot.lane.b32.xlu0 %v1065, 32
      %v1155 = vpop.permute.xlu0 %1154
      %1156 = vrot.lane.b32.xlu0 %v1069, 32
      %v1157 = vpop.permute.xlu0 %1156
      %1158 = vrot.lane.b32.xlu0 %v1073, 32
      %v1159 = vpop.permute.xlu0 %1158
      %1160 = vrot.lane.b32.xlu0 %v1077, 32
      %v1161 = vpop.permute.xlu0 %1160
      %1162 = vrot.lane.b32.xlu0 %v1081, 32
      %v1163 = vpop.permute.xlu0 %1162
      %1164 = vrot.lane.b32.xlu0 %v1085, 32
      %v1165 = vpop.permute.xlu0 %1164
      %1166 = vrot.lane.b32.xlu0 %v1089, 32
      %v1167 = vpop.permute.xlu0 %1166
      %1168 = vrot.lane.b32.xlu0 %v1093, 32
      %v1169 = vpop.permute.xlu0 %1168
      %1170 = vrot.lane.b32.xlu0 %v1097, 32
      %v1171 = vpop.permute.xlu0 %1170
      %1172 = vrot.lane.b32.xlu0 %v1101, 32
      %v1173 = vpop.permute.xlu0 %1172
      %1174 = vrot.lane.b32.xlu0 %v1105, 32
      %v1175 = vpop.permute.xlu0 %1174
      %1176 = vrot.lane.b32.xlu0 %v1109, 32
      %v1177 = vpop.permute.xlu0 %1176
      %1178 = vrot.lane.b32.xlu0 %v1113, 32
      %v1179 = vpop.permute.xlu0 %1178
      %1180 = vrot.lane.b32.xlu0 %v1117, 32
      %v1181 = vpop.permute.xlu0 %1180
      %1182 = vrot.lane.b32.xlu0 %v1121, 32
      %v1183 = vpop.permute.xlu0 %1182
      %1184 = vrot.lane.b32.xlu0 %v1125, 32
      %v1185 = vpop.permute.xlu0 %1184
      %1186 = vrot.lane.b32.xlu0 %v1129, 32
      %v1187 = vpop.permute.xlu0 %1186
      %1188 = vrot.lane.b32.xlu0 %v1133, 32
      %v1189 = vpop.permute.xlu0 %1188
      %1190 = vrot.lane.b32.xlu0 %v1137, 32
      %v1191 = vpop.permute.xlu0 %1190
      %1192 = vrot.lane.b32.xlu0 %v1146, 32
      %v1193 = vpop.permute.xlu0 %1192
      %1194 = vrot.lane.b32.xlu0 %v1151, 32
      %v1195 = vpop.permute.xlu0 %1194
      %vm1197 = vcmask 1043456
      %v1198 = vrot.slane %v207, 4
      %v1199 = vrot.slane %v208, 4
      %v1200 = vsel %vm1197, %v1198, %v1199
      %v1201 = vrot.slane %v209, 4
      %v1202 = vsel %vm1197, %v1199, %v1201
      %v1203 = vrot.slane %v210, 4
      %v1204 = vsel %vm1197, %v1201, %v1203
      %v1205 = vrot.slane %v211, 4
      %v1206 = vsel %vm1197, %v1203, %v1205
      %v1207 = vrot.slane %v212, 4
      %v1208 = vsel %vm1197, %v1205, %v1207
      %v1209 = vrot.slane %v213, 4
      %v1210 = vsel %vm1197, %v1207, %v1209
      %v1211 = vrot.slane %v214, 4
      %v1212 = vsel %vm1197, %v1209, %v1211
      %v1213 = vrot.slane %v215, 4
      %v1214 = vsel %vm1197, %v1211, %v1213
      %v1215 = vrot.slane %v216, 4
      %v1216 = vsel %vm1197, %v1213, %v1215
      %v1217 = vrot.slane %v217, 4
      %v1218 = vsel %vm1197, %v1215, %v1217
      %v1219 = vrot.slane %v218, 4
      %v1220 = vsel %vm1197, %v1217, %v1219
      %v1221 = vrot.slane %v219, 4
      %v1222 = vsel %vm1197, %v1219, %v1221
      %v1223 = vrot.slane %v220, 4
      %v1224 = vsel %vm1197, %v1221, %v1223
      %v1225 = vrot.slane %v221, 4
      %v1226 = vsel %vm1197, %v1223, %v1225
      %v1227 = vrot.slane %v222, 4
      %v1228 = vsel %vm1197, %v1225, %v1227
      %v1229 = vrot.slane %v223, 4
      %v1230 = vsel %vm1197, %v1227, %v1229
      %v1231 = vrot.slane %v224, 4
      %v1232 = vsel %vm1197, %v1229, %v1231
      %v1233 = vrot.slane %v225, 4
      %v1234 = vsel %vm1197, %v1231, %v1233
      %v1235 = vrot.slane %v226, 4
      %v1236 = vsel %vm1197, %v1233, %v1235
      %v1237 = vrot.slane %v227, 4
      %v1238 = vsel %vm1197, %v1235, %v1237
      %v1239 = vrot.slane %v228, 4
      %v1240 = vsel %vm1197, %v1237, %v1239
      %v1241 = vrot.slane %v229, 4
      %v1242 = vsel %vm1197, %v1239, %v1241
      %1243 = vrot.lane.b32.xlu0 %v1200, 36
      %v1244 = vpop.permute.xlu0 %1243
      %1245 = vrot.lane.b32.xlu0 %v1202, 36
      %v1246 = vpop.permute.xlu0 %1245
      %1247 = vrot.lane.b32.xlu0 %v1204, 36
      %v1248 = vpop.permute.xlu0 %1247
      %1249 = vrot.lane.b32.xlu0 %v1206, 36
      %v1250 = vpop.permute.xlu0 %1249
      %1251 = vrot.lane.b32.xlu0 %v1208, 36
      %v1252 = vpop.permute.xlu0 %1251
      %1253 = vrot.lane.b32.xlu0 %v1210, 36
      %v1254 = vpop.permute.xlu0 %1253
      %1255 = vrot.lane.b32.xlu0 %v1212, 36
      %v1256 = vpop.permute.xlu0 %1255
      %1257 = vrot.lane.b32.xlu0 %v1214, 36
      %v1258 = vpop.permute.xlu0 %1257
      %1259 = vrot.lane.b32.xlu0 %v1216, 36
      %v1260 = vpop.permute.xlu0 %1259
      %1261 = vrot.lane.b32.xlu0 %v1218, 36
      %v1262 = vpop.permute.xlu0 %1261
      %1263 = vrot.lane.b32.xlu0 %v1220, 36
      %v1264 = vpop.permute.xlu0 %1263
      %1265 = vrot.lane.b32.xlu0 %v1222, 36
      %v1266 = vpop.permute.xlu0 %1265
      %1267 = vrot.lane.b32.xlu0 %v1224, 36
      %v1268 = vpop.permute.xlu0 %1267
      %1269 = vrot.lane.b32.xlu0 %v1226, 36
      %v1270 = vpop.permute.xlu0 %1269
      %1271 = vrot.lane.b32.xlu0 %v1228, 36
      %v1272 = vpop.permute.xlu0 %1271
      %1273 = vrot.lane.b32.xlu0 %v1230, 36
      %v1274 = vpop.permute.xlu0 %1273
      %1275 = vrot.lane.b32.xlu0 %v1232, 36
      %v1276 = vpop.permute.xlu0 %1275
      %1277 = vrot.lane.b32.xlu0 %v1234, 36
      %v1278 = vpop.permute.xlu0 %1277
      %1279 = vrot.lane.b32.xlu0 %v1236, 36
      %v1280 = vpop.permute.xlu0 %1279
      %1281 = vrot.lane.b32.xlu0 %v1238, 36
      %v1282 = vpop.permute.xlu0 %1281
      %1283 = vrot.lane.b32.xlu0 %v1240, 36
      %v1284 = vpop.permute.xlu0 %1283
      %1285 = vrot.lane.b32.xlu0 %v1242, 36
      %v1286 = vpop.permute.xlu0 %1285
      %vm1287 = vsmask.f32 3328
      %v1288 = vrot.slane %v250, 4
      %v1289 = vrot.slane %v246, 5
      %v1290 = vor.u32 %v1288, %v1289
      %v1291 = vrot.slane %v258, 4
      %v1292 = vrot.slane %v254, 5
      %v1293 = vor.u32 %v1291, %v1292
      %v1294 = vsel %vm1287, %v1290, %v1293
      %v1295 = vrot.slane %v266, 4
      %v1296 = vrot.slane %v262, 5
      %v1297 = vor.u32 %v1295, %v1296
      %v1298 = vsel %vm1287, %v1293, %v1297
      %v1299 = vrot.slane %v274, 4
      %v1300 = vrot.slane %v270, 5
      %v1301 = vor.u32 %v1299, %v1300
      %v1302 = vsel %vm1287, %v1297, %v1301
      %v1303 = vrot.slane %v282, 4
      %v1304 = vrot.slane %v278, 5
      %v1305 = vor.u32 %v1303, %v1304
      %v1306 = vsel %vm1287, %v1301, %v1305
      %v1307 = vrot.slane %v290, 4
      %v1308 = vrot.slane %v286, 5
      %v1309 = vor.u32 %v1307, %v1308
      %v1310 = vsel %vm1287, %v1305, %v1309
      %v1311 = vrot.slane %v298, 4
      %v1312 = vrot.slane %v294, 5
      %v1313 = vor.u32 %v1311, %v1312
      %v1314 = vsel %vm1287, %v1309, %v1313
      %v1315 = vrot.slane %v306, 4
      %v1316 = vrot.slane %v302, 5
      %v1317 = vor.u32 %v1315, %v1316
      %v1318 = vsel %vm1287, %v1313, %v1317
      %v1319 = vrot.slane %v314, 4
      %v1320 = vrot.slane %v310, 5
      %v1321 = vor.u32 %v1319, %v1320
      %v1322 = vsel %vm1287, %v1317, %v1321
      %v1323 = vrot.slane %v322, 4
      %v1324 = vrot.slane %v318, 5
      %v1325 = vor.u32 %v1323, %v1324
      %v1326 = vsel %vm1287, %v1321, %v1325
      %v1327 = vrot.slane %v330, 4
      %v1328 = vrot.slane %v326, 5
      %v1329 = vor.u32 %v1327, %v1328
      %v1330 = vsel %vm1287, %v1325, %v1329
      %v1331 = vrot.slane %v338, 4
      %v1332 = vrot.slane %v334, 5
      %v1333 = vor.u32 %v1331, %v1332
      %v1334 = vsel %vm1287, %v1329, %v1333
      %v1335 = vrot.slane %v346, 4
      %v1336 = vrot.slane %v342, 5
      %v1337 = vor.u32 %v1335, %v1336
      %v1338 = vsel %vm1287, %v1333, %v1337
      %v1339 = vrot.slane %v354, 4
      %v1340 = vrot.slane %v350, 5
      %v1341 = vor.u32 %v1339, %v1340
      %v1342 = vsel %vm1287, %v1337, %v1341
      %v1343 = vrot.slane %v362, 4
      %v1344 = vrot.slane %v358, 5
      %v1345 = vor.u32 %v1343, %v1344
      %v1346 = vsel %vm1287, %v1341, %v1345
      %v1347 = vrot.slane %v370, 4
      %v1348 = vrot.slane %v366, 5
      %v1349 = vor.u32 %v1347, %v1348
      %v1350 = vsel %vm1287, %v1345, %v1349
      %v1351 = vrot.slane %v378, 4
      %v1352 = vrot.slane %v374, 5
      %v1353 = vor.u32 %v1351, %v1352
      %v1354 = vsel %vm1287, %v1349, %v1353
      %v1355 = vrot.slane %v386, 4
      %v1356 = vrot.slane %v382, 5
      %v1357 = vor.u32 %v1355, %v1356
      %v1358 = vsel %vm1287, %v1353, %v1357
      %v1359 = vrot.slane %v394, 4
      %v1360 = vrot.slane %v390, 5
      %v1361 = vor.u32 %v1359, %v1360
      %v1362 = vsel %vm1287, %v1357, %v1361
      %v1363 = vrot.slane %v402, 4
      %v1364 = vrot.slane %v398, 5
      %v1365 = vor.u32 %v1363, %v1364
      %v1366 = vsel %vm1287, %v1361, %v1365
      %v1367 = vrot.slane %v410, 4
      %v1368 = vrot.slane %v406, 5
      %v1369 = vor.u32 %v1367, %v1368
      %v1370 = vsel %vm1287, %v1365, %v1369
      %v1371 = vrot.slane %v1139, 4
      %v1372 = vrot.slane %v1142, 5
      %v1373 = vor.u32 %v1371, %v1372
      %v1374 = vsel %vm1287, %v1369, %v1373
      %v1375 = vshrl.u32 %v229, 16
      %v1377 = vrot.slane %v1375, 4
      %v1378 = vrot.slane %v1148, 5
      %v1379 = vor.u32 %v1377, %v1378
      %v1380 = vsel %vm1287, %v1373, %v1379
      %1381 = vrot.lane.b32.xlu0 %v1294, 40
      %v1382 = vpop.permute.xlu0 %1381
      %1383 = vrot.lane.b32.xlu0 %v1298, 40
      %v1384 = vpop.permute.xlu0 %1383
      %1385 = vrot.lane.b32.xlu0 %v1302, 40
      %v1386 = vpop.permute.xlu0 %1385
      %1387 = vrot.lane.b32.xlu0 %v1306, 40
      %v1388 = vpop.permute.xlu0 %1387
      %1389 = vrot.lane.b32.xlu0 %v1310, 40
      %v1390 = vpop.permute.xlu0 %1389
      %1391 = vrot.lane.b32.xlu0 %v1314, 40
      %v1392 = vpop.permute.xlu0 %1391
      %1393 = vrot.lane.b32.xlu0 %v1318, 40
      %v1394 = vpop.permute.xlu0 %1393
      %1395 = vrot.lane.b32.xlu0 %v1322, 40
      %v1396 = vpop.permute.xlu0 %1395
      %1397 = vrot.lane.b32.xlu0 %v1326, 40
      %v1398 = vpop.permute.xlu0 %1397
      %1399 = vrot.lane.b32.xlu0 %v1330, 40
      %v1400 = vpop.permute.xlu0 %1399
      %1401 = vrot.lane.b32.xlu0 %v1334, 40
      %v1402 = vpop.permute.xlu0 %1401
      %1403 = vrot.lane.b32.xlu0 %v1338, 40
      %v1404 = vpop.permute.xlu0 %1403
      %1405 = vrot.lane.b32.xlu0 %v1342, 40
      %v1406 = vpop.permute.xlu0 %1405
      %1407 = vrot.lane.b32.xlu0 %v1346, 40
      %v1408 = vpop.permute.xlu0 %1407
      %1409 = vrot.lane.b32.xlu0 %v1350, 40
      %v1410 = vpop.permute.xlu0 %1409
      %1411 = vrot.lane.b32.xlu0 %v1354, 40
      %v1412 = vpop.permute.xlu0 %1411
      %1413 = vrot.lane.b32.xlu0 %v1358, 40
      %v1414 = vpop.permute.xlu0 %1413
      %1415 = vrot.lane.b32.xlu0 %v1362, 40
      %v1416 = vpop.permute.xlu0 %1415
      %1417 = vrot.lane.b32.xlu0 %v1366, 40
      %v1418 = vpop.permute.xlu0 %1417
      %1419 = vrot.lane.b32.xlu0 %v1370, 40
      %v1420 = vpop.permute.xlu0 %1419
      %1421 = vrot.lane.b32.xlu0 %v1374, 40
      %v1422 = vpop.permute.xlu0 %1421
      %1423 = vrot.lane.b32.xlu0 %v1380, 40
      %v1424 = vpop.permute.xlu0 %1423
      %vm1425 = vcmask 1042432
      %v1426 = vrot.slane %v207, 5
      %v1427 = vrot.slane %v208, 5
      %v1428 = vsel %vm1425, %v1426, %v1427
      %v1429 = vrot.slane %v209, 5
      %v1430 = vsel %vm1425, %v1427, %v1429
      %v1431 = vrot.slane %v210, 5
      %v1432 = vsel %vm1425, %v1429, %v1431
      %v1433 = vrot.slane %v211, 5
      %v1434 = vsel %vm1425, %v1431, %v1433
      %v1435 = vrot.slane %v212, 5
      %v1436 = vsel %vm1425, %v1433, %v1435
      %v1437 = vrot.slane %v213, 5
      %v1438 = vsel %vm1425, %v1435, %v1437
      %v1439 = vrot.slane %v214, 5
      %v1440 = vsel %vm1425, %v1437, %v1439
      %v1441 = vrot.slane %v215, 5
      %v1442 = vsel %vm1425, %v1439, %v1441
      %v1443 = vrot.slane %v216, 5
      %v1444 = vsel %vm1425, %v1441, %v1443
      %v1445 = vrot.slane %v217, 5
      %v1446 = vsel %vm1425, %v1443, %v1445
      %v1447 = vrot.slane %v218, 5
      %v1448 = vsel %vm1425, %v1445, %v1447
      %v1449 = vrot.slane %v219, 5
      %v1450 = vsel %vm1425, %v1447, %v1449
      %v1451 = vrot.slane %v220, 5
      %v1452 = vsel %vm1425, %v1449, %v1451
      %v1453 = vrot.slane %v221, 5
      %v1454 = vsel %vm1425, %v1451, %v1453
      %v1455 = vrot.slane %v222, 5
      %v1456 = vsel %vm1425, %v1453, %v1455
      %v1457 = vrot.slane %v223, 5
      %v1458 = vsel %vm1425, %v1455, %v1457
      %v1459 = vrot.slane %v224, 5
      %v1460 = vsel %vm1425, %v1457, %v1459
      %v1461 = vrot.slane %v225, 5
      %v1462 = vsel %vm1425, %v1459, %v1461
      %v1463 = vrot.slane %v226, 5
      %v1464 = vsel %vm1425, %v1461, %v1463
      %v1465 = vrot.slane %v227, 5
      %v1466 = vsel %vm1425, %v1463, %v1465
      %v1467 = vrot.slane %v228, 5
      %v1468 = vsel %vm1425, %v1465, %v1467
      %v1469 = vrot.slane %v229, 5
      %v1470 = vsel %vm1425, %v1467, %v1469
      %1471 = vrot.lane.b32.xlu0 %v1428, 44
      %v1472 = vpop.permute.xlu0 %1471
      %1473 = vrot.lane.b32.xlu0 %v1430, 44
      %v1474 = vpop.permute.xlu0 %1473
      %1475 = vrot.lane.b32.xlu0 %v1432, 44
      %v1476 = vpop.permute.xlu0 %1475
      %1477 = vrot.lane.b32.xlu0 %v1434, 44
      %v1478 = vpop.permute.xlu0 %1477
      %1479 = vrot.lane.b32.xlu0 %v1436, 44
      %v1480 = vpop.permute.xlu0 %1479
      %1481 = vrot.lane.b32.xlu0 %v1438, 44
      %v1482 = vpop.permute.xlu0 %1481
      %1483 = vrot.lane.b32.xlu0 %v1440, 44
      %v1484 = vpop.permute.xlu0 %1483
      %1485 = vrot.lane.b32.xlu0 %v1442, 44
      %v1486 = vpop.permute.xlu0 %1485
      %1487 = vrot.lane.b32.xlu0 %v1444, 44
      %v1488 = vpop.permute.xlu0 %1487
      %1489 = vrot.lane.b32.xlu0 %v1446, 44
      %v1490 = vpop.permute.xlu0 %1489
      %1491 = vrot.lane.b32.xlu0 %v1448, 44
      %v1492 = vpop.permute.xlu0 %1491
      %1493 = vrot.lane.b32.xlu0 %v1450, 44
      %v1494 = vpop.permute.xlu0 %1493
      %1495 = vrot.lane.b32.xlu0 %v1452, 44
      %v1496 = vpop.permute.xlu0 %1495
      %1497 = vrot.lane.b32.xlu0 %v1454, 44
      %v1498 = vpop.permute.xlu0 %1497
      %1499 = vrot.lane.b32.xlu0 %v1456, 44
      %v1500 = vpop.permute.xlu0 %1499
      %1501 = vrot.lane.b32.xlu0 %v1458, 44
      %v1502 = vpop.permute.xlu0 %1501
      %1503 = vrot.lane.b32.xlu0 %v1460, 44
      %v1504 = vpop.permute.xlu0 %1503
      %1505 = vrot.lane.b32.xlu0 %v1462, 44
      %v1506 = vpop.permute.xlu0 %1505
      %1507 = vrot.lane.b32.xlu0 %v1464, 44
      %v1508 = vpop.permute.xlu0 %1507
      %1509 = vrot.lane.b32.xlu0 %v1466, 44
      %v1510 = vpop.permute.xlu0 %1509
      %1511 = vrot.lane.b32.xlu0 %v1468, 44
      %v1512 = vpop.permute.xlu0 %1511
      %1513 = vrot.lane.b32.xlu0 %v1470, 44
      %v1514 = vpop.permute.xlu0 %1513
      %vm1515 = vsmask.f32 2304
      %v1516 = vrot.slane %v250, 5
      %v1517 = vrot.slane %v246, 6
      %v1518 = vor.u32 %v1516, %v1517
      %v1519 = vrot.slane %v258, 5
      %v1520 = vrot.slane %v254, 6
      %v1521 = vor.u32 %v1519, %v1520
      %v1522 = vsel %vm1515, %v1518, %v1521
      %v1523 = vrot.slane %v266, 5
      %v1524 = vrot.slane %v262, 6
      %v1525 = vor.u32 %v1523, %v1524
      %v1526 = vsel %vm1515, %v1521, %v1525
      %v1527 = vrot.slane %v274, 5
      %v1528 = vrot.slane %v270, 6
      %v1529 = vor.u32 %v1527, %v1528
      %v1530 = vsel %vm1515, %v1525, %v1529
      %v1531 = vrot.slane %v282, 5
      %v1532 = vrot.slane %v278, 6
      %v1533 = vor.u32 %v1531, %v1532
      %v1534 = vsel %vm1515, %v1529, %v1533
      %v1535 = vrot.slane %v290, 5
      %v1536 = vrot.slane %v286, 6
      %v1537 = vor.u32 %v1535, %v1536
      %v1538 = vsel %vm1515, %v1533, %v1537
      %v1539 = vrot.slane %v298, 5
      %v1540 = vrot.slane %v294, 6
      %v1541 = vor.u32 %v1539, %v1540
      %v1542 = vsel %vm1515, %v1537, %v1541
      %v1543 = vrot.slane %v306, 5
      %v1544 = vrot.slane %v302, 6
      %v1545 = vor.u32 %v1543, %v1544
      %v1546 = vsel %vm1515, %v1541, %v1545
      %v1547 = vrot.slane %v314, 5
      %v1548 = vrot.slane %v310, 6
      %v1549 = vor.u32 %v1547, %v1548
      %v1550 = vsel %vm1515, %v1545, %v1549
      %v1551 = vrot.slane %v322, 5
      %v1552 = vrot.slane %v318, 6
      %v1553 = vor.u32 %v1551, %v1552
      %v1554 = vsel %vm1515, %v1549, %v1553
      %v1555 = vrot.slane %v330, 5
      %v1556 = vrot.slane %v326, 6
      %v1557 = vor.u32 %v1555, %v1556
      %v1558 = vsel %vm1515, %v1553, %v1557
      %v1559 = vrot.slane %v338, 5
      %v1560 = vrot.slane %v334, 6
      %v1561 = vor.u32 %v1559, %v1560
      %v1562 = vsel %vm1515, %v1557, %v1561
      %v1563 = vrot.slane %v346, 5
      %v1564 = vrot.slane %v342, 6
      %v1565 = vor.u32 %v1563, %v1564
      %v1566 = vsel %vm1515, %v1561, %v1565
      %v1567 = vrot.slane %v354, 5
      %v1568 = vrot.slane %v350, 6
      %v1569 = vor.u32 %v1567, %v1568
      %v1570 = vsel %vm1515, %v1565, %v1569
      %v1571 = vrot.slane %v362, 5
      %v1572 = vrot.slane %v358, 6
      %v1573 = vor.u32 %v1571, %v1572
      %v1574 = vsel %vm1515, %v1569, %v1573
      %v1575 = vrot.slane %v370, 5
      %v1576 = vrot.slane %v366, 6
      %v1577 = vor.u32 %v1575, %v1576
      %v1578 = vsel %vm1515, %v1573, %v1577
      %v1579 = vrot.slane %v378, 5
      %v1580 = vrot.slane %v374, 6
      %v1581 = vor.u32 %v1579, %v1580
      %v1582 = vsel %vm1515, %v1577, %v1581
      %v1583 = vrot.slane %v386, 5
      %v1584 = vrot.slane %v382, 6
      %v1585 = vor.u32 %v1583, %v1584
      %v1586 = vsel %vm1515, %v1581, %v1585
      %v1587 = vrot.slane %v394, 5
      %v1588 = vrot.slane %v390, 6
      %v1589 = vor.u32 %v1587, %v1588
      %v1590 = vsel %vm1515, %v1585, %v1589
      %v1591 = vrot.slane %v402, 5
      %v1592 = vrot.slane %v398, 6
      %v1593 = vor.u32 %v1591, %v1592
      %v1594 = vsel %vm1515, %v1589, %v1593
      %v1595 = vrot.slane %v410, 5
      %v1596 = vrot.slane %v406, 6
      %v1597 = vor.u32 %v1595, %v1596
      %v1598 = vsel %vm1515, %v1593, %v1597
      %v1599 = vrot.slane %v1139, 5
      %v1600 = vrot.slane %v1142, 6
      %v1601 = vor.u32 %v1599, %v1600
      %v1602 = vsel %vm1515, %v1597, %v1601
      %v1603 = vrot.slane %v1375, 5
      %v1604 = vrot.slane %v1148, 6
      %v1605 = vor.u32 %v1603, %v1604
      %v1606 = vsel %vm1515, %v1601, %v1605
      %1607 = vrot.lane.b32.xlu0 %v1522, 48
      %v1608 = vpop.permute.xlu0 %1607
      %1609 = vrot.lane.b32.xlu0 %v1526, 48
      %v1610 = vpop.permute.xlu0 %1609
      %1611 = vrot.lane.b32.xlu0 %v1530, 48
      %v1612 = vpop.permute.xlu0 %1611
      %1613 = vrot.lane.b32.xlu0 %v1534, 48
      %v1614 = vpop.permute.xlu0 %1613
      %1615 = vrot.lane.b32.xlu0 %v1538, 48
      %v1616 = vpop.permute.xlu0 %1615
      %1617 = vrot.lane.b32.xlu0 %v1542, 48
      %v1618 = vpop.permute.xlu0 %1617
      %1619 = vrot.lane.b32.xlu0 %v1546, 48
      %v1620 = vpop.permute.xlu0 %1619
      %1621 = vrot.lane.b32.xlu0 %v1550, 48
      %v1622 = vpop.permute.xlu0 %1621
      %1623 = vrot.lane.b32.xlu0 %v1554, 48
      %v1624 = vpop.permute.xlu0 %1623
      %1625 = vrot.lane.b32.xlu0 %v1558, 48
      %v1626 = vpop.permute.xlu0 %1625
      %1627 = vrot.lane.b32.xlu0 %v1562, 48
      %v1628 = vpop.permute.xlu0 %1627
      %1629 = vrot.lane.b32.xlu0 %v1566, 48
      %v1630 = vpop.permute.xlu0 %1629
      %1631 = vrot.lane.b32.xlu0 %v1570, 48
      %v1632 = vpop.permute.xlu0 %1631
      %1633 = vrot.lane.b32.xlu0 %v1574, 48
      %v1634 = vpop.permute.xlu0 %1633
      %1635 = vrot.lane.b32.xlu0 %v1578, 48
      %v1636 = vpop.permute.xlu0 %1635
      %1637 = vrot.lane.b32.xlu0 %v1582, 48
      %v1638 = vpop.permute.xlu0 %1637
      %1639 = vrot.lane.b32.xlu0 %v1586, 48
      %v1640 = vpop.permute.xlu0 %1639
      %1641 = vrot.lane.b32.xlu0 %v1590, 48
      %v1642 = vpop.permute.xlu0 %1641
      %1643 = vrot.lane.b32.xlu0 %v1594, 48
      %v1644 = vpop.permute.xlu0 %1643
      %1645 = vrot.lane.b32.xlu0 %v1598, 48
      %v1646 = vpop.permute.xlu0 %1645
      %1647 = vrot.lane.b32.xlu0 %v1602, 48
      %v1648 = vpop.permute.xlu0 %1647
      %1649 = vrot.lane.b32.xlu0 %v1606, 48
      %v1650 = vpop.permute.xlu0 %1649
      %vm1651 = vcmask 1041408
      %v1652 = vrot.slane %v207, 6
      %v1653 = vrot.slane %v208, 6
      %v1654 = vsel %vm1651, %v1652, %v1653
      %v1655 = vrot.slane %v209, 6
      %v1656 = vsel %vm1651, %v1653, %v1655
      %v1657 = vrot.slane %v210, 6
      %v1658 = vsel %vm1651, %v1655, %v1657
      %v1659 = vrot.slane %v211, 6
      %v1660 = vsel %vm1651, %v1657, %v1659
      %v1661 = vrot.slane %v212, 6
      %v1662 = vsel %vm1651, %v1659, %v1661
      %v1663 = vrot.slane %v213, 6
      %v1664 = vsel %vm1651, %v1661, %v1663
      %v1665 = vrot.slane %v214, 6
      %v1666 = vsel %vm1651, %v1663, %v1665
      %v1667 = vrot.slane %v215, 6
      %v1668 = vsel %vm1651, %v1665, %v1667
      %v1669 = vrot.slane %v216, 6
      %v1670 = vsel %vm1651, %v1667, %v1669
      %v1671 = vrot.slane %v217, 6
      %v1672 = vsel %vm1651, %v1669, %v1671
      %v1673 = vrot.slane %v218, 6
      %v1674 = vsel %vm1651, %v1671, %v1673
      %v1675 = vrot.slane %v219, 6
      %v1676 = vsel %vm1651, %v1673, %v1675
      %v1677 = vrot.slane %v220, 6
      %v1678 = vsel %vm1651, %v1675, %v1677
      %v1679 = vrot.slane %v221, 6
      %v1680 = vsel %vm1651, %v1677, %v1679
      %v1681 = vrot.slane %v222, 6
      %v1682 = vsel %vm1651, %v1679, %v1681
      %v1683 = vrot.slane %v223, 6
      %v1684 = vsel %vm1651, %v1681, %v1683
      %v1685 = vrot.slane %v224, 6
      %v1686 = vsel %vm1651, %v1683, %v1685
      %v1687 = vrot.slane %v225, 6
      %v1688 = vsel %vm1651, %v1685, %v1687
      %v1689 = vrot.slane %v226, 6
      %v1690 = vsel %vm1651, %v1687, %v1689
      %v1691 = vrot.slane %v227, 6
      %v1692 = vsel %vm1651, %v1689, %v1691
      %v1693 = vrot.slane %v228, 6
      %v1694 = vsel %vm1651, %v1691, %v1693
      %v1695 = vrot.slane %v229, 6
      %v1696 = vsel %vm1651, %v1693, %v1695
      %1697 = vrot.lane.b32.xlu0 %v1654, 52
      %v1698 = vpop.permute.xlu0 %1697
      %1699 = vrot.lane.b32.xlu0 %v1656, 52
      %v1700 = vpop.permute.xlu0 %1699
      %1701 = vrot.lane.b32.xlu0 %v1658, 52
      %v1702 = vpop.permute.xlu0 %1701
      %1703 = vrot.lane.b32.xlu0 %v1660, 52
      %v1704 = vpop.permute.xlu0 %1703
      %1705 = vrot.lane.b32.xlu0 %v1662, 52
      %v1706 = vpop.permute.xlu0 %1705
      %1707 = vrot.lane.b32.xlu0 %v1664, 52
      %v1708 = vpop.permute.xlu0 %1707
      %1709 = vrot.lane.b32.xlu0 %v1666, 52
      %v1710 = vpop.permute.xlu0 %1709
      %1711 = vrot.lane.b32.xlu0 %v1668, 52
      %v1712 = vpop.permute.xlu0 %1711
      %1713 = vrot.lane.b32.xlu0 %v1670, 52
      %v1714 = vpop.permute.xlu0 %1713
      %1715 = vrot.lane.b32.xlu0 %v1672, 52
      %v1716 = vpop.permute.xlu0 %1715
      %1717 = vrot.lane.b32.xlu0 %v1674, 52
      %v1718 = vpop.permute.xlu0 %1717
      %1719 = vrot.lane.b32.xlu0 %v1676, 52
      %v1720 = vpop.permute.xlu0 %1719
      %1721 = vrot.lane.b32.xlu0 %v1678, 52
      %v1722 = vpop.permute.xlu0 %1721
      %1723 = vrot.lane.b32.xlu0 %v1680, 52
      %v1724 = vpop.permute.xlu0 %1723
      %1725 = vrot.lane.b32.xlu0 %v1682, 52
      %v1726 = vpop.permute.xlu0 %1725
      %1727 = vrot.lane.b32.xlu0 %v1684, 52
      %v1728 = vpop.permute.xlu0 %1727
      %1729 = vrot.lane.b32.xlu0 %v1686, 52
      %v1730 = vpop.permute.xlu0 %1729
      %1731 = vrot.lane.b32.xlu0 %v1688, 52
      %v1732 = vpop.permute.xlu0 %1731
      %1733 = vrot.lane.b32.xlu0 %v1690, 52
      %v1734 = vpop.permute.xlu0 %1733
      %1735 = vrot.lane.b32.xlu0 %v1692, 52
      %v1736 = vpop.permute.xlu0 %1735
      %1737 = vrot.lane.b32.xlu0 %v1694, 52
      %v1738 = vpop.permute.xlu0 %1737
      %1739 = vrot.lane.b32.xlu0 %v1696, 52
      %v1740 = vpop.permute.xlu0 %1739
      %v1742 = vrot.slane %v230, 6
      %v1743 = vsel %vm1651, %v1695, %v1742
      %1744 = vrot.lane.b32.xlu0 %v1656, 56
      %v1745 = vpop.permute.xlu0 %1744
      %1746 = vrot.lane.b32.xlu0 %v1658, 56
      %v1747 = vpop.permute.xlu0 %1746
      %1748 = vrot.lane.b32.xlu0 %v1660, 56
      %v1749 = vpop.permute.xlu0 %1748
      %1750 = vrot.lane.b32.xlu0 %v1662, 56
      %v1751 = vpop.permute.xlu0 %1750
      %1752 = vrot.lane.b32.xlu0 %v1664, 56
      %v1753 = vpop.permute.xlu0 %1752
      %1754 = vrot.lane.b32.xlu0 %v1666, 56
      %v1755 = vpop.permute.xlu0 %1754
      %1756 = vrot.lane.b32.xlu0 %v1668, 56
      %v1757 = vpop.permute.xlu0 %1756
      %1758 = vrot.lane.b32.xlu0 %v1670, 56
      %v1759 = vpop.permute.xlu0 %1758
      %1760 = vrot.lane.b32.xlu0 %v1672, 56
      %v1761 = vpop.permute.xlu0 %1760
      %1762 = vrot.lane.b32.xlu0 %v1674, 56
      %v1763 = vpop.permute.xlu0 %1762
      %1764 = vrot.lane.b32.xlu0 %v1676, 56
      %v1765 = vpop.permute.xlu0 %1764
      %1766 = vrot.lane.b32.xlu0 %v1678, 56
      %v1767 = vpop.permute.xlu0 %1766
      %1768 = vrot.lane.b32.xlu0 %v1680, 56
      %v1769 = vpop.permute.xlu0 %1768
      %1770 = vrot.lane.b32.xlu0 %v1682, 56
      %v1771 = vpop.permute.xlu0 %1770
      %1772 = vrot.lane.b32.xlu0 %v1684, 56
      %v1773 = vpop.permute.xlu0 %1772
      %1774 = vrot.lane.b32.xlu0 %v1686, 56
      %v1775 = vpop.permute.xlu0 %1774
      %1776 = vrot.lane.b32.xlu0 %v1688, 56
      %v1777 = vpop.permute.xlu0 %1776
      %1778 = vrot.lane.b32.xlu0 %v1690, 56
      %v1779 = vpop.permute.xlu0 %1778
      %1780 = vrot.lane.b32.xlu0 %v1692, 56
      %v1781 = vpop.permute.xlu0 %1780
      %1782 = vrot.lane.b32.xlu0 %v1694, 56
      %v1783 = vpop.permute.xlu0 %1782
      %1784 = vrot.lane.b32.xlu0 %v1696, 56
      %v1785 = vpop.permute.xlu0 %1784
      %1786 = vrot.lane.b32.xlu0 %v1743, 56
      %v1787 = vpop.permute.xlu0 %1786
      %vm1788 = vsmask.f32 1280
      %v1789 = vrot.slane %v258, 6
      %v1790 = vrot.slane %v254, 7
      %v1791 = vor.u32 %v1789, %v1790
      %v1792 = vrot.slane %v266, 6
      %v1793 = vrot.slane %v262, 7
      %v1794 = vor.u32 %v1792, %v1793
      %v1795 = vsel %vm1788, %v1791, %v1794
      %v1796 = vrot.slane %v274, 6
      %v1797 = vrot.slane %v270, 7
      %v1798 = vor.u32 %v1796, %v1797
      %v1799 = vsel %vm1788, %v1794, %v1798
      %v1800 = vrot.slane %v282, 6
      %v1801 = vrot.slane %v278, 7
      %v1802 = vor.u32 %v1800, %v1801
      %v1803 = vsel %vm1788, %v1798, %v1802
      %v1804 = vrot.slane %v290, 6
      %v1805 = vrot.slane %v286, 7
      %v1806 = vor.u32 %v1804, %v1805
      %v1807 = vsel %vm1788, %v1802, %v1806
      %v1808 = vrot.slane %v298, 6
      %v1809 = vrot.slane %v294, 7
      %v1810 = vor.u32 %v1808, %v1809
      %v1811 = vsel %vm1788, %v1806, %v1810
      %v1812 = vrot.slane %v306, 6
      %v1813 = vrot.slane %v302, 7
      %v1814 = vor.u32 %v1812, %v1813
      %v1815 = vsel %vm1788, %v1810, %v1814
      %v1816 = vrot.slane %v314, 6
      %v1817 = vrot.slane %v310, 7
      %v1818 = vor.u32 %v1816, %v1817
      %v1819 = vsel %vm1788, %v1814, %v1818
      %v1820 = vrot.slane %v322, 6
      %v1821 = vrot.slane %v318, 7
      %v1822 = vor.u32 %v1820, %v1821
      %v1823 = vsel %vm1788, %v1818, %v1822
      %v1824 = vrot.slane %v330, 6
      %v1825 = vrot.slane %v326, 7
      %v1826 = vor.u32 %v1824, %v1825
      %v1827 = vsel %vm1788, %v1822, %v1826
      %v1828 = vrot.slane %v338, 6
      %v1829 = vrot.slane %v334, 7
      %v1830 = vor.u32 %v1828, %v1829
      %v1831 = vsel %vm1788, %v1826, %v1830
      %v1832 = vrot.slane %v346, 6
      %v1833 = vrot.slane %v342, 7
      %v1834 = vor.u32 %v1832, %v1833
      %v1835 = vsel %vm1788, %v1830, %v1834
      %v1836 = vrot.slane %v354, 6
      %v1837 = vrot.slane %v350, 7
      %v1838 = vor.u32 %v1836, %v1837
      %v1839 = vsel %vm1788, %v1834, %v1838
      %v1840 = vrot.slane %v362, 6
      %v1841 = vrot.slane %v358, 7
      %v1842 = vor.u32 %v1840, %v1841
      %v1843 = vsel %vm1788, %v1838, %v1842
      %v1844 = vrot.slane %v370, 6
      %v1845 = vrot.slane %v366, 7
      %v1846 = vor.u32 %v1844, %v1845
      %v1847 = vsel %vm1788, %v1842, %v1846
      %v1848 = vrot.slane %v378, 6
      %v1849 = vrot.slane %v374, 7
      %v1850 = vor.u32 %v1848, %v1849
      %v1851 = vsel %vm1788, %v1846, %v1850
      %v1852 = vrot.slane %v386, 6
      %v1853 = vrot.slane %v382, 7
      %v1854 = vor.u32 %v1852, %v1853
      %v1855 = vsel %vm1788, %v1850, %v1854
      %v1856 = vrot.slane %v394, 6
      %v1857 = vrot.slane %v390, 7
      %v1858 = vor.u32 %v1856, %v1857
      %v1859 = vsel %vm1788, %v1854, %v1858
      %v1860 = vrot.slane %v402, 6
      %v1861 = vrot.slane %v398, 7
      %v1862 = vor.u32 %v1860, %v1861
      %v1863 = vsel %vm1788, %v1858, %v1862
      %v1864 = vrot.slane %v410, 6
      %v1865 = vrot.slane %v406, 7
      %v1866 = vor.u32 %v1864, %v1865
      %v1867 = vsel %vm1788, %v1862, %v1866
      %v1868 = vrot.slane %v1139, 6
      %v1869 = vrot.slane %v1142, 7
      %v1870 = vor.u32 %v1868, %v1869
      %v1871 = vsel %vm1788, %v1866, %v1870
      %v1872 = vrot.slane %v1375, 6
      %v1873 = vrot.slane %v1148, 7
      %v1874 = vor.u32 %v1872, %v1873
      %v1875 = vsel %vm1788, %v1870, %v1874
      %v1877 = vshrl.u32 %v230, 16
      %v1879 = vrot.slane %v1877, 6
      %v1880 = vshll.u32 %v230, 16
      %v1882 = vrot.slane %v1880, 7
      %v1883 = vor.u32 %v1879, %v1882
      %v1884 = vsel %vm1788, %v1874, %v1883
      %1885 = vrot.lane.b32.xlu0 %v1795, 60
      %v1886 = vpop.permute.xlu0 %1885
      %1887 = vrot.lane.b32.xlu0 %v1799, 60
      %v1888 = vpop.permute.xlu0 %1887
      %1889 = vrot.lane.b32.xlu0 %v1803, 60
      %v1890 = vpop.permute.xlu0 %1889
      %1891 = vrot.lane.b32.xlu0 %v1807, 60
      %v1892 = vpop.permute.xlu0 %1891
      %1893 = vrot.lane.b32.xlu0 %v1811, 60
      %v1894 = vpop.permute.xlu0 %1893
      %1895 = vrot.lane.b32.xlu0 %v1815, 60
      %v1896 = vpop.permute.xlu0 %1895
      %1897 = vrot.lane.b32.xlu0 %v1819, 60
      %v1898 = vpop.permute.xlu0 %1897
      %1899 = vrot.lane.b32.xlu0 %v1823, 60
      %v1900 = vpop.permute.xlu0 %1899
      %1901 = vrot.lane.b32.xlu0 %v1827, 60
      %v1902 = vpop.permute.xlu0 %1901
      %1903 = vrot.lane.b32.xlu0 %v1831, 60
      %v1904 = vpop.permute.xlu0 %1903
      %1905 = vrot.lane.b32.xlu0 %v1835, 60
      %v1906 = vpop.permute.xlu0 %1905
      %1907 = vrot.lane.b32.xlu0 %v1839, 60
      %v1908 = vpop.permute.xlu0 %1907
      %1909 = vrot.lane.b32.xlu0 %v1843, 60
      %v1910 = vpop.permute.xlu0 %1909
      %1911 = vrot.lane.b32.xlu0 %v1847, 60
      %v1912 = vpop.permute.xlu0 %1911
      %1913 = vrot.lane.b32.xlu0 %v1851, 60
      %v1914 = vpop.permute.xlu0 %1913
      %1915 = vrot.lane.b32.xlu0 %v1855, 60
      %v1916 = vpop.permute.xlu0 %1915
      %1917 = vrot.lane.b32.xlu0 %v1859, 60
      %v1918 = vpop.permute.xlu0 %1917
      %1919 = vrot.lane.b32.xlu0 %v1863, 60
      %v1920 = vpop.permute.xlu0 %1919
      %1921 = vrot.lane.b32.xlu0 %v1867, 60
      %v1922 = vpop.permute.xlu0 %1921
      %1923 = vrot.lane.b32.xlu0 %v1871, 60
      %v1924 = vpop.permute.xlu0 %1923
      %1925 = vrot.lane.b32.xlu0 %v1875, 60
      %v1926 = vpop.permute.xlu0 %1925
      %1927 = vrot.lane.b32.xlu0 %v1884, 60
      %v1928 = vpop.permute.xlu0 %1927
      %vm1929 = vcmask 31744
      %v1931 = vsel %vm1929, %v206, %v414
      %v1933 = vsel %vm1929, %v207, %v416
      %v1935 = vsel %vm1929, %v208, %v418
      %v1937 = vsel %vm1929, %v209, %v420
      %v1939 = vsel %vm1929, %v210, %v422
      %v1941 = vsel %vm1929, %v211, %v424
      %v1943 = vsel %vm1929, %v212, %v426
      %v1945 = vsel %vm1929, %v213, %v428
      %v1947 = vsel %vm1929, %v214, %v430
      %v1949 = vsel %vm1929, %v215, %v432
      %v1951 = vsel %vm1929, %v216, %v434
      %v1953 = vsel %vm1929, %v217, %v436
      %v1955 = vsel %vm1929, %v218, %v438
      %v1957 = vsel %vm1929, %v219, %v440
      %v1959 = vsel %vm1929, %v220, %v442
      %v1961 = vsel %vm1929, %v221, %v444
      %v1963 = vsel %vm1929, %v222, %v446
      %v1965 = vsel %vm1929, %v223, %v448
      %v1967 = vsel %vm1929, %v224, %v450
      %v1969 = vsel %vm1929, %v225, %v452
      %v1971 = vsel %vm1929, %v226, %v454
      %v1973 = vsel %vm1929, %v227, %v456
      %vm1974 = vcmask 64512
      %v1976 = vsel %vm1974, %v1931, %v524
      %v1978 = vsel %vm1974, %v1933, %v526
      %v1980 = vsel %vm1974, %v1935, %v528
      %v1982 = vsel %vm1974, %v1937, %v530
      %v1984 = vsel %vm1974, %v1939, %v532
      %v1986 = vsel %vm1974, %v1941, %v534
      %v1988 = vsel %vm1974, %v1943, %v536
      %v1990 = vsel %vm1974, %v1945, %v538
      %v1992 = vsel %vm1974, %v1947, %v540
      %v1994 = vsel %vm1974, %v1949, %v542
      %v1996 = vsel %vm1974, %v1951, %v544
      %v1998 = vsel %vm1974, %v1953, %v546
      %v2000 = vsel %vm1974, %v1955, %v548
      %v2002 = vsel %vm1974, %v1957, %v550
      %v2004 = vsel %vm1974, %v1959, %v552
      %v2006 = vsel %vm1974, %v1961, %v554
      %v2008 = vsel %vm1974, %v1963, %v556
      %v2010 = vsel %vm1974, %v1965, %v558
      %v2012 = vsel %vm1974, %v1967, %v560
      %v2014 = vsel %vm1974, %v1969, %v562
      %v2016 = vsel %vm1974, %v1971, %v564
      %v2018 = vsel %vm1974, %v1973, %v566
      %vm2019 = vcmask 97280
      %v2021 = vsel %vm2019, %v1976, %v656
      %v2023 = vsel %vm2019, %v1978, %v658
      %v2025 = vsel %vm2019, %v1980, %v660
      %v2027 = vsel %vm2019, %v1982, %v662
      %v2029 = vsel %vm2019, %v1984, %v664
      %v2031 = vsel %vm2019, %v1986, %v666
      %v2033 = vsel %vm2019, %v1988, %v668
      %v2035 = vsel %vm2019, %v1990, %v670
      %v2037 = vsel %vm2019, %v1992, %v672
      %v2039 = vsel %vm2019, %v1994, %v674
      %v2041 = vsel %vm2019, %v1996, %v676
      %v2043 = vsel %vm2019, %v1998, %v678
      %v2045 = vsel %vm2019, %v2000, %v680
      %v2047 = vsel %vm2019, %v2002, %v682
      %v2049 = vsel %vm2019, %v2004, %v684
      %v2051 = vsel %vm2019, %v2006, %v686
      %v2053 = vsel %vm2019, %v2008, %v688
      %v2055 = vsel %vm2019, %v2010, %v690
      %v2057 = vsel %vm2019, %v2012, %v692
      %v2059 = vsel %vm2019, %v2014, %v694
      %v2061 = vsel %vm2019, %v2016, %v696
      %v2063 = vsel %vm2019, %v2018, %v698
      %vm2064 = vcmask 130048
      %v2066 = vsel %vm2064, %v2021, %v744
      %v2068 = vsel %vm2064, %v2023, %v746
      %v2070 = vsel %vm2064, %v2025, %v748
      %v2072 = vsel %vm2064, %v2027, %v750
      %v2074 = vsel %vm2064, %v2029, %v752
      %v2076 = vsel %vm2064, %v2031, %v754
      %v2078 = vsel %vm2064, %v2033, %v756
      %v2080 = vsel %vm2064, %v2035, %v758
      %v2082 = vsel %vm2064, %v2037, %v760
      %v2084 = vsel %vm2064, %v2039, %v762
      %v2086 = vsel %vm2064, %v2041, %v764
      %v2088 = vsel %vm2064, %v2043, %v766
      %v2090 = vsel %vm2064, %v2045, %v768
      %v2092 = vsel %vm2064, %v2047, %v770
      %v2094 = vsel %vm2064, %v2049, %v772
      %v2096 = vsel %vm2064, %v2051, %v774
      %v2098 = vsel %vm2064, %v2053, %v776
      %v2100 = vsel %vm2064, %v2055, %v778
      %v2102 = vsel %vm2064, %v2057, %v780
      %v2104 = vsel %vm2064, %v2059, %v782
      %v2106 = vsel %vm2064, %v2061, %v784
      %v2108 = vsel %vm2064, %v2063, %v786
      %vm2109 = vcmask 162816
      %v2111 = vsel %vm2109, %v2066, %v876
      %v2113 = vsel %vm2109, %v2068, %v878
      %v2115 = vsel %vm2109, %v2070, %v880
      %v2117 = vsel %vm2109, %v2072, %v882
      %v2119 = vsel %vm2109, %v2074, %v884
      %v2121 = vsel %vm2109, %v2076, %v886
      %v2123 = vsel %vm2109, %v2078, %v888
      %v2125 = vsel %vm2109, %v2080, %v890
      %v2127 = vsel %vm2109, %v2082, %v892
      %v2129 = vsel %vm2109, %v2084, %v894
      %v2131 = vsel %vm2109, %v2086, %v896
      %v2133 = vsel %vm2109, %v2088, %v898
      %v2135 = vsel %vm2109, %v2090, %v900
      %v2137 = vsel %vm2109, %v2092, %v902
      %v2139 = vsel %vm2109, %v2094, %v904
      %v2141 = vsel %vm2109, %v2096, %v906
      %v2143 = vsel %vm2109, %v2098, %v908
      %v2145 = vsel %vm2109, %v2100, %v910
      %v2147 = vsel %vm2109, %v2102, %v912
      %v2149 = vsel %vm2109, %v2104, %v914
      %v2151 = vsel %vm2109, %v2106, %v916
      %v2153 = vsel %vm2109, %v2108, %v918
      %vm2154 = vcmask 195584
      %v2156 = vsel %vm2154, %v2111, %v964
      %v2158 = vsel %vm2154, %v2113, %v966
      %v2160 = vsel %vm2154, %v2115, %v968
      %v2162 = vsel %vm2154, %v2117, %v970
      %v2164 = vsel %vm2154, %v2119, %v972
      %v2166 = vsel %vm2154, %v2121, %v974
      %v2168 = vsel %vm2154, %v2123, %v976
      %v2170 = vsel %vm2154, %v2125, %v978
      %v2172 = vsel %vm2154, %v2127, %v980
      %v2174 = vsel %vm2154, %v2129, %v982
      %v2176 = vsel %vm2154, %v2131, %v984
      %v2178 = vsel %vm2154, %v2133, %v986
      %v2180 = vsel %vm2154, %v2135, %v988
      %v2182 = vsel %vm2154, %v2137, %v990
      %v2184 = vsel %vm2154, %v2139, %v992
      %v2186 = vsel %vm2154, %v2141, %v994
      %v2188 = vsel %vm2154, %v2143, %v996
      %v2190 = vsel %vm2154, %v2145, %v998
      %v2192 = vsel %vm2154, %v2147, %v1000
      %v2194 = vsel %vm2154, %v2149, %v1002
      %v2196 = vsel %vm2154, %v2151, %v1004
      %v2198 = vsel %vm2154, %v2153, %v1006
      %vm2199 = vcmask 228352
      %v2201 = vsel %vm2199, %v2156, %v1011
      %v2203 = vsel %vm2199, %v2158, %v1013
      %v2205 = vsel %vm2199, %v2160, %v1015
      %v2207 = vsel %vm2199, %v2162, %v1017
      %v2209 = vsel %vm2199, %v2164, %v1019
      %v2211 = vsel %vm2199, %v2166, %v1021
      %v2213 = vsel %vm2199, %v2168, %v1023
      %v2215 = vsel %vm2199, %v2170, %v1025
      %v2217 = vsel %vm2199, %v2172, %v1027
      %v2219 = vsel %vm2199, %v2174, %v1029
      %v2221 = vsel %vm2199, %v2176, %v1031
      %v2223 = vsel %vm2199, %v2178, %v1033
      %v2225 = vsel %vm2199, %v2180, %v1035
      %v2227 = vsel %vm2199, %v2182, %v1037
      %v2229 = vsel %vm2199, %v2184, %v1039
      %v2231 = vsel %vm2199, %v2186, %v1041
      %v2233 = vsel %vm2199, %v2188, %v1043
      %v2235 = vsel %vm2199, %v2190, %v1045
      %v2237 = vsel %vm2199, %v2192, %v1047
      %v2239 = vsel %vm2199, %v2194, %v1049
      %v2241 = vsel %vm2199, %v2196, %v1051
      %v2243 = vsel %vm2199, %v2198, %v1053
      %vm2244 = vcmask 261120
      %v2246 = vsel %vm2244, %v2201, %v1153
      %v2248 = vsel %vm2244, %v2203, %v1155
      %v2250 = vsel %vm2244, %v2205, %v1157
      %v2252 = vsel %vm2244, %v2207, %v1159
      %v2254 = vsel %vm2244, %v2209, %v1161
      %v2256 = vsel %vm2244, %v2211, %v1163
      %v2258 = vsel %vm2244, %v2213, %v1165
      %v2260 = vsel %vm2244, %v2215, %v1167
      %v2262 = vsel %vm2244, %v2217, %v1169
      %v2264 = vsel %vm2244, %v2219, %v1171
      %v2266 = vsel %vm2244, %v2221, %v1173
      %v2268 = vsel %vm2244, %v2223, %v1175
      %v2270 = vsel %vm2244, %v2225, %v1177
      %v2272 = vsel %vm2244, %v2227, %v1179
      %v2274 = vsel %vm2244, %v2229, %v1181
      %v2276 = vsel %vm2244, %v2231, %v1183
      %v2278 = vsel %vm2244, %v2233, %v1185
      %v2280 = vsel %vm2244, %v2235, %v1187
      %v2282 = vsel %vm2244, %v2237, %v1189
      %v2284 = vsel %vm2244, %v2239, %v1191
      %v2286 = vsel %vm2244, %v2241, %v1193
      %v2288 = vsel %vm2244, %v2243, %v1195
      %vm2289 = vcmask 293888
      %v2291 = vsel %vm2289, %v2246, %v1244
      %v2293 = vsel %vm2289, %v2248, %v1246
      %v2295 = vsel %vm2289, %v2250, %v1248
      %v2297 = vsel %vm2289, %v2252, %v1250
      %v2299 = vsel %vm2289, %v2254, %v1252
      %v2301 = vsel %vm2289, %v2256, %v1254
      %v2303 = vsel %vm2289, %v2258, %v1256
      %v2305 = vsel %vm2289, %v2260, %v1258
      %v2307 = vsel %vm2289, %v2262, %v1260
      %v2309 = vsel %vm2289, %v2264, %v1262
      %v2311 = vsel %vm2289, %v2266, %v1264
      %v2313 = vsel %vm2289, %v2268, %v1266
      %v2315 = vsel %vm2289, %v2270, %v1268
      %v2317 = vsel %vm2289, %v2272, %v1270
      %v2319 = vsel %vm2289, %v2274, %v1272
      %v2321 = vsel %vm2289, %v2276, %v1274
      %v2323 = vsel %vm2289, %v2278, %v1276
      %v2325 = vsel %vm2289, %v2280, %v1278
      %v2327 = vsel %vm2289, %v2282, %v1280
      %v2329 = vsel %vm2289, %v2284, %v1282
      %v2331 = vsel %vm2289, %v2286, %v1284
      %v2333 = vsel %vm2289, %v2288, %v1286
      %vm2334 = vcmask 326656
      %v2336 = vsel %vm2334, %v2291, %v1382
      %v2338 = vsel %vm2334, %v2293, %v1384
      %v2340 = vsel %vm2334, %v2295, %v1386
      %v2342 = vsel %vm2334, %v2297, %v1388
      %v2344 = vsel %vm2334, %v2299, %v1390
      %v2346 = vsel %vm2334, %v2301, %v1392
      %v2348 = vsel %vm2334, %v2303, %v1394
      %v2350 = vsel %vm2334, %v2305, %v1396
      %v2352 = vsel %vm2334, %v2307, %v1398
      %v2354 = vsel %vm2334, %v2309, %v1400
      %v2356 = vsel %vm2334, %v2311, %v1402
      %v2358 = vsel %vm2334, %v2313, %v1404
      %v2360 = vsel %vm2334, %v2315, %v1406
      %v2362 = vsel %vm2334, %v2317, %v1408
      %v2364 = vsel %vm2334, %v2319, %v1410
      %v2366 = vsel %vm2334, %v2321, %v1412
      %v2368 = vsel %vm2334, %v2323, %v1414
      %v2370 = vsel %vm2334, %v2325, %v1416
      %v2372 = vsel %vm2334, %v2327, %v1418
      %v2374 = vsel %vm2334, %v2329, %v1420
      %v2376 = vsel %vm2334, %v2331, %v1422
      %v2378 = vsel %vm2334, %v2333, %v1424
      %vm2379 = vcmask 359424
      %v2381 = vsel %vm2379, %v2336, %v1472
      %v2383 = vsel %vm2379, %v2338, %v1474
      %v2385 = vsel %vm2379, %v2340, %v1476
      %v2387 = vsel %vm2379, %v2342, %v1478
      %v2389 = vsel %vm2379, %v2344, %v1480
      %v2391 = vsel %vm2379, %v2346, %v1482
      %v2393 = vsel %vm2379, %v2348, %v1484
      %v2395 = vsel %vm2379, %v2350, %v1486
      %v2397 = vsel %vm2379, %v2352, %v1488
      %v2399 = vsel %vm2379, %v2354, %v1490
      %v2401 = vsel %vm2379, %v2356, %v1492
      %v2403 = vsel %vm2379, %v2358, %v1494
      %v2405 = vsel %vm2379, %v2360, %v1496
      %v2407 = vsel %vm2379, %v2362, %v1498
      %v2409 = vsel %vm2379, %v2364, %v1500
      %v2411 = vsel %vm2379, %v2366, %v1502
      %v2413 = vsel %vm2379, %v2368, %v1504
      %v2415 = vsel %vm2379, %v2370, %v1506
      %v2417 = vsel %vm2379, %v2372, %v1508
      %v2419 = vsel %vm2379, %v2374, %v1510
      %v2421 = vsel %vm2379, %v2376, %v1512
      %v2423 = vsel %vm2379, %v2378, %v1514
      %vm2424 = vcmask 392192
      %v2426 = vsel %vm2424, %v2381, %v1608
      %v2428 = vsel %vm2424, %v2383, %v1610
      %v2430 = vsel %vm2424, %v2385, %v1612
      %v2432 = vsel %vm2424, %v2387, %v1614
      %v2434 = vsel %vm2424, %v2389, %v1616
      %v2436 = vsel %vm2424, %v2391, %v1618
      %v2438 = vsel %vm2424, %v2393, %v1620
      %v2440 = vsel %vm2424, %v2395, %v1622
      %v2442 = vsel %vm2424, %v2397, %v1624
      %v2444 = vsel %vm2424, %v2399, %v1626
      %v2446 = vsel %vm2424, %v2401, %v1628
      %v2448 = vsel %vm2424, %v2403, %v1630
      %v2450 = vsel %vm2424, %v2405, %v1632
      %v2452 = vsel %vm2424, %v2407, %v1634
      %v2454 = vsel %vm2424, %v2409, %v1636
      %v2456 = vsel %vm2424, %v2411, %v1638
      %v2458 = vsel %vm2424, %v2413, %v1640
      %v2460 = vsel %vm2424, %v2415, %v1642
      %v2462 = vsel %vm2424, %v2417, %v1644
      %v2464 = vsel %vm2424, %v2419, %v1646
      %v2466 = vsel %vm2424, %v2421, %v1648
      %v2468 = vsel %vm2424, %v2423, %v1650
      %vm2469 = vcmask 424960
      %v2471 = vsel %vm2469, %v2426, %v1698
      %v2473 = vsel %vm2469, %v2428, %v1700
      %v2475 = vsel %vm2469, %v2430, %v1702
      %v2477 = vsel %vm2469, %v2432, %v1704
      %v2479 = vsel %vm2469, %v2434, %v1706
      %v2481 = vsel %vm2469, %v2436, %v1708
      %v2483 = vsel %vm2469, %v2438, %v1710
      %v2485 = vsel %vm2469, %v2440, %v1712
      %v2487 = vsel %vm2469, %v2442, %v1714
      %v2489 = vsel %vm2469, %v2444, %v1716
      %v2491 = vsel %vm2469, %v2446, %v1718
      %v2493 = vsel %vm2469, %v2448, %v1720
      %v2495 = vsel %vm2469, %v2450, %v1722
      %v2497 = vsel %vm2469, %v2452, %v1724
      %v2499 = vsel %vm2469, %v2454, %v1726
      %v2501 = vsel %vm2469, %v2456, %v1728
      %v2503 = vsel %vm2469, %v2458, %v1730
      %v2505 = vsel %vm2469, %v2460, %v1732
      %v2507 = vsel %vm2469, %v2462, %v1734
      %v2509 = vsel %vm2469, %v2464, %v1736
      %v2511 = vsel %vm2469, %v2466, %v1738
      %v2513 = vsel %vm2469, %v2468, %v1740
      %vm2514 = vcmask 457728
      %v2516 = vsel %vm2514, %v2471, %v1745
      %v2518 = vsel %vm2514, %v2473, %v1747
      %v2520 = vsel %vm2514, %v2475, %v1749
      %v2522 = vsel %vm2514, %v2477, %v1751
      %v2524 = vsel %vm2514, %v2479, %v1753
      %v2526 = vsel %vm2514, %v2481, %v1755
      %v2528 = vsel %vm2514, %v2483, %v1757
      %v2530 = vsel %vm2514, %v2485, %v1759
      %v2532 = vsel %vm2514, %v2487, %v1761
      %v2534 = vsel %vm2514, %v2489, %v1763
      %v2536 = vsel %vm2514, %v2491, %v1765
      %v2538 = vsel %vm2514, %v2493, %v1767
      %v2540 = vsel %vm2514, %v2495, %v1769
      %v2542 = vsel %vm2514, %v2497, %v1771
      %v2544 = vsel %vm2514, %v2499, %v1773
      %v2546 = vsel %vm2514, %v2501, %v1775
      %v2548 = vsel %vm2514, %v2503, %v1777
      %v2550 = vsel %vm2514, %v2505, %v1779
      %v2552 = vsel %vm2514, %v2507, %v1781
      %v2554 = vsel %vm2514, %v2509, %v1783
      %v2556 = vsel %vm2514, %v2511, %v1785
      %v2558 = vsel %vm2514, %v2513, %v1787
      %vm2559 = vcmask 490496
      %v2561 = vsel %vm2559, %v2516, %v1886
      %v2563 = vsel %vm2559, %v2518, %v1888
      %v2565 = vsel %vm2559, %v2520, %v1890
      %v2567 = vsel %vm2559, %v2522, %v1892
      %v2569 = vsel %vm2559, %v2524, %v1894
      %v2571 = vsel %vm2559, %v2526, %v1896
      %v2573 = vsel %vm2559, %v2528, %v1898
      %v2575 = vsel %vm2559, %v2530, %v1900
      %v2577 = vsel %vm2559, %v2532, %v1902
      %v2579 = vsel %vm2559, %v2534, %v1904
      %v2581 = vsel %vm2559, %v2536, %v1906
      %v2583 = vsel %vm2559, %v2538, %v1908
      %v2585 = vsel %vm2559, %v2540, %v1910
      %v2587 = vsel %vm2559, %v2542, %v1912
      %v2589 = vsel %vm2559, %v2544, %v1914
      %v2591 = vsel %vm2559, %v2546, %v1916
      %v2593 = vsel %vm2559, %v2548, %v1918
      %v2595 = vsel %vm2559, %v2550, %v1920
      %v2597 = vsel %vm2559, %v2552, %v1922
      %v2599 = vsel %vm2559, %v2554, %v1924
      %v2601 = vsel %vm2559, %v2556, %v1926
      %v2603 = vsel %vm2559, %v2558, %v1928
      %v2604 = vsel %vm237, %v258, %v264
      %v2605 = vrot.slane %v1142, 1
      %v2606 = vsel %vm237, %v412, %v2605
      %v2607 = vor.u32 %v1139, %v2605
      %v2608 = vrot.slane %v1148, 1
      %v2609 = vsel %vm237, %v2607, %v2608
      %v2610 = vor.u32 %v1375, %v2608
      %v2611 = vrot.slane %v1880, 1
      %v2612 = vsel %vm237, %v2610, %v2611
      %v2613 = vor.u32 %v1877, %v2611
      %2614 = vrot.lane.b32.xlu0 %v2604, 4
      %v2615 = vpop.permute.xlu0 %2614
      %2616 = vrot.lane.b32.xlu0 %v2606, 4
      %v2617 = vpop.permute.xlu0 %2616
      %2618 = vrot.lane.b32.xlu0 %v2609, 4
      %v2619 = vpop.permute.xlu0 %2618
      %2620 = vrot.lane.b32.xlu0 %v2612, 4
      %v2621 = vpop.permute.xlu0 %2620
      %2622 = vrot.lane.b32.xlu0 %v2613, 4
      %v2623 = vpop.permute.xlu0 %2622
      %v2624 = vrot.slane %v228, 1
      %v2625 = vsel %vm479, %v521, %v2624
      %v2626 = vrot.slane %v229, 1
      %v2627 = vsel %vm479, %v2624, %v2626
      %v2628 = vrot.slane %v230, 1
      %v2629 = vsel %vm479, %v2626, %v2628
      %2630 = vrot.lane.b32.xlu0 %v485, 8
      %v2631 = vpop.permute.xlu0 %2630
      %2632 = vrot.lane.b32.xlu0 %v2625, 8
      %v2633 = vpop.permute.xlu0 %2632
      %2634 = vrot.lane.b32.xlu0 %v2627, 8
      %v2635 = vpop.permute.xlu0 %2634
      %2636 = vrot.lane.b32.xlu0 %v2629, 8
      %v2637 = vpop.permute.xlu0 %2636
      %2638 = vrot.lane.b32.xlu0 %v2628, 8
      %v2639 = vpop.permute.xlu0 %2638
      %v2640 = vrot.slane %v1139, 1
      %v2641 = vrot.slane %v1142, 2
      %v2642 = vor.u32 %v2640, %v2641
      %v2643 = vsel %vm567, %v653, %v2642
      %v2644 = vrot.slane %v1375, 1
      %v2645 = vrot.slane %v1148, 2
      %v2646 = vor.u32 %v2644, %v2645
      %v2647 = vsel %vm567, %v2642, %v2646
      %v2648 = vrot.slane %v1877, 1
      %v2649 = vrot.slane %v1880, 2
      %v2650 = vor.u32 %v2648, %v2649
      %v2651 = vsel %vm567, %v2646, %v2650
      %2652 = vrot.lane.b32.xlu0 %v581, 12
      %v2653 = vpop.permute.xlu0 %2652
      %2654 = vrot.lane.b32.xlu0 %v2643, 12
      %v2655 = vpop.permute.xlu0 %2654
      %2656 = vrot.lane.b32.xlu0 %v2647, 12
      %v2657 = vpop.permute.xlu0 %2656
      %2658 = vrot.lane.b32.xlu0 %v2651, 12
      %v2659 = vpop.permute.xlu0 %2658
      %2660 = vrot.lane.b32.xlu0 %v2650, 12
      %v2661 = vpop.permute.xlu0 %2660
      %v2662 = vrot.slane %v228, 2
      %v2663 = vsel %vm699, %v741, %v2662
      %v2664 = vrot.slane %v229, 2
      %v2665 = vsel %vm699, %v2662, %v2664
      %v2666 = vrot.slane %v230, 2
      %v2667 = vsel %vm699, %v2664, %v2666
      %2668 = vrot.lane.b32.xlu0 %v705, 16
      %v2669 = vpop.permute.xlu0 %2668
      %2670 = vrot.lane.b32.xlu0 %v2663, 16
      %v2671 = vpop.permute.xlu0 %2670
      %2672 = vrot.lane.b32.xlu0 %v2665, 16
      %v2673 = vpop.permute.xlu0 %2672
      %2674 = vrot.lane.b32.xlu0 %v2667, 16
      %v2675 = vpop.permute.xlu0 %2674
      %2676 = vrot.lane.b32.xlu0 %v2666, 16
      %v2677 = vpop.permute.xlu0 %2676
      %v2679 = vrot.slane %v231, 2
      %v2680 = vsel %vm699, %v2666, %v2679
      %2681 = vrot.lane.b32.xlu0 %v707, 20
      %v2682 = vpop.permute.xlu0 %2681
      %2683 = vrot.lane.b32.xlu0 %v710, 20
      %v2684 = vpop.permute.xlu0 %2683
      %2685 = vrot.lane.b32.xlu0 %v712, 20
      %v2686 = vpop.permute.xlu0 %2685
      %2687 = vrot.lane.b32.xlu0 %v714, 20
      %v2688 = vpop.permute.xlu0 %2687
      %2689 = vrot.lane.b32.xlu0 %v716, 20
      %v2690 = vpop.permute.xlu0 %2689
      %2691 = vrot.lane.b32.xlu0 %v718, 20
      %v2692 = vpop.permute.xlu0 %2691
      %2693 = vrot.lane.b32.xlu0 %v720, 20
      %v2694 = vpop.permute.xlu0 %2693
      %2695 = vrot.lane.b32.xlu0 %v722, 20
      %v2696 = vpop.permute.xlu0 %2695
      %2697 = vrot.lane.b32.xlu0 %v724, 20
      %v2698 = vpop.permute.xlu0 %2697
      %2699 = vrot.lane.b32.xlu0 %v726, 20
      %v2700 = vpop.permute.xlu0 %2699
      %2701 = vrot.lane.b32.xlu0 %v728, 20
      %v2702 = vpop.permute.xlu0 %2701
      %2703 = vrot.lane.b32.xlu0 %v730, 20
      %v2704 = vpop.permute.xlu0 %2703
      %2705 = vrot.lane.b32.xlu0 %v732, 20
      %v2706 = vpop.permute.xlu0 %2705
      %2707 = vrot.lane.b32.xlu0 %v734, 20
      %v2708 = vpop.permute.xlu0 %2707
      %2709 = vrot.lane.b32.xlu0 %v736, 20
      %v2710 = vpop.permute.xlu0 %2709
      %2711 = vrot.lane.b32.xlu0 %v738, 20
      %v2712 = vpop.permute.xlu0 %2711
      %2713 = vrot.lane.b32.xlu0 %v740, 20
      %v2714 = vpop.permute.xlu0 %2713
      %2715 = vrot.lane.b32.xlu0 %v742, 20
      %v2716 = vpop.permute.xlu0 %2715
      %2717 = vrot.lane.b32.xlu0 %v2663, 20
      %v2718 = vpop.permute.xlu0 %2717
      %2719 = vrot.lane.b32.xlu0 %v2665, 20
      %v2720 = vpop.permute.xlu0 %2719
      %2721 = vrot.lane.b32.xlu0 %v2667, 20
      %v2722 = vpop.permute.xlu0 %2721
      %2723 = vrot.lane.b32.xlu0 %v2680, 20
      %v2724 = vpop.permute.xlu0 %2723
      %2725 = vrot.lane.b32.xlu0 %v2679, 20
      %v2726 = vpop.permute.xlu0 %2725
      %v2727 = vrot.slane %v1139, 2
      %v2728 = vrot.slane %v1142, 3
      %v2729 = vor.u32 %v2727, %v2728
      %v2730 = vsel %vm787, %v873, %v2729
      %v2731 = vrot.slane %v1375, 2
      %v2732 = vrot.slane %v1148, 3
      %v2733 = vor.u32 %v2731, %v2732
      %v2734 = vsel %vm787, %v2729, %v2733
      %v2735 = vrot.slane %v1877, 2
      %v2736 = vrot.slane %v1880, 3
      %v2737 = vor.u32 %v2735, %v2736
      %v2738 = vsel %vm787, %v2733, %v2737
      %v2740 = vshrl.u32 %v231, 16
      %v2742 = vrot.slane %v2740, 2
      %v2743 = vshll.u32 %v231, 16
      %v2745 = vrot.slane %v2743, 3
      %v2746 = vor.u32 %v2742, %v2745
      %v2747 = vsel %vm787, %v2737, %v2746
      %2748 = vrot.lane.b32.xlu0 %v805, 24
      %v2749 = vpop.permute.xlu0 %2748
      %2750 = vrot.lane.b32.xlu0 %v810, 24
      %v2751 = vpop.permute.xlu0 %2750
      %2752 = vrot.lane.b32.xlu0 %v814, 24
      %v2753 = vpop.permute.xlu0 %2752
      %2754 = vrot.lane.b32.xlu0 %v818, 24
      %v2755 = vpop.permute.xlu0 %2754
      %2756 = vrot.lane.b32.xlu0 %v822, 24
      %v2757 = vpop.permute.xlu0 %2756
      %2758 = vrot.lane.b32.xlu0 %v826, 24
      %v2759 = vpop.permute.xlu0 %2758
      %2760 = vrot.lane.b32.xlu0 %v830, 24
      %v2761 = vpop.permute.xlu0 %2760
      %2762 = vrot.lane.b32.xlu0 %v834, 24
      %v2763 = vpop.permute.xlu0 %2762
      %2764 = vrot.lane.b32.xlu0 %v838, 24
      %v2765 = vpop.permute.xlu0 %2764
      %2766 = vrot.lane.b32.xlu0 %v842, 24
      %v2767 = vpop.permute.xlu0 %2766
      %2768 = vrot.lane.b32.xlu0 %v846, 24
      %v2769 = vpop.permute.xlu0 %2768
      %2770 = vrot.lane.b32.xlu0 %v850, 24
      %v2771 = vpop.permute.xlu0 %2770
      %2772 = vrot.lane.b32.xlu0 %v854, 24
      %v2773 = vpop.permute.xlu0 %2772
      %2774 = vrot.lane.b32.xlu0 %v858, 24
      %v2775 = vpop.permute.xlu0 %2774
      %2776 = vrot.lane.b32.xlu0 %v862, 24
      %v2777 = vpop.permute.xlu0 %2776
      %2778 = vrot.lane.b32.xlu0 %v866, 24
      %v2779 = vpop.permute.xlu0 %2778
      %2780 = vrot.lane.b32.xlu0 %v870, 24
      %v2781 = vpop.permute.xlu0 %2780
      %2782 = vrot.lane.b32.xlu0 %v874, 24
      %v2783 = vpop.permute.xlu0 %2782
      %2784 = vrot.lane.b32.xlu0 %v2730, 24
      %v2785 = vpop.permute.xlu0 %2784
      %2786 = vrot.lane.b32.xlu0 %v2734, 24
      %v2787 = vpop.permute.xlu0 %2786
      %2788 = vrot.lane.b32.xlu0 %v2738, 24
      %v2789 = vpop.permute.xlu0 %2788
      %2790 = vrot.lane.b32.xlu0 %v2747, 24
      %v2791 = vpop.permute.xlu0 %2790
      %2792 = vrot.lane.b32.xlu0 %v2746, 24
      %v2793 = vpop.permute.xlu0 %2792
      %v2794 = vrot.slane %v229, 3
      %v2795 = vsel %vm919, %v1008, %v2794
      %v2796 = vrot.slane %v230, 3
      %v2797 = vsel %vm919, %v2794, %v2796
      %v2798 = vrot.slane %v231, 3
      %v2799 = vsel %vm919, %v2796, %v2798
      %2800 = vrot.lane.b32.xlu0 %v927, 28
      %v2801 = vpop.permute.xlu0 %2800
      %2802 = vrot.lane.b32.xlu0 %v2795, 28
      %v2803 = vpop.permute.xlu0 %2802
      %2804 = vrot.lane.b32.xlu0 %v2797, 28
      %v2805 = vpop.permute.xlu0 %2804
      %2806 = vrot.lane.b32.xlu0 %v2799, 28
      %v2807 = vpop.permute.xlu0 %2806
      %2808 = vrot.lane.b32.xlu0 %v2798, 28
      %v2809 = vpop.permute.xlu0 %2808
      %v2810 = vrot.slane %v1375, 3
      %v2811 = vor.u32 %v2810, %v1150
      %v2812 = vsel %vm1054, %v1145, %v2811
      %v2813 = vrot.slane %v1877, 3
      %v2814 = vrot.slane %v1880, 4
      %v2815 = vor.u32 %v2813, %v2814
      %v2816 = vsel %vm1054, %v2811, %v2815
      %v2817 = vrot.slane %v2740, 3
      %v2818 = vrot.slane %v2743, 4
      %v2819 = vor.u32 %v2817, %v2818
      %v2820 = vsel %vm1054, %v2815, %v2819
      %2821 = vrot.lane.b32.xlu0 %v1068, 32
      %v2822 = vpop.permute.xlu0 %2821
      %2823 = vrot.lane.b32.xlu0 %v2812, 32
      %v2824 = vpop.permute.xlu0 %2823
      %2825 = vrot.lane.b32.xlu0 %v2816, 32
      %v2826 = vpop.permute.xlu0 %2825
      %2827 = vrot.lane.b32.xlu0 %v2820, 32
      %v2828 = vpop.permute.xlu0 %2827
      %2829 = vrot.lane.b32.xlu0 %v2819, 32
      %v2830 = vpop.permute.xlu0 %2829
      %v2831 = vrot.slane %v230, 4
      %v2832 = vsel %vm1197, %v1241, %v2831
      %v2833 = vrot.slane %v231, 4
      %v2834 = vsel %vm1197, %v2831, %v2833
      %2835 = vrot.lane.b32.xlu0 %v1203, 36
      %v2836 = vpop.permute.xlu0 %2835
      %2837 = vrot.lane.b32.xlu0 %v2832, 36
      %v2838 = vpop.permute.xlu0 %2837
      %2839 = vrot.lane.b32.xlu0 %v2834, 36
      %v2840 = vpop.permute.xlu0 %2839
      %2841 = vrot.lane.b32.xlu0 %v2833, 36
      %v2842 = vpop.permute.xlu0 %2841
      %v2843 = vrot.slane %v1877, 4
      %v2844 = vrot.slane %v1880, 5
      %v2845 = vor.u32 %v2843, %v2844
      %v2846 = vsel %vm1287, %v1379, %v2845
      %v2847 = vrot.slane %v2740, 4
      %v2848 = vrot.slane %v2743, 5
      %v2849 = vor.u32 %v2847, %v2848
      %v2850 = vsel %vm1287, %v2845, %v2849
      %v2852 = vshll.u32 %v232, 16
      %v2854 = vrot.slane %v2852, 5
      %v2855 = vsel %vm1287, %v2849, %v2854
      %2856 = vrot.lane.b32.xlu0 %v1301, 40
      %v2857 = vpop.permute.xlu0 %2856
      %2858 = vrot.lane.b32.xlu0 %v2846, 40
      %v2859 = vpop.permute.xlu0 %2858
      %2860 = vrot.lane.b32.xlu0 %v2850, 40
      %v2861 = vpop.permute.xlu0 %2860
      %2862 = vrot.lane.b32.xlu0 %v2855, 40
      %v2863 = vpop.permute.xlu0 %2862
      %v2865 = vrot.slane %v230, 5
      %v2866 = vsel %vm1425, %v1469, %v2865
      %v2867 = vrot.slane %v231, 5
      %v2868 = vsel %vm1425, %v2865, %v2867
      %v2869 = vrot.slane %v232, 5
      %v2870 = vsel %vm1425, %v2867, %v2869
      %2871 = vrot.lane.b32.xlu0 %v1431, 44
      %v2872 = vpop.permute.xlu0 %2871
      %2873 = vrot.lane.b32.xlu0 %v2866, 44
      %v2874 = vpop.permute.xlu0 %2873
      %2875 = vrot.lane.b32.xlu0 %v2868, 44
      %v2876 = vpop.permute.xlu0 %2875
      %2877 = vrot.lane.b32.xlu0 %v2870, 44
      %v2878 = vpop.permute.xlu0 %2877
      %v2880 = vrot.slane %v233, 5
      %v2881 = vsel %vm1425, %v2869, %v2880
      %2882 = vrot.lane.b32.xlu0 %v1433, 48
      %v2883 = vpop.permute.xlu0 %2882
      %2884 = vrot.lane.b32.xlu0 %v1436, 48
      %v2885 = vpop.permute.xlu0 %2884
      %2886 = vrot.lane.b32.xlu0 %v1438, 48
      %v2887 = vpop.permute.xlu0 %2886
      %2888 = vrot.lane.b32.xlu0 %v1440, 48
      %v2889 = vpop.permute.xlu0 %2888
      %2890 = vrot.lane.b32.xlu0 %v1442, 48
      %v2891 = vpop.permute.xlu0 %2890
      %2892 = vrot.lane.b32.xlu0 %v1444, 48
      %v2893 = vpop.permute.xlu0 %2892
      %2894 = vrot.lane.b32.xlu0 %v1446, 48
      %v2895 = vpop.permute.xlu0 %2894
      %2896 = vrot.lane.b32.xlu0 %v1448, 48
      %v2897 = vpop.permute.xlu0 %2896
      %2898 = vrot.lane.b32.xlu0 %v1450, 48
      %v2899 = vpop.permute.xlu0 %2898
      %2900 = vrot.lane.b32.xlu0 %v1452, 48
      %v2901 = vpop.permute.xlu0 %2900
      %2902 = vrot.lane.b32.xlu0 %v1454, 48
      %v2903 = vpop.permute.xlu0 %2902
      %2904 = vrot.lane.b32.xlu0 %v1456, 48
      %v2905 = vpop.permute.xlu0 %2904
      %2906 = vrot.lane.b32.xlu0 %v1458, 48
      %v2907 = vpop.permute.xlu0 %2906
      %2908 = vrot.lane.b32.xlu0 %v1460, 48
      %v2909 = vpop.permute.xlu0 %2908
      %2910 = vrot.lane.b32.xlu0 %v1462, 48
      %v2911 = vpop.permute.xlu0 %2910
      %2912 = vrot.lane.b32.xlu0 %v1464, 48
      %v2913 = vpop.permute.xlu0 %2912
      %2914 = vrot.lane.b32.xlu0 %v1466, 48
      %v2915 = vpop.permute.xlu0 %2914
      %2916 = vrot.lane.b32.xlu0 %v1468, 48
      %v2917 = vpop.permute.xlu0 %2916
      %2918 = vrot.lane.b32.xlu0 %v1470, 48
      %v2919 = vpop.permute.xlu0 %2918
      %2920 = vrot.lane.b32.xlu0 %v2866, 48
      %v2921 = vpop.permute.xlu0 %2920
      %2922 = vrot.lane.b32.xlu0 %v2868, 48
      %v2923 = vpop.permute.xlu0 %2922
      %2924 = vrot.lane.b32.xlu0 %v2870, 48
      %v2925 = vpop.permute.xlu0 %2924
      %2926 = vrot.lane.b32.xlu0 %v2881, 48
      %v2927 = vpop.permute.xlu0 %2926
      %v2928 = vrot.slane %v1877, 5
      %v2929 = vrot.slane %v1880, 6
      %v2930 = vor.u32 %v2928, %v2929
      %v2931 = vsel %vm1515, %v1605, %v2930
      %v2932 = vrot.slane %v2740, 5
      %v2933 = vrot.slane %v2743, 6
      %v2934 = vor.u32 %v2932, %v2933
      %v2935 = vsel %vm1515, %v2930, %v2934
      %v2936 = vshrl.u32 %v232, 16
      %v2938 = vrot.slane %v2936, 5
      %v2939 = vrot.slane %v2852, 6
      %v2940 = vor.u32 %v2938, %v2939
      %v2941 = vsel %vm1515, %v2934, %v2940
      %v2943 = vshrl.u32 %v233, 16
      %v2945 = vrot.slane %v2943, 5
      %v2946 = vshll.u32 %v233, 16
      %v2948 = vrot.slane %v2946, 6
      %v2949 = vor.u32 %v2945, %v2948
      %v2950 = vsel %vm1515, %v2940, %v2949
      %2951 = vrot.lane.b32.xlu0 %v1533, 52
      %v2952 = vpop.permute.xlu0 %2951
      %2953 = vrot.lane.b32.xlu0 %v1538, 52
      %v2954 = vpop.permute.xlu0 %2953
      %2955 = vrot.lane.b32.xlu0 %v1542, 52
      %v2956 = vpop.permute.xlu0 %2955
      %2957 = vrot.lane.b32.xlu0 %v1546, 52
      %v2958 = vpop.permute.xlu0 %2957
      %2959 = vrot.lane.b32.xlu0 %v1550, 52
      %v2960 = vpop.permute.xlu0 %2959
      %2961 = vrot.lane.b32.xlu0 %v1554, 52
      %v2962 = vpop.permute.xlu0 %2961
      %2963 = vrot.lane.b32.xlu0 %v1558, 52
      %v2964 = vpop.permute.xlu0 %2963
      %2965 = vrot.lane.b32.xlu0 %v1562, 52
      %v2966 = vpop.permute.xlu0 %2965
      %2967 = vrot.lane.b32.xlu0 %v1566, 52
      %v2968 = vpop.permute.xlu0 %2967
      %2969 = vrot.lane.b32.xlu0 %v1570, 52
      %v2970 = vpop.permute.xlu0 %2969
      %2971 = vrot.lane.b32.xlu0 %v1574, 52
      %v2972 = vpop.permute.xlu0 %2971
      %2973 = vrot.lane.b32.xlu0 %v1578, 52
      %v2974 = vpop.permute.xlu0 %2973
      %2975 = vrot.lane.b32.xlu0 %v1582, 52
      %v2976 = vpop.permute.xlu0 %2975
      %2977 = vrot.lane.b32.xlu0 %v1586, 52
      %v2978 = vpop.permute.xlu0 %2977
      %2979 = vrot.lane.b32.xlu0 %v1590, 52
      %v2980 = vpop.permute.xlu0 %2979
      %2981 = vrot.lane.b32.xlu0 %v1594, 52
      %v2982 = vpop.permute.xlu0 %2981
      %2983 = vrot.lane.b32.xlu0 %v1598, 52
      %v2984 = vpop.permute.xlu0 %2983
      %2985 = vrot.lane.b32.xlu0 %v1602, 52
      %v2986 = vpop.permute.xlu0 %2985
      %2987 = vrot.lane.b32.xlu0 %v1606, 52
      %v2988 = vpop.permute.xlu0 %2987
      %2989 = vrot.lane.b32.xlu0 %v2931, 52
      %v2990 = vpop.permute.xlu0 %2989
      %2991 = vrot.lane.b32.xlu0 %v2935, 52
      %v2992 = vpop.permute.xlu0 %2991
      %2993 = vrot.lane.b32.xlu0 %v2941, 52
      %v2994 = vpop.permute.xlu0 %2993
      %2995 = vrot.lane.b32.xlu0 %v2950, 52
      %v2996 = vpop.permute.xlu0 %2995
      %v2997 = vrot.slane %v231, 6
      %v2998 = vsel %vm1651, %v1742, %v2997
      %v2999 = vrot.slane %v232, 6
      %v3000 = vsel %vm1651, %v2997, %v2999
      %v3001 = vrot.slane %v233, 6
      %v3002 = vsel %vm1651, %v2999, %v3001
      %3003 = vrot.lane.b32.xlu0 %v1659, 56
      %v3004 = vpop.permute.xlu0 %3003
      %3005 = vrot.lane.b32.xlu0 %v2998, 56
      %v3006 = vpop.permute.xlu0 %3005
      %3007 = vrot.lane.b32.xlu0 %v3000, 56
      %v3008 = vpop.permute.xlu0 %3007
      %3009 = vrot.lane.b32.xlu0 %v3002, 56
      %v3010 = vpop.permute.xlu0 %3009
      %v3011 = vrot.slane %v2740, 6
      %v3012 = vrot.slane %v2743, 7
      %v3013 = vor.u32 %v3011, %v3012
      %v3014 = vsel %vm1788, %v1883, %v3013
      %v3015 = vrot.slane %v2936, 6
      %v3016 = vrot.slane %v2852, 7
      %v3017 = vor.u32 %v3015, %v3016
      %v3018 = vsel %vm1788, %v3013, %v3017
      %v3019 = vrot.slane %v2943, 6
      %v3020 = vrot.slane %v2946, 7
      %v3021 = vor.u32 %v3019, %v3020
      %v3022 = vsel %vm1788, %v3017, %v3021
      %3023 = vrot.lane.b32.xlu0 %v1802, 60
      %v3024 = vpop.permute.xlu0 %3023
      %3025 = vrot.lane.b32.xlu0 %v3014, 60
      %v3026 = vpop.permute.xlu0 %3025
      %3027 = vrot.lane.b32.xlu0 %v3018, 60
      %v3028 = vpop.permute.xlu0 %3027
      %3029 = vrot.lane.b32.xlu0 %v3022, 60
      %v3030 = vpop.permute.xlu0 %3029
      %v3032 = vsel %vm1929, %v208, %v2615
      %v3034 = vsel %vm1929, %v227, %v2617
      %v3036 = vsel %vm1929, %v228, %v2619
      %v3038 = vsel %vm1929, %v229, %v2621
      %v3040 = vsel %vm1929, %v230, %v2623
      %v3042 = vsel %vm1974, %v3032, %v2631
      %v3044 = vsel %vm1974, %v3034, %v2633
      %v3046 = vsel %vm1974, %v3036, %v2635
      %v3048 = vsel %vm1974, %v3038, %v2637
      %v3050 = vsel %vm1974, %v3040, %v2639
      %v3052 = vsel %vm2019, %v3042, %v2653
      %v3054 = vsel %vm2019, %v3044, %v2655
      %v3056 = vsel %vm2019, %v3046, %v2657
      %v3058 = vsel %vm2019, %v3048, %v2659
      %v3060 = vsel %vm2019, %v3050, %v2661
      %v3062 = vsel %vm2064, %v3052, %v2669
      %v3064 = vsel %vm2064, %v3054, %v2671
      %v3066 = vsel %vm2064, %v3056, %v2673
      %v3068 = vsel %vm2064, %v3058, %v2675
      %v3070 = vsel %vm2064, %v3060, %v2677
      %v3072 = vsel %vm2109, %v3062, %v2682
      %v3074 = vsel %vm2109, %v2072, %v2684
      %v3076 = vsel %vm2109, %v2074, %v2686
      %v3078 = vsel %vm2109, %v2076, %v2688
      %v3080 = vsel %vm2109, %v2078, %v2690
      %v3082 = vsel %vm2109, %v2080, %v2692
      %v3084 = vsel %vm2109, %v2082, %v2694
      %v3086 = vsel %vm2109, %v2084, %v2696
      %v3088 = vsel %vm2109, %v2086, %v2698
      %v3090 = vsel %vm2109, %v2088, %v2700
      %v3092 = vsel %vm2109, %v2090, %v2702
      %v3094 = vsel %vm2109, %v2092, %v2704
      %v3096 = vsel %vm2109, %v2094, %v2706
      %v3098 = vsel %vm2109, %v2096, %v2708
      %v3100 = vsel %vm2109, %v2098, %v2710
      %v3102 = vsel %vm2109, %v2100, %v2712
      %v3104 = vsel %vm2109, %v2102, %v2714
      %v3106 = vsel %vm2109, %v2104, %v2716
      %v3108 = vsel %vm2109, %v2106, %v2718
      %v3110 = vsel %vm2109, %v3064, %v2720
      %v3112 = vsel %vm2109, %v3066, %v2722
      %v3114 = vsel %vm2109, %v3068, %v2724
      %v3116 = vsel %vm2109, %v3070, %v2726
      %v3118 = vsel %vm2154, %v3072, %v2749
      %v3120 = vsel %vm2154, %v3074, %v2751
      %v3122 = vsel %vm2154, %v3076, %v2753
      %v3124 = vsel %vm2154, %v3078, %v2755
      %v3126 = vsel %vm2154, %v3080, %v2757
      %v3128 = vsel %vm2154, %v3082, %v2759
      %v3130 = vsel %vm2154, %v3084, %v2761
      %v3132 = vsel %vm2154, %v3086, %v2763
      %v3134 = vsel %vm2154, %v3088, %v2765
      %v3136 = vsel %vm2154, %v3090, %v2767
      %v3138 = vsel %vm2154, %v3092, %v2769
      %v3140 = vsel %vm2154, %v3094, %v2771
      %v3142 = vsel %vm2154, %v3096, %v2773
      %v3144 = vsel %vm2154, %v3098, %v2775
      %v3146 = vsel %vm2154, %v3100, %v2777
      %v3148 = vsel %vm2154, %v3102, %v2779
      %v3150 = vsel %vm2154, %v3104, %v2781
      %v3152 = vsel %vm2154, %v3106, %v2783
      %v3154 = vsel %vm2154, %v3108, %v2785
      %v3156 = vsel %vm2154, %v3110, %v2787
      %v3158 = vsel %vm2154, %v3112, %v2789
      %v3160 = vsel %vm2154, %v3114, %v2791
      %v3162 = vsel %vm2154, %v3116, %v2793
      %v3164 = vsel %vm2199, %v3118, %v2801
      %v3165 = vsel %vm2199, %v3120, %v1017
      %v3166 = vsel %vm2199, %v3122, %v1019
      %v3167 = vsel %vm2199, %v3124, %v1021
      %v3168 = vsel %vm2199, %v3126, %v1023
      %v3169 = vsel %vm2199, %v3128, %v1025
      %v3170 = vsel %vm2199, %v3130, %v1027
      %v3171 = vsel %vm2199, %v3132, %v1029
      %v3172 = vsel %vm2199, %v3134, %v1031
      %v3173 = vsel %vm2199, %v3136, %v1033
      %v3174 = vsel %vm2199, %v3138, %v1035
      %v3175 = vsel %vm2199, %v3140, %v1037
      %v3176 = vsel %vm2199, %v3142, %v1039
      %v3177 = vsel %vm2199, %v3144, %v1041
      %v3178 = vsel %vm2199, %v3146, %v1043
      %v3179 = vsel %vm2199, %v3148, %v1045
      %v3180 = vsel %vm2199, %v3150, %v1047
      %v3181 = vsel %vm2199, %v3152, %v1049
      %v3182 = vsel %vm2199, %v3154, %v1051
      %v3184 = vsel %vm2199, %v3156, %v2803
      %v3186 = vsel %vm2199, %v3158, %v2805
      %v3188 = vsel %vm2199, %v3160, %v2807
      %v3190 = vsel %vm2199, %v3162, %v2809
      %v3192 = vsel %vm2244, %v3164, %v2822
      %v3193 = vsel %vm2244, %v3165, %v1159
      %v3194 = vsel %vm2244, %v3166, %v1161
      %v3195 = vsel %vm2244, %v3167, %v1163
      %v3196 = vsel %vm2244, %v3168, %v1165
      %v3197 = vsel %vm2244, %v3169, %v1167
      %v3198 = vsel %vm2244, %v3170, %v1169
      %v3199 = vsel %vm2244, %v3171, %v1171
      %v3200 = vsel %vm2244, %v3172, %v1173
      %v3201 = vsel %vm2244, %v3173, %v1175
      %v3202 = vsel %vm2244, %v3174, %v1177
      %v3203 = vsel %vm2244, %v3175, %v1179
      %v3204 = vsel %vm2244, %v3176, %v1181
      %v3205 = vsel %vm2244, %v3177, %v1183
      %v3206 = vsel %vm2244, %v3178, %v1185
      %v3207 = vsel %vm2244, %v3179, %v1187
      %v3208 = vsel %vm2244, %v3180, %v1189
      %v3209 = vsel %vm2244, %v3181, %v1191
      %v3210 = vsel %vm2244, %v3182, %v1193
      %v3212 = vsel %vm2244, %v3184, %v2824
      %v3214 = vsel %vm2244, %v3186, %v2826
      %v3216 = vsel %vm2244, %v3188, %v2828
      %v3218 = vsel %vm2244, %v3190, %v2830
      %v3220 = vsel %vm2289, %v3192, %v2836
      %v3221 = vsel %vm2289, %v3193, %v1250
      %v3222 = vsel %vm2289, %v3194, %v1252
      %v3223 = vsel %vm2289, %v3195, %v1254
      %v3224 = vsel %vm2289, %v3196, %v1256
      %v3225 = vsel %vm2289, %v3197, %v1258
      %v3226 = vsel %vm2289, %v3198, %v1260
      %v3227 = vsel %vm2289, %v3199, %v1262
      %v3228 = vsel %vm2289, %v3200, %v1264
      %v3229 = vsel %vm2289, %v3201, %v1266
      %v3230 = vsel %vm2289, %v3202, %v1268
      %v3231 = vsel %vm2289, %v3203, %v1270
      %v3232 = vsel %vm2289, %v3204, %v1272
      %v3233 = vsel %vm2289, %v3205, %v1274
      %v3234 = vsel %vm2289, %v3206, %v1276
      %v3235 = vsel %vm2289, %v3207, %v1278
      %v3236 = vsel %vm2289, %v3208, %v1280
      %v3237 = vsel %vm2289, %v3209, %v1282
      %v3238 = vsel %vm2289, %v3210, %v1284
      %v3239 = vsel %vm2289, %v3212, %v1286
      %v3241 = vsel %vm2289, %v3214, %v2838
      %v3243 = vsel %vm2289, %v3216, %v2840
      %v3245 = vsel %vm2289, %v3218, %v2842
      %v3247 = vsel %vm2334, %v3220, %v2857
      %v3248 = vsel %vm2334, %v3221, %v1388
      %v3249 = vsel %vm2334, %v3222, %v1390
      %v3250 = vsel %vm2334, %v3223, %v1392
      %v3251 = vsel %vm2334, %v3224, %v1394
      %v3252 = vsel %vm2334, %v3225, %v1396
      %v3253 = vsel %vm2334, %v3226, %v1398
      %v3254 = vsel %vm2334, %v3227, %v1400
      %v3255 = vsel %vm2334, %v3228, %v1402
      %v3256 = vsel %vm2334, %v3229, %v1404
      %v3257 = vsel %vm2334, %v3230, %v1406
      %v3258 = vsel %vm2334, %v3231, %v1408
      %v3259 = vsel %vm2334, %v3232, %v1410
      %v3260 = vsel %vm2334, %v3233, %v1412
      %v3261 = vsel %vm2334, %v3234, %v1414
      %v3262 = vsel %vm2334, %v3235, %v1416
      %v3263 = vsel %vm2334, %v3236, %v1418
      %v3264 = vsel %vm2334, %v3237, %v1420
      %v3265 = vsel %vm2334, %v3238, %v1422
      %v3266 = vsel %vm2334, %v3239, %v1424
      %v3268 = vsel %vm2334, %v3241, %v2859
      %v3270 = vsel %vm2334, %v3243, %v2861
      %v3272 = vsel %vm2334, %v3245, %v2863
      %v3274 = vsel %vm2379, %v3247, %v2872
      %v3275 = vsel %vm2379, %v3248, %v1478
      %v3276 = vsel %vm2379, %v3249, %v1480
      %v3277 = vsel %vm2379, %v3250, %v1482
      %v3278 = vsel %vm2379, %v3251, %v1484
      %v3279 = vsel %vm2379, %v3252, %v1486
      %v3280 = vsel %vm2379, %v3253, %v1488
      %v3281 = vsel %vm2379, %v3254, %v1490
      %v3282 = vsel %vm2379, %v3255, %v1492
      %v3283 = vsel %vm2379, %v3256, %v1494
      %v3284 = vsel %vm2379, %v3257, %v1496
      %v3285 = vsel %vm2379, %v3258, %v1498
      %v3286 = vsel %vm2379, %v3259, %v1500
      %v3287 = vsel %vm2379, %v3260, %v1502
      %v3288 = vsel %vm2379, %v3261, %v1504
      %v3289 = vsel %vm2379, %v3262, %v1506
      %v3290 = vsel %vm2379, %v3263, %v1508
      %v3291 = vsel %vm2379, %v3264, %v1510
      %v3292 = vsel %vm2379, %v3265, %v1512
      %v3293 = vsel %vm2379, %v3266, %v1514
      %v3295 = vsel %vm2379, %v3268, %v2874
      %v3297 = vsel %vm2379, %v3270, %v2876
      %v3299 = vsel %vm2379, %v3272, %v2878
      %v3301 = vsel %vm2424, %v3274, %v2883
      %v3303 = vsel %vm2424, %v3275, %v2885
      %v3305 = vsel %vm2424, %v3276, %v2887
      %v3307 = vsel %vm2424, %v3277, %v2889
      %v3309 = vsel %vm2424, %v3278, %v2891
      %v3311 = vsel %vm2424, %v3279, %v2893
      %v3313 = vsel %vm2424, %v3280, %v2895
      %v3315 = vsel %vm2424, %v3281, %v2897
      %v3317 = vsel %vm2424, %v3282, %v2899
      %v3319 = vsel %vm2424, %v3283, %v2901
      %v3321 = vsel %vm2424, %v3284, %v2903
      %v3323 = vsel %vm2424, %v3285, %v2905
      %v3325 = vsel %vm2424, %v3286, %v2907
      %v3327 = vsel %vm2424, %v3287, %v2909
      %v3329 = vsel %vm2424, %v3288, %v2911
      %v3331 = vsel %vm2424, %v3289, %v2913
      %v3333 = vsel %vm2424, %v3290, %v2915
      %v3335 = vsel %vm2424, %v3291, %v2917
      %v3337 = vsel %vm2424, %v3292, %v2919
      %v3339 = vsel %vm2424, %v3293, %v2921
      %v3341 = vsel %vm2424, %v3295, %v2923
      %v3343 = vsel %vm2424, %v3297, %v2925
      %v3345 = vsel %vm2424, %v3299, %v2927
      %v3347 = vsel %vm2469, %v3301, %v2952
      %v3349 = vsel %vm2469, %v3303, %v2954
      %v3351 = vsel %vm2469, %v3305, %v2956
      %v3353 = vsel %vm2469, %v3307, %v2958
      %v3355 = vsel %vm2469, %v3309, %v2960
      %v3357 = vsel %vm2469, %v3311, %v2962
      %v3359 = vsel %vm2469, %v3313, %v2964
      %v3361 = vsel %vm2469, %v3315, %v2966
      %v3363 = vsel %vm2469, %v3317, %v2968
      %v3365 = vsel %vm2469, %v3319, %v2970
      %v3367 = vsel %vm2469, %v3321, %v2972
      %v3369 = vsel %vm2469, %v3323, %v2974
      %v3371 = vsel %vm2469, %v3325, %v2976
      %v3373 = vsel %vm2469, %v3327, %v2978
      %v3375 = vsel %vm2469, %v3329, %v2980
      %v3377 = vsel %vm2469, %v3331, %v2982
      %v3379 = vsel %vm2469, %v3333, %v2984
      %v3381 = vsel %vm2469, %v3335, %v2986
      %v3383 = vsel %vm2469, %v3337, %v2988
      %v3385 = vsel %vm2469, %v3339, %v2990
      %v3387 = vsel %vm2469, %v3341, %v2992
      %v3389 = vsel %vm2469, %v3343, %v2994
      %v3391 = vsel %vm2469, %v3345, %v2996
      %v3393 = vsel %vm2514, %v3347, %v3004
      %v3394 = vsel %vm2514, %v3349, %v1751
      %v3395 = vsel %vm2514, %v3351, %v1753
      %v3396 = vsel %vm2514, %v3353, %v1755
      %v3397 = vsel %vm2514, %v3355, %v1757
      %v3398 = vsel %vm2514, %v3357, %v1759
      %v3399 = vsel %vm2514, %v3359, %v1761
      %v3400 = vsel %vm2514, %v3361, %v1763
      %v3401 = vsel %vm2514, %v3363, %v1765
      %v3402 = vsel %vm2514, %v3365, %v1767
      %v3403 = vsel %vm2514, %v3367, %v1769
      %v3404 = vsel %vm2514, %v3369, %v1771
      %v3405 = vsel %vm2514, %v3371, %v1773
      %v3406 = vsel %vm2514, %v3373, %v1775
      %v3407 = vsel %vm2514, %v3375, %v1777
      %v3408 = vsel %vm2514, %v3377, %v1779
      %v3409 = vsel %vm2514, %v3379, %v1781
      %v3410 = vsel %vm2514, %v3381, %v1783
      %v3411 = vsel %vm2514, %v3383, %v1785
      %v3412 = vsel %vm2514, %v3385, %v1787
      %v3414 = vsel %vm2514, %v3387, %v3006
      %v3416 = vsel %vm2514, %v3389, %v3008
      %v3418 = vsel %vm2514, %v3391, %v3010
      %v3420 = vsel %vm2559, %v3393, %v3024
      %v3421 = vsel %vm2559, %v3394, %v1892
      %v3422 = vsel %vm2559, %v3395, %v1894
      %v3423 = vsel %vm2559, %v3396, %v1896
      %v3424 = vsel %vm2559, %v3397, %v1898
      %v3425 = vsel %vm2559, %v3398, %v1900
      %v3426 = vsel %vm2559, %v3399, %v1902
      %v3427 = vsel %vm2559, %v3400, %v1904
      %v3428 = vsel %vm2559, %v3401, %v1906
      %v3429 = vsel %vm2559, %v3402, %v1908
      %v3430 = vsel %vm2559, %v3403, %v1910
      %v3431 = vsel %vm2559, %v3404, %v1912
      %v3432 = vsel %vm2559, %v3405, %v1914
      %v3433 = vsel %vm2559, %v3406, %v1916
      %v3434 = vsel %vm2559, %v3407, %v1918
      %v3435 = vsel %vm2559, %v3408, %v1920
      %v3436 = vsel %vm2559, %v3409, %v1922
      %v3437 = vsel %vm2559, %v3410, %v1924
      %v3438 = vsel %vm2559, %v3411, %v1926
      %v3439 = vsel %vm2559, %v3412, %v1928
      %v3441 = vsel %vm2559, %v3414, %v3026
      %v3443 = vsel %vm2559, %v3416, %v3028
      %v3445 = vsel %vm2559, %v3418, %v3030
      %v3446 = vrot.slane %v2743, 1
      %v3447 = vsel %vm237, %v2613, %v3446
      %v3448 = vor.u32 %v2740, %v3446
      %v3449 = vrot.slane %v2852, 1
      %v3450 = vsel %vm237, %v3448, %v3449
      %v3451 = vor.u32 %v2936, %v3449
      %v3452 = vrot.slane %v2946, 1
      %v3453 = vsel %vm237, %v3451, %v3452
      %v3454 = vor.u32 %v2943, %v3452
      %3455 = vrot.lane.b32.xlu0 %v3447, 4
      %v3456 = vpop.permute.xlu0 %3455
      %3457 = vrot.lane.b32.xlu0 %v3450, 4
      %v3458 = vpop.permute.xlu0 %3457
      %3459 = vrot.lane.b32.xlu0 %v3453, 4
      %v3460 = vpop.permute.xlu0 %3459
      %3461 = vrot.lane.b32.xlu0 %v3454, 4
      %v3462 = vpop.permute.xlu0 %3461
      %v3463 = vrot.slane %v231, 1
      %v3464 = vsel %vm479, %v2628, %v3463
      %v3465 = vrot.slane %v232, 1
      %v3466 = vsel %vm479, %v3463, %v3465
      %v3467 = vrot.slane %v233, 1
      %v3468 = vsel %vm479, %v3465, %v3467
      %3469 = vrot.lane.b32.xlu0 %v3464, 8
      %v3470 = vpop.permute.xlu0 %3469
      %3471 = vrot.lane.b32.xlu0 %v3466, 8
      %v3472 = vpop.permute.xlu0 %3471
      %3473 = vrot.lane.b32.xlu0 %v3468, 8
      %v3474 = vpop.permute.xlu0 %3473
      %3475 = vrot.lane.b32.xlu0 %v3467, 8
      %v3476 = vpop.permute.xlu0 %3475
      %v3478 = vrot.slane %v234, 1
      %v3479 = vsel %vm479, %v3467, %v3478
      %3480 = vrot.lane.b32.xlu0 %v494, 12
      %v3481 = vpop.permute.xlu0 %3480
      %3482 = vrot.lane.b32.xlu0 %v496, 12
      %v3483 = vpop.permute.xlu0 %3482
      %3484 = vrot.lane.b32.xlu0 %v498, 12
      %v3485 = vpop.permute.xlu0 %3484
      %3486 = vrot.lane.b32.xlu0 %v500, 12
      %v3487 = vpop.permute.xlu0 %3486
      %3488 = vrot.lane.b32.xlu0 %v502, 12
      %v3489 = vpop.permute.xlu0 %3488
      %3490 = vrot.lane.b32.xlu0 %v504, 12
      %v3491 = vpop.permute.xlu0 %3490
      %3492 = vrot.lane.b32.xlu0 %v506, 12
      %v3493 = vpop.permute.xlu0 %3492
      %3494 = vrot.lane.b32.xlu0 %v508, 12
      %v3495 = vpop.permute.xlu0 %3494
      %3496 = vrot.lane.b32.xlu0 %v510, 12
      %v3497 = vpop.permute.xlu0 %3496
      %3498 = vrot.lane.b32.xlu0 %v512, 12
      %v3499 = vpop.permute.xlu0 %3498
      %3500 = vrot.lane.b32.xlu0 %v514, 12
      %v3501 = vpop.permute.xlu0 %3500
      %3502 = vrot.lane.b32.xlu0 %v516, 12
      %v3503 = vpop.permute.xlu0 %3502
      %3504 = vrot.lane.b32.xlu0 %v518, 12
      %v3505 = vpop.permute.xlu0 %3504
      %3506 = vrot.lane.b32.xlu0 %v520, 12
      %v3507 = vpop.permute.xlu0 %3506
      %3508 = vrot.lane.b32.xlu0 %v522, 12
      %v3509 = vpop.permute.xlu0 %3508
      %3510 = vrot.lane.b32.xlu0 %v2625, 12
      %v3511 = vpop.permute.xlu0 %3510
      %3512 = vrot.lane.b32.xlu0 %v2627, 12
      %v3513 = vpop.permute.xlu0 %3512
      %3514 = vrot.lane.b32.xlu0 %v2629, 12
      %v3515 = vpop.permute.xlu0 %3514
      %3516 = vrot.lane.b32.xlu0 %v3464, 12
      %v3517 = vpop.permute.xlu0 %3516
      %3518 = vrot.lane.b32.xlu0 %v3466, 12
      %v3519 = vpop.permute.xlu0 %3518
      %3520 = vrot.lane.b32.xlu0 %v3468, 12
      %v3521 = vpop.permute.xlu0 %3520
      %3522 = vrot.lane.b32.xlu0 %v3479, 12
      %v3523 = vpop.permute.xlu0 %3522
      %3524 = vrot.lane.b32.xlu0 %v3478, 12
      %v3525 = vpop.permute.xlu0 %3524
      %v3526 = vsel %vm567, %v591, %v597
      %v3527 = vrot.slane %v2740, 1
      %v3528 = vrot.slane %v2743, 2
      %v3529 = vor.u32 %v3527, %v3528
      %v3530 = vsel %vm567, %v2650, %v3529
      %v3531 = vrot.slane %v2936, 1
      %v3532 = vrot.slane %v2852, 2
      %v3533 = vor.u32 %v3531, %v3532
      %v3534 = vsel %vm567, %v3529, %v3533
      %v3535 = vrot.slane %v2943, 1
      %v3536 = vrot.slane %v2946, 2
      %v3537 = vor.u32 %v3535, %v3536
      %v3538 = vsel %vm567, %v3533, %v3537
      %v3540 = vshrl.u32 %v234, 16
      %v3542 = vrot.slane %v3540, 1
      %v3543 = vshll.u32 %v234, 16
      %v3545 = vrot.slane %v3543, 2
      %v3546 = vor.u32 %v3542, %v3545
      %v3547 = vsel %vm567, %v3537, %v3546
      %3548 = vrot.lane.b32.xlu0 %v3526, 16
      %v3549 = vpop.permute.xlu0 %3548
      %3550 = vrot.lane.b32.xlu0 %v602, 16
      %v3551 = vpop.permute.xlu0 %3550
      %3552 = vrot.lane.b32.xlu0 %v606, 16
      %v3553 = vpop.permute.xlu0 %3552
      %3554 = vrot.lane.b32.xlu0 %v610, 16
      %v3555 = vpop.permute.xlu0 %3554
      %3556 = vrot.lane.b32.xlu0 %v614, 16
      %v3557 = vpop.permute.xlu0 %3556
      %3558 = vrot.lane.b32.xlu0 %v618, 16
      %v3559 = vpop.permute.xlu0 %3558
      %3560 = vrot.lane.b32.xlu0 %v622, 16
      %v3561 = vpop.permute.xlu0 %3560
      %3562 = vrot.lane.b32.xlu0 %v626, 16
      %v3563 = vpop.permute.xlu0 %3562
      %3564 = vrot.lane.b32.xlu0 %v630, 16
      %v3565 = vpop.permute.xlu0 %3564
      %3566 = vrot.lane.b32.xlu0 %v634, 16
      %v3567 = vpop.permute.xlu0 %3566
      %3568 = vrot.lane.b32.xlu0 %v638, 16
      %v3569 = vpop.permute.xlu0 %3568
      %3570 = vrot.lane.b32.xlu0 %v642, 16
      %v3571 = vpop.permute.xlu0 %3570
      %3572 = vrot.lane.b32.xlu0 %v646, 16
      %v3573 = vpop.permute.xlu0 %3572
      %3574 = vrot.lane.b32.xlu0 %v650, 16
      %v3575 = vpop.permute.xlu0 %3574
      %3576 = vrot.lane.b32.xlu0 %v654, 16
      %v3577 = vpop.permute.xlu0 %3576
      %3578 = vrot.lane.b32.xlu0 %v2643, 16
      %v3579 = vpop.permute.xlu0 %3578
      %3580 = vrot.lane.b32.xlu0 %v2647, 16
      %v3581 = vpop.permute.xlu0 %3580
      %3582 = vrot.lane.b32.xlu0 %v2651, 16
      %v3583 = vpop.permute.xlu0 %3582
      %3584 = vrot.lane.b32.xlu0 %v3530, 16
      %v3585 = vpop.permute.xlu0 %3584
      %3586 = vrot.lane.b32.xlu0 %v3534, 16
      %v3587 = vpop.permute.xlu0 %3586
      %3588 = vrot.lane.b32.xlu0 %v3538, 16
      %v3589 = vpop.permute.xlu0 %3588
      %3590 = vrot.lane.b32.xlu0 %v3547, 16
      %v3591 = vpop.permute.xlu0 %3590
      %3592 = vrot.lane.b32.xlu0 %v3546, 16
      %v3593 = vpop.permute.xlu0 %3592
      %v3594 = vrot.slane %v232, 2
      %v3595 = vsel %vm699, %v2679, %v3594
      %v3596 = vrot.slane %v233, 2
      %v3597 = vsel %vm699, %v3594, %v3596
      %v3598 = vrot.slane %v234, 2
      %v3599 = vsel %vm699, %v3596, %v3598
      %3600 = vrot.lane.b32.xlu0 %v713, 20
      %v3601 = vpop.permute.xlu0 %3600
      %3602 = vrot.lane.b32.xlu0 %v3595, 20
      %v3603 = vpop.permute.xlu0 %3602
      %3604 = vrot.lane.b32.xlu0 %v3597, 20
      %v3605 = vpop.permute.xlu0 %3604
      %3606 = vrot.lane.b32.xlu0 %v3599, 20
      %v3607 = vpop.permute.xlu0 %3606
      %3608 = vrot.lane.b32.xlu0 %v3598, 20
      %v3609 = vpop.permute.xlu0 %3608
      %v3610 = vrot.slane %v2936, 2
      %v3611 = vrot.slane %v2852, 3
      %v3612 = vor.u32 %v3610, %v3611
      %v3613 = vsel %vm787, %v2746, %v3612
      %v3614 = vrot.slane %v2943, 2
      %v3615 = vrot.slane %v2946, 3
      %v3616 = vor.u32 %v3614, %v3615
      %v3617 = vsel %vm787, %v3612, %v3616
      %v3618 = vrot.slane %v3540, 2
      %v3619 = vrot.slane %v3543, 3
      %v3620 = vor.u32 %v3618, %v3619
      %v3621 = vsel %vm787, %v3616, %v3620
      %3622 = vrot.lane.b32.xlu0 %v817, 24
      %v3623 = vpop.permute.xlu0 %3622
      %3624 = vrot.lane.b32.xlu0 %v3613, 24
      %v3625 = vpop.permute.xlu0 %3624
      %3626 = vrot.lane.b32.xlu0 %v3617, 24
      %v3627 = vpop.permute.xlu0 %3626
      %3628 = vrot.lane.b32.xlu0 %v3621, 24
      %v3629 = vpop.permute.xlu0 %3628
      %3630 = vrot.lane.b32.xlu0 %v3620, 24
      %v3631 = vpop.permute.xlu0 %3630
      %v3632 = vrot.slane %v232, 3
      %v3633 = vsel %vm919, %v2798, %v3632
      %v3634 = vrot.slane %v233, 3
      %v3635 = vsel %vm919, %v3632, %v3634
      %v3636 = vrot.slane %v234, 3
      %v3637 = vsel %vm919, %v3634, %v3636
      %3638 = vrot.lane.b32.xlu0 %v933, 28
      %v3639 = vpop.permute.xlu0 %3638
      %3640 = vrot.lane.b32.xlu0 %v3633, 28
      %v3641 = vpop.permute.xlu0 %3640
      %3642 = vrot.lane.b32.xlu0 %v3635, 28
      %v3643 = vpop.permute.xlu0 %3642
      %3644 = vrot.lane.b32.xlu0 %v3637, 28
      %v3645 = vpop.permute.xlu0 %3644
      %3646 = vrot.lane.b32.xlu0 %v3636, 28
      %v3647 = vpop.permute.xlu0 %3646
      %v3648 = vrot.slane %v2936, 3
      %v3649 = vrot.slane %v2852, 4
      %v3650 = vor.u32 %v3648, %v3649
      %v3651 = vsel %vm1054, %v2819, %v3650
      %v3652 = vrot.slane %v2943, 3
      %v3653 = vrot.slane %v2946, 4
      %v3654 = vor.u32 %v3652, %v3653
      %v3655 = vsel %vm1054, %v3650, %v3654
      %v3656 = vrot.slane %v3540, 3
      %v3657 = vrot.slane %v3543, 4
      %v3658 = vor.u32 %v3656, %v3657
      %v3659 = vsel %vm1054, %v3654, %v3658
      %3660 = vrot.lane.b32.xlu0 %v1080, 32
      %v3661 = vpop.permute.xlu0 %3660
      %3662 = vrot.lane.b32.xlu0 %v3651, 32
      %v3663 = vpop.permute.xlu0 %3662
      %3664 = vrot.lane.b32.xlu0 %v3655, 32
      %v3665 = vpop.permute.xlu0 %3664
      %3666 = vrot.lane.b32.xlu0 %v3659, 32
      %v3667 = vpop.permute.xlu0 %3666
      %3668 = vrot.lane.b32.xlu0 %v3658, 32
      %v3669 = vpop.permute.xlu0 %3668
      %v3670 = vrot.slane %v232, 4
      %v3671 = vsel %vm1197, %v2833, %v3670
      %v3672 = vrot.slane %v233, 4
      %v3673 = vsel %vm1197, %v3670, %v3672
      %v3674 = vrot.slane %v234, 4
      %v3675 = vsel %vm1197, %v3672, %v3674
      %3676 = vrot.lane.b32.xlu0 %v1209, 36
      %v3677 = vpop.permute.xlu0 %3676
      %3678 = vrot.lane.b32.xlu0 %v3671, 36
      %v3679 = vpop.permute.xlu0 %3678
      %3680 = vrot.lane.b32.xlu0 %v3673, 36
      %v3681 = vpop.permute.xlu0 %3680
      %3682 = vrot.lane.b32.xlu0 %v3675, 36
      %v3683 = vpop.permute.xlu0 %3682
      %3684 = vrot.lane.b32.xlu0 %v3674, 36
      %v3685 = vpop.permute.xlu0 %3684
      %v3687 = vrot.slane %v235, 4
      %v3688 = vsel %vm1197, %v3674, %v3687
      %3689 = vrot.lane.b32.xlu0 %v1211, 40
      %v3690 = vpop.permute.xlu0 %3689
      %3691 = vrot.lane.b32.xlu0 %v1214, 40
      %v3692 = vpop.permute.xlu0 %3691
      %3693 = vrot.lane.b32.xlu0 %v1216, 40
      %v3694 = vpop.permute.xlu0 %3693
      %3695 = vrot.lane.b32.xlu0 %v1218, 40
      %v3696 = vpop.permute.xlu0 %3695
      %3697 = vrot.lane.b32.xlu0 %v1220, 40
      %v3698 = vpop.permute.xlu0 %3697
      %3699 = vrot.lane.b32.xlu0 %v1222, 40
      %v3700 = vpop.permute.xlu0 %3699
      %3701 = vrot.lane.b32.xlu0 %v1224, 40
      %v3702 = vpop.permute.xlu0 %3701
      %3703 = vrot.lane.b32.xlu0 %v1226, 40
      %v3704 = vpop.permute.xlu0 %3703
      %3705 = vrot.lane.b32.xlu0 %v1228, 40
      %v3706 = vpop.permute.xlu0 %3705
      %3707 = vrot.lane.b32.xlu0 %v1230, 40
      %v3708 = vpop.permute.xlu0 %3707
      %3709 = vrot.lane.b32.xlu0 %v1232, 40
      %v3710 = vpop.permute.xlu0 %3709
      %3711 = vrot.lane.b32.xlu0 %v1234, 40
      %v3712 = vpop.permute.xlu0 %3711
      %3713 = vrot.lane.b32.xlu0 %v1236, 40
      %v3714 = vpop.permute.xlu0 %3713
      %3715 = vrot.lane.b32.xlu0 %v1238, 40
      %v3716 = vpop.permute.xlu0 %3715
      %3717 = vrot.lane.b32.xlu0 %v1240, 40
      %v3718 = vpop.permute.xlu0 %3717
      %3719 = vrot.lane.b32.xlu0 %v1242, 40
      %v3720 = vpop.permute.xlu0 %3719
      %3721 = vrot.lane.b32.xlu0 %v2832, 40
      %v3722 = vpop.permute.xlu0 %3721
      %3723 = vrot.lane.b32.xlu0 %v2834, 40
      %v3724 = vpop.permute.xlu0 %3723
      %3725 = vrot.lane.b32.xlu0 %v3671, 40
      %v3726 = vpop.permute.xlu0 %3725
      %3727 = vrot.lane.b32.xlu0 %v3673, 40
      %v3728 = vpop.permute.xlu0 %3727
      %3729 = vrot.lane.b32.xlu0 %v3675, 40
      %v3730 = vpop.permute.xlu0 %3729
      %3731 = vrot.lane.b32.xlu0 %v3688, 40
      %v3732 = vpop.permute.xlu0 %3731
      %3733 = vrot.lane.b32.xlu0 %v3687, 40
      %v3734 = vpop.permute.xlu0 %3733
      %v3735 = vrot.slane %v2936, 4
      %v3736 = vor.u32 %v3735, %v2854
      %v3737 = vsel %vm1287, %v2849, %v3736
      %v3738 = vrot.slane %v2943, 4
      %v3739 = vrot.slane %v2946, 5
      %v3740 = vor.u32 %v3738, %v3739
      %v3741 = vsel %vm1287, %v3736, %v3740
      %v3742 = vrot.slane %v3540, 4
      %v3743 = vrot.slane %v3543, 5
      %v3744 = vor.u32 %v3742, %v3743
      %v3745 = vsel %vm1287, %v3740, %v3744
      %v3747 = vshrl.u32 %v235, 16
      %v3749 = vrot.slane %v3747, 4
      %v3750 = vshll.u32 %v235, 16
      %v3752 = vrot.slane %v3750, 5
      %v3753 = vor.u32 %v3749, %v3752
      %v3754 = vsel %vm1287, %v3744, %v3753
      %3755 = vrot.lane.b32.xlu0 %v1317, 44
      %v3756 = vpop.permute.xlu0 %3755
      %3757 = vrot.lane.b32.xlu0 %v1322, 44
      %v3758 = vpop.permute.xlu0 %3757
      %3759 = vrot.lane.b32.xlu0 %v1326, 44
      %v3760 = vpop.permute.xlu0 %3759
      %3761 = vrot.lane.b32.xlu0 %v1330, 44
      %v3762 = vpop.permute.xlu0 %3761
      %3763 = vrot.lane.b32.xlu0 %v1334, 44
      %v3764 = vpop.permute.xlu0 %3763
      %3765 = vrot.lane.b32.xlu0 %v1338, 44
      %v3766 = vpop.permute.xlu0 %3765
      %3767 = vrot.lane.b32.xlu0 %v1342, 44
      %v3768 = vpop.permute.xlu0 %3767
      %3769 = vrot.lane.b32.xlu0 %v1346, 44
      %v3770 = vpop.permute.xlu0 %3769
      %3771 = vrot.lane.b32.xlu0 %v1350, 44
      %v3772 = vpop.permute.xlu0 %3771
      %3773 = vrot.lane.b32.xlu0 %v1354, 44
      %v3774 = vpop.permute.xlu0 %3773
      %3775 = vrot.lane.b32.xlu0 %v1358, 44
      %v3776 = vpop.permute.xlu0 %3775
      %3777 = vrot.lane.b32.xlu0 %v1362, 44
      %v3778 = vpop.permute.xlu0 %3777
      %3779 = vrot.lane.b32.xlu0 %v1366, 44
      %v3780 = vpop.permute.xlu0 %3779
      %3781 = vrot.lane.b32.xlu0 %v1370, 44
      %v3782 = vpop.permute.xlu0 %3781
      %3783 = vrot.lane.b32.xlu0 %v1374, 44
      %v3784 = vpop.permute.xlu0 %3783
      %3785 = vrot.lane.b32.xlu0 %v1380, 44
      %v3786 = vpop.permute.xlu0 %3785
      %3787 = vrot.lane.b32.xlu0 %v2846, 44
      %v3788 = vpop.permute.xlu0 %3787
      %3789 = vrot.lane.b32.xlu0 %v2850, 44
      %v3790 = vpop.permute.xlu0 %3789
      %3791 = vrot.lane.b32.xlu0 %v3737, 44
      %v3792 = vpop.permute.xlu0 %3791
      %3793 = vrot.lane.b32.xlu0 %v3741, 44
      %v3794 = vpop.permute.xlu0 %3793
      %3795 = vrot.lane.b32.xlu0 %v3745, 44
      %v3796 = vpop.permute.xlu0 %3795
      %3797 = vrot.lane.b32.xlu0 %v3754, 44
      %v3798 = vpop.permute.xlu0 %3797
      %3799 = vrot.lane.b32.xlu0 %v3753, 44
      %v3800 = vpop.permute.xlu0 %3799
      %v3801 = vrot.slane %v234, 5
      %v3802 = vsel %vm1425, %v2880, %v3801
      %v3803 = vrot.slane %v235, 5
      %v3804 = vsel %vm1425, %v3801, %v3803
      %3805 = vrot.lane.b32.xlu0 %v1439, 48
      %v3806 = vpop.permute.xlu0 %3805
      %3807 = vrot.lane.b32.xlu0 %v3802, 48
      %v3808 = vpop.permute.xlu0 %3807
      %3809 = vrot.lane.b32.xlu0 %v3804, 48
      %v3810 = vpop.permute.xlu0 %3809
      %3811 = vrot.lane.b32.xlu0 %v3803, 48
      %v3812 = vpop.permute.xlu0 %3811
      %v3813 = vrot.slane %v3540, 5
      %v3814 = vrot.slane %v3543, 6
      %v3815 = vor.u32 %v3813, %v3814
      %v3816 = vsel %vm1515, %v2949, %v3815
      %v3817 = vrot.slane %v3747, 5
      %v3818 = vrot.slane %v3750, 6
      %v3819 = vor.u32 %v3817, %v3818
      %v3820 = vsel %vm1515, %v3815, %v3819
      %v3822 = vshll.u32 %v236, 16
      %v3824 = vrot.slane %v3822, 6
      %v3825 = vsel %vm1515, %v3819, %v3824
      %3826 = vrot.lane.b32.xlu0 %v1545, 52
      %v3827 = vpop.permute.xlu0 %3826
      %3828 = vrot.lane.b32.xlu0 %v3816, 52
      %v3829 = vpop.permute.xlu0 %3828
      %3830 = vrot.lane.b32.xlu0 %v3820, 52
      %v3831 = vpop.permute.xlu0 %3830
      %3832 = vrot.lane.b32.xlu0 %v3825, 52
      %v3833 = vpop.permute.xlu0 %3832
      %v3835 = vrot.slane %v234, 6
      %v3836 = vsel %vm1651, %v3001, %v3835
      %v3837 = vrot.slane %v235, 6
      %v3838 = vsel %vm1651, %v3835, %v3837
      %v3839 = vrot.slane %v236, 6
      %v3840 = vsel %vm1651, %v3837, %v3839
      %3841 = vrot.lane.b32.xlu0 %v1665, 56
      %v3842 = vpop.permute.xlu0 %3841
      %3843 = vrot.lane.b32.xlu0 %v3836, 56
      %v3844 = vpop.permute.xlu0 %3843
      %3845 = vrot.lane.b32.xlu0 %v3838, 56
      %v3846 = vpop.permute.xlu0 %3845
      %3847 = vrot.lane.b32.xlu0 %v3840, 56
      %v3848 = vpop.permute.xlu0 %3847
      %v3849 = vrot.slane %v3540, 6
      %v3850 = vrot.slane %v3543, 7
      %v3851 = vor.u32 %v3849, %v3850
      %v3852 = vsel %vm1788, %v3021, %v3851
      %v3853 = vrot.slane %v3747, 6
      %v3854 = vrot.slane %v3750, 7
      %v3855 = vor.u32 %v3853, %v3854
      %v3856 = vsel %vm1788, %v3851, %v3855
      %v3857 = vshrl.u32 %v236, 16
      %v3859 = vrot.slane %v3857, 6
      %v3860 = vrot.slane %v3822, 7
      %v3861 = vor.u32 %v3859, %v3860
      %v3862 = vsel %vm1788, %v3855, %v3861
      %3863 = vrot.lane.b32.xlu0 %v1814, 60
      %v3864 = vpop.permute.xlu0 %3863
      %3865 = vrot.lane.b32.xlu0 %v3852, 60
      %v3866 = vpop.permute.xlu0 %3865
      %3867 = vrot.lane.b32.xlu0 %v3856, 60
      %v3868 = vpop.permute.xlu0 %3867
      %3869 = vrot.lane.b32.xlu0 %v3862, 60
      %v3870 = vpop.permute.xlu0 %3869
      %v3872 = vsel %vm1929, %v230, %v3456
      %v3874 = vsel %vm1929, %v231, %v3458
      %v3876 = vsel %vm1929, %v232, %v3460
      %v3878 = vsel %vm1929, %v233, %v3462
      %v3880 = vsel %vm1974, %v3872, %v3470
      %v3882 = vsel %vm1974, %v3874, %v3472
      %v3884 = vsel %vm1974, %v3876, %v3474
      %v3886 = vsel %vm1974, %v3878, %v3476
      %v3888 = vsel %vm2019, %v1986, %v3481
      %v3890 = vsel %vm2019, %v1988, %v3483
      %v3892 = vsel %vm2019, %v1990, %v3485
      %v3894 = vsel %vm2019, %v1992, %v3487
      %v3896 = vsel %vm2019, %v1994, %v3489
      %v3898 = vsel %vm2019, %v1996, %v3491
      %v3900 = vsel %vm2019, %v1998, %v3493
      %v3902 = vsel %vm2019, %v2000, %v3495
      %v3904 = vsel %vm2019, %v2002, %v3497
      %v3906 = vsel %vm2019, %v2004, %v3499
      %v3908 = vsel %vm2019, %v2006, %v3501
      %v3910 = vsel %vm2019, %v2008, %v3503
      %v3912 = vsel %vm2019, %v2010, %v3505
      %v3914 = vsel %vm2019, %v2012, %v3507
      %v3916 = vsel %vm2019, %v2014, %v3509
      %v3918 = vsel %vm2019, %v2016, %v3511
      %v3920 = vsel %vm2019, %v3044, %v3513
      %v3922 = vsel %vm2019, %v3046, %v3515
      %v3924 = vsel %vm2019, %v3048, %v3517
      %v3926 = vsel %vm2019, %v3880, %v3519
      %v3928 = vsel %vm2019, %v3882, %v3521
      %v3930 = vsel %vm2019, %v3884, %v3523
      %v3932 = vsel %vm2019, %v3886, %v3525
      %v3934 = vsel %vm2064, %v3888, %v3549
      %v3936 = vsel %vm2064, %v3890, %v3551
      %v3938 = vsel %vm2064, %v3892, %v3553
      %v3940 = vsel %vm2064, %v3894, %v3555
      %v3942 = vsel %vm2064, %v3896, %v3557
      %v3944 = vsel %vm2064, %v3898, %v3559
      %v3946 = vsel %vm2064, %v3900, %v3561
      %v3948 = vsel %vm2064, %v3902, %v3563
      %v3950 = vsel %vm2064, %v3904, %v3565
      %v3952 = vsel %vm2064, %v3906, %v3567
      %v3954 = vsel %vm2064, %v3908, %v3569
      %v3956 = vsel %vm2064, %v3910, %v3571
      %v3958 = vsel %vm2064, %v3912, %v3573
      %v3960 = vsel %vm2064, %v3914, %v3575
      %v3962 = vsel %vm2064, %v3916, %v3577
      %v3964 = vsel %vm2064, %v3918, %v3579
      %v3966 = vsel %vm2064, %v3920, %v3581
      %v3968 = vsel %vm2064, %v3922, %v3583
      %v3970 = vsel %vm2064, %v3924, %v3585
      %v3972 = vsel %vm2064, %v3926, %v3587
      %v3974 = vsel %vm2064, %v3928, %v3589
      %v3976 = vsel %vm2064, %v3930, %v3591
      %v3978 = vsel %vm2064, %v3932, %v3593
      %v3980 = vsel %vm2109, %v3934, %v3601
      %v3981 = vsel %vm2109, %v3936, %v2690
      %v3982 = vsel %vm2109, %v3938, %v2692
      %v3983 = vsel %vm2109, %v3940, %v2694
      %v3984 = vsel %vm2109, %v3942, %v2696
      %v3985 = vsel %vm2109, %v3944, %v2698
      %v3986 = vsel %vm2109, %v3946, %v2700
      %v3987 = vsel %vm2109, %v3948, %v2702
      %v3988 = vsel %vm2109, %v3950, %v2704
      %v3989 = vsel %vm2109, %v3952, %v2706
      %v3990 = vsel %vm2109, %v3954, %v2708
      %v3991 = vsel %vm2109, %v3956, %v2710
      %v3992 = vsel %vm2109, %v3958, %v2712
      %v3993 = vsel %vm2109, %v3960, %v2714
      %v3994 = vsel %vm2109, %v3962, %v2716
      %v3995 = vsel %vm2109, %v3964, %v2718
      %v3996 = vsel %vm2109, %v3966, %v2720
      %v3997 = vsel %vm2109, %v3968, %v2722
      %v3998 = vsel %vm2109, %v3970, %v2724
      %v4000 = vsel %vm2109, %v3972, %v3603
      %v4002 = vsel %vm2109, %v3974, %v3605
      %v4004 = vsel %vm2109, %v3976, %v3607
      %v4006 = vsel %vm2109, %v3978, %v3609
      %v4008 = vsel %vm2154, %v3980, %v3623
      %v4009 = vsel %vm2154, %v3981, %v2757
      %v4010 = vsel %vm2154, %v3982, %v2759
      %v4011 = vsel %vm2154, %v3983, %v2761
      %v4012 = vsel %vm2154, %v3984, %v2763
      %v4013 = vsel %vm2154, %v3985, %v2765
      %v4014 = vsel %vm2154, %v3986, %v2767
      %v4015 = vsel %vm2154, %v3987, %v2769
      %v4016 = vsel %vm2154, %v3988, %v2771
      %v4017 = vsel %vm2154, %v3989, %v2773
      %v4018 = vsel %vm2154, %v3990, %v2775
      %v4019 = vsel %vm2154, %v3991, %v2777
      %v4020 = vsel %vm2154, %v3992, %v2779
      %v4021 = vsel %vm2154, %v3993, %v2781
      %v4022 = vsel %vm2154, %v3994, %v2783
      %v4023 = vsel %vm2154, %v3995, %v2785
      %v4024 = vsel %vm2154, %v3996, %v2787
      %v4025 = vsel %vm2154, %v3997, %v2789
      %v4026 = vsel %vm2154, %v3998, %v2791
      %v4028 = vsel %vm2154, %v4000, %v3625
      %v4030 = vsel %vm2154, %v4002, %v3627
      %v4032 = vsel %vm2154, %v4004, %v3629
      %v4034 = vsel %vm2154, %v4006, %v3631
      %v4036 = vsel %vm2199, %v4008, %v3639
      %v4037 = vsel %vm2199, %v4009, %v1023
      %v4038 = vsel %vm2199, %v4010, %v1025
      %v4039 = vsel %vm2199, %v4011, %v1027
      %v4040 = vsel %vm2199, %v4012, %v1029
      %v4041 = vsel %vm2199, %v4013, %v1031
      %v4042 = vsel %vm2199, %v4014, %v1033
      %v4043 = vsel %vm2199, %v4015, %v1035
      %v4044 = vsel %vm2199, %v4016, %v1037
      %v4045 = vsel %vm2199, %v4017, %v1039
      %v4046 = vsel %vm2199, %v4018, %v1041
      %v4047 = vsel %vm2199, %v4019, %v1043
      %v4048 = vsel %vm2199, %v4020, %v1045
      %v4049 = vsel %vm2199, %v4021, %v1047
      %v4050 = vsel %vm2199, %v4022, %v1049
      %v4051 = vsel %vm2199, %v4023, %v1051
      %v4052 = vsel %vm2199, %v4024, %v2803
      %v4053 = vsel %vm2199, %v4025, %v2805
      %v4054 = vsel %vm2199, %v4026, %v2807
      %v4056 = vsel %vm2199, %v4028, %v3641
      %v4058 = vsel %vm2199, %v4030, %v3643
      %v4060 = vsel %vm2199, %v4032, %v3645
      %v4062 = vsel %vm2199, %v4034, %v3647
      %v4064 = vsel %vm2244, %v4036, %v3661
      %v4065 = vsel %vm2244, %v4037, %v1165
      %v4066 = vsel %vm2244, %v4038, %v1167
      %v4067 = vsel %vm2244, %v4039, %v1169
      %v4068 = vsel %vm2244, %v4040, %v1171
      %v4069 = vsel %vm2244, %v4041, %v1173
      %v4070 = vsel %vm2244, %v4042, %v1175
      %v4071 = vsel %vm2244, %v4043, %v1177
      %v4072 = vsel %vm2244, %v4044, %v1179
      %v4073 = vsel %vm2244, %v4045, %v1181
      %v4074 = vsel %vm2244, %v4046, %v1183
      %v4075 = vsel %vm2244, %v4047, %v1185
      %v4076 = vsel %vm2244, %v4048, %v1187
      %v4077 = vsel %vm2244, %v4049, %v1189
      %v4078 = vsel %vm2244, %v4050, %v1191
      %v4079 = vsel %vm2244, %v4051, %v1193
      %v4080 = vsel %vm2244, %v4052, %v2824
      %v4081 = vsel %vm2244, %v4053, %v2826
      %v4082 = vsel %vm2244, %v4054, %v2828
      %v4084 = vsel %vm2244, %v4056, %v3663
      %v4086 = vsel %vm2244, %v4058, %v3665
      %v4088 = vsel %vm2244, %v4060, %v3667
      %v4090 = vsel %vm2244, %v4062, %v3669
      %v4092 = vsel %vm2289, %v4064, %v3677
      %v4093 = vsel %vm2289, %v4065, %v1256
      %v4094 = vsel %vm2289, %v4066, %v1258
      %v4095 = vsel %vm2289, %v4067, %v1260
      %v4096 = vsel %vm2289, %v4068, %v1262
      %v4097 = vsel %vm2289, %v4069, %v1264
      %v4098 = vsel %vm2289, %v4070, %v1266
      %v4099 = vsel %vm2289, %v4071, %v1268
      %v4100 = vsel %vm2289, %v4072, %v1270
      %v4101 = vsel %vm2289, %v4073, %v1272
      %v4102 = vsel %vm2289, %v4074, %v1274
      %v4103 = vsel %vm2289, %v4075, %v1276
      %v4104 = vsel %vm2289, %v4076, %v1278
      %v4105 = vsel %vm2289, %v4077, %v1280
      %v4106 = vsel %vm2289, %v4078, %v1282
      %v4107 = vsel %vm2289, %v4079, %v1284
      %v4108 = vsel %vm2289, %v4080, %v1286
      %v4109 = vsel %vm2289, %v4081, %v2838
      %v4110 = vsel %vm2289, %v4082, %v2840
      %v4112 = vsel %vm2289, %v4084, %v3679
      %v4114 = vsel %vm2289, %v4086, %v3681
      %v4116 = vsel %vm2289, %v4088, %v3683
      %v4118 = vsel %vm2289, %v4090, %v3685
      %v4120 = vsel %vm2334, %v4092, %v3690
      %v4122 = vsel %vm2334, %v4093, %v3692
      %v4124 = vsel %vm2334, %v4094, %v3694
      %v4126 = vsel %vm2334, %v4095, %v3696
      %v4128 = vsel %vm2334, %v4096, %v3698
      %v4130 = vsel %vm2334, %v4097, %v3700
      %v4132 = vsel %vm2334, %v4098, %v3702
      %v4134 = vsel %vm2334, %v4099, %v3704
      %v4136 = vsel %vm2334, %v4100, %v3706
      %v4138 = vsel %vm2334, %v4101, %v3708
      %v4140 = vsel %vm2334, %v4102, %v3710
      %v4142 = vsel %vm2334, %v4103, %v3712
      %v4144 = vsel %vm2334, %v4104, %v3714
      %v4146 = vsel %vm2334, %v4105, %v3716
      %v4148 = vsel %vm2334, %v4106, %v3718
      %v4150 = vsel %vm2334, %v4107, %v3720
      %v4152 = vsel %vm2334, %v4108, %v3722
      %v4154 = vsel %vm2334, %v4109, %v3724
      %v4156 = vsel %vm2334, %v4110, %v3726
      %v4158 = vsel %vm2334, %v4112, %v3728
      %v4160 = vsel %vm2334, %v4114, %v3730
      %v4162 = vsel %vm2334, %v4116, %v3732
      %v4164 = vsel %vm2334, %v4118, %v3734
      %v4166 = vsel %vm2379, %v4120, %v3756
      %v4168 = vsel %vm2379, %v4122, %v3758
      %v4170 = vsel %vm2379, %v4124, %v3760
      %v4172 = vsel %vm2379, %v4126, %v3762
      %v4174 = vsel %vm2379, %v4128, %v3764
      %v4176 = vsel %vm2379, %v4130, %v3766
      %v4178 = vsel %vm2379, %v4132, %v3768
      %v4180 = vsel %vm2379, %v4134, %v3770
      %v4182 = vsel %vm2379, %v4136, %v3772
      %v4184 = vsel %vm2379, %v4138, %v3774
      %v4186 = vsel %vm2379, %v4140, %v3776
      %v4188 = vsel %vm2379, %v4142, %v3778
      %v4190 = vsel %vm2379, %v4144, %v3780
      %v4192 = vsel %vm2379, %v4146, %v3782
      %v4194 = vsel %vm2379, %v4148, %v3784
      %v4196 = vsel %vm2379, %v4150, %v3786
      %v4198 = vsel %vm2379, %v4152, %v3788
      %v4200 = vsel %vm2379, %v4154, %v3790
      %v4202 = vsel %vm2379, %v4156, %v3792
      %v4204 = vsel %vm2379, %v4158, %v3794
      %v4206 = vsel %vm2379, %v4160, %v3796
      %v4208 = vsel %vm2379, %v4162, %v3798
      %v4210 = vsel %vm2379, %v4164, %v3800
      %v4212 = vsel %vm2424, %v4166, %v3806
      %v4213 = vsel %vm2424, %v4168, %v2891
      %v4214 = vsel %vm2424, %v4170, %v2893
      %v4215 = vsel %vm2424, %v4172, %v2895
      %v4216 = vsel %vm2424, %v4174, %v2897
      %v4217 = vsel %vm2424, %v4176, %v2899
      %v4218 = vsel %vm2424, %v4178, %v2901
      %v4219 = vsel %vm2424, %v4180, %v2903
      %v4220 = vsel %vm2424, %v4182, %v2905
      %v4221 = vsel %vm2424, %v4184, %v2907
      %v4222 = vsel %vm2424, %v4186, %v2909
      %v4223 = vsel %vm2424, %v4188, %v2911
      %v4224 = vsel %vm2424, %v4190, %v2913
      %v4225 = vsel %vm2424, %v4192, %v2915
      %v4226 = vsel %vm2424, %v4194, %v2917
      %v4227 = vsel %vm2424, %v4196, %v2919
      %v4228 = vsel %vm2424, %v4198, %v2921
      %v4229 = vsel %vm2424, %v4200, %v2923
      %v4230 = vsel %vm2424, %v4202, %v2925
      %v4231 = vsel %vm2424, %v4204, %v2927
      %v4233 = vsel %vm2424, %v4206, %v3808
      %v4235 = vsel %vm2424, %v4208, %v3810
      %v4237 = vsel %vm2424, %v4210, %v3812
      %v4239 = vsel %vm2469, %v4212, %v3827
      %v4240 = vsel %vm2469, %v4213, %v2960
      %v4241 = vsel %vm2469, %v4214, %v2962
      %v4242 = vsel %vm2469, %v4215, %v2964
      %v4243 = vsel %vm2469, %v4216, %v2966
      %v4244 = vsel %vm2469, %v4217, %v2968
      %v4245 = vsel %vm2469, %v4218, %v2970
      %v4246 = vsel %vm2469, %v4219, %v2972
      %v4247 = vsel %vm2469, %v4220, %v2974
      %v4248 = vsel %vm2469, %v4221, %v2976
      %v4249 = vsel %vm2469, %v4222, %v2978
      %v4250 = vsel %vm2469, %v4223, %v2980
      %v4251 = vsel %vm2469, %v4224, %v2982
      %v4252 = vsel %vm2469, %v4225, %v2984
      %v4253 = vsel %vm2469, %v4226, %v2986
      %v4254 = vsel %vm2469, %v4227, %v2988
      %v4255 = vsel %vm2469, %v4228, %v2990
      %v4256 = vsel %vm2469, %v4229, %v2992
      %v4257 = vsel %vm2469, %v4230, %v2994
      %v4258 = vsel %vm2469, %v4231, %v2996
      %v4260 = vsel %vm2469, %v4233, %v3829
      %v4262 = vsel %vm2469, %v4235, %v3831
      %v4264 = vsel %vm2469, %v4237, %v3833
      %v4266 = vsel %vm2514, %v4239, %v3842
      %v4267 = vsel %vm2514, %v4240, %v1757
      %v4268 = vsel %vm2514, %v4241, %v1759
      %v4269 = vsel %vm2514, %v4242, %v1761
      %v4270 = vsel %vm2514, %v4243, %v1763
      %v4271 = vsel %vm2514, %v4244, %v1765
      %v4272 = vsel %vm2514, %v4245, %v1767
      %v4273 = vsel %vm2514, %v4246, %v1769
      %v4274 = vsel %vm2514, %v4247, %v1771
      %v4275 = vsel %vm2514, %v4248, %v1773
      %v4276 = vsel %vm2514, %v4249, %v1775
      %v4277 = vsel %vm2514, %v4250, %v1777
      %v4278 = vsel %vm2514, %v4251, %v1779
      %v4279 = vsel %vm2514, %v4252, %v1781
      %v4280 = vsel %vm2514, %v4253, %v1783
      %v4281 = vsel %vm2514, %v4254, %v1785
      %v4282 = vsel %vm2514, %v4255, %v1787
      %v4283 = vsel %vm2514, %v4256, %v3006
      %v4284 = vsel %vm2514, %v4257, %v3008
      %v4285 = vsel %vm2514, %v4258, %v3010
      %v4287 = vsel %vm2514, %v4260, %v3844
      %v4289 = vsel %vm2514, %v4262, %v3846
      %v4291 = vsel %vm2514, %v4264, %v3848
      %v4293 = vsel %vm2559, %v4266, %v3864
      %v4294 = vsel %vm2559, %v4267, %v1898
      %v4295 = vsel %vm2559, %v4268, %v1900
      %v4296 = vsel %vm2559, %v4269, %v1902
      %v4297 = vsel %vm2559, %v4270, %v1904
      %v4298 = vsel %vm2559, %v4271, %v1906
      %v4299 = vsel %vm2559, %v4272, %v1908
      %v4300 = vsel %vm2559, %v4273, %v1910
      %v4301 = vsel %vm2559, %v4274, %v1912
      %v4302 = vsel %vm2559, %v4275, %v1914
      %v4303 = vsel %vm2559, %v4276, %v1916
      %v4304 = vsel %vm2559, %v4277, %v1918
      %v4305 = vsel %vm2559, %v4278, %v1920
      %v4306 = vsel %vm2559, %v4279, %v1922
      %v4307 = vsel %vm2559, %v4280, %v1924
      %v4308 = vsel %vm2559, %v4281, %v1926
      %v4309 = vsel %vm2559, %v4282, %v1928
      %v4310 = vsel %vm2559, %v4283, %v3026
      %v4311 = vsel %vm2559, %v4284, %v3028
      %v4312 = vsel %vm2559, %v4285, %v3030
      %v4314 = vsel %vm2559, %v4287, %v3866
      %v4316 = vsel %vm2559, %v4289, %v3868
      %v4318 = vsel %vm2559, %v4291, %v3870
      %vm4342 = vcmask 1040384
      %v4343 = vrot.slane %v3420, 7
      %v4344 = vrot.slane %v3421, 7
      %v4345 = vsel %vm4342, %v4343, %v4344
      %v4346 = vrot.slane %v3422, 7
      %v4347 = vsel %vm4342, %v4344, %v4346
      %v4348 = vrot.slane %v3423, 7
      %v4349 = vsel %vm4342, %v4346, %v4348
      %v4350 = vrot.slane %v3424, 7
      %v4351 = vsel %vm4342, %v4348, %v4350
      %v4352 = vrot.slane %v3425, 7
      %v4353 = vsel %vm4342, %v4350, %v4352
      %v4354 = vrot.slane %v3426, 7
      %v4355 = vsel %vm4342, %v4352, %v4354
      %v4356 = vrot.slane %v3427, 7
      %v4357 = vsel %vm4342, %v4354, %v4356
      %v4358 = vrot.slane %v3428, 7
      %v4359 = vsel %vm4342, %v4356, %v4358
      %v4360 = vrot.slane %v3429, 7
      %v4361 = vsel %vm4342, %v4358, %v4360
      %v4362 = vrot.slane %v3430, 7
      %v4363 = vsel %vm4342, %v4360, %v4362
      %v4364 = vrot.slane %v3431, 7
      %v4365 = vsel %vm4342, %v4362, %v4364
      %v4366 = vrot.slane %v3432, 7
      %v4367 = vsel %vm4342, %v4364, %v4366
      %v4368 = vrot.slane %v3433, 7
      %v4369 = vsel %vm4342, %v4366, %v4368
      %v4370 = vrot.slane %v3434, 7
      %v4371 = vsel %vm4342, %v4368, %v4370
      %v4372 = vrot.slane %v3435, 7
      %v4373 = vsel %vm4342, %v4370, %v4372
      %v4374 = vrot.slane %v3436, 7
      %v4375 = vsel %vm4342, %v4372, %v4374
      %v4376 = vrot.slane %v3437, 7
      %v4377 = vsel %vm4342, %v4374, %v4376
      %v4378 = vrot.slane %v3438, 7
      %v4379 = vsel %vm4342, %v4376, %v4378
      %v4380 = vrot.slane %v3439, 7
      %v4381 = vsel %vm4342, %v4378, %v4380
      %v4382 = vrot.slane %v3441, 7
      %v4383 = vsel %vm4342, %v4380, %v4382
      %v4384 = vrot.slane %v3443, 7
      %v4385 = vsel %vm4342, %v4382, %v4384
      %v4386 = vrot.slane %v3445, 7
      %v4387 = vsel %vm4342, %v4384, %v4386
      %4388 = vrot.lane.b32.xlu0 %v4345, 64
      %v4389 = vpop.permute.xlu0 %4388
      %4390 = vrot.lane.b32.xlu0 %v4347, 64
      %v4391 = vpop.permute.xlu0 %4390
      %4392 = vrot.lane.b32.xlu0 %v4349, 64
      %v4393 = vpop.permute.xlu0 %4392
      %4394 = vrot.lane.b32.xlu0 %v4351, 64
      %v4395 = vpop.permute.xlu0 %4394
      %4396 = vrot.lane.b32.xlu0 %v4353, 64
      %v4397 = vpop.permute.xlu0 %4396
      %4398 = vrot.lane.b32.xlu0 %v4355, 64
      %v4399 = vpop.permute.xlu0 %4398
      %4400 = vrot.lane.b32.xlu0 %v4357, 64
      %v4401 = vpop.permute.xlu0 %4400
      %4402 = vrot.lane.b32.xlu0 %v4359, 64
      %v4403 = vpop.permute.xlu0 %4402
      %4404 = vrot.lane.b32.xlu0 %v4361, 64
      %v4405 = vpop.permute.xlu0 %4404
      %4406 = vrot.lane.b32.xlu0 %v4363, 64
      %v4407 = vpop.permute.xlu0 %4406
      %4408 = vrot.lane.b32.xlu0 %v4365, 64
      %v4409 = vpop.permute.xlu0 %4408
      %4410 = vrot.lane.b32.xlu0 %v4367, 64
      %v4411 = vpop.permute.xlu0 %4410
      %4412 = vrot.lane.b32.xlu0 %v4369, 64
      %v4413 = vpop.permute.xlu0 %4412
      %4414 = vrot.lane.b32.xlu0 %v4371, 64
      %v4415 = vpop.permute.xlu0 %4414
      %4416 = vrot.lane.b32.xlu0 %v4373, 64
      %v4417 = vpop.permute.xlu0 %4416
      %4418 = vrot.lane.b32.xlu0 %v4375, 64
      %v4419 = vpop.permute.xlu0 %4418
      %4420 = vrot.lane.b32.xlu0 %v4377, 64
      %v4421 = vpop.permute.xlu0 %4420
      %4422 = vrot.lane.b32.xlu0 %v4379, 64
      %v4423 = vpop.permute.xlu0 %4422
      %4424 = vrot.lane.b32.xlu0 %v4381, 64
      %v4425 = vpop.permute.xlu0 %4424
      %4426 = vrot.lane.b32.xlu0 %v4383, 64
      %v4427 = vpop.permute.xlu0 %4426
      %4428 = vrot.lane.b32.xlu0 %v4385, 64
      %v4429 = vpop.permute.xlu0 %4428
      %4430 = vrot.lane.b32.xlu0 %v4387, 64
      %v4431 = vpop.permute.xlu0 %4430
      %v4455 = vrot.slane %v4293, 6
      %v4456 = vrot.slane %v4294, 6
      %v4457 = vsel %vm1651, %v4455, %v4456
      %v4458 = vrot.slane %v4295, 6
      %v4459 = vsel %vm1651, %v4456, %v4458
      %v4460 = vrot.slane %v4296, 6
      %v4461 = vsel %vm1651, %v4458, %v4460
      %v4462 = vrot.slane %v4297, 6
      %v4463 = vsel %vm1651, %v4460, %v4462
      %v4464 = vrot.slane %v4298, 6
      %v4465 = vsel %vm1651, %v4462, %v4464
      %v4466 = vrot.slane %v4299, 6
      %v4467 = vsel %vm1651, %v4464, %v4466
      %v4468 = vrot.slane %v4300, 6
      %v4469 = vsel %vm1651, %v4466, %v4468
      %v4470 = vrot.slane %v4301, 6
      %v4471 = vsel %vm1651, %v4468, %v4470
      %v4472 = vrot.slane %v4302, 6
      %v4473 = vsel %vm1651, %v4470, %v4472
      %v4474 = vrot.slane %v4303, 6
      %v4475 = vsel %vm1651, %v4472, %v4474
      %v4476 = vrot.slane %v4304, 6
      %v4477 = vsel %vm1651, %v4474, %v4476
      %v4478 = vrot.slane %v4305, 6
      %v4479 = vsel %vm1651, %v4476, %v4478
      %v4480 = vrot.slane %v4306, 6
      %v4481 = vsel %vm1651, %v4478, %v4480
      %v4482 = vrot.slane %v4307, 6
      %v4483 = vsel %vm1651, %v4480, %v4482
      %v4484 = vrot.slane %v4308, 6
      %v4485 = vsel %vm1651, %v4482, %v4484
      %v4486 = vrot.slane %v4309, 6
      %v4487 = vsel %vm1651, %v4484, %v4486
      %v4488 = vrot.slane %v4310, 6
      %v4489 = vsel %vm1651, %v4486, %v4488
      %v4490 = vrot.slane %v4311, 6
      %v4491 = vsel %vm1651, %v4488, %v4490
      %v4492 = vrot.slane %v4312, 6
      %v4493 = vsel %vm1651, %v4490, %v4492
      %v4494 = vrot.slane %v4314, 6
      %v4495 = vsel %vm1651, %v4492, %v4494
      %v4496 = vrot.slane %v4316, 6
      %v4497 = vsel %vm1651, %v4494, %v4496
      %v4498 = vrot.slane %v4318, 6
      %v4499 = vsel %vm1651, %v4496, %v4498
      %v4500 = vrot.slane %v236, 5
      %v4501 = vsel %vm1425, %v3803, %v4500
      %4502 = vrot.lane.b32.xlu0 %v1442, 64
      %v4503 = vpop.permute.xlu0 %4502
      %4504 = vrot.lane.b32.xlu0 %v1444, 64
      %v4505 = vpop.permute.xlu0 %4504
      %4506 = vrot.lane.b32.xlu0 %v1446, 64
      %v4507 = vpop.permute.xlu0 %4506
      %4508 = vrot.lane.b32.xlu0 %v1448, 64
      %v4509 = vpop.permute.xlu0 %4508
      %4510 = vrot.lane.b32.xlu0 %v1450, 64
      %v4511 = vpop.permute.xlu0 %4510
      %4512 = vrot.lane.b32.xlu0 %v1452, 64
      %v4513 = vpop.permute.xlu0 %4512
      %4514 = vrot.lane.b32.xlu0 %v1454, 64
      %v4515 = vpop.permute.xlu0 %4514
      %4516 = vrot.lane.b32.xlu0 %v1456, 64
      %v4517 = vpop.permute.xlu0 %4516
      %4518 = vrot.lane.b32.xlu0 %v1458, 64
      %v4519 = vpop.permute.xlu0 %4518
      %4520 = vrot.lane.b32.xlu0 %v1460, 64
      %v4521 = vpop.permute.xlu0 %4520
      %4522 = vrot.lane.b32.xlu0 %v1462, 64
      %v4523 = vpop.permute.xlu0 %4522
      %4524 = vrot.lane.b32.xlu0 %v1464, 64
      %v4525 = vpop.permute.xlu0 %4524
      %4526 = vrot.lane.b32.xlu0 %v1466, 64
      %v4527 = vpop.permute.xlu0 %4526
      %4528 = vrot.lane.b32.xlu0 %v1468, 64
      %v4529 = vpop.permute.xlu0 %4528
      %4530 = vrot.lane.b32.xlu0 %v1470, 64
      %v4531 = vpop.permute.xlu0 %4530
      %4532 = vrot.lane.b32.xlu0 %v2866, 64
      %v4533 = vpop.permute.xlu0 %4532
      %4534 = vrot.lane.b32.xlu0 %v2868, 64
      %v4535 = vpop.permute.xlu0 %4534
      %4536 = vrot.lane.b32.xlu0 %v2870, 64
      %v4537 = vpop.permute.xlu0 %4536
      %4538 = vrot.lane.b32.xlu0 %v2881, 64
      %v4539 = vpop.permute.xlu0 %4538
      %4540 = vrot.lane.b32.xlu0 %v3802, 64
      %v4541 = vpop.permute.xlu0 %4540
      %4542 = vrot.lane.b32.xlu0 %v3804, 64
      %v4543 = vpop.permute.xlu0 %4542
      %4544 = vrot.lane.b32.xlu0 %v4501, 64
      %v4545 = vpop.permute.xlu0 %4544
      %vm4546 = vcmask 523264
      %v4548 = vsel %vm4546, %v2561, %v4389
      %v4551 = vsel %vm4546, %v2563, %v4391
      %v4554 = vsel %vm4546, %v2565, %v4393
      %v4557 = vsel %vm4546, %v2567, %v4395
      %v4560 = vsel %vm4546, %v2569, %v4397
      %v4563 = vsel %vm4546, %v2571, %v4399
      %v4566 = vsel %vm4546, %v2573, %v4401
      %v4569 = vsel %vm4546, %v2575, %v4403
      %v4572 = vsel %vm4546, %v2577, %v4405
      %v4575 = vsel %vm4546, %v2579, %v4407
      %v4578 = vsel %vm4546, %v2581, %v4409
      %v4581 = vsel %vm4546, %v2583, %v4411
      %v4584 = vsel %vm4546, %v2585, %v4413
      %v4587 = vsel %vm4546, %v2587, %v4415
      %v4590 = vsel %vm4546, %v2589, %v4417
      %v4593 = vsel %vm4546, %v2591, %v4419
      %v4596 = vsel %vm4546, %v2593, %v4421
      %v4599 = vsel %vm4546, %v2595, %v4423
      %v4602 = vsel %vm4546, %v2597, %v4425
      %v4605 = vsel %vm4546, %v2599, %v4427
      %v4608 = vsel %vm4546, %v2601, %v4429
      %v4611 = vsel %vm4546, %v2603, %v4431
      %v4615 = vsel %vm4546, %v4457, %v4503
      %v4618 = vsel %vm4546, %v4459, %v4505
      %v4621 = vsel %vm4546, %v4461, %v4507
      %v4624 = vsel %vm4546, %v4463, %v4509
      %v4627 = vsel %vm4546, %v4465, %v4511
      %v4630 = vsel %vm4546, %v4467, %v4513
      %v4633 = vsel %vm4546, %v4469, %v4515
      %v4636 = vsel %vm4546, %v4471, %v4517
      %v4639 = vsel %vm4546, %v4473, %v4519
      %v4642 = vsel %vm4546, %v4475, %v4521
      %v4645 = vsel %vm4546, %v4477, %v4523
      %v4648 = vsel %vm4546, %v4479, %v4525
      %v4651 = vsel %vm4546, %v4481, %v4527
      %v4654 = vsel %vm4546, %v4483, %v4529
      %v4657 = vsel %vm4546, %v4485, %v4531
      %v4660 = vsel %vm4546, %v4487, %v4533
      %v4663 = vsel %vm4546, %v4489, %v4535
      %v4666 = vsel %vm4546, %v4491, %v4537
      %v4669 = vsel %vm4546, %v4493, %v4539
      %v4672 = vsel %vm4546, %v4495, %v4541
      %v4675 = vsel %vm4546, %v4497, %v4543
      %v4678 = vsel %vm4546, %v4499, %v4545
      %v4679 = vld [vmem:[%s1] sm:$0xf]
      %v4680 = vld [vmem:[%s1 + $0x4] sm:$0xf]
      %v4681 = vld [vmem:[%s1 + $0x8] sm:$0xf]
      %v4682 = vld [vmem:[%s1 + $0xc] sm:$0xf]
      %v4683 = vld [vmem:[%s1 + $0x10] sm:$0xf]
      %v4684 = vld [vmem:[%s1 + $0x14] sm:$0xf]
      %v4685 = vld [vmem:[%s1 + $0x18] sm:$0xf]
      %v4686 = vld [vmem:[%s1 + $0x1c] sm:$0xf]
      %v4687 = vld [vmem:[%s1 + $0x20] sm:$0xf]
      %v4688 = vld [vmem:[%s1 + $0x24] sm:$0xf]
      %v4689 = vld [vmem:[%s1 + $0x28] sm:$0xf]
      %v4690 = vld [vmem:[%s1 + $0x2c] sm:$0xf]
      %v4691 = vld [vmem:[%s1 + $0x30] sm:$0xf]
      %v4692 = vld [vmem:[%s1 + $0x34] sm:$0xf]
      %v4693 = vld [vmem:[%s1 + $0x38] sm:$0xf]
      %v4694 = vld [vmem:[%s1 + $0x3c] sm:$0xf]
      %v4695 = vld [vmem:[%s1 + $0x40] sm:$0xf]
      %v4696 = vld [vmem:[%s1 + $0x44] sm:$0xf]
      %v4697 = vld [vmem:[%s1 + $0x48] sm:$0xf]
      %v4698 = vld [vmem:[%s1 + $0x4c] sm:$0xf]
      %v4699 = vld [vmem:[%s1 + $0x50] sm:$0xf]
      %v4700 = vld [vmem:[%s1 + $0x54] sm:$0xf]
      %v4701 = vld [vmem:[%s1 + $0x58] sm:$0xf]
      %v4702 = vld [vmem:[%s1 + $0x5c] sm:$0xf]
      %v4703 = vld [vmem:[%s1 + $0x60] sm:$0x3]
      %v4729 = vunpack.c.l.b16 %v4679
      %v4730 = vunpack.c.l.b16 %v4680
      %v4731 = vunpack.c.l.b16 %v4681
      %v4732 = vunpack.c.l.b16 %v4682
      %v4733 = vunpack.c.l.b16 %v4683
      %v4734 = vunpack.c.l.b16 %v4684
      %v4735 = vunpack.c.l.b16 %v4685
      %v4736 = vunpack.c.l.b16 %v4686
      %v4737 = vunpack.c.l.b16 %v4687
      %v4738 = vunpack.c.l.b16 %v4688
      %v4739 = vunpack.c.l.b16 %v4689
      %v4740 = vunpack.c.l.b16 %v4690
      %v4741 = vunpack.c.l.b16 %v4691
      %v4742 = vunpack.c.l.b16 %v4692
      %v4743 = vunpack.c.l.b16 %v4693
      %v4744 = vunpack.c.l.b16 %v4694
      %v4745 = vunpack.c.l.b16 %v4695
      %v4746 = vunpack.c.l.b16 %v4696
      %v4747 = vunpack.c.l.b16 %v4697
      %v4748 = vunpack.c.l.b16 %v4698
      %v4749 = vunpack.c.l.b16 %v4699
      %v4750 = vunpack.c.l.b16 %v4700
      %v4751 = vunpack.c.l.b16 %v4701
      %v4752 = vunpack.c.l.b16 %v4702
      %v4753 = vunpack.c.l.b16 %v4703
      %v4754 = vpack.c.b16 %v4730, %v4729
      %v4755 = vpack.c.b16 %v4732, %v4731
      %v4756 = vpack.c.b16 %v4734, %v4733
      %v4757 = vpack.c.b16 %v4736, %v4735
      %v4758 = vpack.c.b16 %v4738, %v4737
      %v4759 = vpack.c.b16 %v4740, %v4739
      %v4760 = vpack.c.b16 %v4742, %v4741
      %v4761 = vpack.c.b16 %v4744, %v4743
      %v4762 = vpack.c.b16 %v4746, %v4745
      %v4763 = vpack.c.b16 %v4748, %v4747
      %v4764 = vpack.c.b16 %v4750, %v4749
      %v4765 = vpack.c.b16 %v4752, %v4751
      %v4766 = vpack.c.b16 %v4753, %v4753
      %vm4779 = vcmask 556032
      %v4780 = vsel %vm4779, %v4615, 0
      %v4782 = vsel %vm4779, %v4618, 0
      %v4784 = vsel %vm4779, %v4621, 0
      %v4786 = vsel %vm4779, %v4624, 0
      %v4788 = vsel %vm4779, %v4627, 0
      %v4790 = vsel %vm4779, %v4630, 0
      %v4792 = vsel %vm4779, %v4633, 0
      %v4794 = vsel %vm4779, %v4636, 0
      %v4796 = vsel %vm4779, %v4639, 0
      %v4798 = vsel %vm4779, %v4642, 0
      %v4800 = vsel %vm4779, %v4645, 0
      %v4802 = vsel %vm4779, %v4648, 0
      %v4804 = vsel %vm4779, %v4651, 0
      %v4806 = vsel %vm4779, %v4654, 0
      %v4808 = vsel %vm4779, %v4657, 0
      %v4810 = vsel %vm4779, %v4660, 0
      %v4812 = vsel %vm4779, %v4663, 0
      %v4814 = vsel %vm4779, %v4666, 0
      %v4816 = vsel %vm4779, %v4669, 0
      %v4818 = vsel %vm4779, %v4672, 0
      %v4820 = vsel %vm4779, %v4675, 0
      %v4822 = vsel %vm4779, %v4678, 0
      %vm4824 = vcmask 1041408
      %v4826 = vsel %vm4824, %v4766, 0
      %4828 = vmatprep.subr.bf16.mxu0 0
      %4829 = vmatpush1.bf16.msra.mxu0 %v4754
      %4830 = vmatprep.subr.bf16.mxu0 0
      %4831 = vmatpush1.bf16.msra.mxu0 %v4755
      %4832 = vmatprep.subr.bf16.mxu0 0
      %4833 = vmatpush1.bf16.msra.mxu0 %v4756
      %4834 = vmatprep.subr.bf16.mxu0 0
      %4835 = vmatpush1.bf16.msra.mxu0 %v4757
      %4836 = vmatprep.subr.bf16.mxu0 0
      %4837 = vmatpush1.bf16.msra.mxu0 %v4758
      %4838 = vmatprep.subr.bf16.mxu0 0
      %4839 = vmatpush1.bf16.msra.mxu0 %v4759
      %4840 = vmatprep.subr.bf16.mxu0 0
      %4841 = vmatpush1.bf16.msra.mxu0 %v4760
      %4842 = vmatprep.subr.bf16.mxu0 0
      %4843 = vmatpush1.bf16.msra.mxu0 %v4761
      %4844 = vmatprep.subr.bf16.mxu0 0
      %4845 = vmatpush1.bf16.msra.mxu0 %v4762
      %4846 = vmatprep.subr.bf16.mxu0 0
      %4847 = vmatpush1.bf16.msra.mxu0 %v4763
      %4848 = vmatprep.subr.bf16.mxu0 0
      %4849 = vmatpush1.bf16.msra.mxu0 %v4764
      %4850 = vmatprep.subr.bf16.mxu0 0
      %4851 = vmatpush1.bf16.msra.mxu0 %v4765
      %4852 = vmatprep.subr.bf16.mxu0 0
      %4853 = vmatpush1.bf16.msra.mxu0 %v4826
      %4854 = vmatprep.subr.bf16.mxu0 0
      %4855 = vmatpush1.bf16.msra.mxu0 0
      %4856 = vmatprep.subr.bf16.mxu0 0
      %4857 = vmatpush1.bf16.msra.mxu0 0
      %4858 = vmatprep.subr.bf16.mxu0 0
      %4859 = vmatpush1.bf16.msra.mxu0 0
      %4860 = vmatprep.mubr.bf16.mxu0 %v4780
      %4861 = vmatmul.mubr.bf16.gmra.mrb[0].mxu0 %v4548
      %v4862 = vpop.f32.mrb[0].mxu0
      %v4863 = vadd.f32 0.0, %v4862
      %v4864 = vpop.f32.mrb[0].mxu0
      %v4865 = vpop.f32.mrb[0].mxu0
      %v4866 = vadd.f32 0.0, %v4865
      %v4867 = vpop.f32.mrb[0].mxu0
      %4868 = vmatprep.mubr.bf16.mxu0 %v4782
      %4869 = vmatmul.mubr.bf16.gmra.mrb[0].mxu0 %v4551
      %v4870 = vpop.f32.mrb[0].mxu0
      %v4871 = vadd.f32 0.0, %v4870
      %v4872 = vpop.f32.mrb[0].mxu0
      %v4873 = vpop.f32.mrb[0].mxu0
      %v4874 = vadd.f32 0.0, %v4873
      %v4875 = vpop.f32.mrb[0].mxu0
      %4876 = vmatprep.mubr.bf16.mxu0 %v4784
      %4877 = vmatmul.mubr.bf16.gmra.mrb[0].mxu0 %v4554
      %v4878 = vpop.f32.mrb[0].mxu0
      %v4879 = vadd.f32 0.0, %v4878
      %v4880 = vpop.f32.mrb[0].mxu0
      %v4881 = vpop.f32.mrb[0].mxu0
      %v4882 = vadd.f32 0.0, %v4881
      %v4883 = vpop.f32.mrb[0].mxu0
      %4884 = vmatprep.mubr.bf16.mxu0 %v4786
      %4885 = vmatmul.mubr.bf16.gmra.mrb[0].mxu0 %v4557
      %v4886 = vpop.f32.mrb[0].mxu0
      %v4887 = vadd.f32 0.0, %v4886
      %v4888 = vpop.f32.mrb[0].mxu0
      %v4889 = vpop.f32.mrb[0].mxu0
      %v4890 = vadd.f32 0.0, %v4889
      %v4891 = vpop.f32.mrb[0].mxu0
      %4892 = vmatprep.mubr.bf16.mxu0 %v4788
      %4893 = vmatmul.mubr.bf16.gmra.mrb[0].mxu0 %v4560
      %v4894 = vpop.f32.mrb[0].mxu0
      %v4895 = vadd.f32 0.0, %v4894
      %v4896 = vpop.f32.mrb[0].mxu0
      %v4897 = vpop.f32.mrb[0].mxu0
      %v4898 = vadd.f32 0.0, %v4897
      %v4899 = vpop.f32.mrb[0].mxu0
      %4900 = vmatprep.mubr.bf16.mxu0 %v4790
      %4901 = vmatmul.mubr.bf16.gmra.mrb[0].mxu0 %v4563
      %v4902 = vpop.f32.mrb[0].mxu0
      %v4903 = vadd.f32 0.0, %v4902
      %v4904 = vpop.f32.mrb[0].mxu0
      %v4905 = vpop.f32.mrb[0].mxu0
      %v4906 = vadd.f32 0.0, %v4905
      %v4907 = vpop.f32.mrb[0].mxu0
      %4908 = vmatprep.mubr.bf16.mxu0 %v4792
      %4909 = vmatmul.mubr.bf16.gmra.mrb[0].mxu0 %v4566
      %v4910 = vpop.f32.mrb[0].mxu0
      %v4911 = vadd.f32 0.0, %v4910
      %v4912 = vpop.f32.mrb[0].mxu0
      %v4913 = vpop.f32.mrb[0].mxu0
      %v4914 = vadd.f32 0.0, %v4913
      %v4915 = vpop.f32.mrb[0].mxu0
      %4916 = vmatprep.mubr.bf16.mxu0 %v4794
      %4917 = vmatmul.mubr.bf16.gmra.mrb[0].mxu0 %v4569
      %v4918 = vpop.f32.mrb[0].mxu0
      %v4919 = vadd.f32 0.0, %v4918
      %v4920 = vpop.f32.mrb[0].mxu0
      %v4921 = vpop.f32.mrb[0].mxu0
      %v4922 = vadd.f32 0.0, %v4921
      %v4923 = vpop.f32.mrb[0].mxu0
      %4924 = vmatprep.mubr.bf16.mxu0 %v4796
      %4925 = vmatmul.mubr.bf16.gmra.mrb[0].mxu0 %v4572
      %v4926 = vpop.f32.mrb[0].mxu0
      %v4927 = vadd.f32 0.0, %v4926
      %v4928 = vpop.f32.mrb[0].mxu0
      %v4929 = vpop.f32.mrb[0].mxu0
      %v4930 = vadd.f32 0.0, %v4929
      %v4931 = vpop.f32.mrb[0].mxu0
      %4932 = vmatprep.mubr.bf16.mxu0 %v4798
      %4933 = vmatmul.mubr.bf16.gmra.mrb[0].mxu0 %v4575
      %v4934 = vpop.f32.mrb[0].mxu0
      %v4935 = vadd.f32 0.0, %v4934
      %v4936 = vpop.f32.mrb[0].mxu0
      %v4937 = vpop.f32.mrb[0].mxu0
      %v4938 = vadd.f32 0.0, %v4937
      %v4939 = vpop.f32.mrb[0].mxu0
      %4940 = vmatprep.mubr.bf16.mxu0 %v4800
      %4941 = vmatmul.mubr.bf16.gmra.mrb[0].mxu0 %v4578
      %v4942 = vpop.f32.mrb[0].mxu0
      %v4943 = vadd.f32 0.0, %v4942
      %v4944 = vpop.f32.mrb[0].mxu0
      %v4945 = vpop.f32.mrb[0].mxu0
      %v4946 = vadd.f32 0.0, %v4945
      %v4947 = vpop.f32.mrb[0].mxu0
      %4948 = vmatprep.mubr.bf16.mxu0 %v4802
      %4949 = vmatmul.mubr.bf16.gmra.mrb[0].mxu0 %v4581
      %v4950 = vpop.f32.mrb[0].mxu0
      %v4951 = vadd.f32 0.0, %v4950
      %v4952 = vpop.f32.mrb[0].mxu0
      %v4953 = vpop.f32.mrb[0].mxu0
      %v4954 = vadd.f32 0.0, %v4953
      %v4955 = vpop.f32.mrb[0].mxu0
      %4956 = vmatprep.mubr.bf16.mxu0 %v4804
      %4957 = vmatmul.mubr.bf16.gmra.mrb[0].mxu0 %v4584
      %v4958 = vpop.f32.mrb[0].mxu0
      %v4959 = vadd.f32 0.0, %v4958
      %v4960 = vpop.f32.mrb[0].mxu0
      %v4961 = vpop.f32.mrb[0].mxu0
      %v4962 = vadd.f32 0.0, %v4961
      %v4963 = vpop.f32.mrb[0].mxu0
      %4964 = vmatprep.mubr.bf16.mxu0 %v4806
      %4965 = vmatmul.mubr.bf16.gmra.mrb[0].mxu0 %v4587
      %v4966 = vpop.f32.mrb[0].mxu0
      %v4967 = vadd.f32 0.0, %v4966
      %v4968 = vpop.f32.mrb[0].mxu0
      %v4969 = vpop.f32.mrb[0].mxu0
      %v4970 = vadd.f32 0.0, %v4969
      %v4971 = vpop.f32.mrb[0].mxu0
      %4972 = vmatprep.mubr.bf16.mxu0 %v4808
      %4973 = vmatmul.mubr.bf16.gmra.mrb[0].mxu0 %v4590
      %v4974 = vpop.f32.mrb[0].mxu0
      %v4975 = vadd.f32 0.0, %v4974
      %v4976 = vpop.f32.mrb[0].mxu0
      %v4977 = vpop.f32.mrb[0].mxu0
      %v4978 = vadd.f32 0.0, %v4977
      %v4979 = vpop.f32.mrb[0].mxu0
      %4980 = vmatprep.mubr.bf16.mxu0 %v4810
      %4981 = vmatmul.mubr.bf16.gmra.mrb[0].mxu0 %v4593
      %v4982 = vpop.f32.mrb[0].mxu0
      %v4983 = vadd.f32 0.0, %v4982
      %v4984 = vpop.f32.mrb[0].mxu0
      %v4985 = vpop.f32.mrb[0].mxu0
      %v4986 = vadd.f32 0.0, %v4985
      %v4987 = vpop.f32.mrb[0].mxu0
      %4988 = vmatprep.mubr.bf16.mxu0 %v4812
      %4989 = vmatmul.mubr.bf16.gmra.mrb[0].mxu0 %v4596
      %v4990 = vpop.f32.mrb[0].mxu0
      %v4991 = vadd.f32 0.0, %v4990
      %v4992 = vpop.f32.mrb[0].mxu0
      %v4993 = vpop.f32.mrb[0].mxu0
      %v4994 = vadd.f32 0.0, %v4993
      %v4995 = vpop.f32.mrb[0].mxu0
      %4996 = vmatprep.mubr.bf16.mxu0 %v4814
      %4997 = vmatmul.mubr.bf16.gmra.mrb[0].mxu0 %v4599
      %v4998 = vpop.f32.mrb[0].mxu0
      %v4999 = vadd.f32 0.0, %v4998
      %v5000 = vpop.f32.mrb[0].mxu0
      %v5001 = vpop.f32.mrb[0].mxu0
      %v5002 = vadd.f32 0.0, %v5001
      %v5003 = vpop.f32.mrb[0].mxu0
      %5004 = vmatprep.mubr.bf16.mxu0 %v4816
      %5005 = vmatmul.mubr.bf16.gmra.mrb[0].mxu0 %v4602
      %v5006 = vpop.f32.mrb[0].mxu0
      %v5007 = vadd.f32 0.0, %v5006
      %v5008 = vpop.f32.mrb[0].mxu0
      %v5009 = vpop.f32.mrb[0].mxu0
      %v5010 = vadd.f32 0.0, %v5009
      %v5011 = vpop.f32.mrb[0].mxu0
      %5012 = vmatprep.mubr.bf16.mxu0 %v4818
      %5013 = vmatmul.mubr.bf16.gmra.mrb[0].mxu0 %v4605
      %v5014 = vpop.f32.mrb[0].mxu0
      %v5015 = vadd.f32 0.0, %v5014
      %v5016 = vpop.f32.mrb[0].mxu0
      %v5017 = vpop.f32.mrb[0].mxu0
      %v5018 = vadd.f32 0.0, %v5017
      %v5019 = vpop.f32.mrb[0].mxu0
      %5020 = vmatprep.mubr.bf16.mxu0 %v4820
      %5021 = vmatmul.mubr.bf16.gmra.mrb[0].mxu0 %v4608
      %v5022 = vpop.f32.mrb[0].mxu0
      %v5023 = vadd.f32 0.0, %v5022
      %v5024 = vpop.f32.mrb[0].mxu0
      %v5025 = vpop.f32.mrb[0].mxu0
      %v5026 = vadd.f32 0.0, %v5025
      %v5027 = vpop.f32.mrb[0].mxu0
      %5028 = vmatprep.mubr.bf16.mxu0 %v4822
      %5029 = vmatmul.mubr.bf16.gmra.mrb[0].mxu0 %v4611
      %v5030 = vpop.f32.mrb[0].mxu0
      %v5031 = vadd.f32 0.0, %v5030
      %v5032 = vpop.f32.mrb[0].mxu0
      %v5033 = vpop.f32.mrb[0].mxu0
      %v5034 = vadd.f32 0.0, %v5033
      %v5035 = vpop.f32.mrb[0].mxu0
      %5036 = vdwg.mxu0
      %v5037 = vlaneseq
      %v5038 = vshrl.u32 %v5037, 7
      %v5039 = vadd.s32 %v5038, 8
      %v5040 = vadd.s32 %v5038, 16
      %v5041 = vadd.s32 %v5038, 24
      %v5042 = vadd.s32 %v5038, 32
      %v5043 = vadd.s32 %v5038, 40
      %v5044 = vadd.s32 %v5038, 48
      %v5045 = vadd.s32 %v5038, 56
      %v5046 = vadd.s32 %v5038, 64
      %v5047 = vadd.s32 %v5038, 72
      %v5048 = vadd.s32 %v5038, 80
      %v5049 = vadd.s32 %v5038, 88
      %v5050 = vadd.s32 %v5038, 96
      %v5051 = vadd.s32 %v5038, 104
      %v5052 = vadd.s32 %v5038, 112
      %v5053 = vadd.s32 %v5038, 120
      %v5054 = vadd.s32 %v5038, 128
      %v5055 = vadd.s32 %v5038, 136
      %v5056 = vadd.s32 %v5038, 144
      %v5057 = vadd.s32 %v5038, 152
      %v5058 = vadd.s32 %v5038, 160
      %v5059 = vadd.s32 %v5038, 168
      %v5060 = vadd.s32 %v5038, 176
      %v5061 = vadd.s32 %v5038, 184
      %v5062 = vadd.s32 %v5038, 192
      %v5063 = vadd.s32 %v5038, 200
      %v5064 = vadd.s32 %v5038, 208
      %v5065 = vadd.s32 %v5038, 216
      %v5066 = vadd.s32 %v5038, 224
      %v5067 = vadd.s32 %v5038, 232
      %v5068 = vadd.s32 %v5038, 240
      %v5069 = vadd.s32 %v5038, 248
      %v5070 = vadd.s32 %v5038, 256
      %v5071 = vadd.s32 %v5038, 264
      %v5072 = vadd.s32 %v5038, 272
      %v5073 = vadd.s32 %v5038, 280
      %v5074 = vadd.s32 %v5038, 288
      %v5075 = vadd.s32 %v5038, 296
      %v5076 = vadd.s32 %v5038, 304
      %v5077 = vadd.s32 %v5038, 312
      %v5078 = vadd.s32 %v5038, 320
      %v5079 = vadd.s32 %v5038, 328
      %v5080 = vadd.s32 %v5038, 336
      %v5081 = vadd.s32 %v5038, 344
      %vm5082 = vcmp.lt.s32.totalorder %v5038, 0
      %v5083 = vsub.s32 0, %v5038
      %v5084 = vsel %vm5082, %v5083, %v5038
      %v5085 = vmul.u32.u64.compose %v5084, 3123612579
      %v5086 = vextract.low.u32 %v5085
      %v5087 = vextract.high.u32 %v5085
      %v5088 = vshrl.u32 %v5087, 4
      %v5089 = vmul.u32 %v5088, 22
      %v5090 = vsub.s32 %v5084, %v5089
      %v5091 = vsub.s32 0, %v5090
      %v5092 = vsel %vm5082, %v5091, %v5090
      %vm5093 = vcmp.lt.s32.totalorder %v5039, 0
      %v5094 = vsub.s32 0, %v5039
      %v5095 = vsel %vm5093, %v5094, %v5039
      %v5096 = vmul.u32.u64.compose %v5095, 3123612579
      %v5097 = vextract.low.u32 %v5096
      %v5098 = vextract.high.u32 %v5096
      %v5099 = vshrl.u32 %v5098, 4
      %v5100 = vmul.u32 %v5099, 22
      %v5101 = vsub.s32 %v5095, %v5100
      %v5102 = vsub.s32 0, %v5101
      %v5103 = vsel %vm5093, %v5102, %v5101
      %vm5104 = vcmp.lt.s32.totalorder %v5040, 0
      %v5105 = vsub.s32 0, %v5040
      %v5106 = vsel %vm5104, %v5105, %v5040
      %v5107 = vmul.u32.u64.compose %v5106, 3123612579
      %v5108 = vextract.low.u32 %v5107
      %v5109 = vextract.high.u32 %v5107
      %v5110 = vshrl.u32 %v5109, 4
      %v5111 = vmul.u32 %v5110, 22
      %v5112 = vsub.s32 %v5106, %v5111
      %v5113 = vsub.s32 0, %v5112
      %v5114 = vsel %vm5104, %v5113, %v5112
      %vm5115 = vcmp.lt.s32.totalorder %v5041, 0
      %v5116 = vsub.s32 0, %v5041
      %v5117 = vsel %vm5115, %v5116, %v5041
      %v5118 = vmul.u32.u64.compose %v5117, 3123612579
      %v5119 = vextract.low.u32 %v5118
      %v5120 = vextract.high.u32 %v5118
      %v5121 = vshrl.u32 %v5120, 4
      %v5122 = vmul.u32 %v5121, 22
      %v5123 = vsub.s32 %v5117, %v5122
      %v5124 = vsub.s32 0, %v5123
      %v5125 = vsel %vm5115, %v5124, %v5123
      %vm5126 = vcmp.lt.s32.totalorder %v5042, 0
      %v5127 = vsub.s32 0, %v5042
      %v5128 = vsel %vm5126, %v5127, %v5042
      %v5129 = vmul.u32.u64.compose %v5128, 3123612579
      %v5130 = vextract.low.u32 %v5129
      %v5131 = vextract.high.u32 %v5129
      %v5132 = vshrl.u32 %v5131, 4
      %v5133 = vmul.u32 %v5132, 22
      %v5134 = vsub.s32 %v5128, %v5133
      %v5135 = vsub.s32 0, %v5134
      %v5136 = vsel %vm5126, %v5135, %v5134
      %vm5137 = vcmp.lt.s32.totalorder %v5043, 0
      %v5138 = vsub.s32 0, %v5043
      %v5139 = vsel %vm5137, %v5138, %v5043
      %v5140 = vmul.u32.u64.compose %v5139, 3123612579
      %v5141 = vextract.low.u32 %v5140
      %v5142 = vextract.high.u32 %v5140
      %v5143 = vshrl.u32 %v5142, 4
      %v5144 = vmul.u32 %v5143, 22
      %v5145 = vsub.s32 %v5139, %v5144
      %v5146 = vsub.s32 0, %v5145
      %v5147 = vsel %vm5137, %v5146, %v5145
      %vm5148 = vcmp.lt.s32.totalorder %v5044, 0
      %v5149 = vsub.s32 0, %v5044
      %v5150 = vsel %vm5148, %v5149, %v5044
      %v5151 = vmul.u32.u64.compose %v5150, 3123612579
      %v5152 = vextract.low.u32 %v5151
      %v5153 = vextract.high.u32 %v5151
      %v5154 = vshrl.u32 %v5153, 4
      %v5155 = vmul.u32 %v5154, 22
      %v5156 = vsub.s32 %v5150, %v5155
      %v5157 = vsub.s32 0, %v5156
      %v5158 = vsel %vm5148, %v5157, %v5156
      %vm5159 = vcmp.lt.s32.totalorder %v5045, 0
      %v5160 = vsub.s32 0, %v5045
      %v5161 = vsel %vm5159, %v5160, %v5045
      %v5162 = vmul.u32.u64.compose %v5161, 3123612579
      %v5163 = vextract.low.u32 %v5162
      %v5164 = vextract.high.u32 %v5162
      %v5165 = vshrl.u32 %v5164, 4
      %v5166 = vmul.u32 %v5165, 22
      %v5167 = vsub.s32 %v5161, %v5166
      %v5168 = vsub.s32 0, %v5167
      %v5169 = vsel %vm5159, %v5168, %v5167
      %vm5170 = vcmp.lt.s32.totalorder %v5046, 0
      %v5171 = vsub.s32 0, %v5046
      %v5172 = vsel %vm5170, %v5171, %v5046
      %v5173 = vmul.u32.u64.compose %v5172, 3123612579
      %v5174 = vextract.low.u32 %v5173
      %v5175 = vextract.high.u32 %v5173
      %v5176 = vshrl.u32 %v5175, 4
      %v5177 = vmul.u32 %v5176, 22
      %v5178 = vsub.s32 %v5172, %v5177
      %v5179 = vsub.s32 0, %v5178
      %v5180 = vsel %vm5170, %v5179, %v5178
      %vm5181 = vcmp.lt.s32.totalorder %v5047, 0
      %v5182 = vsub.s32 0, %v5047
      %v5183 = vsel %vm5181, %v5182, %v5047
      %v5184 = vmul.u32.u64.compose %v5183, 3123612579
      %v5185 = vextract.low.u32 %v5184
      %v5186 = vextract.high.u32 %v5184
      %v5187 = vshrl.u32 %v5186, 4
      %v5188 = vmul.u32 %v5187, 22
      %v5189 = vsub.s32 %v5183, %v5188
      %v5190 = vsub.s32 0, %v5189
      %v5191 = vsel %vm5181, %v5190, %v5189
      %vm5192 = vcmp.lt.s32.totalorder %v5048, 0
      %v5193 = vsub.s32 0, %v5048
      %v5194 = vsel %vm5192, %v5193, %v5048
      %v5195 = vmul.u32.u64.compose %v5194, 3123612579
      %v5196 = vextract.low.u32 %v5195
      %v5197 = vextract.high.u32 %v5195
      %v5198 = vshrl.u32 %v5197, 4
      %v5199 = vmul.u32 %v5198, 22
      %v5200 = vsub.s32 %v5194, %v5199
      %v5201 = vsub.s32 0, %v5200
      %v5202 = vsel %vm5192, %v5201, %v5200
      %vm5203 = vcmp.lt.s32.totalorder %v5049, 0
      %v5204 = vsub.s32 0, %v5049
      %v5205 = vsel %vm5203, %v5204, %v5049
      %v5206 = vmul.u32.u64.compose %v5205, 3123612579
      %v5207 = vextract.low.u32 %v5206
      %v5208 = vextract.high.u32 %v5206
      %v5209 = vshrl.u32 %v5208, 4
      %v5210 = vmul.u32 %v5209, 22
      %v5211 = vsub.s32 %v5205, %v5210
      %v5212 = vsub.s32 0, %v5211
      %v5213 = vsel %vm5203, %v5212, %v5211
      %vm5214 = vcmp.lt.s32.totalorder %v5050, 0
      %v5215 = vsub.s32 0, %v5050
      %v5216 = vsel %vm5214, %v5215, %v5050
      %v5217 = vmul.u32.u64.compose %v5216, 3123612579
      %v5218 = vextract.low.u32 %v5217
      %v5219 = vextract.high.u32 %v5217
      %v5220 = vshrl.u32 %v5219, 4
      %v5221 = vmul.u32 %v5220, 22
      %v5222 = vsub.s32 %v5216, %v5221
      %v5223 = vsub.s32 0, %v5222
      %v5224 = vsel %vm5214, %v5223, %v5222
      %vm5225 = vcmp.lt.s32.totalorder %v5051, 0
      %v5226 = vsub.s32 0, %v5051
      %v5227 = vsel %vm5225, %v5226, %v5051
      %v5228 = vmul.u32.u64.compose %v5227, 3123612579
      %v5229 = vextract.low.u32 %v5228
      %v5230 = vextract.high.u32 %v5228
      %v5231 = vshrl.u32 %v5230, 4
      %v5232 = vmul.u32 %v5231, 22
      %v5233 = vsub.s32 %v5227, %v5232
      %v5234 = vsub.s32 0, %v5233
      %v5235 = vsel %vm5225, %v5234, %v5233
      %vm5236 = vcmp.lt.s32.totalorder %v5052, 0
      %v5237 = vsub.s32 0, %v5052
      %v5238 = vsel %vm5236, %v5237, %v5052
      %v5239 = vmul.u32.u64.compose %v5238, 3123612579
      %v5240 = vextract.low.u32 %v5239
      %v5241 = vextract.high.u32 %v5239
      %v5242 = vshrl.u32 %v5241, 4
      %v5243 = vmul.u32 %v5242, 22
      %v5244 = vsub.s32 %v5238, %v5243
      %v5245 = vsub.s32 0, %v5244
      %v5246 = vsel %vm5236, %v5245, %v5244
      %vm5247 = vcmp.lt.s32.totalorder %v5053, 0
      %v5248 = vsub.s32 0, %v5053
      %v5249 = vsel %vm5247, %v5248, %v5053
      %v5250 = vmul.u32.u64.compose %v5249, 3123612579
      %v5251 = vextract.low.u32 %v5250
      %v5252 = vextract.high.u32 %v5250
      %v5253 = vshrl.u32 %v5252, 4
      %v5254 = vmul.u32 %v5253, 22
      %v5255 = vsub.s32 %v5249, %v5254
      %v5256 = vsub.s32 0, %v5255
      %v5257 = vsel %vm5247, %v5256, %v5255
      %vm5258 = vcmp.lt.s32.totalorder %v5054, 0
      %v5259 = vsub.s32 0, %v5054
      %v5260 = vsel %vm5258, %v5259, %v5054
      %v5261 = vmul.u32.u64.compose %v5260, 3123612579
      %v5262 = vextract.low.u32 %v5261
      %v5263 = vextract.high.u32 %v5261
      %v5264 = vshrl.u32 %v5263, 4
      %v5265 = vmul.u32 %v5264, 22
      %v5266 = vsub.s32 %v5260, %v5265
      %v5267 = vsub.s32 0, %v5266
      %v5268 = vsel %vm5258, %v5267, %v5266
      %vm5269 = vcmp.lt.s32.totalorder %v5055, 0
      %v5270 = vsub.s32 0, %v5055
      %v5271 = vsel %vm5269, %v5270, %v5055
      %v5272 = vmul.u32.u64.compose %v5271, 3123612579
      %v5273 = vextract.low.u32 %v5272
      %v5274 = vextract.high.u32 %v5272
      %v5275 = vshrl.u32 %v5274, 4
      %v5276 = vmul.u32 %v5275, 22
      %v5277 = vsub.s32 %v5271, %v5276
      %v5278 = vsub.s32 0, %v5277
      %v5279 = vsel %vm5269, %v5278, %v5277
      %vm5280 = vcmp.lt.s32.totalorder %v5056, 0
      %v5281 = vsub.s32 0, %v5056
      %v5282 = vsel %vm5280, %v5281, %v5056
      %v5283 = vmul.u32.u64.compose %v5282, 3123612579
      %v5284 = vextract.low.u32 %v5283
      %v5285 = vextract.high.u32 %v5283
      %v5286 = vshrl.u32 %v5285, 4
      %v5287 = vmul.u32 %v5286, 22
      %v5288 = vsub.s32 %v5282, %v5287
      %v5289 = vsub.s32 0, %v5288
      %v5290 = vsel %vm5280, %v5289, %v5288
      %vm5291 = vcmp.lt.s32.totalorder %v5057, 0
      %v5292 = vsub.s32 0, %v5057
      %v5293 = vsel %vm5291, %v5292, %v5057
      %v5294 = vmul.u32.u64.compose %v5293, 3123612579
      %v5295 = vextract.low.u32 %v5294
      %v5296 = vextract.high.u32 %v5294
      %v5297 = vshrl.u32 %v5296, 4
      %v5298 = vmul.u32 %v5297, 22
      %v5299 = vsub.s32 %v5293, %v5298
      %v5300 = vsub.s32 0, %v5299
      %v5301 = vsel %vm5291, %v5300, %v5299
      %vm5302 = vcmp.lt.s32.totalorder %v5058, 0
      %v5303 = vsub.s32 0, %v5058
      %v5304 = vsel %vm5302, %v5303, %v5058
      %v5305 = vmul.u32.u64.compose %v5304, 3123612579
      %v5306 = vextract.low.u32 %v5305
      %v5307 = vextract.high.u32 %v5305
      %v5308 = vshrl.u32 %v5307, 4
      %v5309 = vmul.u32 %v5308, 22
      %v5310 = vsub.s32 %v5304, %v5309
      %v5311 = vsub.s32 0, %v5310
      %v5312 = vsel %vm5302, %v5311, %v5310
      %vm5313 = vcmp.lt.s32.totalorder %v5059, 0
      %v5314 = vsub.s32 0, %v5059
      %v5315 = vsel %vm5313, %v5314, %v5059
      %v5316 = vmul.u32.u64.compose %v5315, 3123612579
      %v5317 = vextract.low.u32 %v5316
      %v5318 = vextract.high.u32 %v5316
      %v5319 = vshrl.u32 %v5318, 4
      %v5320 = vmul.u32 %v5319, 22
      %v5321 = vsub.s32 %v5315, %v5320
      %v5322 = vsub.s32 0, %v5321
      %v5323 = vsel %vm5313, %v5322, %v5321
      %vm5324 = vcmp.lt.s32.totalorder %v5060, 0
      %v5325 = vsub.s32 0, %v5060
      %v5326 = vsel %vm5324, %v5325, %v5060
      %v5327 = vmul.u32.u64.compose %v5326, 3123612579
      %v5328 = vextract.low.u32 %v5327
      %v5329 = vextract.high.u32 %v5327
      %v5330 = vshrl.u32 %v5329, 4
      %v5331 = vmul.u32 %v5330, 22
      %v5332 = vsub.s32 %v5326, %v5331
      %v5333 = vsub.s32 0, %v5332
      %v5334 = vsel %vm5324, %v5333, %v5332
      %vm5335 = vcmp.lt.s32.totalorder %v5061, 0
      %v5336 = vsub.s32 0, %v5061
      %v5337 = vsel %vm5335, %v5336, %v5061
      %v5338 = vmul.u32.u64.compose %v5337, 3123612579
      %v5339 = vextract.low.u32 %v5338
      %v5340 = vextract.high.u32 %v5338
      %v5341 = vshrl.u32 %v5340, 4
      %v5342 = vmul.u32 %v5341, 22
      %v5343 = vsub.s32 %v5337, %v5342
      %v5344 = vsub.s32 0, %v5343
      %v5345 = vsel %vm5335, %v5344, %v5343
      %vm5346 = vcmp.lt.s32.totalorder %v5062, 0
      %v5347 = vsub.s32 0, %v5062
      %v5348 = vsel %vm5346, %v5347, %v5062
      %v5349 = vmul.u32.u64.compose %v5348, 3123612579
      %v5350 = vextract.low.u32 %v5349
      %v5351 = vextract.high.u32 %v5349
      %v5352 = vshrl.u32 %v5351, 4
      %v5353 = vmul.u32 %v5352, 22
      %v5354 = vsub.s32 %v5348, %v5353
      %v5355 = vsub.s32 0, %v5354
      %v5356 = vsel %vm5346, %v5355, %v5354
      %vm5357 = vcmp.lt.s32.totalorder %v5063, 0
      %v5358 = vsub.s32 0, %v5063
      %v5359 = vsel %vm5357, %v5358, %v5063
      %v5360 = vmul.u32.u64.compose %v5359, 3123612579
      %v5361 = vextract.low.u32 %v5360
      %v5362 = vextract.high.u32 %v5360
      %v5363 = vshrl.u32 %v5362, 4
      %v5364 = vmul.u32 %v5363, 22
      %v5365 = vsub.s32 %v5359, %v5364
      %v5366 = vsub.s32 0, %v5365
      %v5367 = vsel %vm5357, %v5366, %v5365
      %vm5368 = vcmp.lt.s32.totalorder %v5064, 0
      %v5369 = vsub.s32 0, %v5064
      %v5370 = vsel %vm5368, %v5369, %v5064
      %v5371 = vmul.u32.u64.compose %v5370, 3123612579
      %v5372 = vextract.low.u32 %v5371
      %v5373 = vextract.high.u32 %v5371
      %v5374 = vshrl.u32 %v5373, 4
      %v5375 = vmul.u32 %v5374, 22
      %v5376 = vsub.s32 %v5370, %v5375
      %v5377 = vsub.s32 0, %v5376
      %v5378 = vsel %vm5368, %v5377, %v5376
      %vm5379 = vcmp.lt.s32.totalorder %v5065, 0
      %v5380 = vsub.s32 0, %v5065
      %v5381 = vsel %vm5379, %v5380, %v5065
      %v5382 = vmul.u32.u64.compose %v5381, 3123612579
      %v5383 = vextract.low.u32 %v5382
      %v5384 = vextract.high.u32 %v5382
      %v5385 = vshrl.u32 %v5384, 4
      %v5386 = vmul.u32 %v5385, 22
      %v5387 = vsub.s32 %v5381, %v5386
      %v5388 = vsub.s32 0, %v5387
      %v5389 = vsel %vm5379, %v5388, %v5387
      %vm5390 = vcmp.lt.s32.totalorder %v5066, 0
      %v5391 = vsub.s32 0, %v5066
      %v5392 = vsel %vm5390, %v5391, %v5066
      %v5393 = vmul.u32.u64.compose %v5392, 3123612579
      %v5394 = vextract.low.u32 %v5393
      %v5395 = vextract.high.u32 %v5393
      %v5396 = vshrl.u32 %v5395, 4
      %v5397 = vmul.u32 %v5396, 22
      %v5398 = vsub.s32 %v5392, %v5397
      %v5399 = vsub.s32 0, %v5398
      %v5400 = vsel %vm5390, %v5399, %v5398
      %vm5401 = vcmp.lt.s32.totalorder %v5067, 0
      %v5402 = vsub.s32 0, %v5067
      %v5403 = vsel %vm5401, %v5402, %v5067
      %v5404 = vmul.u32.u64.compose %v5403, 3123612579
      %v5405 = vextract.low.u32 %v5404
      %v5406 = vextract.high.u32 %v5404
      %v5407 = vshrl.u32 %v5406, 4
      %v5408 = vmul.u32 %v5407, 22
      %v5409 = vsub.s32 %v5403, %v5408
      %v5410 = vsub.s32 0, %v5409
      %v5411 = vsel %vm5401, %v5410, %v5409
      %vm5412 = vcmp.lt.s32.totalorder %v5068, 0
      %v5413 = vsub.s32 0, %v5068
      %v5414 = vsel %vm5412, %v5413, %v5068
      %v5415 = vmul.u32.u64.compose %v5414, 3123612579
      %v5416 = vextract.low.u32 %v5415
      %v5417 = vextract.high.u32 %v5415
      %v5418 = vshrl.u32 %v5417, 4
      %v5419 = vmul.u32 %v5418, 22
      %v5420 = vsub.s32 %v5414, %v5419
      %v5421 = vsub.s32 0, %v5420
      %v5422 = vsel %vm5412, %v5421, %v5420
      %vm5423 = vcmp.lt.s32.totalorder %v5069, 0
      %v5424 = vsub.s32 0, %v5069
      %v5425 = vsel %vm5423, %v5424, %v5069
      %v5426 = vmul.u32.u64.compose %v5425, 3123612579
      %v5427 = vextract.low.u32 %v5426
      %v5428 = vextract.high.u32 %v5426
      %v5429 = vshrl.u32 %v5428, 4
      %v5430 = vmul.u32 %v5429, 22
      %v5431 = vsub.s32 %v5425, %v5430
      %v5432 = vsub.s32 0, %v5431
      %v5433 = vsel %vm5423, %v5432, %v5431
      %vm5434 = vcmp.lt.s32.totalorder %v5070, 0
      %v5435 = vsub.s32 0, %v5070
      %v5436 = vsel %vm5434, %v5435, %v5070
      %v5437 = vmul.u32.u64.compose %v5436, 3123612579
      %v5438 = vextract.low.u32 %v5437
      %v5439 = vextract.high.u32 %v5437
      %v5440 = vshrl.u32 %v5439, 4
      %v5441 = vmul.u32 %v5440, 22
      %v5442 = vsub.s32 %v5436, %v5441
      %v5443 = vsub.s32 0, %v5442
      %v5444 = vsel %vm5434, %v5443, %v5442
      %vm5445 = vcmp.lt.s32.totalorder %v5071, 0
      %v5446 = vsub.s32 0, %v5071
      %v5447 = vsel %vm5445, %v5446, %v5071
      %v5448 = vmul.u32.u64.compose %v5447, 3123612579
      %v5449 = vextract.low.u32 %v5448
      %v5450 = vextract.high.u32 %v5448
      %v5451 = vshrl.u32 %v5450, 4
      %v5452 = vmul.u32 %v5451, 22
      %v5453 = vsub.s32 %v5447, %v5452
      %v5454 = vsub.s32 0, %v5453
      %v5455 = vsel %vm5445, %v5454, %v5453
      %vm5456 = vcmp.lt.s32.totalorder %v5072, 0
      %v5457 = vsub.s32 0, %v5072
      %v5458 = vsel %vm5456, %v5457, %v5072
      %v5459 = vmul.u32.u64.compose %v5458, 3123612579
      %v5460 = vextract.low.u32 %v5459
      %v5461 = vextract.high.u32 %v5459
      %v5462 = vshrl.u32 %v5461, 4
      %v5463 = vmul.u32 %v5462, 22
      %v5464 = vsub.s32 %v5458, %v5463
      %v5465 = vsub.s32 0, %v5464
      %v5466 = vsel %vm5456, %v5465, %v5464
      %vm5467 = vcmp.lt.s32.totalorder %v5073, 0
      %v5468 = vsub.s32 0, %v5073
      %v5469 = vsel %vm5467, %v5468, %v5073
      %v5470 = vmul.u32.u64.compose %v5469, 3123612579
      %v5471 = vextract.low.u32 %v5470
      %v5472 = vextract.high.u32 %v5470
      %v5473 = vshrl.u32 %v5472, 4
      %v5474 = vmul.u32 %v5473, 22
      %v5475 = vsub.s32 %v5469, %v5474
      %v5476 = vsub.s32 0, %v5475
      %v5477 = vsel %vm5467, %v5476, %v5475
      %vm5478 = vcmp.lt.s32.totalorder %v5074, 0
      %v5479 = vsub.s32 0, %v5074
      %v5480 = vsel %vm5478, %v5479, %v5074
      %v5481 = vmul.u32.u64.compose %v5480, 3123612579
      %v5482 = vextract.low.u32 %v5481
      %v5483 = vextract.high.u32 %v5481
      %v5484 = vshrl.u32 %v5483, 4
      %v5485 = vmul.u32 %v5484, 22
      %v5486 = vsub.s32 %v5480, %v5485
      %v5487 = vsub.s32 0, %v5486
      %v5488 = vsel %vm5478, %v5487, %v5486
      %vm5489 = vcmp.lt.s32.totalorder %v5075, 0
      %v5490 = vsub.s32 0, %v5075
      %v5491 = vsel %vm5489, %v5490, %v5075
      %v5492 = vmul.u32.u64.compose %v5491, 3123612579
      %v5493 = vextract.low.u32 %v5492
      %v5494 = vextract.high.u32 %v5492
      %v5495 = vshrl.u32 %v5494, 4
      %v5496 = vmul.u32 %v5495, 22
      %v5497 = vsub.s32 %v5491, %v5496
      %v5498 = vsub.s32 0, %v5497
      %v5499 = vsel %vm5489, %v5498, %v5497
      %vm5500 = vcmp.lt.s32.totalorder %v5076, 0
      %v5501 = vsub.s32 0, %v5076
      %v5502 = vsel %vm5500, %v5501, %v5076
      %v5503 = vmul.u32.u64.compose %v5502, 3123612579
      %v5504 = vextract.low.u32 %v5503
      %v5505 = vextract.high.u32 %v5503
      %v5506 = vshrl.u32 %v5505, 4
      %v5507 = vmul.u32 %v5506, 22
      %v5508 = vsub.s32 %v5502, %v5507
      %v5509 = vsub.s32 0, %v5508
      %v5510 = vsel %vm5500, %v5509, %v5508
      %vm5511 = vcmp.lt.s32.totalorder %v5077, 0
      %v5512 = vsub.s32 0, %v5077
      %v5513 = vsel %vm5511, %v5512, %v5077
      %v5514 = vmul.u32.u64.compose %v5513, 3123612579
      %v5515 = vextract.low.u32 %v5514
      %v5516 = vextract.high.u32 %v5514
      %v5517 = vshrl.u32 %v5516, 4
      %v5518 = vmul.u32 %v5517, 22
      %v5519 = vsub.s32 %v5513, %v5518
      %v5520 = vsub.s32 0, %v5519
      %v5521 = vsel %vm5511, %v5520, %v5519
      %vm5522 = vcmp.lt.s32.totalorder %v5078, 0
      %v5523 = vsub.s32 0, %v5078
      %v5524 = vsel %vm5522, %v5523, %v5078
      %v5525 = vmul.u32.u64.compose %v5524, 3123612579
      %v5526 = vextract.low.u32 %v5525
      %v5527 = vextract.high.u32 %v5525
      %v5528 = vshrl.u32 %v5527, 4
      %v5529 = vmul.u32 %v5528, 22
      %v5530 = vsub.s32 %v5524, %v5529
      %v5531 = vsub.s32 0, %v5530
      %v5532 = vsel %vm5522, %v5531, %v5530
      %vm5533 = vcmp.lt.s32.totalorder %v5079, 0
      %v5534 = vsub.s32 0, %v5079
      %v5535 = vsel %vm5533, %v5534, %v5079
      %v5536 = vmul.u32.u64.compose %v5535, 3123612579
      %v5537 = vextract.low.u32 %v5536
      %v5538 = vextract.high.u32 %v5536
      %v5539 = vshrl.u32 %v5538, 4
      %v5540 = vmul.u32 %v5539, 22
      %v5541 = vsub.s32 %v5535, %v5540
      %v5542 = vsub.s32 0, %v5541
      %v5543 = vsel %vm5533, %v5542, %v5541
      %vm5544 = vcmp.lt.s32.totalorder %v5080, 0
      %v5545 = vsub.s32 0, %v5080
      %v5546 = vsel %vm5544, %v5545, %v5080
      %v5547 = vmul.u32.u64.compose %v5546, 3123612579
      %v5548 = vextract.low.u32 %v5547
      %v5549 = vextract.high.u32 %v5547
      %v5550 = vshrl.u32 %v5549, 4
      %v5551 = vmul.u32 %v5550, 22
      %v5552 = vsub.s32 %v5546, %v5551
      %v5553 = vsub.s32 0, %v5552
      %v5554 = vsel %vm5544, %v5553, %v5552
      %vm5555 = vcmp.lt.s32.totalorder %v5081, 0
      %v5556 = vsub.s32 0, %v5081
      %v5557 = vsel %vm5555, %v5556, %v5081
      %v5558 = vmul.u32.u64.compose %v5557, 3123612579
      %v5559 = vextract.low.u32 %v5558
      %v5560 = vextract.high.u32 %v5558
      %v5561 = vshrl.u32 %v5560, 4
      %v5562 = vmul.u32 %v5561, 22
      %v5563 = vsub.s32 %v5557, %v5562
      %v5564 = vsub.s32 0, %v5563
      %v5565 = vsel %vm5555, %v5564, %v5563
      %vm5566 = vcmp.ne.s32.totalorder %v5092, 0
      %vm5567 = vcmp.ne.s32.totalorder %v5103, 0
      %vm5568 = vcmp.ne.s32.totalorder %v5114, 0
      %vm5569 = vcmp.ne.s32.totalorder %v5125, 0
      %vm5570 = vcmp.ne.s32.totalorder %v5136, 0
      %vm5571 = vcmp.ne.s32.totalorder %v5147, 0
      %vm5572 = vcmp.ne.s32.totalorder %v5158, 0
      %vm5573 = vcmp.ne.s32.totalorder %v5169, 0
      %vm5574 = vcmp.ne.s32.totalorder %v5180, 0
      %vm5575 = vcmp.ne.s32.totalorder %v5191, 0
      %vm5576 = vcmp.ne.s32.totalorder %v5202, 0
      %vm5577 = vcmp.ne.s32.totalorder %v5213, 0
      %vm5578 = vcmp.ne.s32.totalorder %v5224, 0
      %vm5579 = vcmp.ne.s32.totalorder %v5235, 0
      %vm5580 = vcmp.ne.s32.totalorder %v5246, 0
      %vm5581 = vcmp.ne.s32.totalorder %v5257, 0
      %vm5582 = vcmp.ne.s32.totalorder %v5268, 0
      %vm5583 = vcmp.ne.s32.totalorder %v5279, 0
      %vm5584 = vcmp.ne.s32.totalorder %v5290, 0
      %vm5585 = vcmp.ne.s32.totalorder %v5301, 0
      %vm5586 = vcmp.ne.s32.totalorder %v5312, 0
      %vm5587 = vcmp.ne.s32.totalorder %v5323, 0
      %vm5588 = vcmp.ne.s32.totalorder %v5334, 0
      %vm5589 = vcmp.ne.s32.totalorder %v5345, 0
      %vm5590 = vcmp.ne.s32.totalorder %v5356, 0
      %vm5591 = vcmp.ne.s32.totalorder %v5367, 0
      %vm5592 = vcmp.ne.s32.totalorder %v5378, 0
      %vm5593 = vcmp.ne.s32.totalorder %v5389, 0
      %vm5594 = vcmp.ne.s32.totalorder %v5400, 0
      %vm5595 = vcmp.ne.s32.totalorder %v5411, 0
      %vm5596 = vcmp.ne.s32.totalorder %v5422, 0
      %vm5597 = vcmp.ne.s32.totalorder %v5433, 0
      %vm5598 = vcmp.ne.s32.totalorder %v5444, 0
      %vm5599 = vcmp.ne.s32.totalorder %v5455, 0
      %vm5600 = vcmp.ne.s32.totalorder %v5466, 0
      %vm5601 = vcmp.ne.s32.totalorder %v5477, 0
      %vm5602 = vcmp.ne.s32.totalorder %v5488, 0
      %vm5603 = vcmp.ne.s32.totalorder %v5499, 0
      %vm5604 = vcmp.ne.s32.totalorder %v5510, 0
      %vm5605 = vcmp.ne.s32.totalorder %v5521, 0
      %vm5606 = vcmp.ne.s32.totalorder %v5532, 0
      %vm5607 = vcmp.ne.s32.totalorder %v5543, 0
      %vm5608 = vcmp.ne.s32.totalorder %v5554, 0
      %vm5609 = vcmp.ne.s32.totalorder %v5565, 0
      %vm5610 = vcmp.lt.s32.totalorder %v5092, 0
      %vm5611 = vcmp.lt.s32.totalorder %v5103, 0
      %vm5612 = vcmp.lt.s32.totalorder %v5114, 0
      %vm5613 = vcmp.lt.s32.totalorder %v5125, 0
      %vm5614 = vcmp.lt.s32.totalorder %v5136, 0
      %vm5615 = vcmp.lt.s32.totalorder %v5147, 0
      %vm5616 = vcmp.lt.s32.totalorder %v5158, 0
      %vm5617 = vcmp.lt.s32.totalorder %v5169, 0
      %vm5618 = vcmp.lt.s32.totalorder %v5180, 0
      %vm5619 = vcmp.lt.s32.totalorder %v5191, 0
      %vm5620 = vcmp.lt.s32.totalorder %v5202, 0
      %vm5621 = vcmp.lt.s32.totalorder %v5213, 0
      %vm5622 = vcmp.lt.s32.totalorder %v5224, 0
      %vm5623 = vcmp.lt.s32.totalorder %v5235, 0
      %vm5624 = vcmp.lt.s32.totalorder %v5246, 0
      %vm5625 = vcmp.lt.s32.totalorder %v5257, 0
      %vm5626 = vcmp.lt.s32.totalorder %v5268, 0
      %vm5627 = vcmp.lt.s32.totalorder %v5279, 0
      %vm5628 = vcmp.lt.s32.totalorder %v5290, 0
      %vm5629 = vcmp.lt.s32.totalorder %v5301, 0
      %vm5630 = vcmp.lt.s32.totalorder %v5312, 0
      %vm5631 = vcmp.lt.s32.totalorder %v5323, 0
      %vm5632 = vcmp.lt.s32.totalorder %v5334, 0
      %vm5633 = vcmp.lt.s32.totalorder %v5345, 0
      %vm5634 = vcmp.lt.s32.totalorder %v5356, 0
      %vm5635 = vcmp.lt.s32.totalorder %v5367, 0
      %vm5636 = vcmp.lt.s32.totalorder %v5378, 0
      %vm5637 = vcmp.lt.s32.totalorder %v5389, 0
      %vm5638 = vcmp.lt.s32.totalorder %v5400, 0
      %vm5639 = vcmp.lt.s32.totalorder %v5411, 0
      %vm5640 = vcmp.lt.s32.totalorder %v5422, 0
      %vm5641 = vcmp.lt.s32.totalorder %v5433, 0
      %vm5642 = vcmp.lt.s32.totalorder %v5444, 0
      %vm5643 = vcmp.lt.s32.totalorder %v5455, 0
      %vm5644 = vcmp.lt.s32.totalorder %v5466, 0
      %vm5645 = vcmp.lt.s32.totalorder %v5477, 0
      %vm5646 = vcmp.lt.s32.totalorder %v5488, 0
      %vm5647 = vcmp.lt.s32.totalorder %v5499, 0
      %vm5648 = vcmp.lt.s32.totalorder %v5510, 0
      %vm5649 = vcmp.lt.s32.totalorder %v5521, 0
      %vm5650 = vcmp.lt.s32.totalorder %v5532, 0
      %vm5651 = vcmp.lt.s32.totalorder %v5543, 0
      %vm5652 = vcmp.lt.s32.totalorder %v5554, 0
      %vm5653 = vcmp.lt.s32.totalorder %v5565, 0
      %vm5654 = vmand %vm5610, %vm5566
      %vm5655 = vmand %vm5611, %vm5567
      %vm5656 = vmand %vm5612, %vm5568
      %vm5657 = vmand %vm5613, %vm5569
      %vm5658 = vmand %vm5614, %vm5570
      %vm5659 = vmand %vm5615, %vm5571
      %vm5660 = vmand %vm5616, %vm5572
      %vm5661 = vmand %vm5617, %vm5573
      %vm5662 = vmand %vm5618, %vm5574
      %vm5663 = vmand %vm5619, %vm5575
      %vm5664 = vmand %vm5620, %vm5576
      %vm5665 = vmand %vm5621, %vm5577
      %vm5666 = vmand %vm5622, %vm5578
      %vm5667 = vmand %vm5623, %vm5579
      %vm5668 = vmand %vm5624, %vm5580
      %vm5669 = vmand %vm5625, %vm5581
      %vm5670 = vmand %vm5626, %vm5582
      %vm5671 = vmand %vm5627, %vm5583
      %vm5672 = vmand %vm5628, %vm5584
      %vm5673 = vmand %vm5629, %vm5585
      %vm5674 = vmand %vm5630, %vm5586
      %vm5675 = vmand %vm5631, %vm5587
      %vm5676 = vmand %vm5632, %vm5588
      %vm5677 = vmand %vm5633, %vm5589
      %vm5678 = vmand %vm5634, %vm5590
      %vm5679 = vmand %vm5635, %vm5591
      %vm5680 = vmand %vm5636, %vm5592
      %vm5681 = vmand %vm5637, %vm5593
      %vm5682 = vmand %vm5638, %vm5594
      %vm5683 = vmand %vm5639, %vm5595
      %vm5684 = vmand %vm5640, %vm5596
      %vm5685 = vmand %vm5641, %vm5597
      %vm5686 = vmand %vm5642, %vm5598
      %vm5687 = vmand %vm5643, %vm5599
      %vm5688 = vmand %vm5644, %vm5600
      %vm5689 = vmand %vm5645, %vm5601
      %vm5690 = vmand %vm5646, %vm5602
      %vm5691 = vmand %vm5647, %vm5603
      %vm5692 = vmand %vm5648, %vm5604
      %vm5693 = vmand %vm5649, %vm5605
      %vm5694 = vmand %vm5650, %vm5606
      %vm5695 = vmand %vm5651, %vm5607
      %vm5696 = vmand %vm5652, %vm5608
      %vm5697 = vmand %vm5653, %vm5609
      %v5698 = vadd.s32 %v5092, 22
      %v5699 = vadd.s32 %v5103, 22
      %v5700 = vadd.s32 %v5114, 22
      %v5701 = vadd.s32 %v5125, 22
      %v5702 = vadd.s32 %v5136, 22
      %v5703 = vadd.s32 %v5147, 22
      %v5704 = vadd.s32 %v5158, 22
      %v5705 = vadd.s32 %v5169, 22
      %v5706 = vadd.s32 %v5180, 22
      %v5707 = vadd.s32 %v5191, 22
      %v5708 = vadd.s32 %v5202, 22
      %v5709 = vadd.s32 %v5213, 22
      %v5710 = vadd.s32 %v5224, 22
      %v5711 = vadd.s32 %v5235, 22
      %v5712 = vadd.s32 %v5246, 22
      %v5713 = vadd.s32 %v5257, 22
      %v5714 = vadd.s32 %v5268, 22
      %v5715 = vadd.s32 %v5279, 22
      %v5716 = vadd.s32 %v5290, 22
      %v5717 = vadd.s32 %v5301, 22
      %v5718 = vadd.s32 %v5312, 22
      %v5719 = vadd.s32 %v5323, 22
      %v5720 = vadd.s32 %v5334, 22
      %v5721 = vadd.s32 %v5345, 22
      %v5722 = vadd.s32 %v5356, 22
      %v5723 = vadd.s32 %v5367, 22
      %v5724 = vadd.s32 %v5378, 22
      %v5725 = vadd.s32 %v5389, 22
      %v5726 = vadd.s32 %v5400, 22
      %v5727 = vadd.s32 %v5411, 22
      %v5728 = vadd.s32 %v5422, 22
      %v5729 = vadd.s32 %v5433, 22
      %v5730 = vadd.s32 %v5444, 22
      %v5731 = vadd.s32 %v5455, 22
      %v5732 = vadd.s32 %v5466, 22
      %v5733 = vadd.s32 %v5477, 22
      %v5734 = vadd.s32 %v5488, 22
      %v5735 = vadd.s32 %v5499, 22
      %v5736 = vadd.s32 %v5510, 22
      %v5737 = vadd.s32 %v5521, 22
      %v5738 = vadd.s32 %v5532, 22
      %v5739 = vadd.s32 %v5543, 22
      %v5740 = vadd.s32 %v5554, 22
      %v5741 = vadd.s32 %v5565, 22
      %v5742 = vsel %vm5654, %v5698, %v5092
      %v5743 = vsel %vm5655, %v5699, %v5103
      %v5744 = vsel %vm5656, %v5700, %v5114
      %v5745 = vsel %vm5657, %v5701, %v5125
      %v5746 = vsel %vm5658, %v5702, %v5136
      %v5747 = vsel %vm5659, %v5703, %v5147
      %v5748 = vsel %vm5660, %v5704, %v5158
      %v5749 = vsel %vm5661, %v5705, %v5169
      %v5750 = vsel %vm5662, %v5706, %v5180
      %v5751 = vsel %vm5663, %v5707, %v5191
      %v5752 = vsel %vm5664, %v5708, %v5202
      %v5753 = vsel %vm5665, %v5709, %v5213
      %v5754 = vsel %vm5666, %v5710, %v5224
      %v5755 = vsel %vm5667, %v5711, %v5235
      %v5756 = vsel %vm5668, %v5712, %v5246
      %v5757 = vsel %vm5669, %v5713, %v5257
      %v5758 = vsel %vm5670, %v5714, %v5268
      %v5759 = vsel %vm5671, %v5715, %v5279
      %v5760 = vsel %vm5672, %v5716, %v5290
      %v5761 = vsel %vm5673, %v5717, %v5301
      %v5762 = vsel %vm5674, %v5718, %v5312
      %v5763 = vsel %vm5675, %v5719, %v5323
      %v5764 = vsel %vm5676, %v5720, %v5334
      %v5765 = vsel %vm5677, %v5721, %v5345
      %v5766 = vsel %vm5678, %v5722, %v5356
      %v5767 = vsel %vm5679, %v5723, %v5367
      %v5768 = vsel %vm5680, %v5724, %v5378
      %v5769 = vsel %vm5681, %v5725, %v5389
      %v5770 = vsel %vm5682, %v5726, %v5400
      %v5771 = vsel %vm5683, %v5727, %v5411
      %v5772 = vsel %vm5684, %v5728, %v5422
      %v5773 = vsel %vm5685, %v5729, %v5433
      %v5774 = vsel %vm5686, %v5730, %v5444
      %v5775 = vsel %vm5687, %v5731, %v5455
      %v5776 = vsel %vm5688, %v5732, %v5466
      %v5777 = vsel %vm5689, %v5733, %v5477
      %v5778 = vsel %vm5690, %v5734, %v5488
      %v5779 = vsel %vm5691, %v5735, %v5499
      %v5780 = vsel %vm5692, %v5736, %v5510
      %v5781 = vsel %vm5693, %v5737, %v5521
      %v5782 = vsel %vm5694, %v5738, %v5532
      %v5783 = vsel %vm5695, %v5739, %v5543
      %v5784 = vsel %vm5696, %v5740, %v5554
      %v5785 = vsel %vm5697, %v5741, %v5565
      %vm5786 = vcmp.lt.s32.totalorder %v5742, 16
      %vm5787 = vcmp.lt.s32.totalorder %v5743, 16
      %vm5788 = vcmp.lt.s32.totalorder %v5744, 16
      %vm5789 = vcmp.lt.s32.totalorder %v5745, 16
      %vm5790 = vcmp.lt.s32.totalorder %v5746, 16
      %vm5791 = vcmp.lt.s32.totalorder %v5747, 16
      %vm5792 = vcmp.lt.s32.totalorder %v5748, 16
      %vm5793 = vcmp.lt.s32.totalorder %v5749, 16
      %vm5794 = vcmp.lt.s32.totalorder %v5750, 16
      %vm5795 = vcmp.lt.s32.totalorder %v5751, 16
      %vm5796 = vcmp.lt.s32.totalorder %v5752, 16
      %vm5797 = vcmp.lt.s32.totalorder %v5753, 16
      %vm5798 = vcmp.lt.s32.totalorder %v5754, 16
      %vm5799 = vcmp.lt.s32.totalorder %v5755, 16
      %vm5800 = vcmp.lt.s32.totalorder %v5756, 16
      %vm5801 = vcmp.lt.s32.totalorder %v5757, 16
      %vm5802 = vcmp.lt.s32.totalorder %v5758, 16
      %vm5803 = vcmp.lt.s32.totalorder %v5759, 16
      %vm5804 = vcmp.lt.s32.totalorder %v5760, 16
      %vm5805 = vcmp.lt.s32.totalorder %v5761, 16
      %vm5806 = vcmp.lt.s32.totalorder %v5762, 16
      %vm5807 = vcmp.lt.s32.totalorder %v5763, 16
      %vm5808 = vcmp.lt.s32.totalorder %v5764, 16
      %vm5809 = vcmp.lt.s32.totalorder %v5765, 16
      %vm5810 = vcmp.lt.s32.totalorder %v5766, 16
      %vm5811 = vcmp.lt.s32.totalorder %v5767, 16
      %vm5812 = vcmp.lt.s32.totalorder %v5768, 16
      %vm5813 = vcmp.lt.s32.totalorder %v5769, 16
      %vm5814 = vcmp.lt.s32.totalorder %v5770, 16
      %vm5815 = vcmp.lt.s32.totalorder %v5771, 16
      %vm5816 = vcmp.lt.s32.totalorder %v5772, 16
      %vm5817 = vcmp.lt.s32.totalorder %v5773, 16
      %vm5818 = vcmp.lt.s32.totalorder %v5774, 16
      %vm5819 = vcmp.lt.s32.totalorder %v5775, 16
      %vm5820 = vcmp.lt.s32.totalorder %v5776, 16
      %vm5821 = vcmp.lt.s32.totalorder %v5777, 16
      %vm5822 = vcmp.lt.s32.totalorder %v5778, 16
      %vm5823 = vcmp.lt.s32.totalorder %v5779, 16
      %vm5824 = vcmp.lt.s32.totalorder %v5780, 16
      %vm5825 = vcmp.lt.s32.totalorder %v5781, 16
      %vm5826 = vcmp.lt.s32.totalorder %v5782, 16
      %vm5827 = vcmp.lt.s32.totalorder %v5783, 16
      %vm5828 = vcmp.lt.s32.totalorder %v5784, 16
      %vm5829 = vcmp.lt.s32.totalorder %v5785, 16
      %v5830 = vsel %vm5786, 1, 0
      %v5831 = vsel %vm5787, 1, 0
      %v5832 = vsel %vm5788, 1, 0
      %v5833 = vsel %vm5789, 1, 0
      %v5834 = vsel %vm5790, 1, 0
      %v5835 = vsel %vm5791, 1, 0
      %v5836 = vsel %vm5792, 1, 0
      %v5837 = vsel %vm5793, 1, 0
      %v5838 = vsel %vm5794, 1, 0
      %v5839 = vsel %vm5795, 1, 0
      %v5840 = vsel %vm5796, 1, 0
      %v5841 = vsel %vm5797, 1, 0
      %v5842 = vsel %vm5798, 1, 0
      %v5843 = vsel %vm5799, 1, 0
      %v5844 = vsel %vm5800, 1, 0
      %v5845 = vsel %vm5801, 1, 0
      %v5846 = vsel %vm5802, 1, 0
      %v5847 = vsel %vm5803, 1, 0
      %v5848 = vsel %vm5804, 1, 0
      %v5849 = vsel %vm5805, 1, 0
      %v5850 = vsel %vm5806, 1, 0
      %v5851 = vsel %vm5807, 1, 0
      %v5852 = vsel %vm5808, 1, 0
      %v5853 = vsel %vm5809, 1, 0
      %v5854 = vsel %vm5810, 1, 0
      %v5855 = vsel %vm5811, 1, 0
      %v5856 = vsel %vm5812, 1, 0
      %v5857 = vsel %vm5813, 1, 0
      %v5858 = vsel %vm5814, 1, 0
      %v5859 = vsel %vm5815, 1, 0
      %v5860 = vsel %vm5816, 1, 0
      %v5861 = vsel %vm5817, 1, 0
      %v5862 = vsel %vm5818, 1, 0
      %v5863 = vsel %vm5819, 1, 0
      %v5864 = vsel %vm5820, 1, 0
      %v5865 = vsel %vm5821, 1, 0
      %v5866 = vsel %vm5822, 1, 0
      %v5867 = vsel %vm5823, 1, 0
      %v5868 = vsel %vm5824, 1, 0
      %v5869 = vsel %vm5825, 1, 0
      %v5870 = vsel %vm5826, 1, 0
      %v5871 = vsel %vm5827, 1, 0
      %v5872 = vsel %vm5828, 1, 0
      %v5873 = vsel %vm5829, 1, 0
      %v5874 = vcvt.s32.f32 %v5830
      %v5875 = vcvt.s32.f32 %v5831
      %v5876 = vcvt.s32.f32 %v5832
      %v5877 = vcvt.s32.f32 %v5833
      %v5878 = vcvt.s32.f32 %v5834
      %v5879 = vcvt.s32.f32 %v5835
      %v5880 = vcvt.s32.f32 %v5836
      %v5881 = vcvt.s32.f32 %v5837
      %v5882 = vcvt.s32.f32 %v5838
      %v5883 = vcvt.s32.f32 %v5839
      %v5884 = vcvt.s32.f32 %v5840
      %v5885 = vcvt.s32.f32 %v5841
      %v5886 = vcvt.s32.f32 %v5842
      %v5887 = vcvt.s32.f32 %v5843
      %v5888 = vcvt.s32.f32 %v5844
      %v5889 = vcvt.s32.f32 %v5845
      %v5890 = vcvt.s32.f32 %v5846
      %v5891 = vcvt.s32.f32 %v5847
      %v5892 = vcvt.s32.f32 %v5848
      %v5893 = vcvt.s32.f32 %v5849
      %v5894 = vcvt.s32.f32 %v5850
      %v5895 = vcvt.s32.f32 %v5851
      %v5896 = vcvt.s32.f32 %v5852
      %v5897 = vcvt.s32.f32 %v5853
      %v5898 = vcvt.s32.f32 %v5854
      %v5899 = vcvt.s32.f32 %v5855
      %v5900 = vcvt.s32.f32 %v5856
      %v5901 = vcvt.s32.f32 %v5857
      %v5902 = vcvt.s32.f32 %v5858
      %v5903 = vcvt.s32.f32 %v5859
      %v5904 = vcvt.s32.f32 %v5860
      %v5905 = vcvt.s32.f32 %v5861
      %v5906 = vcvt.s32.f32 %v5862
      %v5907 = vcvt.s32.f32 %v5863
      %v5908 = vcvt.s32.f32 %v5864
      %v5909 = vcvt.s32.f32 %v5865
      %v5910 = vcvt.s32.f32 %v5866
      %v5911 = vcvt.s32.f32 %v5867
      %v5912 = vcvt.s32.f32 %v5868
      %v5913 = vcvt.s32.f32 %v5869
      %v5914 = vcvt.s32.f32 %v5870
      %v5915 = vcvt.s32.f32 %v5871
      %v5916 = vcvt.s32.f32 %v5872
      %v5917 = vcvt.s32.f32 %v5873
      %v5918 = vmul.f32 %v4863, %v5874
      %v5919 = vmul.f32 %v4866, %v5875
      %v5920 = vmul.f32 %v4871, %v5876
      %v5921 = vmul.f32 %v4874, %v5877
      %v5922 = vmul.f32 %v4879, %v5878
      %v5923 = vmul.f32 %v4882, %v5879
      %v5924 = vmul.f32 %v4887, %v5880
      %v5925 = vmul.f32 %v4890, %v5881
      %v5926 = vmul.f32 %v4895, %v5882
      %v5927 = vmul.f32 %v4898, %v5883
      %v5928 = vmul.f32 %v4903, %v5884
      %v5929 = vmul.f32 %v4906, %v5885
      %v5930 = vmul.f32 %v4911, %v5886
      %v5931 = vmul.f32 %v4914, %v5887
      %v5932 = vmul.f32 %v4919, %v5888
      %v5933 = vmul.f32 %v4922, %v5889
      %v5934 = vmul.f32 %v4927, %v5890
      %v5935 = vmul.f32 %v4930, %v5891
      %v5936 = vmul.f32 %v4935, %v5892
      %v5937 = vmul.f32 %v4938, %v5893
      %v5938 = vmul.f32 %v4943, %v5894
      %v5939 = vmul.f32 %v4946, %v5895
      %v5940 = vmul.f32 %v4951, %v5896
      %v5941 = vmul.f32 %v4954, %v5897
      %v5942 = vmul.f32 %v4959, %v5898
      %v5943 = vmul.f32 %v4962, %v5899
      %v5944 = vmul.f32 %v4967, %v5900
      %v5945 = vmul.f32 %v4970, %v5901
      %v5946 = vmul.f32 %v4975, %v5902
      %v5947 = vmul.f32 %v4978, %v5903
      %v5948 = vmul.f32 %v4983, %v5904
      %v5949 = vmul.f32 %v4986, %v5905
      %v5950 = vmul.f32 %v4991, %v5906
      %v5951 = vmul.f32 %v4994, %v5907
      %v5952 = vmul.f32 %v4999, %v5908
      %v5953 = vmul.f32 %v5002, %v5909
      %v5954 = vmul.f32 %v5007, %v5910
      %v5955 = vmul.f32 %v5010, %v5911
      %v5956 = vmul.f32 %v5015, %v5912
      %v5957 = vmul.f32 %v5018, %v5913
      %v5958 = vmul.f32 %v5023, %v5914
      %v5959 = vmul.f32 %v5026, %v5915
      %v5960 = vmul.f32 %v5031, %v5916
      %v5961 = vmul.f32 %v5034, %v5917
      %v5962 = vsel %vm1974, %v5918, 0.0
      %v5963 = vsel %vm1974, %v5919, 0.0
      %v5964 = vadd.f32 %v5962, %v5963
      %v5965 = vsel %vm1974, %v5920, 0.0
      %v5966 = vadd.f32 %v5964, %v5965
      %v5967 = vsel %vm1974, %v5921, 0.0
      %v5968 = vadd.f32 %v5966, %v5967
      %v5969 = vsel %vm1974, %v5922, 0.0
      %v5970 = vadd.f32 %v5968, %v5969
      %v5971 = vsel %vm1974, %v5923, 0.0
      %v5972 = vadd.f32 %v5970, %v5971
      %v5973 = vsel %vm1974, %v5924, 0.0
      %v5974 = vadd.f32 %v5972, %v5973
      %v5975 = vsel %vm1974, %v5925, 0.0
      %v5976 = vadd.f32 %v5974, %v5975
      %v5977 = vsel %vm1974, %v5926, 0.0
      %v5978 = vadd.f32 %v5976, %v5977
      %v5979 = vsel %vm1974, %v5927, 0.0
      %v5980 = vadd.f32 %v5978, %v5979
      %v5981 = vsel %vm1974, %v5928, 0.0
      %v5982 = vadd.f32 %v5980, %v5981
      %v5983 = vsel %vm1974, %v5929, 0.0
      %v5984 = vadd.f32 %v5982, %v5983
      %v5985 = vsel %vm1974, %v5930, 0.0
      %v5986 = vadd.f32 %v5984, %v5985
      %v5987 = vsel %vm1974, %v5931, 0.0
      %v5988 = vadd.f32 %v5986, %v5987
      %v5989 = vsel %vm1974, %v5932, 0.0
      %v5990 = vadd.f32 %v5988, %v5989
      %v5991 = vsel %vm1974, %v5933, 0.0
      %v5992 = vadd.f32 %v5990, %v5991
      %v5993 = vsel %vm1974, %v5934, 0.0
      %v5994 = vadd.f32 %v5992, %v5993
      %v5995 = vsel %vm1974, %v5935, 0.0
      %v5996 = vadd.f32 %v5994, %v5995
      %v5997 = vsel %vm1974, %v5936, 0.0
      %v5998 = vadd.f32 %v5996, %v5997
      %v5999 = vsel %vm1974, %v5937, 0.0
      %v6000 = vadd.f32 %v5998, %v5999
      %v6001 = vsel %vm1974, %v5938, 0.0
      %v6002 = vadd.f32 %v6000, %v6001
      %v6003 = vsel %vm1974, %v5939, 0.0
      %v6004 = vadd.f32 %v6002, %v6003
      %v6005 = vsel %vm1974, %v5940, 0.0
      %v6006 = vadd.f32 %v6004, %v6005
      %v6007 = vsel %vm1974, %v5941, 0.0
      %v6008 = vadd.f32 %v6006, %v6007
      %v6009 = vsel %vm1974, %v5942, 0.0
      %v6010 = vadd.f32 %v6008, %v6009
      %v6011 = vsel %vm1974, %v5943, 0.0
      %v6012 = vadd.f32 %v6010, %v6011
      %v6013 = vsel %vm1974, %v5944, 0.0
      %v6014 = vadd.f32 %v6012, %v6013
      %v6015 = vsel %vm1974, %v5945, 0.0
      %v6016 = vadd.f32 %v6014, %v6015
      %v6017 = vsel %vm1974, %v5946, 0.0
      %v6018 = vadd.f32 %v6016, %v6017
      %v6019 = vsel %vm1974, %v5947, 0.0
      %v6020 = vadd.f32 %v6018, %v6019
      %v6021 = vsel %vm1974, %v5948, 0.0
      %v6022 = vadd.f32 %v6020, %v6021
      %v6023 = vsel %vm1974, %v5949, 0.0
      %v6024 = vadd.f32 %v6022, %v6023
      %v6025 = vsel %vm1974, %v5950, 0.0
      %v6026 = vadd.f32 %v6024, %v6025
      %v6027 = vsel %vm1974, %v5951, 0.0
      %v6028 = vadd.f32 %v6026, %v6027
      %v6029 = vsel %vm1974, %v5952, 0.0
      %v6030 = vadd.f32 %v6028, %v6029
      %v6031 = vsel %vm1974, %v5953, 0.0
      %v6032 = vadd.f32 %v6030, %v6031
      %v6033 = vsel %vm1974, %v5954, 0.0
      %v6034 = vadd.f32 %v6032, %v6033
      %v6035 = vsel %vm1974, %v5955, 0.0
      %v6036 = vadd.f32 %v6034, %v6035
      %v6037 = vsel %vm1974, %v5956, 0.0
      %v6038 = vadd.f32 %v6036, %v6037
      %v6039 = vsel %vm1974, %v5957, 0.0
      %v6040 = vadd.f32 %v6038, %v6039
      %v6041 = vsel %vm1974, %v5958, 0.0
      %v6042 = vadd.f32 %v6040, %v6041
      %v6043 = vsel %vm1974, %v5959, 0.0
      %v6044 = vadd.f32 %v6042, %v6043
      %v6045 = vsel %vm1974, %v5960, 0.0
      %v6046 = vadd.f32 %v6044, %v6045
      %vm6047 = vcmask 58368
      %v6048 = vsel %vm6047, %v5961, 0.0
      %v6049 = vadd.f32 %v6046, %v6048
      %v6050 = vrot.slane %v6049, 4
      %v6051 = vadd.f32 %v6049, %v6050
      %v6052 = vrot.slane %v6051, 2
      %v6053 = vadd.f32 %v6051, %v6052
      %v6054 = vrot.slane %v6053, 1
      %v6055 = vadd.f32 %v6053, %v6054
      %v6056 = vmul.f32 %v6055, 0.00390625
      %v6057 = vmul.f32 %v5918, %v4863
      %v6058 = vmul.f32 %v5919, %v4866
      %v6059 = vmul.f32 %v5920, %v4871
      %v6060 = vmul.f32 %v5921, %v4874
      %v6061 = vmul.f32 %v5922, %v4879
      %v6062 = vmul.f32 %v5923, %v4882
      %v6063 = vmul.f32 %v5924, %v4887
      %v6064 = vmul.f32 %v5925, %v4890
      %v6065 = vmul.f32 %v5926, %v4895
      %v6066 = vmul.f32 %v5927, %v4898
      %v6067 = vmul.f32 %v5928, %v4903
      %v6068 = vmul.f32 %v5929, %v4906
      %v6069 = vmul.f32 %v5930, %v4911
      %v6070 = vmul.f32 %v5931, %v4914
      %v6071 = vmul.f32 %v5932, %v4919
      %v6072 = vmul.f32 %v5933, %v4922
      %v6073 = vmul.f32 %v5934, %v4927
      %v6074 = vmul.f32 %v5935, %v4930
      %v6075 = vmul.f32 %v5936, %v4935
      %v6076 = vmul.f32 %v5937, %v4938
      %v6077 = vmul.f32 %v5938, %v4943
      %v6078 = vmul.f32 %v5939, %v4946
      %v6079 = vmul.f32 %v5940, %v4951
      %v6080 = vmul.f32 %v5941, %v4954
      %v6081 = vmul.f32 %v5942, %v4959
      %v6082 = vmul.f32 %v5943, %v4962
      %v6083 = vmul.f32 %v5944, %v4967
      %v6084 = vmul.f32 %v5945, %v4970
      %v6085 = vmul.f32 %v5946, %v4975
      %v6086 = vmul.f32 %v5947, %v4978
      %v6087 = vmul.f32 %v5948, %v4983
      %v6088 = vmul.f32 %v5949, %v4986
      %v6089 = vmul.f32 %v5950, %v4991
      %v6090 = vmul.f32 %v5951, %v4994
      %v6091 = vmul.f32 %v5952, %v4999
      %v6092 = vmul.f32 %v5953, %v5002
      %v6093 = vmul.f32 %v5954, %v5007
      %v6094 = vmul.f32 %v5955, %v5010
      %v6095 = vmul.f32 %v5956, %v5015
      %v6096 = vmul.f32 %v5957, %v5018
      %v6097 = vmul.f32 %v5958, %v5023
      %v6098 = vmul.f32 %v5959, %v5026
      %v6099 = vmul.f32 %v5960, %v5031
      %v6100 = vmul.f32 %v5961, %v5034
      %v6101 = vsel %vm1974, %v6057, 0.0
      %v6102 = vsel %vm1974, %v6058, 0.0
      %v6103 = vadd.f32 %v6101, %v6102
      %v6104 = vsel %vm1974, %v6059, 0.0
      %v6105 = vadd.f32 %v6103, %v6104
      %v6106 = vsel %vm1974, %v6060, 0.0
      %v6107 = vadd.f32 %v6105, %v6106
      %v6108 = vsel %vm1974, %v6061, 0.0
      %v6109 = vadd.f32 %v6107, %v6108
      %v6110 = vsel %vm1974, %v6062, 0.0
      %v6111 = vadd.f32 %v6109, %v6110
      %v6112 = vsel %vm1974, %v6063, 0.0
      %v6113 = vadd.f32 %v6111, %v6112
      %v6114 = vsel %vm1974, %v6064, 0.0
      %v6115 = vadd.f32 %v6113, %v6114
      %v6116 = vsel %vm1974, %v6065, 0.0
      %v6117 = vadd.f32 %v6115, %v6116
      %v6118 = vsel %vm1974, %v6066, 0.0
      %v6119 = vadd.f32 %v6117, %v6118
      %v6120 = vsel %vm1974, %v6067, 0.0
      %v6121 = vadd.f32 %v6119, %v6120
      %v6122 = vsel %vm1974, %v6068, 0.0
      %v6123 = vadd.f32 %v6121, %v6122
      %v6124 = vsel %vm1974, %v6069, 0.0
      %v6125 = vadd.f32 %v6123, %v6124
      %v6126 = vsel %vm1974, %v6070, 0.0
      %v6127 = vadd.f32 %v6125, %v6126
      %v6128 = vsel %vm1974, %v6071, 0.0
      %v6129 = vadd.f32 %v6127, %v6128
      %v6130 = vsel %vm1974, %v6072, 0.0
      %v6131 = vadd.f32 %v6129, %v6130
      %v6132 = vsel %vm1974, %v6073, 0.0
      %v6133 = vadd.f32 %v6131, %v6132
      %v6134 = vsel %vm1974, %v6074, 0.0
      %v6135 = vadd.f32 %v6133, %v6134
      %v6136 = vsel %vm1974, %v6075, 0.0
      %v6137 = vadd.f32 %v6135, %v6136
      %v6138 = vsel %vm1974, %v6076, 0.0
      %v6139 = vadd.f32 %v6137, %v6138
      %v6140 = vsel %vm1974, %v6077, 0.0
      %v6141 = vadd.f32 %v6139, %v6140
      %v6142 = vsel %vm1974, %v6078, 0.0
      %v6143 = vadd.f32 %v6141, %v6142
      %v6144 = vsel %vm1974, %v6079, 0.0
      %v6145 = vadd.f32 %v6143, %v6144
      %v6146 = vsel %vm1974, %v6080, 0.0
      %v6147 = vadd.f32 %v6145, %v6146
      %v6148 = vsel %vm1974, %v6081, 0.0
      %v6149 = vadd.f32 %v6147, %v6148
      %v6150 = vsel %vm1974, %v6082, 0.0
      %v6151 = vadd.f32 %v6149, %v6150
      %v6152 = vsel %vm1974, %v6083, 0.0
      %v6153 = vadd.f32 %v6151, %v6152
      %v6154 = vsel %vm1974, %v6084, 0.0
      %v6155 = vadd.f32 %v6153, %v6154
      %v6156 = vsel %vm1974, %v6085, 0.0
      %v6157 = vadd.f32 %v6155, %v6156
      %v6158 = vsel %vm1974, %v6086, 0.0
      %v6159 = vadd.f32 %v6157, %v6158
      %v6160 = vsel %vm1974, %v6087, 0.0
      %v6161 = vadd.f32 %v6159, %v6160
      %v6162 = vsel %vm1974, %v6088, 0.0
      %v6163 = vadd.f32 %v6161, %v6162
      %v6164 = vsel %vm1974, %v6089, 0.0
      %v6165 = vadd.f32 %v6163, %v6164
      %v6166 = vsel %vm1974, %v6090, 0.0
      %v6167 = vadd.f32 %v6165, %v6166
      %v6168 = vsel %vm1974, %v6091, 0.0
      %v6169 = vadd.f32 %v6167, %v6168
      %v6170 = vsel %vm1974, %v6092, 0.0
      %v6171 = vadd.f32 %v6169, %v6170
      %v6172 = vsel %vm1974, %v6093, 0.0
      %v6173 = vadd.f32 %v6171, %v6172
      %v6174 = vsel %vm1974, %v6094, 0.0
      %v6175 = vadd.f32 %v6173, %v6174
      %v6176 = vsel %vm1974, %v6095, 0.0
      %v6177 = vadd.f32 %v6175, %v6176
      %v6178 = vsel %vm1974, %v6096, 0.0
      %v6179 = vadd.f32 %v6177, %v6178
      %v6180 = vsel %vm1974, %v6097, 0.0
      %v6181 = vadd.f32 %v6179, %v6180
      %v6182 = vsel %vm1974, %v6098, 0.0
      %v6183 = vadd.f32 %v6181, %v6182
      %v6184 = vsel %vm1974, %v6099, 0.0
      %v6185 = vadd.f32 %v6183, %v6184
      %v6186 = vsel %vm6047, %v6100, 0.0
      %v6187 = vadd.f32 %v6185, %v6186
      %v6188 = vrot.slane %v6187, 4
      %v6189 = vadd.f32 %v6187, %v6188
      %v6190 = vrot.slane %v6189, 2
      %v6191 = vadd.f32 %v6189, %v6190
      %v6192 = vrot.slane %v6191, 1
      %v6193 = vadd.f32 %v6191, %v6192
      %v6194 = vmul.f32 %v6193, 0.00390625
      %v6195 = vmul.f32 %v6056, %v6056
      %v6196 = vsub.f32 %v6194, %v6195
      %v6197 = vmax.f32 %v6196, 0.0
      %v6198 = vsub.f32 %v4863, %v6056
      %v6199 = vsub.f32 %v4866, %v6056
      %v6200 = vsub.f32 %v4871, %v6056
      %v6201 = vsub.f32 %v4874, %v6056
      %v6202 = vsub.f32 %v4879, %v6056
      %v6203 = vsub.f32 %v4882, %v6056
      %v6204 = vsub.f32 %v4887, %v6056
      %v6205 = vsub.f32 %v4890, %v6056
      %v6206 = vsub.f32 %v4895, %v6056
      %v6207 = vsub.f32 %v4898, %v6056
      %v6208 = vsub.f32 %v4903, %v6056
      %v6209 = vsub.f32 %v4906, %v6056
      %v6210 = vsub.f32 %v4911, %v6056
      %v6211 = vsub.f32 %v4914, %v6056
      %v6212 = vsub.f32 %v4919, %v6056
      %v6213 = vsub.f32 %v4922, %v6056
      %v6214 = vsub.f32 %v4927, %v6056
      %v6215 = vsub.f32 %v4930, %v6056
      %v6216 = vsub.f32 %v4935, %v6056
      %v6217 = vsub.f32 %v4938, %v6056
      %v6218 = vsub.f32 %v4943, %v6056
      %v6219 = vsub.f32 %v4946, %v6056
      %v6220 = vsub.f32 %v4951, %v6056
      %v6221 = vsub.f32 %v4954, %v6056
      %v6222 = vsub.f32 %v4959, %v6056
      %v6223 = vsub.f32 %v4962, %v6056
      %v6224 = vsub.f32 %v4967, %v6056
      %v6225 = vsub.f32 %v4970, %v6056
      %v6226 = vsub.f32 %v4975, %v6056
      %v6227 = vsub.f32 %v4978, %v6056
      %v6228 = vsub.f32 %v4983, %v6056
      %v6229 = vsub.f32 %v4986, %v6056
      %v6230 = vsub.f32 %v4991, %v6056
      %v6231 = vsub.f32 %v4994, %v6056
      %v6232 = vsub.f32 %v4999, %v6056
      %v6233 = vsub.f32 %v5002, %v6056
      %v6234 = vsub.f32 %v5007, %v6056
      %v6235 = vsub.f32 %v5010, %v6056
      %v6236 = vsub.f32 %v5015, %v6056
      %v6237 = vsub.f32 %v5018, %v6056
      %v6238 = vsub.f32 %v5023, %v6056
      %v6239 = vsub.f32 %v5026, %v6056
      %v6240 = vsub.f32 %v5031, %v6056
      %v6241 = vsub.f32 %v5034, %v6056
      %v6242 = vadd.f32 %v6197, 1e-05
      %v6243 = vrsqrt.pop %v6242
      %v6244 = vmul.f32 %v6198, %v6243
      %v6245 = vmul.f32 %v6199, %v6243
      %v6246 = vmul.f32 %v6200, %v6243
      %v6247 = vmul.f32 %v6201, %v6243
      %v6248 = vmul.f32 %v6202, %v6243
      %v6249 = vmul.f32 %v6203, %v6243
      %v6250 = vmul.f32 %v6204, %v6243
      %v6251 = vmul.f32 %v6205, %v6243
      %v6252 = vmul.f32 %v6206, %v6243
      %v6253 = vmul.f32 %v6207, %v6243
      %v6254 = vmul.f32 %v6208, %v6243
      %v6255 = vmul.f32 %v6209, %v6243
      %v6256 = vmul.f32 %v6210, %v6243
      %v6257 = vmul.f32 %v6211, %v6243
      %v6258 = vmul.f32 %v6212, %v6243
      %v6259 = vmul.f32 %v6213, %v6243
      %v6260 = vmul.f32 %v6214, %v6243
      %v6261 = vmul.f32 %v6215, %v6243
      %v6262 = vmul.f32 %v6216, %v6243
      %v6263 = vmul.f32 %v6217, %v6243
      %v6264 = vmul.f32 %v6218, %v6243
      %v6265 = vmul.f32 %v6219, %v6243
      %v6266 = vmul.f32 %v6220, %v6243
      %v6267 = vmul.f32 %v6221, %v6243
      %v6268 = vmul.f32 %v6222, %v6243
      %v6269 = vmul.f32 %v6223, %v6243
      %v6270 = vmul.f32 %v6224, %v6243
      %v6271 = vmul.f32 %v6225, %v6243
      %v6272 = vmul.f32 %v6226, %v6243
      %v6273 = vmul.f32 %v6227, %v6243
      %v6274 = vmul.f32 %v6228, %v6243
      %v6275 = vmul.f32 %v6229, %v6243
      %v6276 = vmul.f32 %v6230, %v6243
      %v6277 = vmul.f32 %v6231, %v6243
      %v6278 = vmul.f32 %v6232, %v6243
      %v6279 = vmul.f32 %v6233, %v6243
      %v6280 = vmul.f32 %v6234, %v6243
      %v6281 = vmul.f32 %v6235, %v6243
      %v6282 = vmul.f32 %v6236, %v6243
      %v6283 = vmul.f32 %v6237, %v6243
      %v6284 = vmul.f32 %v6238, %v6243
      %v6285 = vmul.f32 %v6239, %v6243
      %v6286 = vmul.f32 %v6240, %v6243
      %v6287 = vmul.f32 %v6241, %v6243
      %v6288 = vmax.f32 %v6244, 0.0
      %v6289 = vmax.f32 %v6245, 0.0
      %v6290 = vmax.f32 %v6246, 0.0
      %v6291 = vmax.f32 %v6247, 0.0
      %v6292 = vmax.f32 %v6248, 0.0
      %v6293 = vmax.f32 %v6249, 0.0
      %v6294 = vmax.f32 %v6250, 0.0
      %v6295 = vmax.f32 %v6251, 0.0
      %v6296 = vmax.f32 %v6252, 0.0
      %v6297 = vmax.f32 %v6253, 0.0
      %v6298 = vmax.f32 %v6254, 0.0
      %v6299 = vmax.f32 %v6255, 0.0
      %v6300 = vmax.f32 %v6256, 0.0
      %v6301 = vmax.f32 %v6257, 0.0
      %v6302 = vmax.f32 %v6258, 0.0
      %v6303 = vmax.f32 %v6259, 0.0
      %v6304 = vmax.f32 %v6260, 0.0
      %v6305 = vmax.f32 %v6261, 0.0
      %v6306 = vmax.f32 %v6262, 0.0
      %v6307 = vmax.f32 %v6263, 0.0
      %v6308 = vmax.f32 %v6264, 0.0
      %v6309 = vmax.f32 %v6265, 0.0
      %v6310 = vmax.f32 %v6266, 0.0
      %v6311 = vmax.f32 %v6267, 0.0
      %v6312 = vmax.f32 %v6268, 0.0
      %v6313 = vmax.f32 %v6269, 0.0
      %v6314 = vmax.f32 %v6270, 0.0
      %v6315 = vmax.f32 %v6271, 0.0
      %v6316 = vmax.f32 %v6272, 0.0
      %v6317 = vmax.f32 %v6273, 0.0
      %v6318 = vmax.f32 %v6274, 0.0
      %v6319 = vmax.f32 %v6275, 0.0
      %v6320 = vmax.f32 %v6276, 0.0
      %v6321 = vmax.f32 %v6277, 0.0
      %v6322 = vmax.f32 %v6278, 0.0
      %v6323 = vmax.f32 %v6279, 0.0
      %v6324 = vmax.f32 %v6280, 0.0
      %v6325 = vmax.f32 %v6281, 0.0
      %v6326 = vmax.f32 %v6282, 0.0
      %v6327 = vmax.f32 %v6283, 0.0
      %v6328 = vmax.f32 %v6284, 0.0
      %v6329 = vmax.f32 %v6285, 0.0
      %v6330 = vmax.f32 %v6286, 0.0
      %v6331 = vmax.f32 %v6287, 0.0
      %v6332 = vpack.c.bf16 %v6289, %v6288
      %v6333 = vpack.c.bf16 %v6291, %v6290
      %v6334 = vpack.c.bf16 %v6293, %v6292
      %v6335 = vpack.c.bf16 %v6295, %v6294
      %v6336 = vpack.c.bf16 %v6297, %v6296
      %v6337 = vpack.c.bf16 %v6299, %v6298
      %v6338 = vpack.c.bf16 %v6301, %v6300
      %v6339 = vpack.c.bf16 %v6303, %v6302
      %v6340 = vpack.c.bf16 %v6305, %v6304
      %v6341 = vpack.c.bf16 %v6307, %v6306
      %v6342 = vpack.c.bf16 %v6309, %v6308
      %v6343 = vpack.c.bf16 %v6311, %v6310
      %v6344 = vpack.c.bf16 %v6313, %v6312
      %v6345 = vpack.c.bf16 %v6315, %v6314
      %v6346 = vpack.c.bf16 %v6317, %v6316
      %v6347 = vpack.c.bf16 %v6319, %v6318
      %v6348 = vpack.c.bf16 %v6321, %v6320
      %v6349 = vpack.c.bf16 %v6323, %v6322
      %v6350 = vpack.c.bf16 %v6325, %v6324
      %v6351 = vpack.c.bf16 %v6327, %v6326
      %v6352 = vpack.c.bf16 %v6329, %v6328
      %v6353 = vpack.c.bf16 %v6331, %v6330
      %v6376 = vunpack.c.l.b16 %v6332
      %v6377 = vunpack.c.h.b16 %v6332
      %v6378 = vunpack.c.l.b16 %v6333
      %v6379 = vunpack.c.h.b16 %v6333
      %v6380 = vunpack.c.l.b16 %v6334
      %v6381 = vunpack.c.h.b16 %v6334
      %v6382 = vunpack.c.l.b16 %v6335
      %v6383 = vunpack.c.h.b16 %v6335
      %v6384 = vunpack.c.l.b16 %v6336
      %v6385 = vunpack.c.h.b16 %v6336
      %v6386 = vunpack.c.l.b16 %v6337
      %v6387 = vunpack.c.h.b16 %v6337
      %v6388 = vunpack.c.l.b16 %v6338
      %v6389 = vunpack.c.h.b16 %v6338
      %v6390 = vunpack.c.l.b16 %v6339
      %v6391 = vunpack.c.h.b16 %v6339
      %v6392 = vunpack.c.l.b16 %v6340
      %v6393 = vunpack.c.h.b16 %v6340
      %v6394 = vunpack.c.l.b16 %v6341
      %v6395 = vunpack.c.h.b16 %v6341
      %v6396 = vunpack.c.l.b16 %v6342
      %v6397 = vunpack.c.h.b16 %v6342
      %v6398 = vunpack.c.l.b16 %v6343
      %v6399 = vunpack.c.h.b16 %v6343
      %v6400 = vunpack.c.l.b16 %v6344
      %v6401 = vunpack.c.h.b16 %v6344
      %v6402 = vunpack.c.l.b16 %v6345
      %v6403 = vunpack.c.h.b16 %v6345
      %v6404 = vunpack.c.l.b16 %v6346
      %v6405 = vunpack.c.h.b16 %v6346
      %v6406 = vunpack.c.l.b16 %v6347
      %v6407 = vunpack.c.h.b16 %v6347
      %v6408 = vunpack.c.l.b16 %v6348
      %v6409 = vunpack.c.h.b16 %v6348
      %v6410 = vunpack.c.l.b16 %v6349
      %v6411 = vunpack.c.h.b16 %v6349
      %v6412 = vunpack.c.l.b16 %v6350
      %v6413 = vunpack.c.h.b16 %v6350
      %v6414 = vunpack.c.l.b16 %v6351
      %v6415 = vunpack.c.h.b16 %v6351
      %v6416 = vunpack.c.l.b16 %v6352
      %v6417 = vunpack.c.h.b16 %v6352
      %v6418 = vunpack.c.l.b16 %v6353
      %v6419 = vunpack.c.h.b16 %v6353
      %v6420 = vpack.c.b16 %v6376, %v6376
      %v6421 = vpack.c.b16 %v6377, %v6377
      %v6422 = vpack.c.b16 %v6378, %v6378
      %v6423 = vpack.c.b16 %v6379, %v6379
      %v6424 = vpack.c.b16 %v6380, %v6380
      %v6425 = vpack.c.b16 %v6381, %v6381
      %v6426 = vpack.c.b16 %v6382, %v6382
      %v6427 = vpack.c.b16 %v6383, %v6383
      %v6428 = vpack.c.b16 %v6384, %v6384
      %v6429 = vpack.c.b16 %v6385, %v6385
      %v6430 = vpack.c.b16 %v6386, %v6386
      %v6431 = vpack.c.b16 %v6387, %v6387
      %v6432 = vpack.c.b16 %v6388, %v6388
      %v6433 = vpack.c.b16 %v6389, %v6389
      %v6434 = vpack.c.b16 %v6390, %v6390
      %v6435 = vpack.c.b16 %v6391, %v6391
      %v6436 = vpack.c.b16 %v6392, %v6392
      %v6437 = vpack.c.b16 %v6393, %v6393
      %v6438 = vpack.c.b16 %v6394, %v6394
      %v6439 = vpack.c.b16 %v6395, %v6395
      %v6440 = vpack.c.b16 %v6396, %v6396
      %v6441 = vpack.c.b16 %v6397, %v6397
      %v6442 = vpack.c.b16 %v6398, %v6398
      %v6443 = vpack.c.b16 %v6399, %v6399
      %v6444 = vpack.c.b16 %v6400, %v6400
      %v6445 = vpack.c.b16 %v6401, %v6401
      %v6446 = vpack.c.b16 %v6402, %v6402
      %v6447 = vpack.c.b16 %v6403, %v6403
      %v6448 = vpack.c.b16 %v6404, %v6404
      %v6449 = vpack.c.b16 %v6405, %v6405
      %v6450 = vpack.c.b16 %v6406, %v6406
      %v6451 = vpack.c.b16 %v6407, %v6407
      %v6452 = vpack.c.b16 %v6408, %v6408
      %v6453 = vpack.c.b16 %v6409, %v6409
      %v6454 = vpack.c.b16 %v6410, %v6410
      %v6455 = vpack.c.b16 %v6411, %v6411
      %v6456 = vpack.c.b16 %v6412, %v6412
      %v6457 = vpack.c.b16 %v6413, %v6413
      %v6458 = vpack.c.b16 %v6414, %v6414
      %v6459 = vpack.c.b16 %v6415, %v6415
      %v6460 = vpack.c.b16 %v6416, %v6416
      %v6461 = vpack.c.b16 %v6417, %v6417
      %v6462 = vpack.c.b16 %v6418, %v6418
      %v6463 = vpack.c.b16 %v6419, %v6419
      %vm6508 = vcmask 60416
      %6509 = vst.msk [vmem:[%s143] sm:$0xf] %vm6508, %v6420
      %6510 = vst.msk [vmem:[%s143 + $0x4] sm:$0xf] %vm6508, %v6421
      %6511 = vst.msk [vmem:[%s143 + $0x8] sm:$0xf] %vm6508, %v6422
      %6512 = vst.msk [vmem:[%s143 + $0xc] sm:$0xf] %vm6508, %v6423
      %6513 = vst.msk [vmem:[%s143 + $0x10] sm:$0xf] %vm6508, %v6424
      %6514 = vst.msk [vmem:[%s143 + $0x14] sm:$0xf] %vm6508, %v6425
      %6515 = vst.msk [vmem:[%s143 + $0x18] sm:$0xf] %vm6508, %v6426
      %6516 = vst.msk [vmem:[%s143 + $0x1c] sm:$0xf] %vm6508, %v6427
      %6517 = vst.msk [vmem:[%s143 + $0x20] sm:$0xf] %vm6508, %v6428
      %6518 = vst.msk [vmem:[%s143 + $0x24] sm:$0xf] %vm6508, %v6429
      %6519 = vst.msk [vmem:[%s143 + $0x28] sm:$0xf] %vm6508, %v6430
      %6520 = vst.msk [vmem:[%s143 + $0x2c] sm:$0xf] %vm6508, %v6431
      %6521 = vst.msk [vmem:[%s143 + $0x30] sm:$0xf] %vm6508, %v6432
      %6522 = vst.msk [vmem:[%s143 + $0x34] sm:$0xf] %vm6508, %v6433
      %6523 = vst.msk [vmem:[%s143 + $0x38] sm:$0xf] %vm6508, %v6434
      %6524 = vst.msk [vmem:[%s143 + $0x3c] sm:$0xf] %vm6508, %v6435
      %6525 = vst.msk [vmem:[%s143 + $0x40] sm:$0xf] %vm6508, %v6436
      %6526 = vst.msk [vmem:[%s143 + $0x44] sm:$0xf] %vm6508, %v6437
      %6527 = vst.msk [vmem:[%s143 + $0x48] sm:$0xf] %vm6508, %v6438
      %6528 = vst.msk [vmem:[%s143 + $0x4c] sm:$0xf] %vm6508, %v6439
      %6529 = vst.msk [vmem:[%s143 + $0x50] sm:$0xf] %vm6508, %v6440
      %6530 = vst.msk [vmem:[%s143 + $0x54] sm:$0xf] %vm6508, %v6441
      %6531 = vst.msk [vmem:[%s143 + $0x58] sm:$0xf] %vm6508, %v6442
      %6532 = vst.msk [vmem:[%s143 + $0x5c] sm:$0xf] %vm6508, %v6443
      %6533 = vst.msk [vmem:[%s143 + $0x60] sm:$0xf] %vm6508, %v6444
      %6534 = vst.msk [vmem:[%s143 + $0x64] sm:$0xf] %vm6508, %v6445
      %6535 = vst.msk [vmem:[%s143 + $0x68] sm:$0xf] %vm6508, %v6446
      %6536 = vst.msk [vmem:[%s143 + $0x6c] sm:$0xf] %vm6508, %v6447
      %6537 = vst.msk [vmem:[%s143 + $0x70] sm:$0xf] %vm6508, %v6448
      %6538 = vst.msk [vmem:[%s143 + $0x74] sm:$0xf] %vm6508, %v6449
      %6539 = vst.msk [vmem:[%s143 + $0x78] sm:$0xf] %vm6508, %v6450
      %6540 = vst.msk [vmem:[%s143 + $0x7c] sm:$0xf] %vm6508, %v6451
      %6541 = vst.msk [vmem:[%s143 + $0x80] sm:$0xf] %vm6508, %v6452
      %6542 = vst.msk [vmem:[%s143 + $0x84] sm:$0xf] %vm6508, %v6453
      %6543 = vst.msk [vmem:[%s143 + $0x88] sm:$0xf] %vm6508, %v6454
      %6544 = vst.msk [vmem:[%s143 + $0x8c] sm:$0xf] %vm6508, %v6455
      %6545 = vst.msk [vmem:[%s143 + $0x90] sm:$0xf] %vm6508, %v6456
      %6546 = vst.msk [vmem:[%s143 + $0x94] sm:$0xf] %vm6508, %v6457
      %6547 = vst.msk [vmem:[%s143 + $0x98] sm:$0xf] %vm6508, %v6458
      %6548 = vst.msk [vmem:[%s143 + $0x9c] sm:$0xf] %vm6508, %v6459
      %6549 = vst.msk [vmem:[%s143 + $0xa0] sm:$0xf] %vm6508, %v6460
      %6550 = vst.msk [vmem:[%s143 + $0xa4] sm:$0xf] %vm6508, %v6461
      %6551 = vst.msk [vmem:[%s143 + $0xa8] sm:$0xf] %vm6508, %v6462
      %vm6552 = vcmask 57344
      %6553 = vst.msk [vmem:[%s143 + $0xac] sm:$0x1] %vm6552, %v6463
      %p6554 = scmp.lt.s32.totalorder %s13, 1
      %s6555 = scalar_select %p6554, %s13, 1
      %s6556 = smul.addr %s6555, 44
      %s6557 = smul.addr %s6556, 4
      %s6558 = scalar_lea.vmem %s2, %s6557
      // Predicated region
      $region29: #{hdr_resnet_encoder_clear.6} parent=27 // pred_check
        %p6559 = pneg %p78
      $region30: #{hdr_resnet_encoder_clear.6} parent=27 // pred_check_branch
        %6561 = sbr.rel (%p6559) target = $region32
      $region31: #{hdr_resnet_encoder_clear.6} parent=27 // pred_region
        _
      $region32: #{hdr_resnet_encoder_clear.6} parent=27 // pred_fallthru
        _
    $region28: #{hdr_resnet_encoder_clear.6} parent=5 // pred_fallthru
      _
    %p6562 = scmp.le.s32.totalorder 2, %s8
    // Predicated region
    $region33: #{hdr_resnet_encoder_clear.6} parent=5 // pred_check
      %p6563 = pneg %p6562
    $region34: #{hdr_resnet_encoder_clear.6} parent=5 // pred_check_branch
      %6565 = sbr.rel (%p6563) target = $region36
    $region35: #{hdr_resnet_encoder_clear.6} parent=5 // pred_region
      %s6566 = ssub.s32 %s8, 2
      // Predicated region
      $region37: #{hdr_resnet_encoder_clear.6} parent=35 // pred_check
        %p6567 = pneg %p84
      $region38: #{hdr_resnet_encoder_clear.6} parent=35 // pred_check_branch
        %6569 = sbr.rel (%p6567) target = $region40
      $region39: #{hdr_resnet_encoder_clear.6} parent=35 // pred_region
        %p6570 = scmp.lt.s32.totalorder %s14, 1
        %s6571 = scalar_select %p6570, %s14, 1
        %s6572 = smul.addr %s6571, 44
        %s6573 = smul.addr %s6572, 4
        %s6574 = scalar_lea.vmem %s2, %s6573
      $region40: #{hdr_resnet_encoder_clear.6} parent=35 // pred_fallthru
        _
    $region36: #{hdr_resnet_encoder_clear.6} parent=5 // pred_fallthru
      _
  $region6: #{hdr_resnet_encoder_clear.6} parent=0 // loop_footer
    %s12 = sadd.s32 1, %s8
  $region7: #{hdr_resnet_encoder_clear.6} parent=0 // loop_footer_branch
    %7 = sbr.rel target = $region3
  $region8: #{hdr_resnet_encoder_clear.6} parent=0 // loop_exit
    _

</llo_original>
